<compile_context>
chip_gen: v7x
topology: tpu7x:2x2x1
jax: 0.10.0
libtpu: 0.0.40
codegen_flags: <defaults>
</compile_context>

<pallas_src>
import jax
import jax.numpy as jnp
from jax.experimental import pallas as pl
from jax.experimental.pallas import tpu as pltpu

# --- model hyperparameters (NerfModel defaults) ------------------------------
NUM_COARSE = 64
NUM_FINE = 128
NEAR, FAR = 2.0, 6.0
MIN_DEG_POINT, MAX_DEG_POINT = 0, 10
DEG_VIEW = 4
NET_WIDTH = 256
NET_WIDTH_COND = 128
WHITE_BKGD = True

POS_ENC_DIM = 3 + 3 * 2 * (MAX_DEG_POINT - MIN_DEG_POINT)   # 63
POS_ENC_PAD = 64                                            # lane-friendly width
VIEW_ENC_DIM = 3 + 3 * 2 * DEG_VIEW                         # 27
BS_WIDTH = 384      # bottleneck(256) + sigma(1), padded to a multiple of 128
OUT_WIDTH = 8       # packed output: rgb(3) + sigma(1) + pad(4)
TILE_N = 256


# --- Pallas MLP kernel --------------------------------------------------------
def _mlp_kernel(x_ref, vd_ref,
                w0, b0, w1, b1, w2, b2, w3, b3, w4, b4,
                w5a, w5b, b5, w6, b6, w7, b7,
                w_bs, b_bs, wca, wrgb, brgb,
                out_ref):
    f32 = jnp.float32
    bf16 = jnp.bfloat16

    x = x_ref[...]                      # [tile, 64] bf16 (padded posenc)

    # trunk: 8 dense layers, ReLU, skip connection after layer index 4.
    # Matmul operands in bf16, accumulate + bias + ReLU in f32.
    h = jnp.maximum(jnp.dot(x, w0[...], preferred_element_type=f32) + b0[...], 0.0)
    for w, b in ((w1, b1), (w2, b2), (w3, b3), (w4, b4)):
        h = jnp.maximum(
            jnp.dot(h.astype(bf16), w[...], preferred_element_type=f32) + b[...], 0.0)
    # concat([h, inputs], -1) @ W5  ==  h @ w5a + inputs @ w5b
    h = jnp.maximum(
        jnp.dot(h.astype(bf16), w5a[...], preferred_element_type=f32)
        + jnp.dot(x, w5b[...], preferred_element_type=f32)
        + b5[...], 0.0)
    for w, b in ((w6, b6), (w7, b7)):
        h = jnp.maximum(
            jnp.dot(h.astype(bf16), w[...], preferred_element_type=f32) + b[...], 0.0)

    # fused bottleneck (cols 0:256) + raw sigma head (col 256); cols 257:384 pad.
    bs = jnp.dot(h.astype(bf16), w_bs[...], preferred_element_type=f32) + b_bs[...]
    bott = bs[:, :NET_WIDTH]
    raw_sigma = bs[:, NET_WIDTH:NET_WIDTH + 1]        # no activation here (model applies ReLU)

    # condition layer: vd_ref already holds viewdirs_enc @ Wc_b + bc (hoisted per ray)
    hc = jnp.maximum(
        jnp.dot(bott.astype(bf16), wca[...], preferred_element_type=f32)
        + vd_ref[...].astype(f32), 0.0)

    # rgb head padded to 8 output lanes (cols 3..7 of wrgb/brgb are zero)
    raw8 = jnp.dot(hc.astype(bf16), wrgb[...], preferred_element_type=f32) + brgb[...]

    # pack sigma into lane 3 -> single [tile, 8] store per grid step
    col = jax.lax.broadcasted_iota(jnp.int32, raw8.shape, 1)
    out_ref[...] = jnp.where(col == 3, raw_sigma, raw8)


def mlp_pallas(x_enc, vd_proj, kernel_params):
    """[N, 64] bf16 encoded points + [N, 128] bf16 projected viewdirs -> ([N,3],[N,1]) f32."""
    n = x_enc.shape[0]
    # Full-MXU tile on real workloads; shrink to a single full block for tiny inputs
    # so block shapes never exceed the array extent.
    tile = TILE_N if n >= TILE_N else n
    grid = (pl.cdiv(n, tile),)

    def row_spec(d):
        return pl.BlockSpec((tile, d), lambda i: (i, 0))

    def full_spec(a):
        return pl.BlockSpec(a.shape, lambda i: (0,) * a.ndim)

    in_specs = ([row_spec(POS_ENC_PAD), row_spec(NET_WIDTH_COND)]
                + [full_spec(p) for p in kernel_params])
    out_specs = row_spec(OUT_WIDTH)

    out = pl.pallas_call(
        _mlp_kernel,
        out_shape=jax.ShapeDtypeStruct((n, OUT_WIDTH), jnp.float32),
        grid_spec=pltpu.PrefetchScalarGridSpec(
            num_scalar_prefetch=0,
            grid=grid,
            in_specs=in_specs,
            out_specs=out_specs),
        compiler_params=pltpu.CompilerParams(
            dimension_semantics=("parallel",)),
    )(x_enc, vd_proj, *kernel_params)
    return out[:, :3], out[:, 3:4]


# --- plain-JAX glue (sampling, posenc, volumetric rendering) ------------------
def posenc(x, min_deg, max_deg):
    if min_deg == max_deg:
        return x
    scales = jnp.array([2.0 ** i for i in range(min_deg, max_deg)], dtype=x.dtype)
    xb = jnp.reshape(x[..., None, :] * scales[:, None], x.shape[:-1] + (-1,))
    four_feat = jnp.sin(jnp.concatenate([xb, xb + 0.5 * jnp.pi], axis=-1))
    return jnp.concatenate([x, four_feat], axis=-1)


def posenc_points_padded(x):
    """posenc(x, 0, 10) (63 features) zero-padded to 64 lanes in one concatenate."""
    scales = jnp.array([2.0 ** i for i in range(MIN_DEG_POINT, MAX_DEG_POINT)],
                       dtype=x.dtype)
    xb = jnp.reshape(x[..., None, :] * scales[:, None], x.shape[:-1] + (-1,))
    four_feat = jnp.sin(jnp.concatenate([xb, xb + 0.5 * jnp.pi], axis=-1))
    pad = jnp.zeros(x.shape[:-1] + (POS_ENC_PAD - POS_ENC_DIM,), x.dtype)
    return jnp.concatenate([x, four_feat, pad], axis=-1)


def cast_rays(z_vals, origins, directions):
    return origins[..., None, :] + z_vals[..., :, None] * directions[..., None, :]


def sample_along_rays(origins, directions, num_samples, near, far, lindisp=False):
    batch = origins.shape[0]
    t_vals = jnp.linspace(0.0, 1.0, num_samples)
    if lindisp:
        z_vals = 1.0 / (1.0 / near * (1.0 - t_vals) + 1.0 / far * t_vals)
    else:
        z_vals = near * (1.0 - t_vals) + far * t_vals
    z_vals = jnp.broadcast_to(z_vals, (batch, num_samples))
    return z_vals, cast_rays(z_vals, origins, directions)


def volumetric_rendering(rgb, sigma, z_vals, dirs, white_bkgd):
    eps = 1e-10
    dists = jnp.concatenate(
        [z_vals[..., 1:] - z_vals[..., :-1],
         jnp.broadcast_to(1e10, z_vals[..., :1].shape)], -1)
    dists = dists * jnp.linalg.norm(dirs[..., None, :], axis=-1)
    alpha = 1.0 - jnp.exp(-sigma[..., 0] * dists)
    accum_prod = jnp.concatenate(
        [jnp.ones_like(alpha[..., :1]),
         jnp.cumprod(1.0 - alpha[..., :-1] + eps, axis=-1)], -1)
    weights = alpha * accum_prod
    comp_rgb = (weights[..., None] * rgb).sum(axis=-2)
    depth = (weights * z_vals).sum(axis=-1)
    acc = weights.sum(axis=-1)
    inv_eps = 1.0 / eps
    # Safe division: depth==0 implies acc==0 (z_vals >= near > 0, weights >= 0),
    # so the guarded branch output is identical to the reference while keeping
    # the division NaN/inf-free (no NaN leak through gradients).
    disp = acc / jnp.where(depth > 0.0, depth, 1.0)
    disp = jnp.where((disp > 0) & (disp < inv_eps) & (acc > 0), disp, inv_eps)
    if white_bkgd:
        comp_rgb = comp_rgb + (1.0 - acc[..., None])
    return comp_rgb, disp, acc, weights


def piecewise_constant_pdf(bins, weights, num_samples):
    # deterministic (randomized=False) inverse-transform sampling
    eps = 1e-5
    weight_sum = jnp.sum(weights, axis=-1, keepdims=True)
    padding = jnp.maximum(0.0, eps - weight_sum)
    weights = weights + padding / weights.shape[-1]
    weight_sum = weight_sum + padding

    pdf = weights / weight_sum
    cdf = jnp.minimum(1.0, jnp.cumsum(pdf[..., :-1], axis=-1))
    cdf = jnp.concatenate(
        [jnp.zeros(cdf.shape[:-1] + (1,)), cdf,
         jnp.ones(cdf.shape[:-1] + (1,))], axis=-1)

    u = jnp.linspace(0.0, 1.0, num_samples)
    u = jnp.broadcast_to(u, cdf.shape[:-1] + (num_samples,))

    mask = u[..., None, :] >= cdf[..., :, None]

    def find_interval(x):
        x0 = jnp.max(jnp.where(mask, x[..., None], x[..., :1, None]), axis=-2)
        x1 = jnp.min(jnp.where(~mask, x[..., None], x[..., -1:, None]), axis=-2)
        return x0, x1

    bins_g0, bins_g1 = find_interval(bins)
    cdf_g0, cdf_g1 = find_interval(cdf)

    t = jnp.clip(jnp.nan_to_num((u - cdf_g0) / (cdf_g1 - cdf_g0), nan=0.0), 0.0, 1.0)
    samples = bins_g0 + t * (bins_g1 - bins_g0)
    return jax.lax.stop_gradient(samples)


def sample_pdf(bins, weights, origins, directions, z_vals, num_samples):
    z_samples = piecewise_constant_pdf(bins, weights, num_samples)
    z_vals = jnp.sort(jnp.concatenate([z_vals, z_samples], axis=-1), axis=-1)
    return z_vals, cast_rays(z_vals, origins, directions)


# --- full NerfModel forward ---------------------------------------------------
def _run_level(samples, vd_proj_ray, kernel_params, z_vals, directions):
    batch, num_samples = samples.shape[:2]
    samples_enc = posenc_points_padded(samples.reshape(-1, 3)).astype(jnp.bfloat16)
    vd = jnp.broadcast_to(vd_proj_ray[:, None, :],
                          (batch, num_samples, NET_WIDTH_COND)).reshape(
                              batch * num_samples, NET_WIDTH_COND)
    raw_rgb, raw_sigma = mlp_pallas(samples_enc, vd, kernel_params)
    raw_rgb = raw_rgb.reshape(batch, num_samples, 3)
    raw_sigma = raw_sigma.reshape(batch, num_samples, 1)
    # noise_std = 0.0 / randomized=False -> add_gaussian_noise is identity
    rgb = jax.nn.sigmoid(raw_rgb)          # rgb_activation = Sigmoid
    sigma = jnp.maximum(raw_sigma, 0.0)    # sigma_activation = ReLU
    return volumetric_rendering(rgb, sigma, z_vals, directions, WHITE_BKGD)


@jax.jit
def nerf_forward(origins, directions, viewdirs, mlp0, mlp1):
    kp0, (wcb0, bc0) = mlp0
    kp1, (wcb1, bc1) = mlp1

    # coarse
    z_vals, samples = sample_along_rays(origins, directions, NUM_COARSE, NEAR, FAR)
    viewdirs_enc = posenc(viewdirs, 0, DEG_VIEW)                  # [batch, 27]
    # per-ray condition-layer input projection (hoisted out of the kernel)
    vd_proj0 = (viewdirs_enc @ wcb0 + bc0).astype(jnp.bfloat16)   # [batch, 128]
    comp_rgb, disp, acc, weights = _run_level(
        samples, vd_proj0, kp0, z_vals, directions)
    ret = [(comp_rgb, disp, acc)]

    # fine
    z_vals_mid = 0.5 * (z_vals[..., 1:] + z_vals[..., :-1])
    z_vals, samples = sample_pdf(z_vals_mid, weights[..., 1:-1],
                                 origins, directions, z_vals, NUM_FINE)
    vd_proj1 = (viewdirs_enc @ wcb1 + bc1).astype(jnp.bfloat16)
    comp_rgb, disp, acc, _ = _run_level(
        samples, vd_proj1, kp1, z_vals, directions)
    ret.append((comp_rgb, disp, acc))
    return ret


# --- deterministic parameter init + kernel packing ----------------------------
def init_mlp_params(key):
    """Natural (f32) parameterization matching the PyTorch MLP layout."""
    keys = jax.random.split(key, 12)

    def dense(k, din, dout):
        kw, kb = jax.random.split(k)
        w = jax.random.normal(kw, (din, dout), jnp.float32) / jnp.sqrt(float(din))
        b = 0.01 * jax.random.normal(kb, (1, dout), jnp.float32)
        return w, b

    p = {}
    p["w0"], p["b0"] = dense(keys[0], POS_ENC_DIM, NET_WIDTH)
    for i in range(1, 5):
        p[f"w{i}"], p[f"b{i}"] = dense(keys[i], NET_WIDTH, NET_WIDTH)
    # layer 5 consumes concat([x (256), inputs (63)])
    p["w5"], p["b5"] = dense(keys[5], NET_WIDTH + POS_ENC_DIM, NET_WIDTH)
    for i in range(6, 8):
        p[f"w{i}"], p[f"b{i}"] = dense(keys[i], NET_WIDTH, NET_WIDTH)
    p["wsig"], p["bsig"] = dense(keys[8], NET_WIDTH, 1)
    p["wbtl"], p["bbtl"] = dense(keys[9], NET_WIDTH, NET_WIDTH)
    # condition layer consumes concat([bottleneck (256), viewdirs_enc (27)])
    p["wc"], p["bc"] = dense(keys[10], NET_WIDTH + VIEW_ENC_DIM, NET_WIDTH_COND)
    p["wrgb"], p["brgb"] = dense(keys[11], NET_WIDTH_COND, 3)
    return p


def pack_params(p):
    """Pad / split / fuse / cast params into the kernel-ready layout."""
    bf16 = jnp.bfloat16
    f32 = jnp.float32

    def pad_rows(w, rows):
        return jnp.pad(w, ((0, rows - w.shape[0]), (0, 0)))

    w0 = pad_rows(p["w0"], POS_ENC_PAD).astype(bf16)                 # [64, 256]
    w5a = p["w5"][:NET_WIDTH].astype(bf16)                           # [256, 256]
    w5b = pad_rows(p["w5"][NET_WIDTH:], POS_ENC_PAD).astype(bf16)    # [64, 256]

    # fused bottleneck + sigma head, output width padded 257 -> 384
    pad_w = jnp.zeros((NET_WIDTH, BS_WIDTH - NET_WIDTH - 1), f32)
    pad_b = jnp.zeros((1, BS_WIDTH - NET_WIDTH - 1), f32)
    w_bs = jnp.concatenate([p["wbtl"], p["wsig"], pad_w], axis=1).astype(bf16)
    b_bs = jnp.concatenate([p["bbtl"], p["bsig"], pad_b], axis=1)

    wca = p["wc"][:NET_WIDTH].astype(bf16)                           # [256, 128]
    # rgb head padded to 8 output lanes (zeros in lanes 3..7)
    wrgb8 = jnp.pad(p["wrgb"], ((0, 0), (0, OUT_WIDTH - 3))).astype(bf16)
    brgb8 = jnp.pad(p["brgb"], ((0, 0), (0, OUT_WIDTH - 3)))

    kernel_params = (
        w0, p["b0"],
        p["w1"].astype(bf16), p["b1"],
        p["w2"].astype(bf16), p["b2"],
        p["w3"].astype(bf16), p["b3"],
        p["w4"].astype(bf16), p["b4"],
        w5a, w5b, p["b5"],
        p["w6"].astype(bf16), p["b6"],
        p["w7"].astype(bf16), p["b7"],
        w_bs, b_bs,
        wca,
        wrgb8, brgb8,
    )
    # viewdirs branch of the condition layer, applied per ray in plain JAX (f32)
    cond_params = (p["wc"][NET_WIDTH:], p["bc"])                     # [27,128], [1,128]
    return kernel_params, cond_params


if __name__ == "__main__":
    key = jax.random.PRNGKey(0)
    k_o, k_d, k_m0, k_m1 = jax.random.split(key, 4)

    batch = 2
    origins = jax.random.normal(k_o, (batch, 3), jnp.float32)
    directions = jax.random.normal(k_d, (batch, 3), jnp.float32)
    viewdirs = directions / jnp.linalg.norm(directions, axis=-1, keepdims=True)

    mlp0 = pack_params(init_mlp_params(k_m0))
    mlp1 = pack_params(init_mlp_params(k_m1))

    ret = nerf_forward(origins, directions, viewdirs, mlp0, mlp1)
    for (comp_rgb, disp, acc) in ret:
        jax.block_until_ready(comp_rgb)
        jax.block_until_ready(disp)
        jax.block_until_ready(acc)

    assert ret[0][0].shape == (batch, 3) and ret[1][0].shape == (batch, 3)
    assert ret[0][1].shape == (batch,) and ret[0][2].shape == (batch,)
    assert ret[1][1].shape == (batch,) and ret[1][2].shape == (batch,)
    print("KERNEL_OK")
</pallas_src>

<mosaic_0001>
module attributes {stable_mosaic.version = 11 : i64} {
  func.func @_mlp_kernel(%arg0: i32, %arg1: memref<128x64xbf16, #tpu.memory_space<vmem>>, %arg2: memref<128x128xbf16, #tpu.memory_space<vmem>>, %arg3: memref<64x256xbf16, #tpu.memory_space<vmem>>, %arg4: memref<1x256xf32, #tpu.memory_space<vmem>>, %arg5: memref<256x256xbf16, #tpu.memory_space<vmem>>, %arg6: memref<1x256xf32, #tpu.memory_space<vmem>>, %arg7: memref<256x256xbf16, #tpu.memory_space<vmem>>, %arg8: memref<1x256xf32, #tpu.memory_space<vmem>>, %arg9: memref<256x256xbf16, #tpu.memory_space<vmem>>, %arg10: memref<1x256xf32, #tpu.memory_space<vmem>>, %arg11: memref<256x256xbf16, #tpu.memory_space<vmem>>, %arg12: memref<1x256xf32, #tpu.memory_space<vmem>>, %arg13: memref<256x256xbf16, #tpu.memory_space<vmem>>, %arg14: memref<64x256xbf16, #tpu.memory_space<vmem>>, %arg15: memref<1x256xf32, #tpu.memory_space<vmem>>, %arg16: memref<256x256xbf16, #tpu.memory_space<vmem>>, %arg17: memref<1x256xf32, #tpu.memory_space<vmem>>, %arg18: memref<256x256xbf16, #tpu.memory_space<vmem>>, %arg19: memref<1x256xf32, #tpu.memory_space<vmem>>, %arg20: memref<256x384xbf16, #tpu.memory_space<vmem>>, %arg21: memref<1x384xf32, #tpu.memory_space<vmem>>, %arg22: memref<256x128xbf16, #tpu.memory_space<vmem>>, %arg23: memref<128x8xbf16, #tpu.memory_space<vmem>>, %arg24: memref<1x8xf32, #tpu.memory_space<vmem>>, %arg25: memref<128x8xf32, #tpu.memory_space<vmem>>) attributes {dimension_semantics = [#tpu.dimension_semantics<parallel>], iteration_bounds = array<i64: 1>, scalar_prefetch = 0 : i64, scratch_operands = 0 : i64, tpu.core_type = #tpu.core_type<tc>, window_params = [{transform_indices = @transform_0, window_bounds = array<i64: 128, 64>}, {transform_indices = @transform_1, window_bounds = array<i64: 128, 128>}, {pipeline_mode = #tpu.pipeline_mode<synchronous>, transform_indices = @transform_2, window_bounds = array<i64: 64, 256>}, {pipeline_mode = #tpu.pipeline_mode<synchronous>, transform_indices = @transform_3, window_bounds = array<i64: 1, 256>}, {pipeline_mode = #tpu.pipeline_mode<synchronous>, transform_indices = @transform_4, window_bounds = array<i64: 256, 256>}, {pipeline_mode = #tpu.pipeline_mode<synchronous>, transform_indices = @transform_5, window_bounds = array<i64: 1, 256>}, {pipeline_mode = #tpu.pipeline_mode<synchronous>, transform_indices = @transform_6, window_bounds = array<i64: 256, 256>}, {pipeline_mode = #tpu.pipeline_mode<synchronous>, transform_indices = @transform_7, window_bounds = array<i64: 1, 256>}, {pipeline_mode = #tpu.pipeline_mode<synchronous>, transform_indices = @transform_8, window_bounds = array<i64: 256, 256>}, {pipeline_mode = #tpu.pipeline_mode<synchronous>, transform_indices = @transform_9, window_bounds = array<i64: 1, 256>}, {pipeline_mode = #tpu.pipeline_mode<synchronous>, transform_indices = @transform_10, window_bounds = array<i64: 256, 256>}, {pipeline_mode = #tpu.pipeline_mode<synchronous>, transform_indices = @transform_11, window_bounds = array<i64: 1, 256>}, {pipeline_mode = #tpu.pipeline_mode<synchronous>, transform_indices = @transform_12, window_bounds = array<i64: 256, 256>}, {pipeline_mode = #tpu.pipeline_mode<synchronous>, transform_indices = @transform_13, window_bounds = array<i64: 64, 256>}, {pipeline_mode = #tpu.pipeline_mode<synchronous>, transform_indices = @transform_14, window_bounds = array<i64: 1, 256>}, {pipeline_mode = #tpu.pipeline_mode<synchronous>, transform_indices = @transform_15, window_bounds = array<i64: 256, 256>}, {pipeline_mode = #tpu.pipeline_mode<synchronous>, transform_indices = @transform_16, window_bounds = array<i64: 1, 256>}, {pipeline_mode = #tpu.pipeline_mode<synchronous>, transform_indices = @transform_17, window_bounds = array<i64: 256, 256>}, {pipeline_mode = #tpu.pipeline_mode<synchronous>, transform_indices = @transform_18, window_bounds = array<i64: 1, 256>}, {pipeline_mode = #tpu.pipeline_mode<synchronous>, transform_indices = @transform_19, window_bounds = array<i64: 256, 384>}, {pipeline_mode = #tpu.pipeline_mode<synchronous>, transform_indices = @transform_20, window_bounds = array<i64: 1, 384>}, {pipeline_mode = #tpu.pipeline_mode<synchronous>, transform_indices = @transform_21, window_bounds = array<i64: 256, 128>}, {pipeline_mode = #tpu.pipeline_mode<synchronous>, transform_indices = @transform_22, window_bounds = array<i64: 128, 8>}, {pipeline_mode = #tpu.pipeline_mode<synchronous>, transform_indices = @transform_23, window_bounds = array<i64: 1, 8>}, {transform_indices = @transform_24, window_bounds = array<i64: 128, 8>}]} {
    %c0 = arith.constant 0 : index
    %c0_0 = arith.constant 0 : index
    %0 = vector.load %arg1[%c0, %c0_0] : memref<128x64xbf16, #tpu.memory_space<vmem>>, vector<128x64xbf16>
    %c0_1 = arith.constant 0 : index
    %c0_2 = arith.constant 0 : index
    %1 = vector.load %arg3[%c0_1, %c0_2] : memref<64x256xbf16, #tpu.memory_space<vmem>>, vector<64x256xbf16>
    %cst = arith.constant dense<0.000000e+00> : vector<128x256xf32>
    %2 = tpu.matmul %0, %1, %cst {dimension_numbers = #tpu.dot_dimension_numbers<[1], [0], [0], [1], [0, 0, 1, 1], [], []>} : vector<128x64xbf16>, vector<64x256xbf16>, vector<128x256xf32> -> vector<128x256xf32>
    %c0_3 = arith.constant 0 : index
    %c0_4 = arith.constant 0 : index
    %3 = vector.load %arg4[%c0_3, %c0_4] : memref<1x256xf32, #tpu.memory_space<vmem>>, vector<1x256xf32>
    %4 = vector.broadcast %3 : vector<1x256xf32> to vector<128x256xf32>
    %5 = arith.addf %2, %4 : vector<128x256xf32>
    %cst_5 = arith.constant 0.000000e+00 : f32
    %6 = vector.broadcast %cst_5 : f32 to vector<128x256xf32>
    %7 = arith.maximumf %5, %6 : vector<128x256xf32>
    %8 = arith.truncf %7 : vector<128x256xf32> to vector<128x256xbf16>
    %c0_6 = arith.constant 0 : index
    %c0_7 = arith.constant 0 : index
    %9 = vector.load %arg5[%c0_6, %c0_7] : memref<256x256xbf16, #tpu.memory_space<vmem>>, vector<256x256xbf16>
    %cst_8 = arith.constant dense<0.000000e+00> : vector<128x256xf32>
    %10 = tpu.matmul %8, %9, %cst_8 {dimension_numbers = #tpu.dot_dimension_numbers<[1], [0], [0], [1], [0, 0, 1, 1], [], []>} : vector<128x256xbf16>, vector<256x256xbf16>, vector<128x256xf32> -> vector<128x256xf32>
    %c0_9 = arith.constant 0 : index
    %c0_10 = arith.constant 0 : index
    %11 = vector.load %arg6[%c0_9, %c0_10] : memref<1x256xf32, #tpu.memory_space<vmem>>, vector<1x256xf32>
    %12 = vector.broadcast %11 : vector<1x256xf32> to vector<128x256xf32>
    %13 = arith.addf %10, %12 : vector<128x256xf32>
    %cst_11 = arith.constant 0.000000e+00 : f32
    %14 = vector.broadcast %cst_11 : f32 to vector<128x256xf32>
    %15 = arith.maximumf %13, %14 : vector<128x256xf32>
    %16 = arith.truncf %15 : vector<128x256xf32> to vector<128x256xbf16>
    %c0_12 = arith.constant 0 : index
    %c0_13 = arith.constant 0 : index
    %17 = vector.load %arg7[%c0_12, %c0_13] : memref<256x256xbf16, #tpu.memory_space<vmem>>, vector<256x256xbf16>
    %cst_14 = arith.constant dense<0.000000e+00> : vector<128x256xf32>
    %18 = tpu.matmul %16, %17, %cst_14 {dimension_numbers = #tpu.dot_dimension_numbers<[1], [0], [0], [1], [0, 0, 1, 1], [], []>} : vector<128x256xbf16>, vector<256x256xbf16>, vector<128x256xf32> -> vector<128x256xf32>
    %c0_15 = arith.constant 0 : index
    %c0_16 = arith.constant 0 : index
    %19 = vector.load %arg8[%c0_15, %c0_16] : memref<1x256xf32, #tpu.memory_space<vmem>>, vector<1x256xf32>
    %20 = vector.broadcast %19 : vector<1x256xf32> to vector<128x256xf32>
    %21 = arith.addf %18, %20 : vector<128x256xf32>
    %cst_17 = arith.constant 0.000000e+00 : f32
    %22 = vector.broadcast %cst_17 : f32 to vector<128x256xf32>
    %23 = arith.maximumf %21, %22 : vector<128x256xf32>
    %24 = arith.truncf %23 : vector<128x256xf32> to vector<128x256xbf16>
    %c0_18 = arith.constant 0 : index
    %c0_19 = arith.constant 0 : index
    %25 = vector.load %arg9[%c0_18, %c0_19] : memref<256x256xbf16, #tpu.memory_space<vmem>>, vector<256x256xbf16>
    %cst_20 = arith.constant dense<0.000000e+00> : vector<128x256xf32>
    %26 = tpu.matmul %24, %25, %cst_20 {dimension_numbers = #tpu.dot_dimension_numbers<[1], [0], [0], [1], [0, 0, 1, 1], [], []>} : vector<128x256xbf16>, vector<256x256xbf16>, vector<128x256xf32> -> vector<128x256xf32>
    %c0_21 = arith.constant 0 : index
    %c0_22 = arith.constant 0 : index
    %27 = vector.load %arg10[%c0_21, %c0_22] : memref<1x256xf32, #tpu.memory_space<vmem>>, vector<1x256xf32>
    %28 = vector.broadcast %27 : vector<1x256xf32> to vector<128x256xf32>
    %29 = arith.addf %26, %28 : vector<128x256xf32>
    %cst_23 = arith.constant 0.000000e+00 : f32
    %30 = vector.broadcast %cst_23 : f32 to vector<128x256xf32>
    %31 = arith.maximumf %29, %30 : vector<128x256xf32>
    %32 = arith.truncf %31 : vector<128x256xf32> to vector<128x256xbf16>
    %c0_24 = arith.constant 0 : index
    %c0_25 = arith.constant 0 : index
    %33 = vector.load %arg11[%c0_24, %c0_25] : memref<256x256xbf16, #tpu.memory_space<vmem>>, vector<256x256xbf16>
    %cst_26 = arith.constant dense<0.000000e+00> : vector<128x256xf32>
    %34 = tpu.matmul %32, %33, %cst_26 {dimension_numbers = #tpu.dot_dimension_numbers<[1], [0], [0], [1], [0, 0, 1, 1], [], []>} : vector<128x256xbf16>, vector<256x256xbf16>, vector<128x256xf32> -> vector<128x256xf32>
    %c0_27 = arith.constant 0 : index
    %c0_28 = arith.constant 0 : index
    %35 = vector.load %arg12[%c0_27, %c0_28] : memref<1x256xf32, #tpu.memory_space<vmem>>, vector<1x256xf32>
    %36 = vector.broadcast %35 : vector<1x256xf32> to vector<128x256xf32>
    %37 = arith.addf %34, %36 : vector<128x256xf32>
    %cst_29 = arith.constant 0.000000e+00 : f32
    %38 = vector.broadcast %cst_29 : f32 to vector<128x256xf32>
    %39 = arith.maximumf %37, %38 : vector<128x256xf32>
    %40 = arith.truncf %39 : vector<128x256xf32> to vector<128x256xbf16>
    %c0_30 = arith.constant 0 : index
    %c0_31 = arith.constant 0 : index
    %41 = vector.load %arg13[%c0_30, %c0_31] : memref<256x256xbf16, #tpu.memory_space<vmem>>, vector<256x256xbf16>
    %cst_32 = arith.constant dense<0.000000e+00> : vector<128x256xf32>
    %42 = tpu.matmul %40, %41, %cst_32 {dimension_numbers = #tpu.dot_dimension_numbers<[1], [0], [0], [1], [0, 0, 1, 1], [], []>} : vector<128x256xbf16>, vector<256x256xbf16>, vector<128x256xf32> -> vector<128x256xf32>
    %c0_33 = arith.constant 0 : index
    %c0_34 = arith.constant 0 : index
    %43 = vector.load %arg14[%c0_33, %c0_34] : memref<64x256xbf16, #tpu.memory_space<vmem>>, vector<64x256xbf16>
    %cst_35 = arith.constant dense<0.000000e+00> : vector<128x256xf32>
    %44 = tpu.matmul %0, %43, %cst_35 {dimension_numbers = #tpu.dot_dimension_numbers<[1], [0], [0], [1], [0, 0, 1, 1], [], []>} : vector<128x64xbf16>, vector<64x256xbf16>, vector<128x256xf32> -> vector<128x256xf32>
    %45 = arith.addf %42, %44 : vector<128x256xf32>
    %c0_36 = arith.constant 0 : index
    %c0_37 = arith.constant 0 : index
    %46 = vector.load %arg15[%c0_36, %c0_37] : memref<1x256xf32, #tpu.memory_space<vmem>>, vector<1x256xf32>
    %47 = vector.broadcast %46 : vector<1x256xf32> to vector<128x256xf32>
    %48 = arith.addf %45, %47 : vector<128x256xf32>
    %cst_38 = arith.constant 0.000000e+00 : f32
    %49 = vector.broadcast %cst_38 : f32 to vector<128x256xf32>
    %50 = arith.maximumf %48, %49 : vector<128x256xf32>
    %51 = arith.truncf %50 : vector<128x256xf32> to vector<128x256xbf16>
    %c0_39 = arith.constant 0 : index
    %c0_40 = arith.constant 0 : index
    %52 = vector.load %arg16[%c0_39, %c0_40] : memref<256x256xbf16, #tpu.memory_space<vmem>>, vector<256x256xbf16>
    %cst_41 = arith.constant dense<0.000000e+00> : vector<128x256xf32>
    %53 = tpu.matmul %51, %52, %cst_41 {dimension_numbers = #tpu.dot_dimension_numbers<[1], [0], [0], [1], [0, 0, 1, 1], [], []>} : vector<128x256xbf16>, vector<256x256xbf16>, vector<128x256xf32> -> vector<128x256xf32>
    %c0_42 = arith.constant 0 : index
    %c0_43 = arith.constant 0 : index
    %54 = vector.load %arg17[%c0_42, %c0_43] : memref<1x256xf32, #tpu.memory_space<vmem>>, vector<1x256xf32>
    %55 = vector.broadcast %54 : vector<1x256xf32> to vector<128x256xf32>
    %56 = arith.addf %53, %55 : vector<128x256xf32>
    %cst_44 = arith.constant 0.000000e+00 : f32
    %57 = vector.broadcast %cst_44 : f32 to vector<128x256xf32>
    %58 = arith.maximumf %56, %57 : vector<128x256xf32>
    %59 = arith.truncf %58 : vector<128x256xf32> to vector<128x256xbf16>
    %c0_45 = arith.constant 0 : index
    %c0_46 = arith.constant 0 : index
    %60 = vector.load %arg18[%c0_45, %c0_46] : memref<256x256xbf16, #tpu.memory_space<vmem>>, vector<256x256xbf16>
    %cst_47 = arith.constant dense<0.000000e+00> : vector<128x256xf32>
    %61 = tpu.matmul %59, %60, %cst_47 {dimension_numbers = #tpu.dot_dimension_numbers<[1], [0], [0], [1], [0, 0, 1, 1], [], []>} : vector<128x256xbf16>, vector<256x256xbf16>, vector<128x256xf32> -> vector<128x256xf32>
    %c0_48 = arith.constant 0 : index
    %c0_49 = arith.constant 0 : index
    %62 = vector.load %arg19[%c0_48, %c0_49] : memref<1x256xf32, #tpu.memory_space<vmem>>, vector<1x256xf32>
    %63 = vector.broadcast %62 : vector<1x256xf32> to vector<128x256xf32>
    %64 = arith.addf %61, %63 : vector<128x256xf32>
    %cst_50 = arith.constant 0.000000e+00 : f32
    %65 = vector.broadcast %cst_50 : f32 to vector<128x256xf32>
    %66 = arith.maximumf %64, %65 : vector<128x256xf32>
    %67 = arith.truncf %66 : vector<128x256xf32> to vector<128x256xbf16>
    %c0_51 = arith.constant 0 : index
    %c0_52 = arith.constant 0 : index
    %68 = vector.load %arg20[%c0_51, %c0_52] : memref<256x384xbf16, #tpu.memory_space<vmem>>, vector<256x384xbf16>
    %cst_53 = arith.constant dense<0.000000e+00> : vector<128x384xf32>
    %69 = tpu.matmul %67, %68, %cst_53 {dimension_numbers = #tpu.dot_dimension_numbers<[1], [0], [0], [1], [0, 0, 1, 1], [], []>} : vector<128x256xbf16>, vector<256x384xbf16>, vector<128x384xf32> -> vector<128x384xf32>
    %c0_54 = arith.constant 0 : index
    %c0_55 = arith.constant 0 : index
    %70 = vector.load %arg21[%c0_54, %c0_55] : memref<1x384xf32, #tpu.memory_space<vmem>>, vector<1x384xf32>
    %71 = vector.broadcast %70 : vector<1x384xf32> to vector<128x384xf32>
    %72 = arith.addf %69, %71 : vector<128x384xf32>
    %73 = vector.extract_strided_slice %72 {offsets = [0, 0], sizes = [128, 256], strides = [1, 1]} : vector<128x384xf32> to vector<128x256xf32>
    %74 = vector.extract_strided_slice %72 {offsets = [0, 256], sizes = [128, 1], strides = [1, 1]} : vector<128x384xf32> to vector<128x1xf32>
    %75 = arith.truncf %73 : vector<128x256xf32> to vector<128x256xbf16>
    %c0_56 = arith.constant 0 : index
    %c0_57 = arith.constant 0 : index
    %76 = vector.load %arg22[%c0_56, %c0_57] : memref<256x128xbf16, #tpu.memory_space<vmem>>, vector<256x128xbf16>
    %cst_58 = arith.constant dense<0.000000e+00> : vector<128x128xf32>
    %77 = tpu.matmul %75, %76, %cst_58 {dimension_numbers = #tpu.dot_dimension_numbers<[1], [0], [0], [1], [0, 0, 1, 1], [], []>} : vector<128x256xbf16>, vector<256x128xbf16>, vector<128x128xf32> -> vector<128x128xf32>
    %c0_59 = arith.constant 0 : index
    %c0_60 = arith.constant 0 : index
    %78 = vector.load %arg2[%c0_59, %c0_60] : memref<128x128xbf16, #tpu.memory_space<vmem>>, vector<128x128xbf16>
    %79 = arith.extf %78 : vector<128x128xbf16> to vector<128x128xf32>
    %80 = arith.addf %77, %79 : vector<128x128xf32>
    %cst_61 = arith.constant 0.000000e+00 : f32
    %81 = vector.broadcast %cst_61 : f32 to vector<128x128xf32>
    %82 = arith.maximumf %80, %81 : vector<128x128xf32>
    %83 = arith.truncf %82 : vector<128x128xf32> to vector<128x128xbf16>
    %c0_62 = arith.constant 0 : index
    %c0_63 = arith.constant 0 : index
    %84 = vector.load %arg23[%c0_62, %c0_63] : memref<128x8xbf16, #tpu.memory_space<vmem>>, vector<128x8xbf16>
    %cst_64 = arith.constant dense<0.000000e+00> : vector<128x8xf32>
    %85 = tpu.matmul %83, %84, %cst_64 {dimension_numbers = #tpu.dot_dimension_numbers<[1], [0], [0], [1], [0, 0, 1, 1], [], []>} : vector<128x128xbf16>, vector<128x8xbf16>, vector<128x8xf32> -> vector<128x8xf32>
    %c0_65 = arith.constant 0 : index
    %c0_66 = arith.constant 0 : index
    %86 = vector.load %arg24[%c0_65, %c0_66] : memref<1x8xf32, #tpu.memory_space<vmem>>, vector<1x8xf32>
    %87 = vector.broadcast %86 : vector<1x8xf32> to vector<128x8xf32>
    %88 = arith.addf %85, %87 : vector<128x8xf32>
    %89 = tpu.iota {dimensions = array<i32: 1>} : vector<128x8xi32>
    %c3_i32 = arith.constant 3 : i32
    %90 = vector.broadcast %c3_i32 : i32 to vector<128x8xi32>
    %91 = arith.cmpi eq, %89, %90 : vector<128x8xi32>
    %92 = vector.shape_cast %74 : vector<128x1xf32> to vector<128x1xf32>
    %93 = vector.broadcast %92 : vector<128x1xf32> to vector<128x8xf32>
    %94 = arith.select %91, %93, %88 : vector<128x8xi1>, vector<128x8xf32>
    %c0_67 = arith.constant 0 : index
    %c0_68 = arith.constant 0 : index
    %95 = vector.load %arg25[%c0_67, %c0_68] : memref<128x8xf32, #tpu.memory_space<vmem>>, vector<128x8xf32>
    tpu.vector_store %arg25[%c0_67, %c0_68], %94 {strides = array<i32>} : memref<128x8xf32, #tpu.memory_space<vmem>>, vector<128x8xf32>,
    return
  }
  func.func @transform_0(%arg0: i32) -> (i32, i32) {
    %c0_i32 = arith.constant 0 : i32
    %c0_i32_0 = arith.constant 0 : i32
    return %arg0, %c0_i32 : i32, i32
  }
  func.func @transform_1(%arg0: i32) -> (i32, i32) {
    %c0_i32 = arith.constant 0 : i32
    %c0_i32_0 = arith.constant 0 : i32
    return %arg0, %c0_i32 : i32, i32
  }
  func.func @transform_2(%arg0: i32) -> (i32, i32) {
    %c0_i32 = arith.constant 0 : i32
    %c0_i32_0 = arith.constant 0 : i32
    %c0_i32_1 = arith.constant 0 : i32
    return %c0_i32, %c0_i32_0 : i32, i32
  }
  func.func @transform_3(%arg0: i32) -> (i32, i32) {
    %c0_i32 = arith.constant 0 : i32
    %c0_i32_0 = arith.constant 0 : i32
    %c0_i32_1 = arith.constant 0 : i32
    return %c0_i32, %c0_i32_0 : i32, i32
  }
  func.func @transform_4(%arg0: i32) -> (i32, i32) {
    %c0_i32 = arith.constant 0 : i32
    %c0_i32_0 = arith.constant 0 : i32
    %c0_i32_1 = arith.constant 0 : i32
    return %c0_i32, %c0_i32_0 : i32, i32
  }
  func.func @transform_5(%arg0: i32) -> (i32, i32) {
    %c0_i32 = arith.constant 0 : i32
    %c0_i32_0 = arith.constant 0 : i32
    %c0_i32_1 = arith.constant 0 : i32
    return %c0_i32, %c0_i32_0 : i32, i32
  }
  func.func @transform_6(%arg0: i32) -> (i32, i32) {
    %c0_i32 = arith.constant 0 : i32
    %c0_i32_0 = arith.constant 0 : i32
    %c0_i32_1 = arith.constant 0 : i32
    return %c0_i32, %c0_i32_0 : i32, i32
  }
  func.func @transform_7(%arg0: i32) -> (i32, i32) {
    %c0_i32 = arith.constant 0 : i32
    %c0_i32_0 = arith.constant 0 : i32
    %c0_i32_1 = arith.constant 0 : i32
    return %c0_i32, %c0_i32_0 : i32, i32
  }
  func.func @transform_8(%arg0: i32) -> (i32, i32) {
    %c0_i32 = arith.constant 0 : i32
    %c0_i32_0 = arith.constant 0 : i32
    %c0_i32_1 = arith.constant 0 : i32
    return %c0_i32, %c0_i32_0 : i32, i32
  }
  func.func @transform_9(%arg0: i32) -> (i32, i32) {
    %c0_i32 = arith.constant 0 : i32
    %c0_i32_0 = arith.constant 0 : i32
    %c0_i32_1 = arith.constant 0 : i32
    return %c0_i32, %c0_i32_0 : i32, i32
  }
  func.func @transform_10(%arg0: i32) -> (i32, i32) {
    %c0_i32 = arith.constant 0 : i32
    %c0_i32_0 = arith.constant 0 : i32
    %c0_i32_1 = arith.constant 0 : i32
    return %c0_i32, %c0_i32_0 : i32, i32
  }
  func.func @transform_11(%arg0: i32) -> (i32, i32) {
    %c0_i32 = arith.constant 0 : i32
    %c0_i32_0 = arith.constant 0 : i32
    %c0_i32_1 = arith.constant 0 : i32
    return %c0_i32, %c0_i32_0 : i32, i32
  }
  func.func @transform_12(%arg0: i32) -> (i32, i32) {
    %c0_i32 = arith.constant 0 : i32
    %c0_i32_0 = arith.constant 0 : i32
    %c0_i32_1 = arith.constant 0 : i32
    return %c0_i32, %c0_i32_0 : i32, i32
  }
  func.func @transform_13(%arg0: i32) -> (i32, i32) {
    %c0_i32 = arith.constant 0 : i32
    %c0_i32_0 = arith.constant 0 : i32
    %c0_i32_1 = arith.constant 0 : i32
    return %c0_i32, %c0_i32_0 : i32, i32
  }
  func.func @transform_14(%arg0: i32) -> (i32, i32) {
    %c0_i32 = arith.constant 0 : i32
    %c0_i32_0 = arith.constant 0 : i32
    %c0_i32_1 = arith.constant 0 : i32
    return %c0_i32, %c0_i32_0 : i32, i32
  }
  func.func @transform_15(%arg0: i32) -> (i32, i32) {
    %c0_i32 = arith.constant 0 : i32
    %c0_i32_0 = arith.constant 0 : i32
    %c0_i32_1 = arith.constant 0 : i32
    return %c0_i32, %c0_i32_0 : i32, i32
  }
  func.func @transform_16(%arg0: i32) -> (i32, i32) {
    %c0_i32 = arith.constant 0 : i32
    %c0_i32_0 = arith.constant 0 : i32
    %c0_i32_1 = arith.constant 0 : i32
    return %c0_i32, %c0_i32_0 : i32, i32
  }
  func.func @transform_17(%arg0: i32) -> (i32, i32) {
    %c0_i32 = arith.constant 0 : i32
    %c0_i32_0 = arith.constant 0 : i32
    %c0_i32_1 = arith.constant 0 : i32
    return %c0_i32, %c0_i32_0 : i32, i32
  }
  func.func @transform_18(%arg0: i32) -> (i32, i32) {
    %c0_i32 = arith.constant 0 : i32
    %c0_i32_0 = arith.constant 0 : i32
    %c0_i32_1 = arith.constant 0 : i32
    return %c0_i32, %c0_i32_0 : i32, i32
  }
  func.func @transform_19(%arg0: i32) -> (i32, i32) {
    %c0_i32 = arith.constant 0 : i32
    %c0_i32_0 = arith.constant 0 : i32
    %c0_i32_1 = arith.constant 0 : i32
    return %c0_i32, %c0_i32_0 : i32, i32
  }
  func.func @transform_20(%arg0: i32) -> (i32, i32) {
    %c0_i32 = arith.constant 0 : i32
    %c0_i32_0 = arith.constant 0 : i32
    %c0_i32_1 = arith.constant 0 : i32
    return %c0_i32, %c0_i32_0 : i32, i32
  }
  func.func @transform_21(%arg0: i32) -> (i32, i32) {
    %c0_i32 = arith.constant 0 : i32
    %c0_i32_0 = arith.constant 0 : i32
    %c0_i32_1 = arith.constant 0 : i32
    return %c0_i32, %c0_i32_0 : i32, i32
  }
  func.func @transform_22(%arg0: i32) -> (i32, i32) {
    %c0_i32 = arith.constant 0 : i32
    %c0_i32_0 = arith.constant 0 : i32
    %c0_i32_1 = arith.constant 0 : i32
    return %c0_i32, %c0_i32_0 : i32, i32
  }
  func.func @transform_23(%arg0: i32) -> (i32, i32) {
    %c0_i32 = arith.constant 0 : i32
    %c0_i32_0 = arith.constant 0 : i32
    %c0_i32_1 = arith.constant 0 : i32
    return %c0_i32, %c0_i32_0 : i32, i32
  }
  func.func @transform_24(%arg0: i32) -> (i32, i32) {
    %c0_i32 = arith.constant 0 : i32
    %c0_i32_0 = arith.constant 0 : i32
    return %arg0, %c0_i32 : i32, i32
  }
}

module attributes {stable_mosaic.version = 11 : i64} {
  func.func @_mlp_kernel(%arg0: i32, %arg1: memref<256x64xbf16, #tpu.memory_space<vmem>>, %arg2: memref<256x128xbf16, #tpu.memory_space<vmem>>, %arg3: memref<64x256xbf16, #tpu.memory_space<vmem>>, %arg4: memref<1x256xf32, #tpu.memory_space<vmem>>, %arg5: memref<256x256xbf16, #tpu.memory_space<vmem>>, %arg6: memref<1x256xf32, #tpu.memory_space<vmem>>, %arg7: memref<256x256xbf16, #tpu.memory_space<vmem>>, %arg8: memref<1x256xf32, #tpu.memory_space<vmem>>, %arg9: memref<256x256xbf16, #tpu.memory_space<vmem>>, %arg10: memref<1x256xf32, #tpu.memory_space<vmem>>, %arg11: memref<256x256xbf16, #tpu.memory_space<vmem>>, %arg12: memref<1x256xf32, #tpu.memory_space<vmem>>, %arg13: memref<256x256xbf16, #tpu.memory_space<vmem>>, %arg14: memref<64x256xbf16, #tpu.memory_space<vmem>>, %arg15: memref<1x256xf32, #tpu.memory_space<vmem>>, %arg16: memref<256x256xbf16, #tpu.memory_space<vmem>>, %arg17: memref<1x256xf32, #tpu.memory_space<vmem>>, %arg18: memref<256x256xbf16, #tpu.memory_space<vmem>>, %arg19: memref<1x256xf32, #tpu.memory_space<vmem>>, %arg20: memref<256x384xbf16, #tpu.memory_space<vmem>>, %arg21: memref<1x384xf32, #tpu.memory_space<vmem>>, %arg22: memref<256x128xbf16, #tpu.memory_space<vmem>>, %arg23: memref<128x8xbf16, #tpu.memory_space<vmem>>, %arg24: memref<1x8xf32, #tpu.memory_space<vmem>>, %arg25: memref<256x8xf32, #tpu.memory_space<vmem>>) attributes {dimension_semantics = [#tpu.dimension_semantics<parallel>], iteration_bounds = array<i64: 2>, scalar_prefetch = 0 : i64, scratch_operands = 0 : i64, tpu.core_type = #tpu.core_type<tc>, window_params = [{transform_indices = @transform_0, window_bounds = array<i64: 256, 64>}, {transform_indices = @transform_1, window_bounds = array<i64: 256, 128>}, {pipeline_mode = #tpu.pipeline_mode<synchronous>, transform_indices = @transform_2, window_bounds = array<i64: 64, 256>}, {pipeline_mode = #tpu.pipeline_mode<synchronous>, transform_indices = @transform_3, window_bounds = array<i64: 1, 256>}, {pipeline_mode = #tpu.pipeline_mode<synchronous>, transform_indices = @transform_4, window_bounds = array<i64: 256, 256>}, {pipeline_mode = #tpu.pipeline_mode<synchronous>, transform_indices = @transform_5, window_bounds = array<i64: 1, 256>}, {pipeline_mode = #tpu.pipeline_mode<synchronous>, transform_indices = @transform_6, window_bounds = array<i64: 256, 256>}, {pipeline_mode = #tpu.pipeline_mode<synchronous>, transform_indices = @transform_7, window_bounds = array<i64: 1, 256>}, {pipeline_mode = #tpu.pipeline_mode<synchronous>, transform_indices = @transform_8, window_bounds = array<i64: 256, 256>}, {pipeline_mode = #tpu.pipeline_mode<synchronous>, transform_indices = @transform_9, window_bounds = array<i64: 1, 256>}, {pipeline_mode = #tpu.pipeline_mode<synchronous>, transform_indices = @transform_10, window_bounds = array<i64: 256, 256>}, {pipeline_mode = #tpu.pipeline_mode<synchronous>, transform_indices = @transform_11, window_bounds = array<i64: 1, 256>}, {pipeline_mode = #tpu.pipeline_mode<synchronous>, transform_indices = @transform_12, window_bounds = array<i64: 256, 256>}, {pipeline_mode = #tpu.pipeline_mode<synchronous>, transform_indices = @transform_13, window_bounds = array<i64: 64, 256>}, {pipeline_mode = #tpu.pipeline_mode<synchronous>, transform_indices = @transform_14, window_bounds = array<i64: 1, 256>}, {pipeline_mode = #tpu.pipeline_mode<synchronous>, transform_indices = @transform_15, window_bounds = array<i64: 256, 256>}, {pipeline_mode = #tpu.pipeline_mode<synchronous>, transform_indices = @transform_16, window_bounds = array<i64: 1, 256>}, {pipeline_mode = #tpu.pipeline_mode<synchronous>, transform_indices = @transform_17, window_bounds = array<i64: 256, 256>}, {pipeline_mode = #tpu.pipeline_mode<synchronous>, transform_indices = @transform_18, window_bounds = array<i64: 1, 256>}, {pipeline_mode = #tpu.pipeline_mode<synchronous>, transform_indices = @transform_19, window_bounds = array<i64: 256, 384>}, {pipeline_mode = #tpu.pipeline_mode<synchronous>, transform_indices = @transform_20, window_bounds = array<i64: 1, 384>}, {pipeline_mode = #tpu.pipeline_mode<synchronous>, transform_indices = @transform_21, window_bounds = array<i64: 256, 128>}, {pipeline_mode = #tpu.pipeline_mode<synchronous>, transform_indices = @transform_22, window_bounds = array<i64: 128, 8>}, {pipeline_mode = #tpu.pipeline_mode<synchronous>, transform_indices = @transform_23, window_bounds = array<i64: 1, 8>}, {transform_indices = @transform_24, window_bounds = array<i64: 256, 8>}]} {
    %c0 = arith.constant 0 : index
    %c0_0 = arith.constant 0 : index
    %0 = vector.load %arg1[%c0, %c0_0] : memref<256x64xbf16, #tpu.memory_space<vmem>>, vector<256x64xbf16>
    %c0_1 = arith.constant 0 : index
    %c0_2 = arith.constant 0 : index
    %1 = vector.load %arg3[%c0_1, %c0_2] : memref<64x256xbf16, #tpu.memory_space<vmem>>, vector<64x256xbf16>
    %cst = arith.constant dense<0.000000e+00> : vector<256x256xf32>
    %2 = tpu.matmul %0, %1, %cst {dimension_numbers = #tpu.dot_dimension_numbers<[1], [0], [0], [1], [0, 0, 1, 1], [], []>} : vector<256x64xbf16>, vector<64x256xbf16>, vector<256x256xf32> -> vector<256x256xf32>
    %c0_3 = arith.constant 0 : index
    %c0_4 = arith.constant 0 : index
    %3 = vector.load %arg4[%c0_3, %c0_4] : memref<1x256xf32, #tpu.memory_space<vmem>>, vector<1x256xf32>
    %4 = vector.broadcast %3 : vector<1x256xf32> to vector<256x256xf32>
    %5 = arith.addf %2, %4 : vector<256x256xf32>
    %cst_5 = arith.constant 0.000000e+00 : f32
    %6 = vector.broadcast %cst_5 : f32 to vector<256x256xf32>
    %7 = arith.maximumf %5, %6 : vector<256x256xf32>
    %8 = arith.truncf %7 : vector<256x256xf32> to vector<256x256xbf16>
    %c0_6 = arith.constant 0 : index
    %c0_7 = arith.constant 0 : index
    %9 = vector.load %arg5[%c0_6, %c0_7] : memref<256x256xbf16, #tpu.memory_space<vmem>>, vector<256x256xbf16>
    %cst_8 = arith.constant dense<0.000000e+00> : vector<256x256xf32>
    %10 = tpu.matmul %8, %9, %cst_8 {dimension_numbers = #tpu.dot_dimension_numbers<[1], [0], [0], [1], [0, 0, 1, 1], [], []>} : vector<256x256xbf16>, vector<256x256xbf16>, vector<256x256xf32> -> vector<256x256xf32>
    %c0_9 = arith.constant 0 : index
    %c0_10 = arith.constant 0 : index
    %11 = vector.load %arg6[%c0_9, %c0_10] : memref<1x256xf32, #tpu.memory_space<vmem>>, vector<1x256xf32>
    %12 = vector.broadcast %11 : vector<1x256xf32> to vector<256x256xf32>
    %13 = arith.addf %10, %12 : vector<256x256xf32>
    %cst_11 = arith.constant 0.000000e+00 : f32
    %14 = vector.broadcast %cst_11 : f32 to vector<256x256xf32>
    %15 = arith.maximumf %13, %14 : vector<256x256xf32>
    %16 = arith.truncf %15 : vector<256x256xf32> to vector<256x256xbf16>
    %c0_12 = arith.constant 0 : index
    %c0_13 = arith.constant 0 : index
    %17 = vector.load %arg7[%c0_12, %c0_13] : memref<256x256xbf16, #tpu.memory_space<vmem>>, vector<256x256xbf16>
    %cst_14 = arith.constant dense<0.000000e+00> : vector<256x256xf32>
    %18 = tpu.matmul %16, %17, %cst_14 {dimension_numbers = #tpu.dot_dimension_numbers<[1], [0], [0], [1], [0, 0, 1, 1], [], []>} : vector<256x256xbf16>, vector<256x256xbf16>, vector<256x256xf32> -> vector<256x256xf32>
    %c0_15 = arith.constant 0 : index
    %c0_16 = arith.constant 0 : index
    %19 = vector.load %arg8[%c0_15, %c0_16] : memref<1x256xf32, #tpu.memory_space<vmem>>, vector<1x256xf32>
    %20 = vector.broadcast %19 : vector<1x256xf32> to vector<256x256xf32>
    %21 = arith.addf %18, %20 : vector<256x256xf32>
    %cst_17 = arith.constant 0.000000e+00 : f32
    %22 = vector.broadcast %cst_17 : f32 to vector<256x256xf32>
    %23 = arith.maximumf %21, %22 : vector<256x256xf32>
    %24 = arith.truncf %23 : vector<256x256xf32> to vector<256x256xbf16>
    %c0_18 = arith.constant 0 : index
    %c0_19 = arith.constant 0 : index
    %25 = vector.load %arg9[%c0_18, %c0_19] : memref<256x256xbf16, #tpu.memory_space<vmem>>, vector<256x256xbf16>
    %cst_20 = arith.constant dense<0.000000e+00> : vector<256x256xf32>
    %26 = tpu.matmul %24, %25, %cst_20 {dimension_numbers = #tpu.dot_dimension_numbers<[1], [0], [0], [1], [0, 0, 1, 1], [], []>} : vector<256x256xbf16>, vector<256x256xbf16>, vector<256x256xf32> -> vector<256x256xf32>
    %c0_21 = arith.constant 0 : index
    %c0_22 = arith.constant 0 : index
    %27 = vector.load %arg10[%c0_21, %c0_22] : memref<1x256xf32, #tpu.memory_space<vmem>>, vector<1x256xf32>
    %28 = vector.broadcast %27 : vector<1x256xf32> to vector<256x256xf32>
    %29 = arith.addf %26, %28 : vector<256x256xf32>
    %cst_23 = arith.constant 0.000000e+00 : f32
    %30 = vector.broadcast %cst_23 : f32 to vector<256x256xf32>
    %31 = arith.maximumf %29, %30 : vector<256x256xf32>
    %32 = arith.truncf %31 : vector<256x256xf32> to vector<256x256xbf16>
    %c0_24 = arith.constant 0 : index
    %c0_25 = arith.constant 0 : index
    %33 = vector.load %arg11[%c0_24, %c0_25] : memref<256x256xbf16, #tpu.memory_space<vmem>>, vector<256x256xbf16>
    %cst_26 = arith.constant dense<0.000000e+00> : vector<256x256xf32>
    %34 = tpu.matmul %32, %33, %cst_26 {dimension_numbers = #tpu.dot_dimension_numbers<[1], [0], [0], [1], [0, 0, 1, 1], [], []>} : vector<256x256xbf16>, vector<256x256xbf16>, vector<256x256xf32> -> vector<256x256xf32>
    %c0_27 = arith.constant 0 : index
    %c0_28 = arith.constant 0 : index
    %35 = vector.load %arg12[%c0_27, %c0_28] : memref<1x256xf32, #tpu.memory_space<vmem>>, vector<1x256xf32>
    %36 = vector.broadcast %35 : vector<1x256xf32> to vector<256x256xf32>
    %37 = arith.addf %34, %36 : vector<256x256xf32>
    %cst_29 = arith.constant 0.000000e+00 : f32
    %38 = vector.broadcast %cst_29 : f32 to vector<256x256xf32>
    %39 = arith.maximumf %37, %38 : vector<256x256xf32>
    %40 = arith.truncf %39 : vector<256x256xf32> to vector<256x256xbf16>
    %c0_30 = arith.constant 0 : index
    %c0_31 = arith.constant 0 : index
    %41 = vector.load %arg13[%c0_30, %c0_31] : memref<256x256xbf16, #tpu.memory_space<vmem>>, vector<256x256xbf16>
    %cst_32 = arith.constant dense<0.000000e+00> : vector<256x256xf32>
    %42 = tpu.matmul %40, %41, %cst_32 {dimension_numbers = #tpu.dot_dimension_numbers<[1], [0], [0], [1], [0, 0, 1, 1], [], []>} : vector<256x256xbf16>, vector<256x256xbf16>, vector<256x256xf32> -> vector<256x256xf32>
    %c0_33 = arith.constant 0 : index
    %c0_34 = arith.constant 0 : index
    %43 = vector.load %arg14[%c0_33, %c0_34] : memref<64x256xbf16, #tpu.memory_space<vmem>>, vector<64x256xbf16>
    %cst_35 = arith.constant dense<0.000000e+00> : vector<256x256xf32>
    %44 = tpu.matmul %0, %43, %cst_35 {dimension_numbers = #tpu.dot_dimension_numbers<[1], [0], [0], [1], [0, 0, 1, 1], [], []>} : vector<256x64xbf16>, vector<64x256xbf16>, vector<256x256xf32> -> vector<256x256xf32>
    %45 = arith.addf %42, %44 : vector<256x256xf32>
    %c0_36 = arith.constant 0 : index
    %c0_37 = arith.constant 0 : index
    %46 = vector.load %arg15[%c0_36, %c0_37] : memref<1x256xf32, #tpu.memory_space<vmem>>, vector<1x256xf32>
    %47 = vector.broadcast %46 : vector<1x256xf32> to vector<256x256xf32>
    %48 = arith.addf %45, %47 : vector<256x256xf32>
    %cst_38 = arith.constant 0.000000e+00 : f32
    %49 = vector.broadcast %cst_38 : f32 to vector<256x256xf32>
    %50 = arith.maximumf %48, %49 : vector<256x256xf32>
    %51 = arith.truncf %50 : vector<256x256xf32> to vector<256x256xbf16>
    %c0_39 = arith.constant 0 : index
    %c0_40 = arith.constant 0 : index
    %52 = vector.load %arg16[%c0_39, %c0_40] : memref<256x256xbf16, #tpu.memory_space<vmem>>, vector<256x256xbf16>
    %cst_41 = arith.constant dense<0.000000e+00> : vector<256x256xf32>
    %53 = tpu.matmul %51, %52, %cst_41 {dimension_numbers = #tpu.dot_dimension_numbers<[1], [0], [0], [1], [0, 0, 1, 1], [], []>} : vector<256x256xbf16>, vector<256x256xbf16>, vector<256x256xf32> -> vector<256x256xf32>
    %c0_42 = arith.constant 0 : index
    %c0_43 = arith.constant 0 : index
    %54 = vector.load %arg17[%c0_42, %c0_43] : memref<1x256xf32, #tpu.memory_space<vmem>>, vector<1x256xf32>
    %55 = vector.broadcast %54 : vector<1x256xf32> to vector<256x256xf32>
    %56 = arith.addf %53, %55 : vector<256x256xf32>
    %cst_44 = arith.constant 0.000000e+00 : f32
    %57 = vector.broadcast %cst_44 : f32 to vector<256x256xf32>
    %58 = arith.maximumf %56, %57 : vector<256x256xf32>
    %59 = arith.truncf %58 : vector<256x256xf32> to vector<256x256xbf16>
    %c0_45 = arith.constant 0 : index
    %c0_46 = arith.constant 0 : index
    %60 = vector.load %arg18[%c0_45, %c0_46] : memref<256x256xbf16, #tpu.memory_space<vmem>>, vector<256x256xbf16>
    %cst_47 = arith.constant dense<0.000000e+00> : vector<256x256xf32>
    %61 = tpu.matmul %59, %60, %cst_47 {dimension_numbers = #tpu.dot_dimension_numbers<[1], [0], [0], [1], [0, 0, 1, 1], [], []>} : vector<256x256xbf16>, vector<256x256xbf16>, vector<256x256xf32> -> vector<256x256xf32>
    %c0_48 = arith.constant 0 : index
    %c0_49 = arith.constant 0 : index
    %62 = vector.load %arg19[%c0_48, %c0_49] : memref<1x256xf32, #tpu.memory_space<vmem>>, vector<1x256xf32>
    %63 = vector.broadcast %62 : vector<1x256xf32> to vector<256x256xf32>
    %64 = arith.addf %61, %63 : vector<256x256xf32>
    %cst_50 = arith.constant 0.000000e+00 : f32
    %65 = vector.broadcast %cst_50 : f32 to vector<256x256xf32>
    %66 = arith.maximumf %64, %65 : vector<256x256xf32>
    %67 = arith.truncf %66 : vector<256x256xf32> to vector<256x256xbf16>
    %c0_51 = arith.constant 0 : index
    %c0_52 = arith.constant 0 : index
    %68 = vector.load %arg20[%c0_51, %c0_52] : memref<256x384xbf16, #tpu.memory_space<vmem>>, vector<256x384xbf16>
    %cst_53 = arith.constant dense<0.000000e+00> : vector<256x384xf32>
    %69 = tpu.matmul %67, %68, %cst_53 {dimension_numbers = #tpu.dot_dimension_numbers<[1], [0], [0], [1], [0, 0, 1, 1], [], []>} : vector<256x256xbf16>, vector<256x384xbf16>, vector<256x384xf32> -> vector<256x384xf32>
    %c0_54 = arith.constant 0 : index
    %c0_55 = arith.constant 0 : index
    %70 = vector.load %arg21[%c0_54, %c0_55] : memref<1x384xf32, #tpu.memory_space<vmem>>, vector<1x384xf32>
    %71 = vector.broadcast %70 : vector<1x384xf32> to vector<256x384xf32>
    %72 = arith.addf %69, %71 : vector<256x384xf32>
    %73 = vector.extract_strided_slice %72 {offsets = [0, 0], sizes = [256, 256], strides = [1, 1]} : vector<256x384xf32> to vector<256x256xf32>
    %74 = vector.extract_strided_slice %72 {offsets = [0, 256], sizes = [256, 1], strides = [1, 1]} : vector<256x384xf32> to vector<256x1xf32>
    %75 = arith.truncf %73 : vector<256x256xf32> to vector<256x256xbf16>
    %c0_56 = arith.constant 0 : index
    %c0_57 = arith.constant 0 : index
    %76 = vector.load %arg22[%c0_56, %c0_57] : memref<256x128xbf16, #tpu.memory_space<vmem>>, vector<256x128xbf16>
    %cst_58 = arith.constant dense<0.000000e+00> : vector<256x128xf32>
    %77 = tpu.matmul %75, %76, %cst_58 {dimension_numbers = #tpu.dot_dimension_numbers<[1], [0], [0], [1], [0, 0, 1, 1], [], []>} : vector<256x256xbf16>, vector<256x128xbf16>, vector<256x128xf32> -> vector<256x128xf32>
    %c0_59 = arith.constant 0 : index
    %c0_60 = arith.constant 0 : index
    %78 = vector.load %arg2[%c0_59, %c0_60] : memref<256x128xbf16, #tpu.memory_space<vmem>>, vector<256x128xbf16>
    %79 = arith.extf %78 : vector<256x128xbf16> to vector<256x128xf32>
    %80 = arith.addf %77, %79 : vector<256x128xf32>
    %cst_61 = arith.constant 0.000000e+00 : f32
    %81 = vector.broadcast %cst_61 : f32 to vector<256x128xf32>
    %82 = arith.maximumf %80, %81 : vector<256x128xf32>
    %83 = arith.truncf %82 : vector<256x128xf32> to vector<256x128xbf16>
    %c0_62 = arith.constant 0 : index
    %c0_63 = arith.constant 0 : index
    %84 = vector.load %arg23[%c0_62, %c0_63] : memref<128x8xbf16, #tpu.memory_space<vmem>>, vector<128x8xbf16>
    %cst_64 = arith.constant dense<0.000000e+00> : vector<256x8xf32>
    %85 = tpu.matmul %83, %84, %cst_64 {dimension_numbers = #tpu.dot_dimension_numbers<[1], [0], [0], [1], [0, 0, 1, 1], [], []>} : vector<256x128xbf16>, vector<128x8xbf16>, vector<256x8xf32> -> vector<256x8xf32>
    %c0_65 = arith.constant 0 : index
    %c0_66 = arith.constant 0 : index
    %86 = vector.load %arg24[%c0_65, %c0_66] : memref<1x8xf32, #tpu.memory_space<vmem>>, vector<1x8xf32>
    %87 = vector.broadcast %86 : vector<1x8xf32> to vector<256x8xf32>
    %88 = arith.addf %85, %87 : vector<256x8xf32>
    %89 = tpu.iota {dimensions = array<i32: 1>} : vector<256x8xi32>
    %c3_i32 = arith.constant 3 : i32
    %90 = vector.broadcast %c3_i32 : i32 to vector<256x8xi32>
    %91 = arith.cmpi eq, %89, %90 : vector<256x8xi32>
    %92 = vector.shape_cast %74 : vector<256x1xf32> to vector<256x1xf32>
    %93 = vector.broadcast %92 : vector<256x1xf32> to vector<256x8xf32>
    %94 = arith.select %91, %93, %88 : vector<256x8xi1>, vector<256x8xf32>
    %c0_67 = arith.constant 0 : index
    %c0_68 = arith.constant 0 : index
    %95 = vector.load %arg25[%c0_67, %c0_68] : memref<256x8xf32, #tpu.memory_space<vmem>>, vector<256x8xf32>
    tpu.vector_store %arg25[%c0_67, %c0_68], %94 {strides = array<i32>} : memref<256x8xf32, #tpu.memory_space<vmem>>, vector<256x8xf32>,
    return
  }
  func.func @transform_0(%arg0: i32) -> (i32, i32) {
    %c0_i32 = arith.constant 0 : i32
    %c0_i32_0 = arith.constant 0 : i32
    return %arg0, %c0_i32 : i32, i32
  }
  func.func @transform_1(%arg0: i32) -> (i32, i32) {
    %c0_i32 = arith.constant 0 : i32
    %c0_i32_0 = arith.constant 0 : i32
    return %arg0, %c0_i32 : i32, i32
  }
  func.func @transform_2(%arg0: i32) -> (i32, i32) {
    %c0_i32 = arith.constant 0 : i32
    %c0_i32_0 = arith.constant 0 : i32
    %c0_i32_1 = arith.constant 0 : i32
    return %c0_i32, %c0_i32_0 : i32, i32
  }
  func.func @transform_3(%arg0: i32) -> (i32, i32) {
    %c0_i32 = arith.constant 0 : i32
    %c0_i32_0 = arith.constant 0 : i32
    %c0_i32_1 = arith.constant 0 : i32
    return %c0_i32, %c0_i32_0 : i32, i32
  }
  func.func @transform_4(%arg0: i32) -> (i32, i32) {
    %c0_i32 = arith.constant 0 : i32
    %c0_i32_0 = arith.constant 0 : i32
    %c0_i32_1 = arith.constant 0 : i32
    return %c0_i32, %c0_i32_0 : i32, i32
  }
  func.func @transform_5(%arg0: i32) -> (i32, i32) {
    %c0_i32 = arith.constant 0 : i32
    %c0_i32_0 = arith.constant 0 : i32
    %c0_i32_1 = arith.constant 0 : i32
    return %c0_i32, %c0_i32_0 : i32, i32
  }
  func.func @transform_6(%arg0: i32) -> (i32, i32) {
    %c0_i32 = arith.constant 0 : i32
    %c0_i32_0 = arith.constant 0 : i32
    %c0_i32_1 = arith.constant 0 : i32
    return %c0_i32, %c0_i32_0 : i32, i32
  }
  func.func @transform_7(%arg0: i32) -> (i32, i32) {
    %c0_i32 = arith.constant 0 : i32
    %c0_i32_0 = arith.constant 0 : i32
    %c0_i32_1 = arith.constant 0 : i32
    return %c0_i32, %c0_i32_0 : i32, i32
  }
  func.func @transform_8(%arg0: i32) -> (i32, i32) {
    %c0_i32 = arith.constant 0 : i32
    %c0_i32_0 = arith.constant 0 : i32
    %c0_i32_1 = arith.constant 0 : i32
    return %c0_i32, %c0_i32_0 : i32, i32
  }
  func.func @transform_9(%arg0: i32) -> (i32, i32) {
    %c0_i32 = arith.constant 0 : i32
    %c0_i32_0 = arith.constant 0 : i32
    %c0_i32_1 = arith.constant 0 : i32
    return %c0_i32, %c0_i32_0 : i32, i32
  }
  func.func @transform_10(%arg0: i32) -> (i32, i32) {
    %c0_i32 = arith.constant 0 : i32
    %c0_i32_0 = arith.constant 0 : i32
    %c0_i32_1 = arith.constant 0 : i32
    return %c0_i32, %c0_i32_0 : i32, i32
  }
  func.func @transform_11(%arg0: i32) -> (i32, i32) {
    %c0_i32 = arith.constant 0 : i32
    %c0_i32_0 = arith.constant 0 : i32
    %c0_i32_1 = arith.constant 0 : i32
    return %c0_i32, %c0_i32_0 : i32, i32
  }
  func.func @transform_12(%arg0: i32) -> (i32, i32) {
    %c0_i32 = arith.constant 0 : i32
    %c0_i32_0 = arith.constant 0 : i32
    %c0_i32_1 = arith.constant 0 : i32
    return %c0_i32, %c0_i32_0 : i32, i32
  }
  func.func @transform_13(%arg0: i32) -> (i32, i32) {
    %c0_i32 = arith.constant 0 : i32
    %c0_i32_0 = arith.constant 0 : i32
    %c0_i32_1 = arith.constant 0 : i32
    return %c0_i32, %c0_i32_0 : i32, i32
  }
  func.func @transform_14(%arg0: i32) -> (i32, i32) {
    %c0_i32 = arith.constant 0 : i32
    %c0_i32_0 = arith.constant 0 : i32
    %c0_i32_1 = arith.constant 0 : i32
    return %c0_i32, %c0_i32_0 : i32, i32
  }
  func.func @transform_15(%arg0: i32) -> (i32, i32) {
    %c0_i32 = arith.constant 0 : i32
    %c0_i32_0 = arith.constant 0 : i32
    %c0_i32_1 = arith.constant 0 : i32
    return %c0_i32, %c0_i32_0 : i32, i32
  }
  func.func @transform_16(%arg0: i32) -> (i32, i32) {
    %c0_i32 = arith.constant 0 : i32
    %c0_i32_0 = arith.constant 0 : i32
    %c0_i32_1 = arith.constant 0 : i32
    return %c0_i32, %c0_i32_0 : i32, i32
  }
  func.func @transform_17(%arg0: i32) -> (i32, i32) {
    %c0_i32 = arith.constant 0 : i32
    %c0_i32_0 = arith.constant 0 : i32
    %c0_i32_1 = arith.constant 0 : i32
    return %c0_i32, %c0_i32_0 : i32, i32
  }
  func.func @transform_18(%arg0: i32) -> (i32, i32) {
    %c0_i32 = arith.constant 0 : i32
    %c0_i32_0 = arith.constant 0 : i32
    %c0_i32_1 = arith.constant 0 : i32
    return %c0_i32, %c0_i32_0 : i32, i32
  }
  func.func @transform_19(%arg0: i32) -> (i32, i32) {
    %c0_i32 = arith.constant 0 : i32
    %c0_i32_0 = arith.constant 0 : i32
    %c0_i32_1 = arith.constant 0 : i32
    return %c0_i32, %c0_i32_0 : i32, i32
  }
  func.func @transform_20(%arg0: i32) -> (i32, i32) {
    %c0_i32 = arith.constant 0 : i32
    %c0_i32_0 = arith.constant 0 : i32
    %c0_i32_1 = arith.constant 0 : i32
    return %c0_i32, %c0_i32_0 : i32, i32
  }
  func.func @transform_21(%arg0: i32) -> (i32, i32) {
    %c0_i32 = arith.constant 0 : i32
    %c0_i32_0 = arith.constant 0 : i32
    %c0_i32_1 = arith.constant 0 : i32
    return %c0_i32, %c0_i32_0 : i32, i32
  }
  func.func @transform_22(%arg0: i32) -> (i32, i32) {
    %c0_i32 = arith.constant 0 : i32
    %c0_i32_0 = arith.constant 0 : i32
    %c0_i32_1 = arith.constant 0 : i32
    return %c0_i32, %c0_i32_0 : i32, i32
  }
  func.func @transform_23(%arg0: i32) -> (i32, i32) {
    %c0_i32 = arith.constant 0 : i32
    %c0_i32_0 = arith.constant 0 : i32
    %c0_i32_1 = arith.constant 0 : i32
    return %c0_i32, %c0_i32_0 : i32, i32
  }
  func.func @transform_24(%arg0: i32) -> (i32, i32) {
    %c0_i32 = arith.constant 0 : i32
    %c0_i32_0 = arith.constant 0 : i32
    return %arg0, %c0_i32 : i32, i32
  }
}

</mosaic_0001>

<llo_original>
// kernel: nerf_forward.2
$region0: #{nerf_forward.2}
  #allocation0 [shape = 'u32[]', space=smem, size = 0x4, offset = 0x4, fixed_abs, tag = 'smem constant byte address 0x4 - core index']
  #allocation1 [shape = 'u32[144,128]{1,0:T(1,128)}', space=vmem, size = 0x12000, scoped, tag = 'internal scratch']
  %s0 = inlined_call_operand.vmem [shape: bf16[128,64], index: 0, kind: input, shape index: {}]
  %s1 = inlined_call_operand.vmem [shape: bf16[128,128], index: 1, kind: input, shape index: {}]
  %s2 = inlined_call_operand.vmem [shape: bf16[64,256], index: 2, kind: input, shape index: {}]
  %s3 = inlined_call_operand.vmem [shape: f32[1,256], index: 3, kind: input, shape index: {}]
  %s4 = inlined_call_operand.vmem [shape: bf16[256,256], index: 4, kind: input, shape index: {}]
  %s5 = inlined_call_operand.vmem [shape: f32[1,256], index: 5, kind: input, shape index: {}]
  %s6 = inlined_call_operand.vmem [shape: bf16[256,256], index: 6, kind: input, shape index: {}]
  %s7 = inlined_call_operand.vmem [shape: f32[1,256], index: 7, kind: input, shape index: {}]
  %s8 = inlined_call_operand.vmem [shape: bf16[256,256], index: 8, kind: input, shape index: {}]
  %s9 = inlined_call_operand.vmem [shape: f32[1,256], index: 9, kind: input, shape index: {}]
  %s10 = inlined_call_operand.vmem [shape: bf16[256,256], index: 10, kind: input, shape index: {}]
  %s11 = inlined_call_operand.vmem [shape: f32[1,256], index: 11, kind: input, shape index: {}]
  %s12 = inlined_call_operand.vmem [shape: bf16[256,256], index: 12, kind: input, shape index: {}]
  %s13 = inlined_call_operand.hbm [shape: bf16[64,256], index: 13, kind: input, shape index: {}]
  %s14 = inlined_call_operand.vmem [shape: f32[1,256], index: 14, kind: input, shape index: {}]
  %s15 = inlined_call_operand.vmem [shape: bf16[256,256], index: 15, kind: input, shape index: {}]
  %s16 = inlined_call_operand.vmem [shape: f32[1,256], index: 16, kind: input, shape index: {}]
  %s17 = inlined_call_operand.vmem [shape: bf16[256,256], index: 17, kind: input, shape index: {}]
  %s18 = inlined_call_operand.vmem [shape: f32[1,256], index: 18, kind: input, shape index: {}]
  %s19 = inlined_call_operand.vmem [shape: bf16[256,384], index: 19, kind: input, shape index: {}]
  %s20 = inlined_call_operand.vmem [shape: f32[1,384], index: 20, kind: input, shape index: {}]
  %s21 = inlined_call_operand.vmem [shape: bf16[256,128], index: 21, kind: input, shape index: {}]
  %s22 = inlined_call_operand.vmem [shape: bf16[128,8], index: 22, kind: input, shape index: {}]
  %s23 = inlined_call_operand.vmem [shape: f32[1,8], index: 23, kind: input, shape index: {}]
  %s24 = inlined_call_operand.vmem [shape: f32[128,8], index: 24, kind: output, shape index: {}]
  %s25 = sld [smem:[#allocation0]]
  $region110: #{nerf_forward.2} parent=0
    _
  %s27 = ssub.s32 1, %s25
  %s28 = scalar_select 0, %s27, %s25
  $region1: #{nerf_forward.2} parent=0
    #allocation2 [shape = 'u8[32768]{0}', space=vmem, size = 0x8000, scoped, tag = 'input window, operand 13, single buffered']
    #allocation3 [shape = 's32[1]{0}', space=sflag, size = 0x4, scoped, tag = 'scoped memory for nerf_forward.2']
    %29 = vsyncpa [#allocation3], 0
    // Predicated region
    $region2: #{nerf_forward.2} parent=1 // pred_check
      _
    $region3: #{nerf_forward.2} parent=1 // pred_check_branch
      %31 = sbr.rel (0) target = $region5
    $region4: #{nerf_forward.2} parent=1 // pred_region
      _
    $region5: #{nerf_forward.2} parent=1 // pred_fallthru
      _
    // Predicated region
    $region6: #{nerf_forward.2} parent=1 // pred_check
      _
    $region7: #{nerf_forward.2} parent=1 // pred_check_branch
      %33 = sbr.rel (0) target = $region9
    $region8: #{nerf_forward.2} parent=1 // pred_region
      _
    $region9: #{nerf_forward.2} parent=1 // pred_fallthru
      _
    // Predicated region
    $region10: #{nerf_forward.2} parent=1 // pred_check
      _
    $region11: #{nerf_forward.2} parent=1 // pred_check_branch
      %35 = sbr.rel (0) target = $region13
    $region12: #{nerf_forward.2} parent=1 // pred_region
      _
    $region13: #{nerf_forward.2} parent=1 // pred_fallthru
      _
    // Predicated region
    $region14: #{nerf_forward.2} parent=1 // pred_check
      _
    $region15: #{nerf_forward.2} parent=1 // pred_check_branch
      %37 = sbr.rel (0) target = $region17
    $region16: #{nerf_forward.2} parent=1 // pred_region
      _
    $region17: #{nerf_forward.2} parent=1 // pred_fallthru
      _
    // Predicated region
    $region18: #{nerf_forward.2} parent=1 // pred_check
      _
    $region19: #{nerf_forward.2} parent=1 // pred_check_branch
      %39 = sbr.rel (0) target = $region21
    $region20: #{nerf_forward.2} parent=1 // pred_region
      _
    $region21: #{nerf_forward.2} parent=1 // pred_fallthru
      _
    // Predicated region
    $region22: #{nerf_forward.2} parent=1 // pred_check
      _
    $region23: #{nerf_forward.2} parent=1 // pred_check_branch
      %41 = sbr.rel (0) target = $region25
    $region24: #{nerf_forward.2} parent=1 // pred_region
      _
    $region25: #{nerf_forward.2} parent=1 // pred_fallthru
      _
    // Predicated region
    $region26: #{nerf_forward.2} parent=1 // pred_check
      _
    $region27: #{nerf_forward.2} parent=1 // pred_check_branch
      %43 = sbr.rel (0) target = $region29
    $region28: #{nerf_forward.2} parent=1 // pred_region
      _
    $region29: #{nerf_forward.2} parent=1 // pred_fallthru
      _
    // Predicated region
    $region30: #{nerf_forward.2} parent=1 // pred_check
      _
    $region31: #{nerf_forward.2} parent=1 // pred_check_branch
      %45 = sbr.rel (0) target = $region33
    $region32: #{nerf_forward.2} parent=1 // pred_region
      _
    $region33: #{nerf_forward.2} parent=1 // pred_fallthru
      _
    // Predicated region
    $region34: #{nerf_forward.2} parent=1 // pred_check
      _
    $region35: #{nerf_forward.2} parent=1 // pred_check_branch
      %47 = sbr.rel (0) target = $region37
    $region36: #{nerf_forward.2} parent=1 // pred_region
      _
    $region37: #{nerf_forward.2} parent=1 // pred_fallthru
      _
    // Predicated region
    $region38: #{nerf_forward.2} parent=1 // pred_check
      _
    $region39: #{nerf_forward.2} parent=1 // pred_check_branch
      %49 = sbr.rel (0) target = $region41
    $region40: #{nerf_forward.2} parent=1 // pred_region
      _
    $region41: #{nerf_forward.2} parent=1 // pred_fallthru
      _
    // Predicated region
    $region42: #{nerf_forward.2} parent=1 // pred_check
      _
    $region43: #{nerf_forward.2} parent=1 // pred_check_branch
      %51 = sbr.rel (0) target = $region45
    $region44: #{nerf_forward.2} parent=1 // pred_region
      _
    $region45: #{nerf_forward.2} parent=1 // pred_fallthru
      _
    // Predicated region
    $region46: #{nerf_forward.2} parent=1 // pred_check
      _
    $region47: #{nerf_forward.2} parent=1 // pred_check_branch
      %53 = sbr.rel (0) target = $region49
    $region48: #{nerf_forward.2} parent=1 // pred_region
      _
    $region49: #{nerf_forward.2} parent=1 // pred_fallthru
      _
    // Predicated region
    $region50: #{nerf_forward.2} parent=1 // pred_check
      _
    $region51: #{nerf_forward.2} parent=1 // pred_check_branch
      %55 = sbr.rel (0) target = $region53
    $region52: #{nerf_forward.2} parent=1 // pred_region
      _
    $region53: #{nerf_forward.2} parent=1 // pred_fallthru
      _
    // Predicated region
    $region54: #{nerf_forward.2} parent=1 // pred_check
      _
    $region55: #{nerf_forward.2} parent=1 // pred_check_branch
      %57 = sbr.rel (0) target = $region57
    $region56: #{nerf_forward.2} parent=1 // pred_region
      %s59 = ssub.s32 1024, 1024
      %60 = vsyncadd [#allocation3], %s59
      %s61 = sshll.u32 [#allocation2], 4
      %s62 = int_to_ptr.vmem [resolvable:$true] %s61
      %67 = dma.hbm_to_vmem [thread:$0]  %s13, 1024, %s62, [#allocation3], 128, 128, 8
    $region57: #{nerf_forward.2} parent=1 // pred_fallthru
      _
    // Predicated region
    $region58: #{nerf_forward.2} parent=1 // pred_check
      _
    $region59: #{nerf_forward.2} parent=1 // pred_check_branch
      %69 = sbr.rel (0) target = $region61
    $region60: #{nerf_forward.2} parent=1 // pred_region
      _
    $region61: #{nerf_forward.2} parent=1 // pred_fallthru
      _
    // Predicated region
    $region62: #{nerf_forward.2} parent=1 // pred_check
      _
    $region63: #{nerf_forward.2} parent=1 // pred_check_branch
      %71 = sbr.rel (0) target = $region65
    $region64: #{nerf_forward.2} parent=1 // pred_region
      _
    $region65: #{nerf_forward.2} parent=1 // pred_fallthru
      _
    // Predicated region
    $region66: #{nerf_forward.2} parent=1 // pred_check
      _
    $region67: #{nerf_forward.2} parent=1 // pred_check_branch
      %73 = sbr.rel (0) target = $region69
    $region68: #{nerf_forward.2} parent=1 // pred_region
      _
    $region69: #{nerf_forward.2} parent=1 // pred_fallthru
      _
    // Predicated region
    $region70: #{nerf_forward.2} parent=1 // pred_check
      _
    $region71: #{nerf_forward.2} parent=1 // pred_check_branch
      %75 = sbr.rel (0) target = $region73
    $region72: #{nerf_forward.2} parent=1 // pred_region
      _
    $region73: #{nerf_forward.2} parent=1 // pred_fallthru
      _
    // Predicated region
    $region74: #{nerf_forward.2} parent=1 // pred_check
      _
    $region75: #{nerf_forward.2} parent=1 // pred_check_branch
      %77 = sbr.rel (0) target = $region77
    $region76: #{nerf_forward.2} parent=1 // pred_region
      _
    $region77: #{nerf_forward.2} parent=1 // pred_fallthru
      _
    // Predicated region
    $region78: #{nerf_forward.2} parent=1 // pred_check
      _
    $region79: #{nerf_forward.2} parent=1 // pred_check_branch
      %79 = sbr.rel (0) target = $region81
    $region80: #{nerf_forward.2} parent=1 // pred_region
      _
    $region81: #{nerf_forward.2} parent=1 // pred_fallthru
      _
    // Predicated region
    $region82: #{nerf_forward.2} parent=1 // pred_check
      _
    $region83: #{nerf_forward.2} parent=1 // pred_check_branch
      %81 = sbr.rel (0) target = $region85
    $region84: #{nerf_forward.2} parent=1 // pred_region
      _
    $region85: #{nerf_forward.2} parent=1 // pred_fallthru
      _
    // Predicated region
    $region86: #{nerf_forward.2} parent=1 // pred_check
      _
    $region87: #{nerf_forward.2} parent=1 // pred_check_branch
      %83 = sbr.rel (0) target = $region89
    $region88: #{nerf_forward.2} parent=1 // pred_region
      _
    $region89: #{nerf_forward.2} parent=1 // pred_fallthru
      _
    // Predicated region
    $region90: #{nerf_forward.2} parent=1 // pred_check
      _
    $region91: #{nerf_forward.2} parent=1 // pred_check_branch
      %85 = sbr.rel (0) target = $region93
    $region92: #{nerf_forward.2} parent=1 // pred_region
      _
    $region93: #{nerf_forward.2} parent=1 // pred_fallthru
      _
    // Predicated region
    $region94: #{nerf_forward.2} parent=1 // pred_check
      _
    $region95: #{nerf_forward.2} parent=1 // pred_check_branch
      %87 = sbr.rel (0) target = $region97
    $region96: #{nerf_forward.2} parent=1 // pred_region
      _
    $region97: #{nerf_forward.2} parent=1 // pred_fallthru
      _
    // Predicated region
    $region98: #{nerf_forward.2} parent=1 // pred_check
      _
    $region99: #{nerf_forward.2} parent=1 // pred_check_branch
      %89 = sbr.rel (0) target = $region101
    $region100: #{nerf_forward.2} parent=1 // pred_region
      %90 = dma.done [#allocation3], 1024
    $region101: #{nerf_forward.2} parent=1 // pred_fallthru
      _
    %v92 = vld [vmem:[%s0] sm:$0xf]
    %v93 = vld [vmem:[%s0 + $0x4] sm:$0xf]
    %v94 = vld [vmem:[%s0 + $0x8] sm:$0xf]
    %v95 = vld [vmem:[%s0 + $0xc] sm:$0xf]
    %v96 = vld [vmem:[%s0 + $0x10] sm:$0xf]
    %v97 = vld [vmem:[%s0 + $0x14] sm:$0xf]
    %v98 = vld [vmem:[%s0 + $0x18] sm:$0xf]
    %v99 = vld [vmem:[%s0 + $0x1c] sm:$0xf]
    %v100 = vld [vmem:[%s0 + $0x20] sm:$0xf]
    %v101 = vld [vmem:[%s0 + $0x24] sm:$0xf]
    %v102 = vld [vmem:[%s0 + $0x28] sm:$0xf]
    %v103 = vld [vmem:[%s0 + $0x2c] sm:$0xf]
    %v104 = vld [vmem:[%s0 + $0x30] sm:$0xf]
    %v105 = vld [vmem:[%s0 + $0x34] sm:$0xf]
    %v106 = vld [vmem:[%s0 + $0x38] sm:$0xf]
    %v107 = vld [vmem:[%s0 + $0x3c] sm:$0xf]
    %v108 = vld [vmem:[%s2] sm:$0xff]
    %v109 = vld [vmem:[%s2 + $0x8] sm:$0xff]
    %v110 = vld [vmem:[%s2 + $0x10] sm:$0xff]
    %v111 = vld [vmem:[%s2 + $0x18] sm:$0xff]
    %v112 = vld [vmem:[%s2 + $0x20] sm:$0xff]
    %v113 = vld [vmem:[%s2 + $0x28] sm:$0xff]
    %v114 = vld [vmem:[%s2 + $0x30] sm:$0xff]
    %v115 = vld [vmem:[%s2 + $0x38] sm:$0xff]
    %v116 = vld [vmem:[%s3] sm:$0x3]
    %v118 = vlaneseq
    %v119 = vshrl.u32 %v118, 7
    %v120 = vsub.s32 0, %v119
    %v121 = vrot.slane %v116, %v120
    %v122 = vlaneseq
    %v123 = vshrl.u32 %v122, 7
    %v124 = vsub.s32 1, %v123
    %v125 = vrot.slane %v116, %v124
    %v144 = vunpack.c.l.b16 %v92
    %v145 = vunpack.c.l.b16 %v93
    %v146 = vunpack.c.l.b16 %v94
    %v147 = vunpack.c.l.b16 %v95
    %v148 = vunpack.c.l.b16 %v96
    %v149 = vunpack.c.l.b16 %v97
    %v150 = vunpack.c.l.b16 %v98
    %v151 = vunpack.c.l.b16 %v99
    %v152 = vunpack.c.l.b16 %v100
    %v153 = vunpack.c.l.b16 %v101
    %v154 = vunpack.c.l.b16 %v102
    %v155 = vunpack.c.l.b16 %v103
    %v156 = vunpack.c.l.b16 %v104
    %v157 = vunpack.c.l.b16 %v105
    %v158 = vunpack.c.l.b16 %v106
    %v159 = vunpack.c.l.b16 %v107
    %v160 = vpack.c.b16 %v145, %v144
    %v161 = vpack.c.b16 %v147, %v146
    %v162 = vpack.c.b16 %v149, %v148
    %v163 = vpack.c.b16 %v151, %v150
    %v164 = vpack.c.b16 %v153, %v152
    %v165 = vpack.c.b16 %v155, %v154
    %v166 = vpack.c.b16 %v157, %v156
    %v167 = vpack.c.b16 %v159, %v158
    %v176 = vunpack.c.l.b16 %v108
    %v177 = vunpack.c.h.b16 %v108
    %v178 = vunpack.c.l.b16 %v109
    %v179 = vunpack.c.h.b16 %v109
    %v180 = vunpack.c.l.b16 %v110
    %v181 = vunpack.c.h.b16 %v110
    %v182 = vunpack.c.l.b16 %v111
    %v183 = vunpack.c.h.b16 %v111
    %v184 = vunpack.c.l.b16 %v112
    %v185 = vunpack.c.h.b16 %v112
    %v186 = vunpack.c.l.b16 %v113
    %v187 = vunpack.c.h.b16 %v113
    %v188 = vunpack.c.l.b16 %v114
    %v189 = vunpack.c.h.b16 %v114
    %v190 = vunpack.c.l.b16 %v115
    %v191 = vunpack.c.h.b16 %v115
    %v192 = vpack.c.b16 %v178, %v176
    %v193 = vpack.c.b16 %v179, %v177
    %v194 = vpack.c.b16 %v182, %v180
    %v195 = vpack.c.b16 %v183, %v181
    %v196 = vpack.c.b16 %v186, %v184
    %v197 = vpack.c.b16 %v187, %v185
    %v198 = vpack.c.b16 %v190, %v188
    %v199 = vpack.c.b16 %v191, %v189
    %vm208 = vcmask 523264
    %v210 = vsel %vm208, %v160, 0
    %v213 = vsel %vm208, %v161, 0
    %v216 = vsel %vm208, %v162, 0
    %v219 = vsel %vm208, %v163, 0
    %v222 = vsel %vm208, %v164, 0
    %v225 = vsel %vm208, %v165, 0
    %v228 = vsel %vm208, %v166, 0
    %v231 = vsel %vm208, %v167, 0
    %233 = vmatprep.subr.bf16.mxu0 %v193
    %234 = vmatpush1.bf16.msra.mxu0 %v192
    %235 = vmatprep.subr.bf16.mxu0 %v195
    %236 = vmatpush1.bf16.msra.mxu0 %v194
    %237 = vmatprep.subr.bf16.mxu0 %v197
    %238 = vmatpush1.bf16.msra.mxu0 %v196
    %239 = vmatprep.subr.bf16.mxu0 %v199
    %240 = vmatpush1.bf16.msra.mxu0 %v198
    %241 = vmatprep.subr.bf16.mxu0 0
    %242 = vmatpush1.bf16.msra.mxu0 0
    %243 = vmatprep.subr.bf16.mxu0 0
    %244 = vmatpush1.bf16.msra.mxu0 0
    %245 = vmatprep.subr.bf16.mxu0 0
    %246 = vmatpush1.bf16.msra.mxu0 0
    %247 = vmatprep.subr.bf16.mxu0 0
    %248 = vmatpush1.bf16.msra.mxu0 0
    %249 = vmatprep.subr.bf16.mxu0 0
    %250 = vmatpush1.bf16.msra.mxu0 0
    %251 = vmatprep.subr.bf16.mxu0 0
    %252 = vmatpush1.bf16.msra.mxu0 0
    %253 = vmatprep.subr.bf16.mxu0 0
    %254 = vmatpush1.bf16.msra.mxu0 0
    %255 = vmatprep.subr.bf16.mxu0 0
    %256 = vmatpush1.bf16.msra.mxu0 0
    %257 = vmatprep.subr.bf16.mxu0 0
    %258 = vmatpush1.bf16.msra.mxu0 0
    %259 = vmatprep.subr.bf16.mxu0 0
    %260 = vmatpush1.bf16.msra.mxu0 0
    %261 = vmatprep.subr.bf16.mxu0 0
    %262 = vmatpush1.bf16.msra.mxu0 0
    %263 = vmatprep.subr.bf16.mxu0 0
    %264 = vmatpush1.bf16.msra.mxu0 0
    %265 = vmatprep.mubr.bf16.mxu0 0
    %266 = vmatmul.mubr.bf16.gmra.mrb[0].mxu0 %v210
    %v267 = vpop.f32.mrb[0].mxu0
    %v268 = vadd.f32 %v121, %v267
    %v269 = vpop.f32.mrb[0].mxu0
    %v270 = vadd.f32 %v125, %v269
    %v271 = vpop.f32.mrb[0].mxu0
    %v272 = vadd.f32 %v121, %v271
    %v273 = vpop.f32.mrb[0].mxu0
    %v274 = vadd.f32 %v125, %v273
    %275 = vmatprep.mubr.bf16.mxu0 0
    %276 = vmatmul.mubr.bf16.gmra.mrb[0].mxu0 %v213
    %v277 = vpop.f32.mrb[0].mxu0
    %v278 = vadd.f32 %v121, %v277
    %v279 = vpop.f32.mrb[0].mxu0
    %v280 = vadd.f32 %v125, %v279
    %v281 = vpop.f32.mrb[0].mxu0
    %v282 = vadd.f32 %v121, %v281
    %v283 = vpop.f32.mrb[0].mxu0
    %v284 = vadd.f32 %v125, %v283
    %285 = vmatprep.mubr.bf16.mxu0 0
    %286 = vmatmul.mubr.bf16.gmra.mrb[0].mxu0 %v216
    %v287 = vpop.f32.mrb[0].mxu0
    %v288 = vadd.f32 %v121, %v287
    %v289 = vpop.f32.mrb[0].mxu0
    %v290 = vadd.f32 %v125, %v289
    %v291 = vpop.f32.mrb[0].mxu0
    %v292 = vadd.f32 %v121, %v291
    %v293 = vpop.f32.mrb[0].mxu0
    %v294 = vadd.f32 %v125, %v293
    %295 = vmatprep.mubr.bf16.mxu0 0
    %296 = vmatmul.mubr.bf16.gmra.mrb[0].mxu0 %v219
    %v297 = vpop.f32.mrb[0].mxu0
    %v298 = vadd.f32 %v121, %v297
    %v299 = vpop.f32.mrb[0].mxu0
    %v300 = vadd.f32 %v125, %v299
    %v301 = vpop.f32.mrb[0].mxu0
    %v302 = vadd.f32 %v121, %v301
    %v303 = vpop.f32.mrb[0].mxu0
    %v304 = vadd.f32 %v125, %v303
    %305 = vmatprep.mubr.bf16.mxu0 0
    %306 = vmatmul.mubr.bf16.gmra.mrb[0].mxu0 %v222
    %v307 = vpop.f32.mrb[0].mxu0
    %v308 = vadd.f32 %v121, %v307
    %v309 = vpop.f32.mrb[0].mxu0
    %v310 = vadd.f32 %v125, %v309
    %v311 = vpop.f32.mrb[0].mxu0
    %v312 = vadd.f32 %v121, %v311
    %v313 = vpop.f32.mrb[0].mxu0
    %v314 = vadd.f32 %v125, %v313
    %315 = vmatprep.mubr.bf16.mxu0 0
    %316 = vmatmul.mubr.bf16.gmra.mrb[0].mxu0 %v225
    %v317 = vpop.f32.mrb[0].mxu0
    %v318 = vadd.f32 %v121, %v317
    %v319 = vpop.f32.mrb[0].mxu0
    %v320 = vadd.f32 %v125, %v319
    %v321 = vpop.f32.mrb[0].mxu0
    %v322 = vadd.f32 %v121, %v321
    %v323 = vpop.f32.mrb[0].mxu0
    %v324 = vadd.f32 %v125, %v323
    %325 = vmatprep.mubr.bf16.mxu0 0
    %326 = vmatmul.mubr.bf16.gmra.mrb[0].mxu0 %v228
    %v327 = vpop.f32.mrb[0].mxu0
    %v328 = vadd.f32 %v121, %v327
    %v329 = vpop.f32.mrb[0].mxu0
    %v330 = vadd.f32 %v125, %v329
    %v331 = vpop.f32.mrb[0].mxu0
    %v332 = vadd.f32 %v121, %v331
    %v333 = vpop.f32.mrb[0].mxu0
    %v334 = vadd.f32 %v125, %v333
    %335 = vmatprep.mubr.bf16.mxu0 0
    %336 = vmatmul.mubr.bf16.gmra.mrb[0].mxu0 %v231
    %v337 = vpop.f32.mrb[0].mxu0
    %v338 = vadd.f32 %v121, %v337
    %v339 = vpop.f32.mrb[0].mxu0
    %v340 = vadd.f32 %v125, %v339
    %v341 = vpop.f32.mrb[0].mxu0
    %v342 = vadd.f32 %v121, %v341
    %v343 = vpop.f32.mrb[0].mxu0
    %v344 = vadd.f32 %v125, %v343
    %345 = vdwg.mxu0
    %v346 = vmax.f32 %v268, 0.0
    %v347 = vmax.f32 %v270, 0.0
    %v348 = vmax.f32 %v272, 0.0
    %v349 = vmax.f32 %v274, 0.0
    %v350 = vmax.f32 %v278, 0.0
    %v351 = vmax.f32 %v280, 0.0
    %v352 = vmax.f32 %v282, 0.0
    %v353 = vmax.f32 %v284, 0.0
    %v354 = vmax.f32 %v288, 0.0
    %v355 = vmax.f32 %v290, 0.0
    %v356 = vmax.f32 %v292, 0.0
    %v357 = vmax.f32 %v294, 0.0
    %v358 = vmax.f32 %v298, 0.0
    %v359 = vmax.f32 %v300, 0.0
    %v360 = vmax.f32 %v302, 0.0
    %v361 = vmax.f32 %v304, 0.0
    %v362 = vmax.f32 %v308, 0.0
    %v363 = vmax.f32 %v310, 0.0
    %v364 = vmax.f32 %v312, 0.0
    %v365 = vmax.f32 %v314, 0.0
    %v366 = vmax.f32 %v318, 0.0
    %v367 = vmax.f32 %v320, 0.0
    %v368 = vmax.f32 %v322, 0.0
    %v369 = vmax.f32 %v324, 0.0
    %v370 = vmax.f32 %v328, 0.0
    %v371 = vmax.f32 %v330, 0.0
    %v372 = vmax.f32 %v332, 0.0
    %v373 = vmax.f32 %v334, 0.0
    %v374 = vmax.f32 %v338, 0.0
    %v375 = vmax.f32 %v340, 0.0
    %v376 = vmax.f32 %v342, 0.0
    %v377 = vmax.f32 %v344, 0.0
    %v378 = vpack.c.bf16 %v348, %v346
    %v379 = vpack.c.bf16 %v349, %v347
    %v380 = vpack.c.bf16 %v352, %v350
    %v381 = vpack.c.bf16 %v353, %v351
    %v382 = vpack.c.bf16 %v356, %v354
    %v383 = vpack.c.bf16 %v357, %v355
    %v384 = vpack.c.bf16 %v360, %v358
    %v385 = vpack.c.bf16 %v361, %v359
    %v386 = vpack.c.bf16 %v364, %v362
    %v387 = vpack.c.bf16 %v365, %v363
    %v388 = vpack.c.bf16 %v368, %v366
    %v389 = vpack.c.bf16 %v369, %v367
    %v390 = vpack.c.bf16 %v372, %v370
    %v391 = vpack.c.bf16 %v373, %v371
    %v392 = vpack.c.bf16 %v376, %v374
    %v393 = vpack.c.bf16 %v377, %v375
    %v394 = vld [vmem:[%s4] sm:$0xff]
    %v395 = vld [vmem:[%s4 + $0x8] sm:$0xff]
    %v396 = vld [vmem:[%s4 + $0x10] sm:$0xff]
    %v397 = vld [vmem:[%s4 + $0x18] sm:$0xff]
    %v398 = vld [vmem:[%s4 + $0x20] sm:$0xff]
    %v399 = vld [vmem:[%s4 + $0x28] sm:$0xff]
    %v400 = vld [vmem:[%s4 + $0x30] sm:$0xff]
    %v401 = vld [vmem:[%s4 + $0x38] sm:$0xff]
    %v402 = vld [vmem:[%s4 + $0x40] sm:$0xff]
    %v403 = vld [vmem:[%s4 + $0x48] sm:$0xff]
    %v404 = vld [vmem:[%s4 + $0x50] sm:$0xff]
    %v405 = vld [vmem:[%s4 + $0x58] sm:$0xff]
    %v406 = vld [vmem:[%s4 + $0x60] sm:$0xff]
    %v407 = vld [vmem:[%s4 + $0x68] sm:$0xff]
    %v408 = vld [vmem:[%s4 + $0x70] sm:$0xff]
    %v409 = vld [vmem:[%s4 + $0x78] sm:$0xff]
    %v410 = vld [vmem:[%s4 + $0x80] sm:$0xff]
    %v411 = vld [vmem:[%s4 + $0x88] sm:$0xff]
    %v412 = vld [vmem:[%s4 + $0x90] sm:$0xff]
    %v413 = vld [vmem:[%s4 + $0x98] sm:$0xff]
    %v414 = vld [vmem:[%s4 + $0xa0] sm:$0xff]
    %v415 = vld [vmem:[%s4 + $0xa8] sm:$0xff]
    %v416 = vld [vmem:[%s4 + $0xb0] sm:$0xff]
    %v417 = vld [vmem:[%s4 + $0xb8] sm:$0xff]
    %v418 = vld [vmem:[%s4 + $0xc0] sm:$0xff]
    %v419 = vld [vmem:[%s4 + $0xc8] sm:$0xff]
    %v420 = vld [vmem:[%s4 + $0xd0] sm:$0xff]
    %v421 = vld [vmem:[%s4 + $0xd8] sm:$0xff]
    %v422 = vld [vmem:[%s4 + $0xe0] sm:$0xff]
    %v423 = vld [vmem:[%s4 + $0xe8] sm:$0xff]
    %v424 = vld [vmem:[%s4 + $0xf0] sm:$0xff]
    %v425 = vld [vmem:[%s4 + $0xf8] sm:$0xff]
    %v426 = vld [vmem:[%s5] sm:$0x3]
    %v428 = vlaneseq
    %v429 = vshrl.u32 %v428, 7
    %v430 = vsub.s32 0, %v429
    %v431 = vrot.slane %v426, %v430
    %v432 = vlaneseq
    %v433 = vshrl.u32 %v432, 7
    %v434 = vsub.s32 1, %v433
    %v435 = vrot.slane %v426, %v434
    %v470 = vunpack.c.l.b16 %v394
    %v471 = vunpack.c.h.b16 %v394
    %v472 = vunpack.c.l.b16 %v395
    %v473 = vunpack.c.h.b16 %v395
    %v474 = vunpack.c.l.b16 %v396
    %v475 = vunpack.c.h.b16 %v396
    %v476 = vunpack.c.l.b16 %v397
    %v477 = vunpack.c.h.b16 %v397
    %v478 = vunpack.c.l.b16 %v398
    %v479 = vunpack.c.h.b16 %v398
    %v480 = vunpack.c.l.b16 %v399
    %v481 = vunpack.c.h.b16 %v399
    %v482 = vunpack.c.l.b16 %v400
    %v483 = vunpack.c.h.b16 %v400
    %v484 = vunpack.c.l.b16 %v401
    %v485 = vunpack.c.h.b16 %v401
    %v486 = vunpack.c.l.b16 %v402
    %v487 = vunpack.c.h.b16 %v402
    %v488 = vunpack.c.l.b16 %v403
    %v489 = vunpack.c.h.b16 %v403
    %v490 = vunpack.c.l.b16 %v404
    %v491 = vunpack.c.h.b16 %v404
    %v492 = vunpack.c.l.b16 %v405
    %v493 = vunpack.c.h.b16 %v405
    %v494 = vunpack.c.l.b16 %v406
    %v495 = vunpack.c.h.b16 %v406
    %v496 = vunpack.c.l.b16 %v407
    %v497 = vunpack.c.h.b16 %v407
    %v498 = vunpack.c.l.b16 %v408
    %v499 = vunpack.c.h.b16 %v408
    %v500 = vunpack.c.l.b16 %v409
    %v501 = vunpack.c.h.b16 %v409
    %v502 = vunpack.c.l.b16 %v410
    %v503 = vunpack.c.h.b16 %v410
    %v504 = vunpack.c.l.b16 %v411
    %v505 = vunpack.c.h.b16 %v411
    %v506 = vunpack.c.l.b16 %v412
    %v507 = vunpack.c.h.b16 %v412
    %v508 = vunpack.c.l.b16 %v413
    %v509 = vunpack.c.h.b16 %v413
    %v510 = vunpack.c.l.b16 %v414
    %v511 = vunpack.c.h.b16 %v414
    %v512 = vunpack.c.l.b16 %v415
    %v513 = vunpack.c.h.b16 %v415
    %v514 = vunpack.c.l.b16 %v416
    %v515 = vunpack.c.h.b16 %v416
    %v516 = vunpack.c.l.b16 %v417
    %v517 = vunpack.c.h.b16 %v417
    %v518 = vunpack.c.l.b16 %v418
    %v519 = vunpack.c.h.b16 %v418
    %v520 = vunpack.c.l.b16 %v419
    %v521 = vunpack.c.h.b16 %v419
    %v522 = vunpack.c.l.b16 %v420
    %v523 = vunpack.c.h.b16 %v420
    %v524 = vunpack.c.l.b16 %v421
    %v525 = vunpack.c.h.b16 %v421
    %v526 = vunpack.c.l.b16 %v422
    %v527 = vunpack.c.h.b16 %v422
    %v528 = vunpack.c.l.b16 %v423
    %v529 = vunpack.c.h.b16 %v423
    %v530 = vunpack.c.l.b16 %v424
    %v531 = vunpack.c.h.b16 %v424
    %v532 = vunpack.c.l.b16 %v425
    %v533 = vunpack.c.h.b16 %v425
    %v534 = vpack.c.b16 %v472, %v470
    %v535 = vpack.c.b16 %v473, %v471
    %v536 = vpack.c.b16 %v476, %v474
    %v537 = vpack.c.b16 %v477, %v475
    %v538 = vpack.c.b16 %v480, %v478
    %v539 = vpack.c.b16 %v481, %v479
    %v540 = vpack.c.b16 %v484, %v482
    %v541 = vpack.c.b16 %v485, %v483
    %v542 = vpack.c.b16 %v488, %v486
    %v543 = vpack.c.b16 %v489, %v487
    %v544 = vpack.c.b16 %v492, %v490
    %v545 = vpack.c.b16 %v493, %v491
    %v546 = vpack.c.b16 %v496, %v494
    %v547 = vpack.c.b16 %v497, %v495
    %v548 = vpack.c.b16 %v500, %v498
    %v549 = vpack.c.b16 %v501, %v499
    %v550 = vpack.c.b16 %v504, %v502
    %v551 = vpack.c.b16 %v505, %v503
    %v552 = vpack.c.b16 %v508, %v506
    %v553 = vpack.c.b16 %v509, %v507
    %v554 = vpack.c.b16 %v512, %v510
    %v555 = vpack.c.b16 %v513, %v511
    %v556 = vpack.c.b16 %v516, %v514
    %v557 = vpack.c.b16 %v517, %v515
    %v558 = vpack.c.b16 %v520, %v518
    %v559 = vpack.c.b16 %v521, %v519
    %v560 = vpack.c.b16 %v524, %v522
    %v561 = vpack.c.b16 %v525, %v523
    %v562 = vpack.c.b16 %v528, %v526
    %v563 = vpack.c.b16 %v529, %v527
    %v564 = vpack.c.b16 %v532, %v530
    %v565 = vpack.c.b16 %v533, %v531
    %598 = vmatprep.subr.bf16.mxu0 %v535
    %599 = vmatpush1.bf16.msra.mxu0 %v534
    %600 = vmatprep.subr.bf16.mxu0 %v537
    %601 = vmatpush1.bf16.msra.mxu0 %v536
    %602 = vmatprep.subr.bf16.mxu0 %v539
    %603 = vmatpush1.bf16.msra.mxu0 %v538
    %604 = vmatprep.subr.bf16.mxu0 %v541
    %605 = vmatpush1.bf16.msra.mxu0 %v540
    %606 = vmatprep.subr.bf16.mxu0 %v543
    %607 = vmatpush1.bf16.msra.mxu0 %v542
    %608 = vmatprep.subr.bf16.mxu0 %v545
    %609 = vmatpush1.bf16.msra.mxu0 %v544
    %610 = vmatprep.subr.bf16.mxu0 %v547
    %611 = vmatpush1.bf16.msra.mxu0 %v546
    %612 = vmatprep.subr.bf16.mxu0 %v549
    %613 = vmatpush1.bf16.msra.mxu0 %v548
    %614 = vmatprep.subr.bf16.mxu0 %v551
    %615 = vmatpush1.bf16.msra.mxu0 %v550
    %616 = vmatprep.subr.bf16.mxu0 %v553
    %617 = vmatpush1.bf16.msra.mxu0 %v552
    %618 = vmatprep.subr.bf16.mxu0 %v555
    %619 = vmatpush1.bf16.msra.mxu0 %v554
    %620 = vmatprep.subr.bf16.mxu0 %v557
    %621 = vmatpush1.bf16.msra.mxu0 %v556
    %622 = vmatprep.subr.bf16.mxu0 %v559
    %623 = vmatpush1.bf16.msra.mxu0 %v558
    %624 = vmatprep.subr.bf16.mxu0 %v561
    %625 = vmatpush1.bf16.msra.mxu0 %v560
    %626 = vmatprep.subr.bf16.mxu0 %v563
    %627 = vmatpush1.bf16.msra.mxu0 %v562
    %628 = vmatprep.subr.bf16.mxu0 %v565
    %629 = vmatpush1.bf16.msra.mxu0 %v564
    %630 = vmatprep.mubr.bf16.mxu0 %v379
    %631 = vmatmul.mubr.bf16.gmra.mrb[0].mxu0 %v378
    %v632 = vpop.f32.mrb[0].mxu0
    %v633 = vadd.f32 %v431, %v632
    %v634 = vpop.f32.mrb[0].mxu0
    %v635 = vadd.f32 %v435, %v634
    %v636 = vpop.f32.mrb[0].mxu0
    %v637 = vadd.f32 %v431, %v636
    %v638 = vpop.f32.mrb[0].mxu0
    %v639 = vadd.f32 %v435, %v638
    %640 = vmatprep.mubr.bf16.mxu0 %v381
    %641 = vmatmul.mubr.bf16.gmra.mrb[0].mxu0 %v380
    %v642 = vpop.f32.mrb[0].mxu0
    %v643 = vadd.f32 %v431, %v642
    %v644 = vpop.f32.mrb[0].mxu0
    %v645 = vadd.f32 %v435, %v644
    %v646 = vpop.f32.mrb[0].mxu0
    %v647 = vadd.f32 %v431, %v646
    %v648 = vpop.f32.mrb[0].mxu0
    %v649 = vadd.f32 %v435, %v648
    %650 = vmatprep.mubr.bf16.mxu0 %v383
    %651 = vmatmul.mubr.bf16.gmra.mrb[0].mxu0 %v382
    %v652 = vpop.f32.mrb[0].mxu0
    %v653 = vadd.f32 %v431, %v652
    %v654 = vpop.f32.mrb[0].mxu0
    %v655 = vadd.f32 %v435, %v654
    %v656 = vpop.f32.mrb[0].mxu0
    %v657 = vadd.f32 %v431, %v656
    %v658 = vpop.f32.mrb[0].mxu0
    %v659 = vadd.f32 %v435, %v658
    %660 = vmatprep.mubr.bf16.mxu0 %v385
    %661 = vmatmul.mubr.bf16.gmra.mrb[0].mxu0 %v384
    %v662 = vpop.f32.mrb[0].mxu0
    %v663 = vadd.f32 %v431, %v662
    %v664 = vpop.f32.mrb[0].mxu0
    %v665 = vadd.f32 %v435, %v664
    %v666 = vpop.f32.mrb[0].mxu0
    %v667 = vadd.f32 %v431, %v666
    %v668 = vpop.f32.mrb[0].mxu0
    %v669 = vadd.f32 %v435, %v668
    %670 = vmatprep.mubr.bf16.mxu0 %v387
    %671 = vmatmul.mubr.bf16.gmra.mrb[0].mxu0 %v386
    %v672 = vpop.f32.mrb[0].mxu0
    %v673 = vadd.f32 %v431, %v672
    %v674 = vpop.f32.mrb[0].mxu0
    %v675 = vadd.f32 %v435, %v674
    %v676 = vpop.f32.mrb[0].mxu0
    %v677 = vadd.f32 %v431, %v676
    %v678 = vpop.f32.mrb[0].mxu0
    %v679 = vadd.f32 %v435, %v678
    %680 = vmatprep.mubr.bf16.mxu0 %v389
    %681 = vmatmul.mubr.bf16.gmra.mrb[0].mxu0 %v388
    %v682 = vpop.f32.mrb[0].mxu0
    %v683 = vadd.f32 %v431, %v682
    %v684 = vpop.f32.mrb[0].mxu0
    %v685 = vadd.f32 %v435, %v684
    %v686 = vpop.f32.mrb[0].mxu0
    %v687 = vadd.f32 %v431, %v686
    %v688 = vpop.f32.mrb[0].mxu0
    %v689 = vadd.f32 %v435, %v688
    %690 = vmatprep.mubr.bf16.mxu0 %v391
    %691 = vmatmul.mubr.bf16.gmra.mrb[0].mxu0 %v390
    %v692 = vpop.f32.mrb[0].mxu0
    %v693 = vadd.f32 %v431, %v692
    %v694 = vpop.f32.mrb[0].mxu0
    %v695 = vadd.f32 %v435, %v694
    %v696 = vpop.f32.mrb[0].mxu0
    %v697 = vadd.f32 %v431, %v696
    %v698 = vpop.f32.mrb[0].mxu0
    %v699 = vadd.f32 %v435, %v698
    %700 = vmatprep.mubr.bf16.mxu0 %v393
    %701 = vmatmul.mubr.bf16.gmra.mrb[0].mxu0 %v392
    %v702 = vpop.f32.mrb[0].mxu0
    %v703 = vadd.f32 %v431, %v702
    %v704 = vpop.f32.mrb[0].mxu0
    %v705 = vadd.f32 %v435, %v704
    %v706 = vpop.f32.mrb[0].mxu0
    %v707 = vadd.f32 %v431, %v706
    %v708 = vpop.f32.mrb[0].mxu0
    %v709 = vadd.f32 %v435, %v708
    %710 = vdwg.mxu0
    %v711 = vmax.f32 %v633, 0.0
    %v712 = vmax.f32 %v635, 0.0
    %v713 = vmax.f32 %v637, 0.0
    %v714 = vmax.f32 %v639, 0.0
    %v715 = vmax.f32 %v643, 0.0
    %v716 = vmax.f32 %v645, 0.0
    %v717 = vmax.f32 %v647, 0.0
    %v718 = vmax.f32 %v649, 0.0
    %v719 = vmax.f32 %v653, 0.0
    %v720 = vmax.f32 %v655, 0.0
    %v721 = vmax.f32 %v657, 0.0
    %v722 = vmax.f32 %v659, 0.0
    %v723 = vmax.f32 %v663, 0.0
    %v724 = vmax.f32 %v665, 0.0
    %v725 = vmax.f32 %v667, 0.0
    %v726 = vmax.f32 %v669, 0.0
    %v727 = vmax.f32 %v673, 0.0
    %v728 = vmax.f32 %v675, 0.0
    %v729 = vmax.f32 %v677, 0.0
    %v730 = vmax.f32 %v679, 0.0
    %v731 = vmax.f32 %v683, 0.0
    %v732 = vmax.f32 %v685, 0.0
    %v733 = vmax.f32 %v687, 0.0
    %v734 = vmax.f32 %v689, 0.0
    %v735 = vmax.f32 %v693, 0.0
    %v736 = vmax.f32 %v695, 0.0
    %v737 = vmax.f32 %v697, 0.0
    %v738 = vmax.f32 %v699, 0.0
    %v739 = vmax.f32 %v703, 0.0
    %v740 = vmax.f32 %v705, 0.0
    %v741 = vmax.f32 %v707, 0.0
    %v742 = vmax.f32 %v709, 0.0
    %v743 = vpack.c.bf16 %v713, %v711
    %v744 = vpack.c.bf16 %v714, %v712
    %v745 = vpack.c.bf16 %v717, %v715
    %v746 = vpack.c.bf16 %v718, %v716
    %v747 = vpack.c.bf16 %v721, %v719
    %v748 = vpack.c.bf16 %v722, %v720
    %v749 = vpack.c.bf16 %v725, %v723
    %v750 = vpack.c.bf16 %v726, %v724
    %v751 = vpack.c.bf16 %v729, %v727
    %v752 = vpack.c.bf16 %v730, %v728
    %v753 = vpack.c.bf16 %v733, %v731
    %v754 = vpack.c.bf16 %v734, %v732
    %v755 = vpack.c.bf16 %v737, %v735
    %v756 = vpack.c.bf16 %v738, %v736
    %v757 = vpack.c.bf16 %v741, %v739
    %v758 = vpack.c.bf16 %v742, %v740
    %v759 = vld [vmem:[%s6] sm:$0xff]
    %v760 = vld [vmem:[%s6 + $0x8] sm:$0xff]
    %v761 = vld [vmem:[%s6 + $0x10] sm:$0xff]
    %v762 = vld [vmem:[%s6 + $0x18] sm:$0xff]
    %v763 = vld [vmem:[%s6 + $0x20] sm:$0xff]
    %v764 = vld [vmem:[%s6 + $0x28] sm:$0xff]
    %v765 = vld [vmem:[%s6 + $0x30] sm:$0xff]
    %v766 = vld [vmem:[%s6 + $0x38] sm:$0xff]
    %v767 = vld [vmem:[%s6 + $0x40] sm:$0xff]
    %v768 = vld [vmem:[%s6 + $0x48] sm:$0xff]
    %v769 = vld [vmem:[%s6 + $0x50] sm:$0xff]
    %v770 = vld [vmem:[%s6 + $0x58] sm:$0xff]
    %v771 = vld [vmem:[%s6 + $0x60] sm:$0xff]
    %v772 = vld [vmem:[%s6 + $0x68] sm:$0xff]
    %v773 = vld [vmem:[%s6 + $0x70] sm:$0xff]
    %v774 = vld [vmem:[%s6 + $0x78] sm:$0xff]
    %v775 = vld [vmem:[%s6 + $0x80] sm:$0xff]
    %v776 = vld [vmem:[%s6 + $0x88] sm:$0xff]
    %v777 = vld [vmem:[%s6 + $0x90] sm:$0xff]
    %v778 = vld [vmem:[%s6 + $0x98] sm:$0xff]
    %v779 = vld [vmem:[%s6 + $0xa0] sm:$0xff]
    %v780 = vld [vmem:[%s6 + $0xa8] sm:$0xff]
    %v781 = vld [vmem:[%s6 + $0xb0] sm:$0xff]
    %v782 = vld [vmem:[%s6 + $0xb8] sm:$0xff]
    %v783 = vld [vmem:[%s6 + $0xc0] sm:$0xff]
    %v784 = vld [vmem:[%s6 + $0xc8] sm:$0xff]
    %v785 = vld [vmem:[%s6 + $0xd0] sm:$0xff]
    %v786 = vld [vmem:[%s6 + $0xd8] sm:$0xff]
    %v787 = vld [vmem:[%s6 + $0xe0] sm:$0xff]
    %v788 = vld [vmem:[%s6 + $0xe8] sm:$0xff]
    %v789 = vld [vmem:[%s6 + $0xf0] sm:$0xff]
    %v790 = vld [vmem:[%s6 + $0xf8] sm:$0xff]
    %v791 = vld [vmem:[%s7] sm:$0x3]
    %v793 = vlaneseq
    %v794 = vshrl.u32 %v793, 7
    %v795 = vsub.s32 0, %v794
    %v796 = vrot.slane %v791, %v795
    %v797 = vlaneseq
    %v798 = vshrl.u32 %v797, 7
    %v799 = vsub.s32 1, %v798
    %v800 = vrot.slane %v791, %v799
    %v835 = vunpack.c.l.b16 %v759
    %v836 = vunpack.c.h.b16 %v759
    %v837 = vunpack.c.l.b16 %v760
    %v838 = vunpack.c.h.b16 %v760
    %v839 = vunpack.c.l.b16 %v761
    %v840 = vunpack.c.h.b16 %v761
    %v841 = vunpack.c.l.b16 %v762
    %v842 = vunpack.c.h.b16 %v762
    %v843 = vunpack.c.l.b16 %v763
    %v844 = vunpack.c.h.b16 %v763
    %v845 = vunpack.c.l.b16 %v764
    %v846 = vunpack.c.h.b16 %v764
    %v847 = vunpack.c.l.b16 %v765
    %v848 = vunpack.c.h.b16 %v765
    %v849 = vunpack.c.l.b16 %v766
    %v850 = vunpack.c.h.b16 %v766
    %v851 = vunpack.c.l.b16 %v767
    %v852 = vunpack.c.h.b16 %v767
    %v853 = vunpack.c.l.b16 %v768
    %v854 = vunpack.c.h.b16 %v768
    %v855 = vunpack.c.l.b16 %v769
    %v856 = vunpack.c.h.b16 %v769
    %v857 = vunpack.c.l.b16 %v770
    %v858 = vunpack.c.h.b16 %v770
    %v859 = vunpack.c.l.b16 %v771
    %v860 = vunpack.c.h.b16 %v771
    %v861 = vunpack.c.l.b16 %v772
    %v862 = vunpack.c.h.b16 %v772
    %v863 = vunpack.c.l.b16 %v773
    %v864 = vunpack.c.h.b16 %v773
    %v865 = vunpack.c.l.b16 %v774
    %v866 = vunpack.c.h.b16 %v774
    %v867 = vunpack.c.l.b16 %v775
    %v868 = vunpack.c.h.b16 %v775
    %v869 = vunpack.c.l.b16 %v776
    %v870 = vunpack.c.h.b16 %v776
    %v871 = vunpack.c.l.b16 %v777
    %v872 = vunpack.c.h.b16 %v777
    %v873 = vunpack.c.l.b16 %v778
    %v874 = vunpack.c.h.b16 %v778
    %v875 = vunpack.c.l.b16 %v779
    %v876 = vunpack.c.h.b16 %v779
    %v877 = vunpack.c.l.b16 %v780
    %v878 = vunpack.c.h.b16 %v780
    %v879 = vunpack.c.l.b16 %v781
    %v880 = vunpack.c.h.b16 %v781
    %v881 = vunpack.c.l.b16 %v782
    %v882 = vunpack.c.h.b16 %v782
    %v883 = vunpack.c.l.b16 %v783
    %v884 = vunpack.c.h.b16 %v783
    %v885 = vunpack.c.l.b16 %v784
    %v886 = vunpack.c.h.b16 %v784
    %v887 = vunpack.c.l.b16 %v785
    %v888 = vunpack.c.h.b16 %v785
    %v889 = vunpack.c.l.b16 %v786
    %v890 = vunpack.c.h.b16 %v786
    %v891 = vunpack.c.l.b16 %v787
    %v892 = vunpack.c.h.b16 %v787
    %v893 = vunpack.c.l.b16 %v788
    %v894 = vunpack.c.h.b16 %v788
    %v895 = vunpack.c.l.b16 %v789
    %v896 = vunpack.c.h.b16 %v789
    %v897 = vunpack.c.l.b16 %v790
    %v898 = vunpack.c.h.b16 %v790
    %v899 = vpack.c.b16 %v837, %v835
    %v900 = vpack.c.b16 %v838, %v836
    %v901 = vpack.c.b16 %v841, %v839
    %v902 = vpack.c.b16 %v842, %v840
    %v903 = vpack.c.b16 %v845, %v843
    %v904 = vpack.c.b16 %v846, %v844
    %v905 = vpack.c.b16 %v849, %v847
    %v906 = vpack.c.b16 %v850, %v848
    %v907 = vpack.c.b16 %v853, %v851
    %v908 = vpack.c.b16 %v854, %v852
    %v909 = vpack.c.b16 %v857, %v855
    %v910 = vpack.c.b16 %v858, %v856
    %v911 = vpack.c.b16 %v861, %v859
    %v912 = vpack.c.b16 %v862, %v860
    %v913 = vpack.c.b16 %v865, %v863
    %v914 = vpack.c.b16 %v866, %v864
    %v915 = vpack.c.b16 %v869, %v867
    %v916 = vpack.c.b16 %v870, %v868
    %v917 = vpack.c.b16 %v873, %v871
    %v918 = vpack.c.b16 %v874, %v872
    %v919 = vpack.c.b16 %v877, %v875
    %v920 = vpack.c.b16 %v878, %v876
    %v921 = vpack.c.b16 %v881, %v879
    %v922 = vpack.c.b16 %v882, %v880
    %v923 = vpack.c.b16 %v885, %v883
    %v924 = vpack.c.b16 %v886, %v884
    %v925 = vpack.c.b16 %v889, %v887
    %v926 = vpack.c.b16 %v890, %v888
    %v927 = vpack.c.b16 %v893, %v891
    %v928 = vpack.c.b16 %v894, %v892
    %v929 = vpack.c.b16 %v897, %v895
    %v930 = vpack.c.b16 %v898, %v896
    %963 = vmatprep.subr.bf16.mxu0 %v900
    %964 = vmatpush1.bf16.msra.mxu0 %v899
    %965 = vmatprep.subr.bf16.mxu0 %v902
    %966 = vmatpush1.bf16.msra.mxu0 %v901
    %967 = vmatprep.subr.bf16.mxu0 %v904
    %968 = vmatpush1.bf16.msra.mxu0 %v903
    %969 = vmatprep.subr.bf16.mxu0 %v906
    %970 = vmatpush1.bf16.msra.mxu0 %v905
    %971 = vmatprep.subr.bf16.mxu0 %v908
    %972 = vmatpush1.bf16.msra.mxu0 %v907
    %973 = vmatprep.subr.bf16.mxu0 %v910
    %974 = vmatpush1.bf16.msra.mxu0 %v909
    %975 = vmatprep.subr.bf16.mxu0 %v912
    %976 = vmatpush1.bf16.msra.mxu0 %v911
    %977 = vmatprep.subr.bf16.mxu0 %v914
    %978 = vmatpush1.bf16.msra.mxu0 %v913
    %979 = vmatprep.subr.bf16.mxu0 %v916
    %980 = vmatpush1.bf16.msra.mxu0 %v915
    %981 = vmatprep.subr.bf16.mxu0 %v918
    %982 = vmatpush1.bf16.msra.mxu0 %v917
    %983 = vmatprep.subr.bf16.mxu0 %v920
    %984 = vmatpush1.bf16.msra.mxu0 %v919
    %985 = vmatprep.subr.bf16.mxu0 %v922
    %986 = vmatpush1.bf16.msra.mxu0 %v921
    %987 = vmatprep.subr.bf16.mxu0 %v924
    %988 = vmatpush1.bf16.msra.mxu0 %v923
    %989 = vmatprep.subr.bf16.mxu0 %v926
    %990 = vmatpush1.bf16.msra.mxu0 %v925
    %991 = vmatprep.subr.bf16.mxu0 %v928
    %992 = vmatpush1.bf16.msra.mxu0 %v927
    %993 = vmatprep.subr.bf16.mxu0 %v930
    %994 = vmatpush1.bf16.msra.mxu0 %v929
    %995 = vmatprep.mubr.bf16.mxu0 %v744
    %996 = vmatmul.mubr.bf16.gmra.mrb[0].mxu0 %v743
    %v997 = vpop.f32.mrb[0].mxu0
    %v998 = vadd.f32 %v796, %v997
    %v999 = vpop.f32.mrb[0].mxu0
    %v1000 = vadd.f32 %v800, %v999
    %v1001 = vpop.f32.mrb[0].mxu0
    %v1002 = vadd.f32 %v796, %v1001
    %v1003 = vpop.f32.mrb[0].mxu0
    %v1004 = vadd.f32 %v800, %v1003
    %1005 = vmatprep.mubr.bf16.mxu0 %v746
    %1006 = vmatmul.mubr.bf16.gmra.mrb[0].mxu0 %v745
    %v1007 = vpop.f32.mrb[0].mxu0
    %v1008 = vadd.f32 %v796, %v1007
    %v1009 = vpop.f32.mrb[0].mxu0
    %v1010 = vadd.f32 %v800, %v1009
    %v1011 = vpop.f32.mrb[0].mxu0
    %v1012 = vadd.f32 %v796, %v1011
    %v1013 = vpop.f32.mrb[0].mxu0
    %v1014 = vadd.f32 %v800, %v1013
    %1015 = vmatprep.mubr.bf16.mxu0 %v748
    %1016 = vmatmul.mubr.bf16.gmra.mrb[0].mxu0 %v747
    %v1017 = vpop.f32.mrb[0].mxu0
    %v1018 = vadd.f32 %v796, %v1017
    %v1019 = vpop.f32.mrb[0].mxu0
    %v1020 = vadd.f32 %v800, %v1019
    %v1021 = vpop.f32.mrb[0].mxu0
    %v1022 = vadd.f32 %v796, %v1021
    %v1023 = vpop.f32.mrb[0].mxu0
    %v1024 = vadd.f32 %v800, %v1023
    %1025 = vmatprep.mubr.bf16.mxu0 %v750
    %1026 = vmatmul.mubr.bf16.gmra.mrb[0].mxu0 %v749
    %v1027 = vpop.f32.mrb[0].mxu0
    %v1028 = vadd.f32 %v796, %v1027
    %v1029 = vpop.f32.mrb[0].mxu0
    %v1030 = vadd.f32 %v800, %v1029
    %v1031 = vpop.f32.mrb[0].mxu0
    %v1032 = vadd.f32 %v796, %v1031
    %v1033 = vpop.f32.mrb[0].mxu0
    %v1034 = vadd.f32 %v800, %v1033
    %1035 = vmatprep.mubr.bf16.mxu0 %v752
    %1036 = vmatmul.mubr.bf16.gmra.mrb[0].mxu0 %v751
    %v1037 = vpop.f32.mrb[0].mxu0
    %v1038 = vadd.f32 %v796, %v1037
    %v1039 = vpop.f32.mrb[0].mxu0
    %v1040 = vadd.f32 %v800, %v1039
    %v1041 = vpop.f32.mrb[0].mxu0
    %v1042 = vadd.f32 %v796, %v1041
    %v1043 = vpop.f32.mrb[0].mxu0
    %v1044 = vadd.f32 %v800, %v1043
    %1045 = vmatprep.mubr.bf16.mxu0 %v754
    %1046 = vmatmul.mubr.bf16.gmra.mrb[0].mxu0 %v753
    %v1047 = vpop.f32.mrb[0].mxu0
    %v1048 = vadd.f32 %v796, %v1047
    %v1049 = vpop.f32.mrb[0].mxu0
    %v1050 = vadd.f32 %v800, %v1049
    %v1051 = vpop.f32.mrb[0].mxu0
    %v1052 = vadd.f32 %v796, %v1051
    %v1053 = vpop.f32.mrb[0].mxu0
    %v1054 = vadd.f32 %v800, %v1053
    %1055 = vmatprep.mubr.bf16.mxu0 %v756
    %1056 = vmatmul.mubr.bf16.gmra.mrb[0].mxu0 %v755
    %v1057 = vpop.f32.mrb[0].mxu0
    %v1058 = vadd.f32 %v796, %v1057
    %v1059 = vpop.f32.mrb[0].mxu0
    %v1060 = vadd.f32 %v800, %v1059
    %v1061 = vpop.f32.mrb[0].mxu0
    %v1062 = vadd.f32 %v796, %v1061
    %v1063 = vpop.f32.mrb[0].mxu0
    %v1064 = vadd.f32 %v800, %v1063
    %1065 = vmatprep.mubr.bf16.mxu0 %v758
    %1066 = vmatmul.mubr.bf16.gmra.mrb[0].mxu0 %v757
    %v1067 = vpop.f32.mrb[0].mxu0
    %v1068 = vadd.f32 %v796, %v1067
    %v1069 = vpop.f32.mrb[0].mxu0
    %v1070 = vadd.f32 %v800, %v1069
    %v1071 = vpop.f32.mrb[0].mxu0
    %v1072 = vadd.f32 %v796, %v1071
    %v1073 = vpop.f32.mrb[0].mxu0
    %v1074 = vadd.f32 %v800, %v1073
    %1075 = vdwg.mxu0
    %v1076 = vmax.f32 %v998, 0.0
    %v1077 = vmax.f32 %v1000, 0.0
    %v1078 = vmax.f32 %v1002, 0.0
    %v1079 = vmax.f32 %v1004, 0.0
    %v1080 = vmax.f32 %v1008, 0.0
    %v1081 = vmax.f32 %v1010, 0.0
    %v1082 = vmax.f32 %v1012, 0.0
    %v1083 = vmax.f32 %v1014, 0.0
    %v1084 = vmax.f32 %v1018, 0.0
    %v1085 = vmax.f32 %v1020, 0.0
    %v1086 = vmax.f32 %v1022, 0.0
    %v1087 = vmax.f32 %v1024, 0.0
    %v1088 = vmax.f32 %v1028, 0.0
    %v1089 = vmax.f32 %v1030, 0.0
    %v1090 = vmax.f32 %v1032, 0.0
    %v1091 = vmax.f32 %v1034, 0.0
    %v1092 = vmax.f32 %v1038, 0.0
    %v1093 = vmax.f32 %v1040, 0.0
    %v1094 = vmax.f32 %v1042, 0.0
    %v1095 = vmax.f32 %v1044, 0.0
    %v1096 = vmax.f32 %v1048, 0.0
    %v1097 = vmax.f32 %v1050, 0.0
    %v1098 = vmax.f32 %v1052, 0.0
    %v1099 = vmax.f32 %v1054, 0.0
    %v1100 = vmax.f32 %v1058, 0.0
    %v1101 = vmax.f32 %v1060, 0.0
    %v1102 = vmax.f32 %v1062, 0.0
    %v1103 = vmax.f32 %v1064, 0.0
    %v1104 = vmax.f32 %v1068, 0.0
    %v1105 = vmax.f32 %v1070, 0.0
    %v1106 = vmax.f32 %v1072, 0.0
    %v1107 = vmax.f32 %v1074, 0.0
    %v1108 = vpack.c.bf16 %v1078, %v1076
    %v1109 = vpack.c.bf16 %v1079, %v1077
    %v1110 = vpack.c.bf16 %v1082, %v1080
    %v1111 = vpack.c.bf16 %v1083, %v1081
    %v1112 = vpack.c.bf16 %v1086, %v1084
    %v1113 = vpack.c.bf16 %v1087, %v1085
    %v1114 = vpack.c.bf16 %v1090, %v1088
    %v1115 = vpack.c.bf16 %v1091, %v1089
    %v1116 = vpack.c.bf16 %v1094, %v1092
    %v1117 = vpack.c.bf16 %v1095, %v1093
    %v1118 = vpack.c.bf16 %v1098, %v1096
    %v1119 = vpack.c.bf16 %v1099, %v1097
    %v1120 = vpack.c.bf16 %v1102, %v1100
    %v1121 = vpack.c.bf16 %v1103, %v1101
    %v1122 = vpack.c.bf16 %v1106, %v1104
    %v1123 = vpack.c.bf16 %v1107, %v1105
    %v1124 = vld [vmem:[%s8] sm:$0xff]
    %v1125 = vld [vmem:[%s8 + $0x8] sm:$0xff]
    %v1126 = vld [vmem:[%s8 + $0x10] sm:$0xff]
    %v1127 = vld [vmem:[%s8 + $0x18] sm:$0xff]
    %v1128 = vld [vmem:[%s8 + $0x20] sm:$0xff]
    %v1129 = vld [vmem:[%s8 + $0x28] sm:$0xff]
    %v1130 = vld [vmem:[%s8 + $0x30] sm:$0xff]
    %v1131 = vld [vmem:[%s8 + $0x38] sm:$0xff]
    %v1132 = vld [vmem:[%s8 + $0x40] sm:$0xff]
    %v1133 = vld [vmem:[%s8 + $0x48] sm:$0xff]
    %v1134 = vld [vmem:[%s8 + $0x50] sm:$0xff]
    %v1135 = vld [vmem:[%s8 + $0x58] sm:$0xff]
    %v1136 = vld [vmem:[%s8 + $0x60] sm:$0xff]
    %v1137 = vld [vmem:[%s8 + $0x68] sm:$0xff]
    %v1138 = vld [vmem:[%s8 + $0x70] sm:$0xff]
    %v1139 = vld [vmem:[%s8 + $0x78] sm:$0xff]
    %v1140 = vld [vmem:[%s8 + $0x80] sm:$0xff]
    %v1141 = vld [vmem:[%s8 + $0x88] sm:$0xff]
    %v1142 = vld [vmem:[%s8 + $0x90] sm:$0xff]
    %v1143 = vld [vmem:[%s8 + $0x98] sm:$0xff]
    %v1144 = vld [vmem:[%s8 + $0xa0] sm:$0xff]
    %v1145 = vld [vmem:[%s8 + $0xa8] sm:$0xff]
    %v1146 = vld [vmem:[%s8 + $0xb0] sm:$0xff]
    %v1147 = vld [vmem:[%s8 + $0xb8] sm:$0xff]
    %v1148 = vld [vmem:[%s8 + $0xc0] sm:$0xff]
    %v1149 = vld [vmem:[%s8 + $0xc8] sm:$0xff]
    %v1150 = vld [vmem:[%s8 + $0xd0] sm:$0xff]
    %v1151 = vld [vmem:[%s8 + $0xd8] sm:$0xff]
    %v1152 = vld [vmem:[%s8 + $0xe0] sm:$0xff]
    %v1153 = vld [vmem:[%s8 + $0xe8] sm:$0xff]
    %v1154 = vld [vmem:[%s8 + $0xf0] sm:$0xff]
    %v1155 = vld [vmem:[%s8 + $0xf8] sm:$0xff]
    %v1156 = vld [vmem:[%s9] sm:$0x3]
    %v1158 = vlaneseq
    %v1159 = vshrl.u32 %v1158, 7
    %v1160 = vsub.s32 0, %v1159
    %v1161 = vrot.slane %v1156, %v1160
    %v1162 = vlaneseq
    %v1163 = vshrl.u32 %v1162, 7
    %v1164 = vsub.s32 1, %v1163
    %v1165 = vrot.slane %v1156, %v1164
    %v1200 = vunpack.c.l.b16 %v1124
    %v1201 = vunpack.c.h.b16 %v1124
    %v1202 = vunpack.c.l.b16 %v1125
    %v1203 = vunpack.c.h.b16 %v1125
    %v1204 = vunpack.c.l.b16 %v1126
    %v1205 = vunpack.c.h.b16 %v1126
    %v1206 = vunpack.c.l.b16 %v1127
    %v1207 = vunpack.c.h.b16 %v1127
    %v1208 = vunpack.c.l.b16 %v1128
    %v1209 = vunpack.c.h.b16 %v1128
    %v1210 = vunpack.c.l.b16 %v1129
    %v1211 = vunpack.c.h.b16 %v1129
    %v1212 = vunpack.c.l.b16 %v1130
    %v1213 = vunpack.c.h.b16 %v1130
    %v1214 = vunpack.c.l.b16 %v1131
    %v1215 = vunpack.c.h.b16 %v1131
    %v1216 = vunpack.c.l.b16 %v1132
    %v1217 = vunpack.c.h.b16 %v1132
    %v1218 = vunpack.c.l.b16 %v1133
    %v1219 = vunpack.c.h.b16 %v1133
    %v1220 = vunpack.c.l.b16 %v1134
    %v1221 = vunpack.c.h.b16 %v1134
    %v1222 = vunpack.c.l.b16 %v1135
    %v1223 = vunpack.c.h.b16 %v1135
    %v1224 = vunpack.c.l.b16 %v1136
    %v1225 = vunpack.c.h.b16 %v1136
    %v1226 = vunpack.c.l.b16 %v1137
    %v1227 = vunpack.c.h.b16 %v1137
    %v1228 = vunpack.c.l.b16 %v1138
    %v1229 = vunpack.c.h.b16 %v1138
    %v1230 = vunpack.c.l.b16 %v1139
    %v1231 = vunpack.c.h.b16 %v1139
    %v1232 = vunpack.c.l.b16 %v1140
    %v1233 = vunpack.c.h.b16 %v1140
    %v1234 = vunpack.c.l.b16 %v1141
    %v1235 = vunpack.c.h.b16 %v1141
    %v1236 = vunpack.c.l.b16 %v1142
    %v1237 = vunpack.c.h.b16 %v1142
    %v1238 = vunpack.c.l.b16 %v1143
    %v1239 = vunpack.c.h.b16 %v1143
    %v1240 = vunpack.c.l.b16 %v1144
    %v1241 = vunpack.c.h.b16 %v1144
    %v1242 = vunpack.c.l.b16 %v1145
    %v1243 = vunpack.c.h.b16 %v1145
    %v1244 = vunpack.c.l.b16 %v1146
    %v1245 = vunpack.c.h.b16 %v1146
    %v1246 = vunpack.c.l.b16 %v1147
    %v1247 = vunpack.c.h.b16 %v1147
    %v1248 = vunpack.c.l.b16 %v1148
    %v1249 = vunpack.c.h.b16 %v1148
    %v1250 = vunpack.c.l.b16 %v1149
    %v1251 = vunpack.c.h.b16 %v1149
    %v1252 = vunpack.c.l.b16 %v1150
    %v1253 = vunpack.c.h.b16 %v1150
    %v1254 = vunpack.c.l.b16 %v1151
    %v1255 = vunpack.c.h.b16 %v1151
    %v1256 = vunpack.c.l.b16 %v1152
    %v1257 = vunpack.c.h.b16 %v1152
    %v1258 = vunpack.c.l.b16 %v1153
    %v1259 = vunpack.c.h.b16 %v1153
    %v1260 = vunpack.c.l.b16 %v1154
    %v1261 = vunpack.c.h.b16 %v1154
    %v1262 = vunpack.c.l.b16 %v1155
    %v1263 = vunpack.c.h.b16 %v1155
    %v1264 = vpack.c.b16 %v1202, %v1200
    %v1265 = vpack.c.b16 %v1203, %v1201
    %v1266 = vpack.c.b16 %v1206, %v1204
    %v1267 = vpack.c.b16 %v1207, %v1205
    %v1268 = vpack.c.b16 %v1210, %v1208
    %v1269 = vpack.c.b16 %v1211, %v1209
    %v1270 = vpack.c.b16 %v1214, %v1212
    %v1271 = vpack.c.b16 %v1215, %v1213
    %v1272 = vpack.c.b16 %v1218, %v1216
    %v1273 = vpack.c.b16 %v1219, %v1217
    %v1274 = vpack.c.b16 %v1222, %v1220
    %v1275 = vpack.c.b16 %v1223, %v1221
    %v1276 = vpack.c.b16 %v1226, %v1224
    %v1277 = vpack.c.b16 %v1227, %v1225
    %v1278 = vpack.c.b16 %v1230, %v1228
    %v1279 = vpack.c.b16 %v1231, %v1229
    %v1280 = vpack.c.b16 %v1234, %v1232
    %v1281 = vpack.c.b16 %v1235, %v1233
    %v1282 = vpack.c.b16 %v1238, %v1236
    %v1283 = vpack.c.b16 %v1239, %v1237
    %v1284 = vpack.c.b16 %v1242, %v1240
    %v1285 = vpack.c.b16 %v1243, %v1241
    %v1286 = vpack.c.b16 %v1246, %v1244
    %v1287 = vpack.c.b16 %v1247, %v1245
    %v1288 = vpack.c.b16 %v1250, %v1248
    %v1289 = vpack.c.b16 %v1251, %v1249
    %v1290 = vpack.c.b16 %v1254, %v1252
    %v1291 = vpack.c.b16 %v1255, %v1253
    %v1292 = vpack.c.b16 %v1258, %v1256
    %v1293 = vpack.c.b16 %v1259, %v1257
    %v1294 = vpack.c.b16 %v1262, %v1260
    %v1295 = vpack.c.b16 %v1263, %v1261
    %1328 = vmatprep.subr.bf16.mxu0 %v1265
    %1329 = vmatpush1.bf16.msra.mxu0 %v1264
    %1330 = vmatprep.subr.bf16.mxu0 %v1267
    %1331 = vmatpush1.bf16.msra.mxu0 %v1266
    %1332 = vmatprep.subr.bf16.mxu0 %v1269
    %1333 = vmatpush1.bf16.msra.mxu0 %v1268
    %1334 = vmatprep.subr.bf16.mxu0 %v1271
    %1335 = vmatpush1.bf16.msra.mxu0 %v1270
    %1336 = vmatprep.subr.bf16.mxu0 %v1273
    %1337 = vmatpush1.bf16.msra.mxu0 %v1272
    %1338 = vmatprep.subr.bf16.mxu0 %v1275
    %1339 = vmatpush1.bf16.msra.mxu0 %v1274
    %1340 = vmatprep.subr.bf16.mxu0 %v1277
    %1341 = vmatpush1.bf16.msra.mxu0 %v1276
    %1342 = vmatprep.subr.bf16.mxu0 %v1279
    %1343 = vmatpush1.bf16.msra.mxu0 %v1278
    %1344 = vmatprep.subr.bf16.mxu0 %v1281
    %1345 = vmatpush1.bf16.msra.mxu0 %v1280
    %1346 = vmatprep.subr.bf16.mxu0 %v1283
    %1347 = vmatpush1.bf16.msra.mxu0 %v1282
    %1348 = vmatprep.subr.bf16.mxu0 %v1285
    %1349 = vmatpush1.bf16.msra.mxu0 %v1284
    %1350 = vmatprep.subr.bf16.mxu0 %v1287
    %1351 = vmatpush1.bf16.msra.mxu0 %v1286
    %1352 = vmatprep.subr.bf16.mxu0 %v1289
    %1353 = vmatpush1.bf16.msra.mxu0 %v1288
    %1354 = vmatprep.subr.bf16.mxu0 %v1291
    %1355 = vmatpush1.bf16.msra.mxu0 %v1290
    %1356 = vmatprep.subr.bf16.mxu0 %v1293
    %1357 = vmatpush1.bf16.msra.mxu0 %v1292
    %1358 = vmatprep.subr.bf16.mxu0 %v1295
    %1359 = vmatpush1.bf16.msra.mxu0 %v1294
    %1360 = vmatprep.mubr.bf16.mxu0 %v1109
    %1361 = vmatmul.mubr.bf16.gmra.mrb[0].mxu0 %v1108
    %v1362 = vpop.f32.mrb[0].mxu0
    %v1363 = vadd.f32 %v1161, %v1362
    %v1364 = vpop.f32.mrb[0].mxu0
    %v1365 = vadd.f32 %v1165, %v1364
    %v1366 = vpop.f32.mrb[0].mxu0
    %v1367 = vadd.f32 %v1161, %v1366
    %v1368 = vpop.f32.mrb[0].mxu0
    %v1369 = vadd.f32 %v1165, %v1368
    %1370 = vmatprep.mubr.bf16.mxu0 %v1111
    %1371 = vmatmul.mubr.bf16.gmra.mrb[0].mxu0 %v1110
    %v1372 = vpop.f32.mrb[0].mxu0
    %v1373 = vadd.f32 %v1161, %v1372
    %v1374 = vpop.f32.mrb[0].mxu0
    %v1375 = vadd.f32 %v1165, %v1374
    %v1376 = vpop.f32.mrb[0].mxu0
    %v1377 = vadd.f32 %v1161, %v1376
    %v1378 = vpop.f32.mrb[0].mxu0
    %v1379 = vadd.f32 %v1165, %v1378
    %1380 = vmatprep.mubr.bf16.mxu0 %v1113
    %1381 = vmatmul.mubr.bf16.gmra.mrb[0].mxu0 %v1112
    %v1382 = vpop.f32.mrb[0].mxu0
    %v1383 = vadd.f32 %v1161, %v1382
    %v1384 = vpop.f32.mrb[0].mxu0
    %v1385 = vadd.f32 %v1165, %v1384
    %v1386 = vpop.f32.mrb[0].mxu0
    %v1387 = vadd.f32 %v1161, %v1386
    %v1388 = vpop.f32.mrb[0].mxu0
    %v1389 = vadd.f32 %v1165, %v1388
    %1390 = vmatprep.mubr.bf16.mxu0 %v1115
    %1391 = vmatmul.mubr.bf16.gmra.mrb[0].mxu0 %v1114
    %v1392 = vpop.f32.mrb[0].mxu0
    %v1393 = vadd.f32 %v1161, %v1392
    %v1394 = vpop.f32.mrb[0].mxu0
    %v1395 = vadd.f32 %v1165, %v1394
    %v1396 = vpop.f32.mrb[0].mxu0
    %v1397 = vadd.f32 %v1161, %v1396
    %v1398 = vpop.f32.mrb[0].mxu0
    %v1399 = vadd.f32 %v1165, %v1398
    %1400 = vmatprep.mubr.bf16.mxu0 %v1117
    %1401 = vmatmul.mubr.bf16.gmra.mrb[0].mxu0 %v1116
    %v1402 = vpop.f32.mrb[0].mxu0
    %v1403 = vadd.f32 %v1161, %v1402
    %v1404 = vpop.f32.mrb[0].mxu0
    %v1405 = vadd.f32 %v1165, %v1404
    %v1406 = vpop.f32.mrb[0].mxu0
    %v1407 = vadd.f32 %v1161, %v1406
    %v1408 = vpop.f32.mrb[0].mxu0
    %v1409 = vadd.f32 %v1165, %v1408
    %1410 = vmatprep.mubr.bf16.mxu0 %v1119
    %1411 = vmatmul.mubr.bf16.gmra.mrb[0].mxu0 %v1118
    %v1412 = vpop.f32.mrb[0].mxu0
    %v1413 = vadd.f32 %v1161, %v1412
    %v1414 = vpop.f32.mrb[0].mxu0
    %v1415 = vadd.f32 %v1165, %v1414
    %v1416 = vpop.f32.mrb[0].mxu0
    %v1417 = vadd.f32 %v1161, %v1416
    %v1418 = vpop.f32.mrb[0].mxu0
    %v1419 = vadd.f32 %v1165, %v1418
    %1420 = vmatprep.mubr.bf16.mxu0 %v1121
    %1421 = vmatmul.mubr.bf16.gmra.mrb[0].mxu0 %v1120
    %v1422 = vpop.f32.mrb[0].mxu0
    %v1423 = vadd.f32 %v1161, %v1422
    %v1424 = vpop.f32.mrb[0].mxu0
    %v1425 = vadd.f32 %v1165, %v1424
    %v1426 = vpop.f32.mrb[0].mxu0
    %v1427 = vadd.f32 %v1161, %v1426
    %v1428 = vpop.f32.mrb[0].mxu0
    %v1429 = vadd.f32 %v1165, %v1428
    %1430 = vmatprep.mubr.bf16.mxu0 %v1123
    %1431 = vmatmul.mubr.bf16.gmra.mrb[0].mxu0 %v1122
    %v1432 = vpop.f32.mrb[0].mxu0
    %v1433 = vadd.f32 %v1161, %v1432
    %v1434 = vpop.f32.mrb[0].mxu0
    %v1435 = vadd.f32 %v1165, %v1434
    %v1436 = vpop.f32.mrb[0].mxu0
    %v1437 = vadd.f32 %v1161, %v1436
    %v1438 = vpop.f32.mrb[0].mxu0
    %v1439 = vadd.f32 %v1165, %v1438
    %1440 = vdwg.mxu0
    %v1441 = vmax.f32 %v1363, 0.0
    %v1442 = vmax.f32 %v1365, 0.0
    %v1443 = vmax.f32 %v1367, 0.0
    %v1444 = vmax.f32 %v1369, 0.0
    %v1445 = vmax.f32 %v1373, 0.0
    %v1446 = vmax.f32 %v1375, 0.0
    %v1447 = vmax.f32 %v1377, 0.0
    %v1448 = vmax.f32 %v1379, 0.0
    %v1449 = vmax.f32 %v1383, 0.0
    %v1450 = vmax.f32 %v1385, 0.0
    %v1451 = vmax.f32 %v1387, 0.0
    %v1452 = vmax.f32 %v1389, 0.0
    %v1453 = vmax.f32 %v1393, 0.0
    %v1454 = vmax.f32 %v1395, 0.0
    %v1455 = vmax.f32 %v1397, 0.0
    %v1456 = vmax.f32 %v1399, 0.0
    %v1457 = vmax.f32 %v1403, 0.0
    %v1458 = vmax.f32 %v1405, 0.0
    %v1459 = vmax.f32 %v1407, 0.0
    %v1460 = vmax.f32 %v1409, 0.0
    %v1461 = vmax.f32 %v1413, 0.0
    %v1462 = vmax.f32 %v1415, 0.0
    %v1463 = vmax.f32 %v1417, 0.0
    %v1464 = vmax.f32 %v1419, 0.0
    %v1465 = vmax.f32 %v1423, 0.0
    %v1466 = vmax.f32 %v1425, 0.0
    %v1467 = vmax.f32 %v1427, 0.0
    %v1468 = vmax.f32 %v1429, 0.0
    %v1469 = vmax.f32 %v1433, 0.0
    %v1470 = vmax.f32 %v1435, 0.0
    %v1471 = vmax.f32 %v1437, 0.0
    %v1472 = vmax.f32 %v1439, 0.0
    %v1473 = vpack.c.bf16 %v1443, %v1441
    %v1474 = vpack.c.bf16 %v1444, %v1442
    %v1475 = vpack.c.bf16 %v1447, %v1445
    %v1476 = vpack.c.bf16 %v1448, %v1446
    %v1477 = vpack.c.bf16 %v1451, %v1449
    %v1478 = vpack.c.bf16 %v1452, %v1450
    %v1479 = vpack.c.bf16 %v1455, %v1453
    %v1480 = vpack.c.bf16 %v1456, %v1454
    %v1481 = vpack.c.bf16 %v1459, %v1457
    %v1482 = vpack.c.bf16 %v1460, %v1458
    %v1483 = vpack.c.bf16 %v1463, %v1461
    %v1484 = vpack.c.bf16 %v1464, %v1462
    %v1485 = vpack.c.bf16 %v1467, %v1465
    %v1486 = vpack.c.bf16 %v1468, %v1466
    %v1487 = vpack.c.bf16 %v1471, %v1469
    %v1488 = vpack.c.bf16 %v1472, %v1470
    %v1489 = vld [vmem:[%s10] sm:$0xff]
    %v1490 = vld [vmem:[%s10 + $0x8] sm:$0xff]
    %v1491 = vld [vmem:[%s10 + $0x10] sm:$0xff]
    %v1492 = vld [vmem:[%s10 + $0x18] sm:$0xff]
    %v1493 = vld [vmem:[%s10 + $0x20] sm:$0xff]
    %v1494 = vld [vmem:[%s10 + $0x28] sm:$0xff]
    %v1495 = vld [vmem:[%s10 + $0x30] sm:$0xff]
    %v1496 = vld [vmem:[%s10 + $0x38] sm:$0xff]
    %v1497 = vld [vmem:[%s10 + $0x40] sm:$0xff]
    %v1498 = vld [vmem:[%s10 + $0x48] sm:$0xff]
    %v1499 = vld [vmem:[%s10 + $0x50] sm:$0xff]
    %v1500 = vld [vmem:[%s10 + $0x58] sm:$0xff]
    %v1501 = vld [vmem:[%s10 + $0x60] sm:$0xff]
    %v1502 = vld [vmem:[%s10 + $0x68] sm:$0xff]
    %v1503 = vld [vmem:[%s10 + $0x70] sm:$0xff]
    %v1504 = vld [vmem:[%s10 + $0x78] sm:$0xff]
    %v1505 = vld [vmem:[%s10 + $0x80] sm:$0xff]
    %v1506 = vld [vmem:[%s10 + $0x88] sm:$0xff]
    %v1507 = vld [vmem:[%s10 + $0x90] sm:$0xff]
    %v1508 = vld [vmem:[%s10 + $0x98] sm:$0xff]
    %v1509 = vld [vmem:[%s10 + $0xa0] sm:$0xff]
    %v1510 = vld [vmem:[%s10 + $0xa8] sm:$0xff]
    %v1511 = vld [vmem:[%s10 + $0xb0] sm:$0xff]
    %v1512 = vld [vmem:[%s10 + $0xb8] sm:$0xff]
    %v1513 = vld [vmem:[%s10 + $0xc0] sm:$0xff]
    %v1514 = vld [vmem:[%s10 + $0xc8] sm:$0xff]
    %v1515 = vld [vmem:[%s10 + $0xd0] sm:$0xff]
    %v1516 = vld [vmem:[%s10 + $0xd8] sm:$0xff]
    %v1517 = vld [vmem:[%s10 + $0xe0] sm:$0xff]
    %v1518 = vld [vmem:[%s10 + $0xe8] sm:$0xff]
    %v1519 = vld [vmem:[%s10 + $0xf0] sm:$0xff]
    %v1520 = vld [vmem:[%s10 + $0xf8] sm:$0xff]
    %v1521 = vld [vmem:[%s11] sm:$0x3]
    %v1523 = vlaneseq
    %v1524 = vshrl.u32 %v1523, 7
    %v1525 = vsub.s32 0, %v1524
    %v1526 = vrot.slane %v1521, %v1525
    %v1527 = vlaneseq
    %v1528 = vshrl.u32 %v1527, 7
    %v1529 = vsub.s32 1, %v1528
    %v1530 = vrot.slane %v1521, %v1529
    %v1565 = vunpack.c.l.b16 %v1489
    %v1566 = vunpack.c.h.b16 %v1489
    %v1567 = vunpack.c.l.b16 %v1490
    %v1568 = vunpack.c.h.b16 %v1490
    %v1569 = vunpack.c.l.b16 %v1491
    %v1570 = vunpack.c.h.b16 %v1491
    %v1571 = vunpack.c.l.b16 %v1492
    %v1572 = vunpack.c.h.b16 %v1492
    %v1573 = vunpack.c.l.b16 %v1493
    %v1574 = vunpack.c.h.b16 %v1493
    %v1575 = vunpack.c.l.b16 %v1494
    %v1576 = vunpack.c.h.b16 %v1494
    %v1577 = vunpack.c.l.b16 %v1495
    %v1578 = vunpack.c.h.b16 %v1495
    %v1579 = vunpack.c.l.b16 %v1496
    %v1580 = vunpack.c.h.b16 %v1496
    %v1581 = vunpack.c.l.b16 %v1497
    %v1582 = vunpack.c.h.b16 %v1497
    %v1583 = vunpack.c.l.b16 %v1498
    %v1584 = vunpack.c.h.b16 %v1498
    %v1585 = vunpack.c.l.b16 %v1499
    %v1586 = vunpack.c.h.b16 %v1499
    %v1587 = vunpack.c.l.b16 %v1500
    %v1588 = vunpack.c.h.b16 %v1500
    %v1589 = vunpack.c.l.b16 %v1501
    %v1590 = vunpack.c.h.b16 %v1501
    %v1591 = vunpack.c.l.b16 %v1502
    %v1592 = vunpack.c.h.b16 %v1502
    %v1593 = vunpack.c.l.b16 %v1503
    %v1594 = vunpack.c.h.b16 %v1503
    %v1595 = vunpack.c.l.b16 %v1504
    %v1596 = vunpack.c.h.b16 %v1504
    %v1597 = vunpack.c.l.b16 %v1505
    %v1598 = vunpack.c.h.b16 %v1505
    %v1599 = vunpack.c.l.b16 %v1506
    %v1600 = vunpack.c.h.b16 %v1506
    %v1601 = vunpack.c.l.b16 %v1507
    %v1602 = vunpack.c.h.b16 %v1507
    %v1603 = vunpack.c.l.b16 %v1508
    %v1604 = vunpack.c.h.b16 %v1508
    %v1605 = vunpack.c.l.b16 %v1509
    %v1606 = vunpack.c.h.b16 %v1509
    %v1607 = vunpack.c.l.b16 %v1510
    %v1608 = vunpack.c.h.b16 %v1510
    %v1609 = vunpack.c.l.b16 %v1511
    %v1610 = vunpack.c.h.b16 %v1511
    %v1611 = vunpack.c.l.b16 %v1512
    %v1612 = vunpack.c.h.b16 %v1512
    %v1613 = vunpack.c.l.b16 %v1513
    %v1614 = vunpack.c.h.b16 %v1513
    %v1615 = vunpack.c.l.b16 %v1514
    %v1616 = vunpack.c.h.b16 %v1514
    %v1617 = vunpack.c.l.b16 %v1515
    %v1618 = vunpack.c.h.b16 %v1515
    %v1619 = vunpack.c.l.b16 %v1516
    %v1620 = vunpack.c.h.b16 %v1516
    %v1621 = vunpack.c.l.b16 %v1517
    %v1622 = vunpack.c.h.b16 %v1517
    %v1623 = vunpack.c.l.b16 %v1518
    %v1624 = vunpack.c.h.b16 %v1518
    %v1625 = vunpack.c.l.b16 %v1519
    %v1626 = vunpack.c.h.b16 %v1519
    %v1627 = vunpack.c.l.b16 %v1520
    %v1628 = vunpack.c.h.b16 %v1520
    %v1629 = vpack.c.b16 %v1567, %v1565
    %v1630 = vpack.c.b16 %v1568, %v1566
    %v1631 = vpack.c.b16 %v1571, %v1569
    %v1632 = vpack.c.b16 %v1572, %v1570
    %v1633 = vpack.c.b16 %v1575, %v1573
    %v1634 = vpack.c.b16 %v1576, %v1574
    %v1635 = vpack.c.b16 %v1579, %v1577
    %v1636 = vpack.c.b16 %v1580, %v1578
    %v1637 = vpack.c.b16 %v1583, %v1581
    %v1638 = vpack.c.b16 %v1584, %v1582
    %v1639 = vpack.c.b16 %v1587, %v1585
    %v1640 = vpack.c.b16 %v1588, %v1586
    %v1641 = vpack.c.b16 %v1591, %v1589
    %v1642 = vpack.c.b16 %v1592, %v1590
    %v1643 = vpack.c.b16 %v1595, %v1593
    %v1644 = vpack.c.b16 %v1596, %v1594
    %v1645 = vpack.c.b16 %v1599, %v1597
    %v1646 = vpack.c.b16 %v1600, %v1598
    %v1647 = vpack.c.b16 %v1603, %v1601
    %v1648 = vpack.c.b16 %v1604, %v1602
    %v1649 = vpack.c.b16 %v1607, %v1605
    %v1650 = vpack.c.b16 %v1608, %v1606
    %v1651 = vpack.c.b16 %v1611, %v1609
    %v1652 = vpack.c.b16 %v1612, %v1610
    %v1653 = vpack.c.b16 %v1615, %v1613
    %v1654 = vpack.c.b16 %v1616, %v1614
    %v1655 = vpack.c.b16 %v1619, %v1617
    %v1656 = vpack.c.b16 %v1620, %v1618
    %v1657 = vpack.c.b16 %v1623, %v1621
    %v1658 = vpack.c.b16 %v1624, %v1622
    %v1659 = vpack.c.b16 %v1627, %v1625
    %v1660 = vpack.c.b16 %v1628, %v1626
    %1693 = vmatprep.subr.bf16.mxu0 %v1630
    %1694 = vmatpush1.bf16.msra.mxu0 %v1629
    %1695 = vmatprep.subr.bf16.mxu0 %v1632
    %1696 = vmatpush1.bf16.msra.mxu0 %v1631
    %1697 = vmatprep.subr.bf16.mxu0 %v1634
    %1698 = vmatpush1.bf16.msra.mxu0 %v1633
    %1699 = vmatprep.subr.bf16.mxu0 %v1636
    %1700 = vmatpush1.bf16.msra.mxu0 %v1635
    %1701 = vmatprep.subr.bf16.mxu0 %v1638
    %1702 = vmatpush1.bf16.msra.mxu0 %v1637
    %1703 = vmatprep.subr.bf16.mxu0 %v1640
    %1704 = vmatpush1.bf16.msra.mxu0 %v1639
    %1705 = vmatprep.subr.bf16.mxu0 %v1642
    %1706 = vmatpush1.bf16.msra.mxu0 %v1641
    %1707 = vmatprep.subr.bf16.mxu0 %v1644
    %1708 = vmatpush1.bf16.msra.mxu0 %v1643
    %1709 = vmatprep.subr.bf16.mxu0 %v1646
    %1710 = vmatpush1.bf16.msra.mxu0 %v1645
    %1711 = vmatprep.subr.bf16.mxu0 %v1648
    %1712 = vmatpush1.bf16.msra.mxu0 %v1647
    %1713 = vmatprep.subr.bf16.mxu0 %v1650
    %1714 = vmatpush1.bf16.msra.mxu0 %v1649
    %1715 = vmatprep.subr.bf16.mxu0 %v1652
    %1716 = vmatpush1.bf16.msra.mxu0 %v1651
    %1717 = vmatprep.subr.bf16.mxu0 %v1654
    %1718 = vmatpush1.bf16.msra.mxu0 %v1653
    %1719 = vmatprep.subr.bf16.mxu0 %v1656
    %1720 = vmatpush1.bf16.msra.mxu0 %v1655
    %1721 = vmatprep.subr.bf16.mxu0 %v1658
    %1722 = vmatpush1.bf16.msra.mxu0 %v1657
    %1723 = vmatprep.subr.bf16.mxu0 %v1660
    %1724 = vmatpush1.bf16.msra.mxu0 %v1659
    %1725 = vmatprep.mubr.bf16.mxu0 %v1474
    %1726 = vmatmul.mubr.bf16.gmra.mrb[0].mxu0 %v1473
    %v1727 = vpop.f32.mrb[0].mxu0
    %v1728 = vadd.f32 %v1526, %v1727
    %v1729 = vpop.f32.mrb[0].mxu0
    %v1730 = vadd.f32 %v1530, %v1729
    %v1731 = vpop.f32.mrb[0].mxu0
    %v1732 = vadd.f32 %v1526, %v1731
    %v1733 = vpop.f32.mrb[0].mxu0
    %v1734 = vadd.f32 %v1530, %v1733
    %1735 = vmatprep.mubr.bf16.mxu0 %v1476
    %1736 = vmatmul.mubr.bf16.gmra.mrb[0].mxu0 %v1475
    %v1737 = vpop.f32.mrb[0].mxu0
    %v1738 = vadd.f32 %v1526, %v1737
    %v1739 = vpop.f32.mrb[0].mxu0
    %v1740 = vadd.f32 %v1530, %v1739
    %v1741 = vpop.f32.mrb[0].mxu0
    %v1742 = vadd.f32 %v1526, %v1741
    %v1743 = vpop.f32.mrb[0].mxu0
    %v1744 = vadd.f32 %v1530, %v1743
    %1745 = vmatprep.mubr.bf16.mxu0 %v1478
    %1746 = vmatmul.mubr.bf16.gmra.mrb[0].mxu0 %v1477
    %v1747 = vpop.f32.mrb[0].mxu0
    %v1748 = vadd.f32 %v1526, %v1747
    %v1749 = vpop.f32.mrb[0].mxu0
    %v1750 = vadd.f32 %v1530, %v1749
    %v1751 = vpop.f32.mrb[0].mxu0
    %v1752 = vadd.f32 %v1526, %v1751
    %v1753 = vpop.f32.mrb[0].mxu0
    %v1754 = vadd.f32 %v1530, %v1753
    %1755 = vmatprep.mubr.bf16.mxu0 %v1480
    %1756 = vmatmul.mubr.bf16.gmra.mrb[0].mxu0 %v1479
    %v1757 = vpop.f32.mrb[0].mxu0
    %v1758 = vadd.f32 %v1526, %v1757
    %v1759 = vpop.f32.mrb[0].mxu0
    %v1760 = vadd.f32 %v1530, %v1759
    %v1761 = vpop.f32.mrb[0].mxu0
    %v1762 = vadd.f32 %v1526, %v1761
    %v1763 = vpop.f32.mrb[0].mxu0
    %v1764 = vadd.f32 %v1530, %v1763
    %1765 = vmatprep.mubr.bf16.mxu0 %v1482
    %1766 = vmatmul.mubr.bf16.gmra.mrb[0].mxu0 %v1481
    %v1767 = vpop.f32.mrb[0].mxu0
    %v1768 = vadd.f32 %v1526, %v1767
    %v1769 = vpop.f32.mrb[0].mxu0
    %v1770 = vadd.f32 %v1530, %v1769
    %v1771 = vpop.f32.mrb[0].mxu0
    %v1772 = vadd.f32 %v1526, %v1771
    %v1773 = vpop.f32.mrb[0].mxu0
    %v1774 = vadd.f32 %v1530, %v1773
    %1775 = vmatprep.mubr.bf16.mxu0 %v1484
    %1776 = vmatmul.mubr.bf16.gmra.mrb[0].mxu0 %v1483
    %v1777 = vpop.f32.mrb[0].mxu0
    %v1778 = vadd.f32 %v1526, %v1777
    %v1779 = vpop.f32.mrb[0].mxu0
    %v1780 = vadd.f32 %v1530, %v1779
    %v1781 = vpop.f32.mrb[0].mxu0
    %v1782 = vadd.f32 %v1526, %v1781
    %v1783 = vpop.f32.mrb[0].mxu0
    %v1784 = vadd.f32 %v1530, %v1783
    %1785 = vmatprep.mubr.bf16.mxu0 %v1486
    %1786 = vmatmul.mubr.bf16.gmra.mrb[0].mxu0 %v1485
    %v1787 = vpop.f32.mrb[0].mxu0
    %v1788 = vadd.f32 %v1526, %v1787
    %v1789 = vpop.f32.mrb[0].mxu0
    %v1790 = vadd.f32 %v1530, %v1789
    %v1791 = vpop.f32.mrb[0].mxu0
    %v1792 = vadd.f32 %v1526, %v1791
    %v1793 = vpop.f32.mrb[0].mxu0
    %v1794 = vadd.f32 %v1530, %v1793
    %1795 = vmatprep.mubr.bf16.mxu0 %v1488
    %1796 = vmatmul.mubr.bf16.gmra.mrb[0].mxu0 %v1487
    %v1797 = vpop.f32.mrb[0].mxu0
    %v1798 = vadd.f32 %v1526, %v1797
    %v1799 = vpop.f32.mrb[0].mxu0
    %v1800 = vadd.f32 %v1530, %v1799
    %v1801 = vpop.f32.mrb[0].mxu0
    %v1802 = vadd.f32 %v1526, %v1801
    %v1803 = vpop.f32.mrb[0].mxu0
    %v1804 = vadd.f32 %v1530, %v1803
    %1805 = vdwg.mxu0
    %v1806 = vmax.f32 %v1728, 0.0
    %v1807 = vmax.f32 %v1730, 0.0
    %v1808 = vmax.f32 %v1732, 0.0
    %v1809 = vmax.f32 %v1734, 0.0
    %v1810 = vmax.f32 %v1738, 0.0
    %v1811 = vmax.f32 %v1740, 0.0
    %v1812 = vmax.f32 %v1742, 0.0
    %v1813 = vmax.f32 %v1744, 0.0
    %v1814 = vmax.f32 %v1748, 0.0
    %v1815 = vmax.f32 %v1750, 0.0
    %v1816 = vmax.f32 %v1752, 0.0
    %v1817 = vmax.f32 %v1754, 0.0
    %v1818 = vmax.f32 %v1758, 0.0
    %v1819 = vmax.f32 %v1760, 0.0
    %v1820 = vmax.f32 %v1762, 0.0
    %v1821 = vmax.f32 %v1764, 0.0
    %v1822 = vmax.f32 %v1768, 0.0
    %v1823 = vmax.f32 %v1770, 0.0
    %v1824 = vmax.f32 %v1772, 0.0
    %v1825 = vmax.f32 %v1774, 0.0
    %v1826 = vmax.f32 %v1778, 0.0
    %v1827 = vmax.f32 %v1780, 0.0
    %v1828 = vmax.f32 %v1782, 0.0
    %v1829 = vmax.f32 %v1784, 0.0
    %v1830 = vmax.f32 %v1788, 0.0
    %v1831 = vmax.f32 %v1790, 0.0
    %v1832 = vmax.f32 %v1792, 0.0
    %v1833 = vmax.f32 %v1794, 0.0
    %v1834 = vmax.f32 %v1798, 0.0
    %v1835 = vmax.f32 %v1800, 0.0
    %v1836 = vmax.f32 %v1802, 0.0
    %v1837 = vmax.f32 %v1804, 0.0
    %v1838 = vpack.c.bf16 %v1808, %v1806
    %v1839 = vpack.c.bf16 %v1809, %v1807
    %v1840 = vpack.c.bf16 %v1812, %v1810
    %v1841 = vpack.c.bf16 %v1813, %v1811
    %v1842 = vpack.c.bf16 %v1816, %v1814
    %v1843 = vpack.c.bf16 %v1817, %v1815
    %v1844 = vpack.c.bf16 %v1820, %v1818
    %v1845 = vpack.c.bf16 %v1821, %v1819
    %v1846 = vpack.c.bf16 %v1824, %v1822
    %v1847 = vpack.c.bf16 %v1825, %v1823
    %v1848 = vpack.c.bf16 %v1828, %v1826
    %v1849 = vpack.c.bf16 %v1829, %v1827
    %v1850 = vpack.c.bf16 %v1832, %v1830
    %v1851 = vpack.c.bf16 %v1833, %v1831
    %v1852 = vpack.c.bf16 %v1836, %v1834
    %v1853 = vpack.c.bf16 %v1837, %v1835
    %v1854 = vld [vmem:[%s12] sm:$0xff]
    %v1855 = vld [vmem:[%s12 + $0x8] sm:$0xff]
    %v1856 = vld [vmem:[%s12 + $0x10] sm:$0xff]
    %v1857 = vld [vmem:[%s12 + $0x18] sm:$0xff]
    %v1858 = vld [vmem:[%s12 + $0x20] sm:$0xff]
    %v1859 = vld [vmem:[%s12 + $0x28] sm:$0xff]
    %v1860 = vld [vmem:[%s12 + $0x30] sm:$0xff]
    %v1861 = vld [vmem:[%s12 + $0x38] sm:$0xff]
    %v1862 = vld [vmem:[%s12 + $0x40] sm:$0xff]
    %v1863 = vld [vmem:[%s12 + $0x48] sm:$0xff]
    %v1864 = vld [vmem:[%s12 + $0x50] sm:$0xff]
    %v1865 = vld [vmem:[%s12 + $0x58] sm:$0xff]
    %v1866 = vld [vmem:[%s12 + $0x60] sm:$0xff]
    %v1867 = vld [vmem:[%s12 + $0x68] sm:$0xff]
    %v1868 = vld [vmem:[%s12 + $0x70] sm:$0xff]
    %v1869 = vld [vmem:[%s12 + $0x78] sm:$0xff]
    %v1870 = vld [vmem:[%s12 + $0x80] sm:$0xff]
    %v1871 = vld [vmem:[%s12 + $0x88] sm:$0xff]
    %v1872 = vld [vmem:[%s12 + $0x90] sm:$0xff]
    %v1873 = vld [vmem:[%s12 + $0x98] sm:$0xff]
    %v1874 = vld [vmem:[%s12 + $0xa0] sm:$0xff]
    %v1875 = vld [vmem:[%s12 + $0xa8] sm:$0xff]
    %v1876 = vld [vmem:[%s12 + $0xb0] sm:$0xff]
    %v1877 = vld [vmem:[%s12 + $0xb8] sm:$0xff]
    %v1878 = vld [vmem:[%s12 + $0xc0] sm:$0xff]
    %v1879 = vld [vmem:[%s12 + $0xc8] sm:$0xff]
    %v1880 = vld [vmem:[%s12 + $0xd0] sm:$0xff]
    %v1881 = vld [vmem:[%s12 + $0xd8] sm:$0xff]
    %v1882 = vld [vmem:[%s12 + $0xe0] sm:$0xff]
    %v1883 = vld [vmem:[%s12 + $0xe8] sm:$0xff]
    %v1884 = vld [vmem:[%s12 + $0xf0] sm:$0xff]
    %v1885 = vld [vmem:[%s12 + $0xf8] sm:$0xff]
    %v1886 = vld [vmem:[#allocation2] sm:$0xff]
    %v1887 = vld [vmem:[#allocation2 + $0x8] sm:$0xff]
    %v1888 = vld [vmem:[#allocation2 + $0x10] sm:$0xff]
    %v1889 = vld [vmem:[#allocation2 + $0x18] sm:$0xff]
    %v1890 = vld [vmem:[#allocation2 + $0x20] sm:$0xff]
    %v1891 = vld [vmem:[#allocation2 + $0x28] sm:$0xff]
    %v1892 = vld [vmem:[#allocation2 + $0x30] sm:$0xff]
    %v1893 = vld [vmem:[#allocation2 + $0x38] sm:$0xff]
    %v1902 = vunpack.c.l.b16 %v1886
    %v1903 = vunpack.c.h.b16 %v1886
    %v1904 = vunpack.c.l.b16 %v1887
    %v1905 = vunpack.c.h.b16 %v1887
    %v1906 = vunpack.c.l.b16 %v1888
    %v1907 = vunpack.c.h.b16 %v1888
    %v1908 = vunpack.c.l.b16 %v1889
    %v1909 = vunpack.c.h.b16 %v1889
    %v1910 = vunpack.c.l.b16 %v1890
    %v1911 = vunpack.c.h.b16 %v1890
    %v1912 = vunpack.c.l.b16 %v1891
    %v1913 = vunpack.c.h.b16 %v1891
    %v1914 = vunpack.c.l.b16 %v1892
    %v1915 = vunpack.c.h.b16 %v1892
    %v1916 = vunpack.c.l.b16 %v1893
    %v1917 = vunpack.c.h.b16 %v1893
    %v1918 = vpack.c.b16 %v1904, %v1902
    %v1919 = vpack.c.b16 %v1905, %v1903
    %v1920 = vpack.c.b16 %v1908, %v1906
    %v1921 = vpack.c.b16 %v1909, %v1907
    %v1922 = vpack.c.b16 %v1912, %v1910
    %v1923 = vpack.c.b16 %v1913, %v1911
    %v1924 = vpack.c.b16 %v1916, %v1914
    %v1925 = vpack.c.b16 %v1917, %v1915
    %1934 = vmatprep.subr.bf16.mxu0 %v1919
    %1935 = vmatpush1.bf16.msra.mxu0 %v1918
    %1936 = vmatprep.subr.bf16.mxu0 %v1921
    %1937 = vmatpush1.bf16.msra.mxu0 %v1920
    %1938 = vmatprep.subr.bf16.mxu0 %v1923
    %1939 = vmatpush1.bf16.msra.mxu0 %v1922
    %1940 = vmatprep.subr.bf16.mxu0 %v1925
    %1941 = vmatpush1.bf16.msra.mxu0 %v1924
    %1942 = vmatprep.subr.bf16.mxu0 0
    %1943 = vmatpush1.bf16.msra.mxu0 0
    %1944 = vmatprep.subr.bf16.mxu0 0
    %1945 = vmatpush1.bf16.msra.mxu0 0
    %1946 = vmatprep.subr.bf16.mxu0 0
    %1947 = vmatpush1.bf16.msra.mxu0 0
    %1948 = vmatprep.subr.bf16.mxu0 0
    %1949 = vmatpush1.bf16.msra.mxu0 0
    %1950 = vmatprep.subr.bf16.mxu0 0
    %1951 = vmatpush1.bf16.msra.mxu0 0
    %1952 = vmatprep.subr.bf16.mxu0 0
    %1953 = vmatpush1.bf16.msra.mxu0 0
    %1954 = vmatprep.subr.bf16.mxu0 0
    %1955 = vmatpush1.bf16.msra.mxu0 0
    %1956 = vmatprep.subr.bf16.mxu0 0
    %1957 = vmatpush1.bf16.msra.mxu0 0
    %1958 = vmatprep.subr.bf16.mxu0 0
    %1959 = vmatpush1.bf16.msra.mxu0 0
    %1960 = vmatprep.subr.bf16.mxu0 0
    %1961 = vmatpush1.bf16.msra.mxu0 0
    %1962 = vmatprep.subr.bf16.mxu0 0
    %1963 = vmatpush1.bf16.msra.mxu0 0
    %1964 = vmatprep.subr.bf16.mxu0 0
    %1965 = vmatpush1.bf16.msra.mxu0 0
    %1966 = vmatprep.mubr.bf16.mxu0 0
    %1967 = vmatmul.mubr.bf16.gmra.mrb[0].mxu0 %v210
    %v1968 = vpop.f32.mrb[0].mxu0
    %v1969 = vadd.f32 0.0, %v1968
    %v1970 = vpop.f32.mrb[0].mxu0
    %v1971 = vadd.f32 0.0, %v1970
    %v1972 = vpop.f32.mrb[0].mxu0
    %v1973 = vadd.f32 0.0, %v1972
    %v1974 = vpop.f32.mrb[0].mxu0
    %v1975 = vadd.f32 0.0, %v1974
    %1976 = vmatprep.mubr.bf16.mxu0 0
    %1977 = vmatmul.mubr.bf16.gmra.mrb[0].mxu0 %v213
    %v1978 = vpop.f32.mrb[0].mxu0
    %v1979 = vadd.f32 0.0, %v1978
    %v1980 = vpop.f32.mrb[0].mxu0
    %v1981 = vadd.f32 0.0, %v1980
    %v1982 = vpop.f32.mrb[0].mxu0
    %v1983 = vadd.f32 0.0, %v1982
    %v1984 = vpop.f32.mrb[0].mxu0
    %v1985 = vadd.f32 0.0, %v1984
    %1986 = vmatprep.mubr.bf16.mxu0 0
    %1987 = vmatmul.mubr.bf16.gmra.mrb[0].mxu0 %v216
    %v1988 = vpop.f32.mrb[0].mxu0
    %v1989 = vadd.f32 0.0, %v1988
    %v1990 = vpop.f32.mrb[0].mxu0
    %v1991 = vadd.f32 0.0, %v1990
    %v1992 = vpop.f32.mrb[0].mxu0
    %v1993 = vadd.f32 0.0, %v1992
    %v1994 = vpop.f32.mrb[0].mxu0
    %v1995 = vadd.f32 0.0, %v1994
    %1996 = vmatprep.mubr.bf16.mxu0 0
    %1997 = vmatmul.mubr.bf16.gmra.mrb[0].mxu0 %v219
    %v1998 = vpop.f32.mrb[0].mxu0
    %v1999 = vadd.f32 0.0, %v1998
    %v2000 = vpop.f32.mrb[0].mxu0
    %v2001 = vadd.f32 0.0, %v2000
    %v2002 = vpop.f32.mrb[0].mxu0
    %v2003 = vadd.f32 0.0, %v2002
    %v2004 = vpop.f32.mrb[0].mxu0
    %v2005 = vadd.f32 0.0, %v2004
    %2006 = vmatprep.mubr.bf16.mxu0 0
    %2007 = vmatmul.mubr.bf16.gmra.mrb[0].mxu0 %v222
    %v2008 = vpop.f32.mrb[0].mxu0
    %v2009 = vadd.f32 0.0, %v2008
    %v2010 = vpop.f32.mrb[0].mxu0
    %v2011 = vadd.f32 0.0, %v2010
    %v2012 = vpop.f32.mrb[0].mxu0
    %v2013 = vadd.f32 0.0, %v2012
    %v2014 = vpop.f32.mrb[0].mxu0
    %v2015 = vadd.f32 0.0, %v2014
    %2016 = vmatprep.mubr.bf16.mxu0 0
    %2017 = vmatmul.mubr.bf16.gmra.mrb[0].mxu0 %v225
    %v2018 = vpop.f32.mrb[0].mxu0
    %v2019 = vadd.f32 0.0, %v2018
    %v2020 = vpop.f32.mrb[0].mxu0
    %v2021 = vadd.f32 0.0, %v2020
    %v2022 = vpop.f32.mrb[0].mxu0
    %v2023 = vadd.f32 0.0, %v2022
    %v2024 = vpop.f32.mrb[0].mxu0
    %v2025 = vadd.f32 0.0, %v2024
    %2026 = vmatprep.mubr.bf16.mxu0 0
    %2027 = vmatmul.mubr.bf16.gmra.mrb[0].mxu0 %v228
    %v2028 = vpop.f32.mrb[0].mxu0
    %v2029 = vadd.f32 0.0, %v2028
    %v2030 = vpop.f32.mrb[0].mxu0
    %v2031 = vadd.f32 0.0, %v2030
    %v2032 = vpop.f32.mrb[0].mxu0
    %v2033 = vadd.f32 0.0, %v2032
    %v2034 = vpop.f32.mrb[0].mxu0
    %v2035 = vadd.f32 0.0, %v2034
    %2036 = vmatprep.mubr.bf16.mxu0 0
    %2037 = vmatmul.mubr.bf16.gmra.mrb[0].mxu0 %v231
    %v2038 = vpop.f32.mrb[0].mxu0
    %v2039 = vadd.f32 0.0, %v2038
    %v2040 = vpop.f32.mrb[0].mxu0
    %v2041 = vadd.f32 0.0, %v2040
    %v2042 = vpop.f32.mrb[0].mxu0
    %v2043 = vadd.f32 0.0, %v2042
    %v2044 = vpop.f32.mrb[0].mxu0
    %v2045 = vadd.f32 0.0, %v2044
    %2046 = vdwg.mxu0
    %v2079 = vunpack.c.l.b16 %v1854
    %v2080 = vunpack.c.h.b16 %v1854
    %v2081 = vunpack.c.l.b16 %v1855
    %v2082 = vunpack.c.h.b16 %v1855
    %v2083 = vunpack.c.l.b16 %v1856
    %v2084 = vunpack.c.h.b16 %v1856
    %v2085 = vunpack.c.l.b16 %v1857
    %v2086 = vunpack.c.h.b16 %v1857
    %v2087 = vunpack.c.l.b16 %v1858
    %v2088 = vunpack.c.h.b16 %v1858
    %v2089 = vunpack.c.l.b16 %v1859
    %v2090 = vunpack.c.h.b16 %v1859
    %v2091 = vunpack.c.l.b16 %v1860
    %v2092 = vunpack.c.h.b16 %v1860
    %v2093 = vunpack.c.l.b16 %v1861
    %v2094 = vunpack.c.h.b16 %v1861
    %v2095 = vunpack.c.l.b16 %v1862
    %v2096 = vunpack.c.h.b16 %v1862
    %v2097 = vunpack.c.l.b16 %v1863
    %v2098 = vunpack.c.h.b16 %v1863
    %v2099 = vunpack.c.l.b16 %v1864
    %v2100 = vunpack.c.h.b16 %v1864
    %v2101 = vunpack.c.l.b16 %v1865
    %v2102 = vunpack.c.h.b16 %v1865
    %v2103 = vunpack.c.l.b16 %v1866
    %v2104 = vunpack.c.h.b16 %v1866
    %v2105 = vunpack.c.l.b16 %v1867
    %v2106 = vunpack.c.h.b16 %v1867
    %v2107 = vunpack.c.l.b16 %v1868
    %v2108 = vunpack.c.h.b16 %v1868
    %v2109 = vunpack.c.l.b16 %v1869
    %v2110 = vunpack.c.h.b16 %v1869
    %v2111 = vunpack.c.l.b16 %v1870
    %v2112 = vunpack.c.h.b16 %v1870
    %v2113 = vunpack.c.l.b16 %v1871
    %v2114 = vunpack.c.h.b16 %v1871
    %v2115 = vunpack.c.l.b16 %v1872
    %v2116 = vunpack.c.h.b16 %v1872
    %v2117 = vunpack.c.l.b16 %v1873
    %v2118 = vunpack.c.h.b16 %v1873
    %v2119 = vunpack.c.l.b16 %v1874
    %v2120 = vunpack.c.h.b16 %v1874
    %v2121 = vunpack.c.l.b16 %v1875
    %v2122 = vunpack.c.h.b16 %v1875
    %v2123 = vunpack.c.l.b16 %v1876
    %v2124 = vunpack.c.h.b16 %v1876
    %v2125 = vunpack.c.l.b16 %v1877
    %v2126 = vunpack.c.h.b16 %v1877
    %v2127 = vunpack.c.l.b16 %v1878
    %v2128 = vunpack.c.h.b16 %v1878
    %v2129 = vunpack.c.l.b16 %v1879
    %v2130 = vunpack.c.h.b16 %v1879
    %v2131 = vunpack.c.l.b16 %v1880
    %v2132 = vunpack.c.h.b16 %v1880
    %v2133 = vunpack.c.l.b16 %v1881
    %v2134 = vunpack.c.h.b16 %v1881
    %v2135 = vunpack.c.l.b16 %v1882
    %v2136 = vunpack.c.h.b16 %v1882
    %v2137 = vunpack.c.l.b16 %v1883
    %v2138 = vunpack.c.h.b16 %v1883
    %v2139 = vunpack.c.l.b16 %v1884
    %v2140 = vunpack.c.h.b16 %v1884
    %v2141 = vunpack.c.l.b16 %v1885
    %v2142 = vunpack.c.h.b16 %v1885
    %v2143 = vpack.c.b16 %v2081, %v2079
    %v2144 = vpack.c.b16 %v2082, %v2080
    %v2145 = vpack.c.b16 %v2085, %v2083
    %v2146 = vpack.c.b16 %v2086, %v2084
    %v2147 = vpack.c.b16 %v2089, %v2087
    %v2148 = vpack.c.b16 %v2090, %v2088
    %v2149 = vpack.c.b16 %v2093, %v2091
    %v2150 = vpack.c.b16 %v2094, %v2092
    %v2151 = vpack.c.b16 %v2097, %v2095
    %v2152 = vpack.c.b16 %v2098, %v2096
    %v2153 = vpack.c.b16 %v2101, %v2099
    %v2154 = vpack.c.b16 %v2102, %v2100
    %v2155 = vpack.c.b16 %v2105, %v2103
    %v2156 = vpack.c.b16 %v2106, %v2104
    %v2157 = vpack.c.b16 %v2109, %v2107
    %v2158 = vpack.c.b16 %v2110, %v2108
    %v2159 = vpack.c.b16 %v2113, %v2111
    %v2160 = vpack.c.b16 %v2114, %v2112
    %v2161 = vpack.c.b16 %v2117, %v2115
    %v2162 = vpack.c.b16 %v2118, %v2116
    %v2163 = vpack.c.b16 %v2121, %v2119
    %v2164 = vpack.c.b16 %v2122, %v2120
    %v2165 = vpack.c.b16 %v2125, %v2123
    %v2166 = vpack.c.b16 %v2126, %v2124
    %v2167 = vpack.c.b16 %v2129, %v2127
    %v2168 = vpack.c.b16 %v2130, %v2128
    %v2169 = vpack.c.b16 %v2133, %v2131
    %v2170 = vpack.c.b16 %v2134, %v2132
    %v2171 = vpack.c.b16 %v2137, %v2135
    %v2172 = vpack.c.b16 %v2138, %v2136
    %v2173 = vpack.c.b16 %v2141, %v2139
    %v2174 = vpack.c.b16 %v2142, %v2140
    %2207 = vmatprep.subr.bf16.mxu0 %v2144
    %2208 = vmatpush1.bf16.msra.mxu0 %v2143
    %2209 = vmatprep.subr.bf16.mxu0 %v2146
    %2210 = vmatpush1.bf16.msra.mxu0 %v2145
    %2211 = vmatprep.subr.bf16.mxu0 %v2148
    %2212 = vmatpush1.bf16.msra.mxu0 %v2147
    %2213 = vmatprep.subr.bf16.mxu0 %v2150
    %2214 = vmatpush1.bf16.msra.mxu0 %v2149
    %2215 = vmatprep.subr.bf16.mxu0 %v2152
    %2216 = vmatpush1.bf16.msra.mxu0 %v2151
    %2217 = vmatprep.subr.bf16.mxu0 %v2154
    %2218 = vmatpush1.bf16.msra.mxu0 %v2153
    %2219 = vmatprep.subr.bf16.mxu0 %v2156
    %2220 = vmatpush1.bf16.msra.mxu0 %v2155
    %2221 = vmatprep.subr.bf16.mxu0 %v2158
    %2222 = vmatpush1.bf16.msra.mxu0 %v2157
    %2223 = vmatprep.subr.bf16.mxu0 %v2160
    %2224 = vmatpush1.bf16.msra.mxu0 %v2159
    %2225 = vmatprep.subr.bf16.mxu0 %v2162
    %2226 = vmatpush1.bf16.msra.mxu0 %v2161
    %2227 = vmatprep.subr.bf16.mxu0 %v2164
    %2228 = vmatpush1.bf16.msra.mxu0 %v2163
    %2229 = vmatprep.subr.bf16.mxu0 %v2166
    %2230 = vmatpush1.bf16.msra.mxu0 %v2165
    %2231 = vmatprep.subr.bf16.mxu0 %v2168
    %2232 = vmatpush1.bf16.msra.mxu0 %v2167
    %2233 = vmatprep.subr.bf16.mxu0 %v2170
    %2234 = vmatpush1.bf16.msra.mxu0 %v2169
    %2235 = vmatprep.subr.bf16.mxu0 %v2172
    %2236 = vmatpush1.bf16.msra.mxu0 %v2171
    %2237 = vmatprep.subr.bf16.mxu0 %v2174
    %2238 = vmatpush1.bf16.msra.mxu0 %v2173
    %2239 = vmatprep.mubr.bf16.mxu0 %v1839
    %2240 = vmatmul.mubr.bf16.gmra.mrb[0].mxu0 %v1838
    %v2241 = vpop.f32.mrb[0].mxu0
    %v2242 = vadd.f32 %v1969, %v2241
    %v2243 = vpop.f32.mrb[0].mxu0
    %v2244 = vadd.f32 %v1971, %v2243
    %v2245 = vpop.f32.mrb[0].mxu0
    %v2246 = vadd.f32 %v1973, %v2245
    %v2247 = vpop.f32.mrb[0].mxu0
    %v2248 = vadd.f32 %v1975, %v2247
    %2249 = vmatprep.mubr.bf16.mxu0 %v1841
    %2250 = vmatmul.mubr.bf16.gmra.mrb[0].mxu0 %v1840
    %v2251 = vpop.f32.mrb[0].mxu0
    %v2252 = vadd.f32 %v1979, %v2251
    %v2253 = vpop.f32.mrb[0].mxu0
    %v2254 = vadd.f32 %v1981, %v2253
    %v2255 = vpop.f32.mrb[0].mxu0
    %v2256 = vadd.f32 %v1983, %v2255
    %v2257 = vpop.f32.mrb[0].mxu0
    %v2258 = vadd.f32 %v1985, %v2257
    %2259 = vmatprep.mubr.bf16.mxu0 %v1843
    %2260 = vmatmul.mubr.bf16.gmra.mrb[0].mxu0 %v1842
    %v2261 = vpop.f32.mrb[0].mxu0
    %v2262 = vadd.f32 %v1989, %v2261
    %v2263 = vpop.f32.mrb[0].mxu0
    %v2264 = vadd.f32 %v1991, %v2263
    %v2265 = vpop.f32.mrb[0].mxu0
    %v2266 = vadd.f32 %v1993, %v2265
    %v2267 = vpop.f32.mrb[0].mxu0
    %v2268 = vadd.f32 %v1995, %v2267
    %2269 = vmatprep.mubr.bf16.mxu0 %v1845
    %2270 = vmatmul.mubr.bf16.gmra.mrb[0].mxu0 %v1844
    %v2271 = vpop.f32.mrb[0].mxu0
    %v2272 = vadd.f32 %v1999, %v2271
    %v2273 = vpop.f32.mrb[0].mxu0
    %v2274 = vadd.f32 %v2001, %v2273
    %v2275 = vpop.f32.mrb[0].mxu0
    %v2276 = vadd.f32 %v2003, %v2275
    %v2277 = vpop.f32.mrb[0].mxu0
    %v2278 = vadd.f32 %v2005, %v2277
    %2279 = vmatprep.mubr.bf16.mxu0 %v1847
    %2280 = vmatmul.mubr.bf16.gmra.mrb[0].mxu0 %v1846
    %v2281 = vpop.f32.mrb[0].mxu0
    %v2282 = vadd.f32 %v2009, %v2281
    %v2283 = vpop.f32.mrb[0].mxu0
    %v2284 = vadd.f32 %v2011, %v2283
    %v2285 = vpop.f32.mrb[0].mxu0
    %v2286 = vadd.f32 %v2013, %v2285
    %v2287 = vpop.f32.mrb[0].mxu0
    %v2288 = vadd.f32 %v2015, %v2287
    %2289 = vmatprep.mubr.bf16.mxu0 %v1849
    %2290 = vmatmul.mubr.bf16.gmra.mrb[0].mxu0 %v1848
    %v2291 = vpop.f32.mrb[0].mxu0
    %v2292 = vadd.f32 %v2019, %v2291
    %v2293 = vpop.f32.mrb[0].mxu0
    %v2294 = vadd.f32 %v2021, %v2293
    %v2295 = vpop.f32.mrb[0].mxu0
    %v2296 = vadd.f32 %v2023, %v2295
    %v2297 = vpop.f32.mrb[0].mxu0
    %v2298 = vadd.f32 %v2025, %v2297
    %2299 = vmatprep.mubr.bf16.mxu0 %v1851
    %2300 = vmatmul.mubr.bf16.gmra.mrb[0].mxu0 %v1850
    %v2301 = vpop.f32.mrb[0].mxu0
    %v2302 = vadd.f32 %v2029, %v2301
    %v2303 = vpop.f32.mrb[0].mxu0
    %v2304 = vadd.f32 %v2031, %v2303
    %v2305 = vpop.f32.mrb[0].mxu0
    %v2306 = vadd.f32 %v2033, %v2305
    %v2307 = vpop.f32.mrb[0].mxu0
    %v2308 = vadd.f32 %v2035, %v2307
    %2309 = vmatprep.mubr.bf16.mxu0 %v1853
    %2310 = vmatmul.mubr.bf16.gmra.mrb[0].mxu0 %v1852
    %v2311 = vpop.f32.mrb[0].mxu0
    %v2312 = vadd.f32 %v2039, %v2311
    %v2313 = vpop.f32.mrb[0].mxu0
    %v2314 = vadd.f32 %v2041, %v2313
    %v2315 = vpop.f32.mrb[0].mxu0
    %v2316 = vadd.f32 %v2043, %v2315
    %v2317 = vpop.f32.mrb[0].mxu0
    %v2318 = vadd.f32 %v2045, %v2317
    %2319 = vdwg.mxu0
    %v2320 = vld [vmem:[%s14] sm:$0x3]
    %v2322 = vlaneseq
    %v2323 = vshrl.u32 %v2322, 7
    %v2324 = vsub.s32 0, %v2323
    %v2325 = vrot.slane %v2320, %v2324
    %v2326 = vlaneseq
    %v2327 = vshrl.u32 %v2326, 7
    %v2328 = vsub.s32 1, %v2327
    %v2329 = vrot.slane %v2320, %v2328
    %v2332 = vadd.f32 %v2242, %v2325
    %v2333 = vadd.f32 %v2244, %v2329
    %v2334 = vadd.f32 %v2246, %v2325
    %v2335 = vadd.f32 %v2248, %v2329
    %v2336 = vadd.f32 %v2252, %v2325
    %v2337 = vadd.f32 %v2254, %v2329
    %v2338 = vadd.f32 %v2256, %v2325
    %v2339 = vadd.f32 %v2258, %v2329
    %v2340 = vadd.f32 %v2262, %v2325
    %v2341 = vadd.f32 %v2264, %v2329
    %v2342 = vadd.f32 %v2266, %v2325
    %v2343 = vadd.f32 %v2268, %v2329
    %v2344 = vadd.f32 %v2272, %v2325
    %v2345 = vadd.f32 %v2274, %v2329
    %v2346 = vadd.f32 %v2276, %v2325
    %v2347 = vadd.f32 %v2278, %v2329
    %v2348 = vadd.f32 %v2282, %v2325
    %v2349 = vadd.f32 %v2284, %v2329
    %v2350 = vadd.f32 %v2286, %v2325
    %v2351 = vadd.f32 %v2288, %v2329
    %v2352 = vadd.f32 %v2292, %v2325
    %v2353 = vadd.f32 %v2294, %v2329
    %v2354 = vadd.f32 %v2296, %v2325
    %v2355 = vadd.f32 %v2298, %v2329
    %v2356 = vadd.f32 %v2302, %v2325
    %v2357 = vadd.f32 %v2304, %v2329
    %v2358 = vadd.f32 %v2306, %v2325
    %v2359 = vadd.f32 %v2308, %v2329
    %v2360 = vadd.f32 %v2312, %v2325
    %v2361 = vadd.f32 %v2314, %v2329
    %v2362 = vadd.f32 %v2316, %v2325
    %v2363 = vadd.f32 %v2318, %v2329
    %v2364 = vmax.f32 %v2332, 0.0
    %v2365 = vmax.f32 %v2333, 0.0
    %v2366 = vmax.f32 %v2334, 0.0
    %v2367 = vmax.f32 %v2335, 0.0
    %v2368 = vmax.f32 %v2336, 0.0
    %v2369 = vmax.f32 %v2337, 0.0
    %v2370 = vmax.f32 %v2338, 0.0
    %v2371 = vmax.f32 %v2339, 0.0
    %v2372 = vmax.f32 %v2340, 0.0
    %v2373 = vmax.f32 %v2341, 0.0
    %v2374 = vmax.f32 %v2342, 0.0
    %v2375 = vmax.f32 %v2343, 0.0
    %v2376 = vmax.f32 %v2344, 0.0
    %v2377 = vmax.f32 %v2345, 0.0
    %v2378 = vmax.f32 %v2346, 0.0
    %v2379 = vmax.f32 %v2347, 0.0
    %v2380 = vmax.f32 %v2348, 0.0
    %v2381 = vmax.f32 %v2349, 0.0
    %v2382 = vmax.f32 %v2350, 0.0
    %v2383 = vmax.f32 %v2351, 0.0
    %v2384 = vmax.f32 %v2352, 0.0
    %v2385 = vmax.f32 %v2353, 0.0
    %v2386 = vmax.f32 %v2354, 0.0
    %v2387 = vmax.f32 %v2355, 0.0
    %v2388 = vmax.f32 %v2356, 0.0
    %v2389 = vmax.f32 %v2357, 0.0
    %v2390 = vmax.f32 %v2358, 0.0
    %v2391 = vmax.f32 %v2359, 0.0
    %v2392 = vmax.f32 %v2360, 0.0
    %v2393 = vmax.f32 %v2361, 0.0
    %v2394 = vmax.f32 %v2362, 0.0
    %v2395 = vmax.f32 %v2363, 0.0
    %v2396 = vpack.c.bf16 %v2366, %v2364
    %v2397 = vpack.c.bf16 %v2367, %v2365
    %v2398 = vpack.c.bf16 %v2370, %v2368
    %v2399 = vpack.c.bf16 %v2371, %v2369
    %v2400 = vpack.c.bf16 %v2374, %v2372
    %v2401 = vpack.c.bf16 %v2375, %v2373
    %v2402 = vpack.c.bf16 %v2378, %v2376
    %v2403 = vpack.c.bf16 %v2379, %v2377
    %v2404 = vpack.c.bf16 %v2382, %v2380
    %v2405 = vpack.c.bf16 %v2383, %v2381
    %v2406 = vpack.c.bf16 %v2386, %v2384
    %v2407 = vpack.c.bf16 %v2387, %v2385
    %v2408 = vpack.c.bf16 %v2390, %v2388
    %v2409 = vpack.c.bf16 %v2391, %v2389
    %v2410 = vpack.c.bf16 %v2394, %v2392
    %v2411 = vpack.c.bf16 %v2395, %v2393
    %v2412 = vld [vmem:[%s15] sm:$0xff]
    %v2413 = vld [vmem:[%s15 + $0x8] sm:$0xff]
    %v2414 = vld [vmem:[%s15 + $0x10] sm:$0xff]
    %v2415 = vld [vmem:[%s15 + $0x18] sm:$0xff]
    %v2416 = vld [vmem:[%s15 + $0x20] sm:$0xff]
    %v2417 = vld [vmem:[%s15 + $0x28] sm:$0xff]
    %v2418 = vld [vmem:[%s15 + $0x30] sm:$0xff]
    %v2419 = vld [vmem:[%s15 + $0x38] sm:$0xff]
    %v2420 = vld [vmem:[%s15 + $0x40] sm:$0xff]
    %v2421 = vld [vmem:[%s15 + $0x48] sm:$0xff]
    %v2422 = vld [vmem:[%s15 + $0x50] sm:$0xff]
    %v2423 = vld [vmem:[%s15 + $0x58] sm:$0xff]
    %v2424 = vld [vmem:[%s15 + $0x60] sm:$0xff]
    %v2425 = vld [vmem:[%s15 + $0x68] sm:$0xff]
    %v2426 = vld [vmem:[%s15 + $0x70] sm:$0xff]
    %v2427 = vld [vmem:[%s15 + $0x78] sm:$0xff]
    %v2428 = vld [vmem:[%s15 + $0x80] sm:$0xff]
    %v2429 = vld [vmem:[%s15 + $0x88] sm:$0xff]
    %v2430 = vld [vmem:[%s15 + $0x90] sm:$0xff]
    %v2431 = vld [vmem:[%s15 + $0x98] sm:$0xff]
    %v2432 = vld [vmem:[%s15 + $0xa0] sm:$0xff]
    %v2433 = vld [vmem:[%s15 + $0xa8] sm:$0xff]
    %v2434 = vld [vmem:[%s15 + $0xb0] sm:$0xff]
    %v2435 = vld [vmem:[%s15 + $0xb8] sm:$0xff]
    %v2436 = vld [vmem:[%s15 + $0xc0] sm:$0xff]
    %v2437 = vld [vmem:[%s15 + $0xc8] sm:$0xff]
    %v2438 = vld [vmem:[%s15 + $0xd0] sm:$0xff]
    %v2439 = vld [vmem:[%s15 + $0xd8] sm:$0xff]
    %v2440 = vld [vmem:[%s15 + $0xe0] sm:$0xff]
    %v2441 = vld [vmem:[%s15 + $0xe8] sm:$0xff]
    %v2442 = vld [vmem:[%s15 + $0xf0] sm:$0xff]
    %v2443 = vld [vmem:[%s15 + $0xf8] sm:$0xff]
    %v2444 = vld [vmem:[%s16] sm:$0x3]
    %v2446 = vlaneseq
    %v2447 = vshrl.u32 %v2446, 7
    %v2448 = vsub.s32 0, %v2447
    %v2449 = vrot.slane %v2444, %v2448
    %v2450 = vlaneseq
    %v2451 = vshrl.u32 %v2450, 7
    %v2452 = vsub.s32 1, %v2451
    %v2453 = vrot.slane %v2444, %v2452
    %v2488 = vunpack.c.l.b16 %v2412
    %v2489 = vunpack.c.h.b16 %v2412
    %v2490 = vunpack.c.l.b16 %v2413
    %v2491 = vunpack.c.h.b16 %v2413
    %v2492 = vunpack.c.l.b16 %v2414
    %v2493 = vunpack.c.h.b16 %v2414
    %v2494 = vunpack.c.l.b16 %v2415
    %v2495 = vunpack.c.h.b16 %v2415
    %v2496 = vunpack.c.l.b16 %v2416
    %v2497 = vunpack.c.h.b16 %v2416
    %v2498 = vunpack.c.l.b16 %v2417
    %v2499 = vunpack.c.h.b16 %v2417
    %v2500 = vunpack.c.l.b16 %v2418
    %v2501 = vunpack.c.h.b16 %v2418
    %v2502 = vunpack.c.l.b16 %v2419
    %v2503 = vunpack.c.h.b16 %v2419
    %v2504 = vunpack.c.l.b16 %v2420
    %v2505 = vunpack.c.h.b16 %v2420
    %v2506 = vunpack.c.l.b16 %v2421
    %v2507 = vunpack.c.h.b16 %v2421
    %v2508 = vunpack.c.l.b16 %v2422
    %v2509 = vunpack.c.h.b16 %v2422
    %v2510 = vunpack.c.l.b16 %v2423
    %v2511 = vunpack.c.h.b16 %v2423
    %v2512 = vunpack.c.l.b16 %v2424
    %v2513 = vunpack.c.h.b16 %v2424
    %v2514 = vunpack.c.l.b16 %v2425
    %v2515 = vunpack.c.h.b16 %v2425
    %v2516 = vunpack.c.l.b16 %v2426
    %v2517 = vunpack.c.h.b16 %v2426
    %v2518 = vunpack.c.l.b16 %v2427
    %v2519 = vunpack.c.h.b16 %v2427
    %v2520 = vunpack.c.l.b16 %v2428
    %v2521 = vunpack.c.h.b16 %v2428
    %v2522 = vunpack.c.l.b16 %v2429
    %v2523 = vunpack.c.h.b16 %v2429
    %v2524 = vunpack.c.l.b16 %v2430
    %v2525 = vunpack.c.h.b16 %v2430
    %v2526 = vunpack.c.l.b16 %v2431
    %v2527 = vunpack.c.h.b16 %v2431
    %v2528 = vunpack.c.l.b16 %v2432
    %v2529 = vunpack.c.h.b16 %v2432
    %v2530 = vunpack.c.l.b16 %v2433
    %v2531 = vunpack.c.h.b16 %v2433
    %v2532 = vunpack.c.l.b16 %v2434
    %v2533 = vunpack.c.h.b16 %v2434
    %v2534 = vunpack.c.l.b16 %v2435
    %v2535 = vunpack.c.h.b16 %v2435
    %v2536 = vunpack.c.l.b16 %v2436
    %v2537 = vunpack.c.h.b16 %v2436
    %v2538 = vunpack.c.l.b16 %v2437
    %v2539 = vunpack.c.h.b16 %v2437
    %v2540 = vunpack.c.l.b16 %v2438
    %v2541 = vunpack.c.h.b16 %v2438
    %v2542 = vunpack.c.l.b16 %v2439
    %v2543 = vunpack.c.h.b16 %v2439
    %v2544 = vunpack.c.l.b16 %v2440
    %v2545 = vunpack.c.h.b16 %v2440
    %v2546 = vunpack.c.l.b16 %v2441
    %v2547 = vunpack.c.h.b16 %v2441
    %v2548 = vunpack.c.l.b16 %v2442
    %v2549 = vunpack.c.h.b16 %v2442
    %v2550 = vunpack.c.l.b16 %v2443
    %v2551 = vunpack.c.h.b16 %v2443
    %v2552 = vpack.c.b16 %v2490, %v2488
    %v2553 = vpack.c.b16 %v2491, %v2489
    %v2554 = vpack.c.b16 %v2494, %v2492
    %v2555 = vpack.c.b16 %v2495, %v2493
    %v2556 = vpack.c.b16 %v2498, %v2496
    %v2557 = vpack.c.b16 %v2499, %v2497
    %v2558 = vpack.c.b16 %v2502, %v2500
    %v2559 = vpack.c.b16 %v2503, %v2501
    %v2560 = vpack.c.b16 %v2506, %v2504
    %v2561 = vpack.c.b16 %v2507, %v2505
    %v2562 = vpack.c.b16 %v2510, %v2508
    %v2563 = vpack.c.b16 %v2511, %v2509
    %v2564 = vpack.c.b16 %v2514, %v2512
    %v2565 = vpack.c.b16 %v2515, %v2513
    %v2566 = vpack.c.b16 %v2518, %v2516
    %v2567 = vpack.c.b16 %v2519, %v2517
    %v2568 = vpack.c.b16 %v2522, %v2520
    %v2569 = vpack.c.b16 %v2523, %v2521
    %v2570 = vpack.c.b16 %v2526, %v2524
    %v2571 = vpack.c.b16 %v2527, %v2525
    %v2572 = vpack.c.b16 %v2530, %v2528
    %v2573 = vpack.c.b16 %v2531, %v2529
    %v2574 = vpack.c.b16 %v2534, %v2532
    %v2575 = vpack.c.b16 %v2535, %v2533
    %v2576 = vpack.c.b16 %v2538, %v2536
    %v2577 = vpack.c.b16 %v2539, %v2537
    %v2578 = vpack.c.b16 %v2542, %v2540
    %v2579 = vpack.c.b16 %v2543, %v2541
    %v2580 = vpack.c.b16 %v2546, %v2544
    %v2581 = vpack.c.b16 %v2547, %v2545
    %v2582 = vpack.c.b16 %v2550, %v2548
    %v2583 = vpack.c.b16 %v2551, %v2549
    %2616 = vmatprep.subr.bf16.mxu0 %v2553
    %2617 = vmatpush1.bf16.msra.mxu0 %v2552
    %2618 = vmatprep.subr.bf16.mxu0 %v2555
    %2619 = vmatpush1.bf16.msra.mxu0 %v2554
    %2620 = vmatprep.subr.bf16.mxu0 %v2557
    %2621 = vmatpush1.bf16.msra.mxu0 %v2556
    %2622 = vmatprep.subr.bf16.mxu0 %v2559
    %2623 = vmatpush1.bf16.msra.mxu0 %v2558
    %2624 = vmatprep.subr.bf16.mxu0 %v2561
    %2625 = vmatpush1.bf16.msra.mxu0 %v2560
    %2626 = vmatprep.subr.bf16.mxu0 %v2563
    %2627 = vmatpush1.bf16.msra.mxu0 %v2562
    %2628 = vmatprep.subr.bf16.mxu0 %v2565
    %2629 = vmatpush1.bf16.msra.mxu0 %v2564
    %2630 = vmatprep.subr.bf16.mxu0 %v2567
    %2631 = vmatpush1.bf16.msra.mxu0 %v2566
    %2632 = vmatprep.subr.bf16.mxu0 %v2569
    %2633 = vmatpush1.bf16.msra.mxu0 %v2568
    %2634 = vmatprep.subr.bf16.mxu0 %v2571
    %2635 = vmatpush1.bf16.msra.mxu0 %v2570
    %2636 = vmatprep.subr.bf16.mxu0 %v2573
    %2637 = vmatpush1.bf16.msra.mxu0 %v2572
    %2638 = vmatprep.subr.bf16.mxu0 %v2575
    %2639 = vmatpush1.bf16.msra.mxu0 %v2574
    %2640 = vmatprep.subr.bf16.mxu0 %v2577
    %2641 = vmatpush1.bf16.msra.mxu0 %v2576
    %2642 = vmatprep.subr.bf16.mxu0 %v2579
    %2643 = vmatpush1.bf16.msra.mxu0 %v2578
    %2644 = vmatprep.subr.bf16.mxu0 %v2581
    %2645 = vmatpush1.bf16.msra.mxu0 %v2580
    %2646 = vmatprep.subr.bf16.mxu0 %v2583
    %2647 = vmatpush1.bf16.msra.mxu0 %v2582
    %2648 = vmatprep.mubr.bf16.mxu0 %v2397
    %2649 = vmatmul.mubr.bf16.gmra.mrb[0].mxu0 %v2396
    %v2650 = vpop.f32.mrb[0].mxu0
    %v2651 = vadd.f32 %v2449, %v2650
    %v2652 = vpop.f32.mrb[0].mxu0
    %v2653 = vadd.f32 %v2453, %v2652
    %v2654 = vpop.f32.mrb[0].mxu0
    %v2655 = vadd.f32 %v2449, %v2654
    %v2656 = vpop.f32.mrb[0].mxu0
    %v2657 = vadd.f32 %v2453, %v2656
    %2658 = vmatprep.mubr.bf16.mxu0 %v2399
    %2659 = vmatmul.mubr.bf16.gmra.mrb[0].mxu0 %v2398
    %v2660 = vpop.f32.mrb[0].mxu0
    %v2661 = vadd.f32 %v2449, %v2660
    %v2662 = vpop.f32.mrb[0].mxu0
    %v2663 = vadd.f32 %v2453, %v2662
    %v2664 = vpop.f32.mrb[0].mxu0
    %v2665 = vadd.f32 %v2449, %v2664
    %v2666 = vpop.f32.mrb[0].mxu0
    %v2667 = vadd.f32 %v2453, %v2666
    %2668 = vmatprep.mubr.bf16.mxu0 %v2401
    %2669 = vmatmul.mubr.bf16.gmra.mrb[0].mxu0 %v2400
    %v2670 = vpop.f32.mrb[0].mxu0
    %v2671 = vadd.f32 %v2449, %v2670
    %v2672 = vpop.f32.mrb[0].mxu0
    %v2673 = vadd.f32 %v2453, %v2672
    %v2674 = vpop.f32.mrb[0].mxu0
    %v2675 = vadd.f32 %v2449, %v2674
    %v2676 = vpop.f32.mrb[0].mxu0
    %v2677 = vadd.f32 %v2453, %v2676
    %2678 = vmatprep.mubr.bf16.mxu0 %v2403
    %2679 = vmatmul.mubr.bf16.gmra.mrb[0].mxu0 %v2402
    %v2680 = vpop.f32.mrb[0].mxu0
    %v2681 = vadd.f32 %v2449, %v2680
    %v2682 = vpop.f32.mrb[0].mxu0
    %v2683 = vadd.f32 %v2453, %v2682
    %v2684 = vpop.f32.mrb[0].mxu0
    %v2685 = vadd.f32 %v2449, %v2684
    %v2686 = vpop.f32.mrb[0].mxu0
    %v2687 = vadd.f32 %v2453, %v2686
    %2688 = vmatprep.mubr.bf16.mxu0 %v2405
    %2689 = vmatmul.mubr.bf16.gmra.mrb[0].mxu0 %v2404
    %v2690 = vpop.f32.mrb[0].mxu0
    %v2691 = vadd.f32 %v2449, %v2690
    %v2692 = vpop.f32.mrb[0].mxu0
    %v2693 = vadd.f32 %v2453, %v2692
    %v2694 = vpop.f32.mrb[0].mxu0
    %v2695 = vadd.f32 %v2449, %v2694
    %v2696 = vpop.f32.mrb[0].mxu0
    %v2697 = vadd.f32 %v2453, %v2696
    %2698 = vmatprep.mubr.bf16.mxu0 %v2407
    %2699 = vmatmul.mubr.bf16.gmra.mrb[0].mxu0 %v2406
    %v2700 = vpop.f32.mrb[0].mxu0
    %v2701 = vadd.f32 %v2449, %v2700
    %v2702 = vpop.f32.mrb[0].mxu0
    %v2703 = vadd.f32 %v2453, %v2702
    %v2704 = vpop.f32.mrb[0].mxu0
    %v2705 = vadd.f32 %v2449, %v2704
    %v2706 = vpop.f32.mrb[0].mxu0
    %v2707 = vadd.f32 %v2453, %v2706
    %2708 = vmatprep.mubr.bf16.mxu0 %v2409
    %2709 = vmatmul.mubr.bf16.gmra.mrb[0].mxu0 %v2408
    %v2710 = vpop.f32.mrb[0].mxu0
    %v2711 = vadd.f32 %v2449, %v2710
    %v2712 = vpop.f32.mrb[0].mxu0
    %v2713 = vadd.f32 %v2453, %v2712
    %v2714 = vpop.f32.mrb[0].mxu0
    %v2715 = vadd.f32 %v2449, %v2714
    %v2716 = vpop.f32.mrb[0].mxu0
    %v2717 = vadd.f32 %v2453, %v2716
    %2718 = vmatprep.mubr.bf16.mxu0 %v2411
    %2719 = vmatmul.mubr.bf16.gmra.mrb[0].mxu0 %v2410
    %v2720 = vpop.f32.mrb[0].mxu0
    %v2721 = vadd.f32 %v2449, %v2720
    %v2722 = vpop.f32.mrb[0].mxu0
    %v2723 = vadd.f32 %v2453, %v2722
    %v2724 = vpop.f32.mrb[0].mxu0
    %v2725 = vadd.f32 %v2449, %v2724
    %v2726 = vpop.f32.mrb[0].mxu0
    %v2727 = vadd.f32 %v2453, %v2726
    %2728 = vdwg.mxu0
    %v2729 = vmax.f32 %v2651, 0.0
    %v2730 = vmax.f32 %v2653, 0.0
    %v2731 = vmax.f32 %v2655, 0.0
    %v2732 = vmax.f32 %v2657, 0.0
    %v2733 = vmax.f32 %v2661, 0.0
    %v2734 = vmax.f32 %v2663, 0.0
    %v2735 = vmax.f32 %v2665, 0.0
    %v2736 = vmax.f32 %v2667, 0.0
    %v2737 = vmax.f32 %v2671, 0.0
    %v2738 = vmax.f32 %v2673, 0.0
    %v2739 = vmax.f32 %v2675, 0.0
    %v2740 = vmax.f32 %v2677, 0.0
    %v2741 = vmax.f32 %v2681, 0.0
    %v2742 = vmax.f32 %v2683, 0.0
    %v2743 = vmax.f32 %v2685, 0.0
    %v2744 = vmax.f32 %v2687, 0.0
    %v2745 = vmax.f32 %v2691, 0.0
    %v2746 = vmax.f32 %v2693, 0.0
    %v2747 = vmax.f32 %v2695, 0.0
    %v2748 = vmax.f32 %v2697, 0.0
    %v2749 = vmax.f32 %v2701, 0.0
    %v2750 = vmax.f32 %v2703, 0.0
    %v2751 = vmax.f32 %v2705, 0.0
    %v2752 = vmax.f32 %v2707, 0.0
    %v2753 = vmax.f32 %v2711, 0.0
    %v2754 = vmax.f32 %v2713, 0.0
    %v2755 = vmax.f32 %v2715, 0.0
    %v2756 = vmax.f32 %v2717, 0.0
    %v2757 = vmax.f32 %v2721, 0.0
    %v2758 = vmax.f32 %v2723, 0.0
    %v2759 = vmax.f32 %v2725, 0.0
    %v2760 = vmax.f32 %v2727, 0.0
    %v2761 = vpack.c.bf16 %v2731, %v2729
    %v2762 = vpack.c.bf16 %v2732, %v2730
    %v2763 = vpack.c.bf16 %v2735, %v2733
    %v2764 = vpack.c.bf16 %v2736, %v2734
    %v2765 = vpack.c.bf16 %v2739, %v2737
    %v2766 = vpack.c.bf16 %v2740, %v2738
    %v2767 = vpack.c.bf16 %v2743, %v2741
    %v2768 = vpack.c.bf16 %v2744, %v2742
    %v2769 = vpack.c.bf16 %v2747, %v2745
    %v2770 = vpack.c.bf16 %v2748, %v2746
    %v2771 = vpack.c.bf16 %v2751, %v2749
    %v2772 = vpack.c.bf16 %v2752, %v2750
    %v2773 = vpack.c.bf16 %v2755, %v2753
    %v2774 = vpack.c.bf16 %v2756, %v2754
    %v2775 = vpack.c.bf16 %v2759, %v2757
    %v2776 = vpack.c.bf16 %v2760, %v2758
    %v2777 = vld [vmem:[%s17] sm:$0xff]
    %v2778 = vld [vmem:[%s17 + $0x8] sm:$0xff]
    %v2779 = vld [vmem:[%s17 + $0x10] sm:$0xff]
    %v2780 = vld [vmem:[%s17 + $0x18] sm:$0xff]
    %v2781 = vld [vmem:[%s17 + $0x20] sm:$0xff]
    %v2782 = vld [vmem:[%s17 + $0x28] sm:$0xff]
    %v2783 = vld [vmem:[%s17 + $0x30] sm:$0xff]
    %v2784 = vld [vmem:[%s17 + $0x38] sm:$0xff]
    %v2785 = vld [vmem:[%s17 + $0x40] sm:$0xff]
    %v2786 = vld [vmem:[%s17 + $0x48] sm:$0xff]
    %v2787 = vld [vmem:[%s17 + $0x50] sm:$0xff]
    %v2788 = vld [vmem:[%s17 + $0x58] sm:$0xff]
    %v2789 = vld [vmem:[%s17 + $0x60] sm:$0xff]
    %v2790 = vld [vmem:[%s17 + $0x68] sm:$0xff]
    %v2791 = vld [vmem:[%s17 + $0x70] sm:$0xff]
    %v2792 = vld [vmem:[%s17 + $0x78] sm:$0xff]
    %v2793 = vld [vmem:[%s17 + $0x80] sm:$0xff]
    %v2794 = vld [vmem:[%s17 + $0x88] sm:$0xff]
    %v2795 = vld [vmem:[%s17 + $0x90] sm:$0xff]
    %v2796 = vld [vmem:[%s17 + $0x98] sm:$0xff]
    %v2797 = vld [vmem:[%s17 + $0xa0] sm:$0xff]
    %v2798 = vld [vmem:[%s17 + $0xa8] sm:$0xff]
    %v2799 = vld [vmem:[%s17 + $0xb0] sm:$0xff]
    %v2800 = vld [vmem:[%s17 + $0xb8] sm:$0xff]
    %v2801 = vld [vmem:[%s17 + $0xc0] sm:$0xff]
    %v2802 = vld [vmem:[%s17 + $0xc8] sm:$0xff]
    %v2803 = vld [vmem:[%s17 + $0xd0] sm:$0xff]
    %v2804 = vld [vmem:[%s17 + $0xd8] sm:$0xff]
    %v2805 = vld [vmem:[%s17 + $0xe0] sm:$0xff]
    %v2806 = vld [vmem:[%s17 + $0xe8] sm:$0xff]
    %v2807 = vld [vmem:[%s17 + $0xf0] sm:$0xff]
    %v2808 = vld [vmem:[%s17 + $0xf8] sm:$0xff]
    %v2809 = vld [vmem:[%s18] sm:$0x3]
    %v2811 = vlaneseq
    %v2812 = vshrl.u32 %v2811, 7
    %v2813 = vsub.s32 0, %v2812
    %v2814 = vrot.slane %v2809, %v2813
    %v2815 = vlaneseq
    %v2816 = vshrl.u32 %v2815, 7
    %v2817 = vsub.s32 1, %v2816
    %v2818 = vrot.slane %v2809, %v2817
    %v2853 = vunpack.c.l.b16 %v2777
    %v2854 = vunpack.c.h.b16 %v2777
    %v2855 = vunpack.c.l.b16 %v2778
    %v2856 = vunpack.c.h.b16 %v2778
    %v2857 = vunpack.c.l.b16 %v2779
    %v2858 = vunpack.c.h.b16 %v2779
    %v2859 = vunpack.c.l.b16 %v2780
    %v2860 = vunpack.c.h.b16 %v2780
    %v2861 = vunpack.c.l.b16 %v2781
    %v2862 = vunpack.c.h.b16 %v2781
    %v2863 = vunpack.c.l.b16 %v2782
    %v2864 = vunpack.c.h.b16 %v2782
    %v2865 = vunpack.c.l.b16 %v2783
    %v2866 = vunpack.c.h.b16 %v2783
    %v2867 = vunpack.c.l.b16 %v2784
    %v2868 = vunpack.c.h.b16 %v2784
    %v2869 = vunpack.c.l.b16 %v2785
    %v2870 = vunpack.c.h.b16 %v2785
    %v2871 = vunpack.c.l.b16 %v2786
    %v2872 = vunpack.c.h.b16 %v2786
    %v2873 = vunpack.c.l.b16 %v2787
    %v2874 = vunpack.c.h.b16 %v2787
    %v2875 = vunpack.c.l.b16 %v2788
    %v2876 = vunpack.c.h.b16 %v2788
    %v2877 = vunpack.c.l.b16 %v2789
    %v2878 = vunpack.c.h.b16 %v2789
    %v2879 = vunpack.c.l.b16 %v2790
    %v2880 = vunpack.c.h.b16 %v2790
    %v2881 = vunpack.c.l.b16 %v2791
    %v2882 = vunpack.c.h.b16 %v2791
    %v2883 = vunpack.c.l.b16 %v2792
    %v2884 = vunpack.c.h.b16 %v2792
    %v2885 = vunpack.c.l.b16 %v2793
    %v2886 = vunpack.c.h.b16 %v2793
    %v2887 = vunpack.c.l.b16 %v2794
    %v2888 = vunpack.c.h.b16 %v2794
    %v2889 = vunpack.c.l.b16 %v2795
    %v2890 = vunpack.c.h.b16 %v2795
    %v2891 = vunpack.c.l.b16 %v2796
    %v2892 = vunpack.c.h.b16 %v2796
    %v2893 = vunpack.c.l.b16 %v2797
    %v2894 = vunpack.c.h.b16 %v2797
    %v2895 = vunpack.c.l.b16 %v2798
    %v2896 = vunpack.c.h.b16 %v2798
    %v2897 = vunpack.c.l.b16 %v2799
    %v2898 = vunpack.c.h.b16 %v2799
    %v2899 = vunpack.c.l.b16 %v2800
    %v2900 = vunpack.c.h.b16 %v2800
    %v2901 = vunpack.c.l.b16 %v2801
    %v2902 = vunpack.c.h.b16 %v2801
    %v2903 = vunpack.c.l.b16 %v2802
    %v2904 = vunpack.c.h.b16 %v2802
    %v2905 = vunpack.c.l.b16 %v2803
    %v2906 = vunpack.c.h.b16 %v2803
    %v2907 = vunpack.c.l.b16 %v2804
    %v2908 = vunpack.c.h.b16 %v2804
    %v2909 = vunpack.c.l.b16 %v2805
    %v2910 = vunpack.c.h.b16 %v2805
    %v2911 = vunpack.c.l.b16 %v2806
    %v2912 = vunpack.c.h.b16 %v2806
    %v2913 = vunpack.c.l.b16 %v2807
    %v2914 = vunpack.c.h.b16 %v2807
    %v2915 = vunpack.c.l.b16 %v2808
    %v2916 = vunpack.c.h.b16 %v2808
    %v2917 = vpack.c.b16 %v2855, %v2853
    %v2918 = vpack.c.b16 %v2856, %v2854
    %v2919 = vpack.c.b16 %v2859, %v2857
    %v2920 = vpack.c.b16 %v2860, %v2858
    %v2921 = vpack.c.b16 %v2863, %v2861
    %v2922 = vpack.c.b16 %v2864, %v2862
    %v2923 = vpack.c.b16 %v2867, %v2865
    %v2924 = vpack.c.b16 %v2868, %v2866
    %v2925 = vpack.c.b16 %v2871, %v2869
    %v2926 = vpack.c.b16 %v2872, %v2870
    %v2927 = vpack.c.b16 %v2875, %v2873
    %v2928 = vpack.c.b16 %v2876, %v2874
    %v2929 = vpack.c.b16 %v2879, %v2877
    %v2930 = vpack.c.b16 %v2880, %v2878
    %v2931 = vpack.c.b16 %v2883, %v2881
    %v2932 = vpack.c.b16 %v2884, %v2882
    %v2933 = vpack.c.b16 %v2887, %v2885
    %v2934 = vpack.c.b16 %v2888, %v2886
    %v2935 = vpack.c.b16 %v2891, %v2889
    %v2936 = vpack.c.b16 %v2892, %v2890
    %v2937 = vpack.c.b16 %v2895, %v2893
    %v2938 = vpack.c.b16 %v2896, %v2894
    %v2939 = vpack.c.b16 %v2899, %v2897
    %v2940 = vpack.c.b16 %v2900, %v2898
    %v2941 = vpack.c.b16 %v2903, %v2901
    %v2942 = vpack.c.b16 %v2904, %v2902
    %v2943 = vpack.c.b16 %v2907, %v2905
    %v2944 = vpack.c.b16 %v2908, %v2906
    %v2945 = vpack.c.b16 %v2911, %v2909
    %v2946 = vpack.c.b16 %v2912, %v2910
    %v2947 = vpack.c.b16 %v2915, %v2913
    %v2948 = vpack.c.b16 %v2916, %v2914
    %2981 = vmatprep.subr.bf16.mxu0 %v2918
    %2982 = vmatpush1.bf16.msra.mxu0 %v2917
    %2983 = vmatprep.subr.bf16.mxu0 %v2920
    %2984 = vmatpush1.bf16.msra.mxu0 %v2919
    %2985 = vmatprep.subr.bf16.mxu0 %v2922
    %2986 = vmatpush1.bf16.msra.mxu0 %v2921
    %2987 = vmatprep.subr.bf16.mxu0 %v2924
    %2988 = vmatpush1.bf16.msra.mxu0 %v2923
    %2989 = vmatprep.subr.bf16.mxu0 %v2926
    %2990 = vmatpush1.bf16.msra.mxu0 %v2925
    %2991 = vmatprep.subr.bf16.mxu0 %v2928
    %2992 = vmatpush1.bf16.msra.mxu0 %v2927
    %2993 = vmatprep.subr.bf16.mxu0 %v2930
    %2994 = vmatpush1.bf16.msra.mxu0 %v2929
    %2995 = vmatprep.subr.bf16.mxu0 %v2932
    %2996 = vmatpush1.bf16.msra.mxu0 %v2931
    %2997 = vmatprep.subr.bf16.mxu0 %v2934
    %2998 = vmatpush1.bf16.msra.mxu0 %v2933
    %2999 = vmatprep.subr.bf16.mxu0 %v2936
    %3000 = vmatpush1.bf16.msra.mxu0 %v2935
    %3001 = vmatprep.subr.bf16.mxu0 %v2938
    %3002 = vmatpush1.bf16.msra.mxu0 %v2937
    %3003 = vmatprep.subr.bf16.mxu0 %v2940
    %3004 = vmatpush1.bf16.msra.mxu0 %v2939
    %3005 = vmatprep.subr.bf16.mxu0 %v2942
    %3006 = vmatpush1.bf16.msra.mxu0 %v2941
    %3007 = vmatprep.subr.bf16.mxu0 %v2944
    %3008 = vmatpush1.bf16.msra.mxu0 %v2943
    %3009 = vmatprep.subr.bf16.mxu0 %v2946
    %3010 = vmatpush1.bf16.msra.mxu0 %v2945
    %3011 = vmatprep.subr.bf16.mxu0 %v2948
    %3012 = vmatpush1.bf16.msra.mxu0 %v2947
    %3013 = vmatprep.mubr.bf16.mxu0 %v2762
    %3014 = vmatmul.mubr.bf16.gmra.mrb[0].mxu0 %v2761
    %v3015 = vpop.f32.mrb[0].mxu0
    %v3016 = vadd.f32 %v2814, %v3015
    %v3017 = vpop.f32.mrb[0].mxu0
    %v3018 = vadd.f32 %v2818, %v3017
    %v3019 = vpop.f32.mrb[0].mxu0
    %v3020 = vadd.f32 %v2814, %v3019
    %v3021 = vpop.f32.mrb[0].mxu0
    %v3022 = vadd.f32 %v2818, %v3021
    %3023 = vmatprep.mubr.bf16.mxu0 %v2764
    %3024 = vmatmul.mubr.bf16.gmra.mrb[0].mxu0 %v2763
    %v3025 = vpop.f32.mrb[0].mxu0
    %v3026 = vadd.f32 %v2814, %v3025
    %v3027 = vpop.f32.mrb[0].mxu0
    %v3028 = vadd.f32 %v2818, %v3027
    %v3029 = vpop.f32.mrb[0].mxu0
    %v3030 = vadd.f32 %v2814, %v3029
    %v3031 = vpop.f32.mrb[0].mxu0
    %v3032 = vadd.f32 %v2818, %v3031
    %3033 = vmatprep.mubr.bf16.mxu0 %v2766
    %3034 = vmatmul.mubr.bf16.gmra.mrb[0].mxu0 %v2765
    %v3035 = vpop.f32.mrb[0].mxu0
    %v3036 = vadd.f32 %v2814, %v3035
    %v3037 = vpop.f32.mrb[0].mxu0
    %v3038 = vadd.f32 %v2818, %v3037
    %v3039 = vpop.f32.mrb[0].mxu0
    %v3040 = vadd.f32 %v2814, %v3039
    %v3041 = vpop.f32.mrb[0].mxu0
    %v3042 = vadd.f32 %v2818, %v3041
    %3043 = vmatprep.mubr.bf16.mxu0 %v2768
    %3044 = vmatmul.mubr.bf16.gmra.mrb[0].mxu0 %v2767
    %v3045 = vpop.f32.mrb[0].mxu0
    %v3046 = vadd.f32 %v2814, %v3045
    %v3047 = vpop.f32.mrb[0].mxu0
    %v3048 = vadd.f32 %v2818, %v3047
    %v3049 = vpop.f32.mrb[0].mxu0
    %v3050 = vadd.f32 %v2814, %v3049
    %v3051 = vpop.f32.mrb[0].mxu0
    %v3052 = vadd.f32 %v2818, %v3051
    %3053 = vmatprep.mubr.bf16.mxu0 %v2770
    %3054 = vmatmul.mubr.bf16.gmra.mrb[0].mxu0 %v2769
    %v3055 = vpop.f32.mrb[0].mxu0
    %v3056 = vadd.f32 %v2814, %v3055
    %v3057 = vpop.f32.mrb[0].mxu0
    %v3058 = vadd.f32 %v2818, %v3057
    %v3059 = vpop.f32.mrb[0].mxu0
    %v3060 = vadd.f32 %v2814, %v3059
    %v3061 = vpop.f32.mrb[0].mxu0
    %v3062 = vadd.f32 %v2818, %v3061
    %3063 = vmatprep.mubr.bf16.mxu0 %v2772
    %3064 = vmatmul.mubr.bf16.gmra.mrb[0].mxu0 %v2771
    %v3065 = vpop.f32.mrb[0].mxu0
    %v3066 = vadd.f32 %v2814, %v3065
    %v3067 = vpop.f32.mrb[0].mxu0
    %v3068 = vadd.f32 %v2818, %v3067
    %v3069 = vpop.f32.mrb[0].mxu0
    %v3070 = vadd.f32 %v2814, %v3069
    %v3071 = vpop.f32.mrb[0].mxu0
    %v3072 = vadd.f32 %v2818, %v3071
    %3073 = vmatprep.mubr.bf16.mxu0 %v2774
    %3074 = vmatmul.mubr.bf16.gmra.mrb[0].mxu0 %v2773
    %v3075 = vpop.f32.mrb[0].mxu0
    %v3076 = vadd.f32 %v2814, %v3075
    %v3077 = vpop.f32.mrb[0].mxu0
    %v3078 = vadd.f32 %v2818, %v3077
    %v3079 = vpop.f32.mrb[0].mxu0
    %v3080 = vadd.f32 %v2814, %v3079
    %v3081 = vpop.f32.mrb[0].mxu0
    %v3082 = vadd.f32 %v2818, %v3081
    %3083 = vmatprep.mubr.bf16.mxu0 %v2776
    %3084 = vmatmul.mubr.bf16.gmra.mrb[0].mxu0 %v2775
    %v3085 = vpop.f32.mrb[0].mxu0
    %v3086 = vadd.f32 %v2814, %v3085
    %v3087 = vpop.f32.mrb[0].mxu0
    %v3088 = vadd.f32 %v2818, %v3087
    %v3089 = vpop.f32.mrb[0].mxu0
    %v3090 = vadd.f32 %v2814, %v3089
    %v3091 = vpop.f32.mrb[0].mxu0
    %v3092 = vadd.f32 %v2818, %v3091
    %3093 = vdwg.mxu0
    %v3094 = vmax.f32 %v3016, 0.0
    %v3095 = vmax.f32 %v3018, 0.0
    %v3096 = vmax.f32 %v3020, 0.0
    %v3097 = vmax.f32 %v3022, 0.0
    %v3098 = vmax.f32 %v3026, 0.0
    %v3099 = vmax.f32 %v3028, 0.0
    %v3100 = vmax.f32 %v3030, 0.0
    %v3101 = vmax.f32 %v3032, 0.0
    %v3102 = vmax.f32 %v3036, 0.0
    %v3103 = vmax.f32 %v3038, 0.0
    %v3104 = vmax.f32 %v3040, 0.0
    %v3105 = vmax.f32 %v3042, 0.0
    %v3106 = vmax.f32 %v3046, 0.0
    %v3107 = vmax.f32 %v3048, 0.0
    %v3108 = vmax.f32 %v3050, 0.0
    %v3109 = vmax.f32 %v3052, 0.0
    %v3110 = vmax.f32 %v3056, 0.0
    %v3111 = vmax.f32 %v3058, 0.0
    %v3112 = vmax.f32 %v3060, 0.0
    %v3113 = vmax.f32 %v3062, 0.0
    %v3114 = vmax.f32 %v3066, 0.0
    %v3115 = vmax.f32 %v3068, 0.0
    %v3116 = vmax.f32 %v3070, 0.0
    %v3117 = vmax.f32 %v3072, 0.0
    %v3118 = vmax.f32 %v3076, 0.0
    %v3119 = vmax.f32 %v3078, 0.0
    %v3120 = vmax.f32 %v3080, 0.0
    %v3121 = vmax.f32 %v3082, 0.0
    %v3122 = vmax.f32 %v3086, 0.0
    %v3123 = vmax.f32 %v3088, 0.0
    %v3124 = vmax.f32 %v3090, 0.0
    %v3125 = vmax.f32 %v3092, 0.0
    %v3126 = vpack.c.bf16 %v3096, %v3094
    %v3127 = vpack.c.bf16 %v3097, %v3095
    %v3128 = vpack.c.bf16 %v3100, %v3098
    %v3129 = vpack.c.bf16 %v3101, %v3099
    %v3130 = vpack.c.bf16 %v3104, %v3102
    %v3131 = vpack.c.bf16 %v3105, %v3103
    %v3132 = vpack.c.bf16 %v3108, %v3106
    %v3133 = vpack.c.bf16 %v3109, %v3107
    %v3134 = vpack.c.bf16 %v3112, %v3110
    %v3135 = vpack.c.bf16 %v3113, %v3111
    %v3136 = vpack.c.bf16 %v3116, %v3114
    %v3137 = vpack.c.bf16 %v3117, %v3115
    %v3138 = vpack.c.bf16 %v3120, %v3118
    %v3139 = vpack.c.bf16 %v3121, %v3119
    %v3140 = vpack.c.bf16 %v3124, %v3122
    %v3141 = vpack.c.bf16 %v3125, %v3123
    %v3142 = vld [vmem:[%s19] sm:$0xff]
    %v3143 = vld [vmem:[%s19 + $0x8] sm:$0xf]
    %v3144 = vld [vmem:[%s19 + $0xc] sm:$0xff]
    %v3145 = vld [vmem:[%s19 + $0x14] sm:$0xf]
    %v3146 = vld [vmem:[%s19 + $0x18] sm:$0xff]
    %v3147 = vld [vmem:[%s19 + $0x20] sm:$0xf]
    %v3148 = vld [vmem:[%s19 + $0x24] sm:$0xff]
    %v3149 = vld [vmem:[%s19 + $0x2c] sm:$0xf]
    %v3150 = vld [vmem:[%s19 + $0x30] sm:$0xff]
    %v3151 = vld [vmem:[%s19 + $0x38] sm:$0xf]
    %v3152 = vld [vmem:[%s19 + $0x3c] sm:$0xff]
    %v3153 = vld [vmem:[%s19 + $0x44] sm:$0xf]
    %v3154 = vld [vmem:[%s19 + $0x48] sm:$0xff]
    %v3155 = vld [vmem:[%s19 + $0x50] sm:$0xf]
    %v3156 = vld [vmem:[%s19 + $0x54] sm:$0xff]
    %v3157 = vld [vmem:[%s19 + $0x5c] sm:$0xf]
    %v3158 = vld [vmem:[%s19 + $0x60] sm:$0xff]
    %v3159 = vld [vmem:[%s19 + $0x68] sm:$0xf]
    %v3160 = vld [vmem:[%s19 + $0x6c] sm:$0xff]
    %v3161 = vld [vmem:[%s19 + $0x74] sm:$0xf]
    %v3162 = vld [vmem:[%s19 + $0x78] sm:$0xff]
    %v3163 = vld [vmem:[%s19 + $0x80] sm:$0xf]
    %v3164 = vld [vmem:[%s19 + $0x84] sm:$0xff]
    %v3165 = vld [vmem:[%s19 + $0x8c] sm:$0xf]
    %v3166 = vld [vmem:[%s19 + $0x90] sm:$0xff]
    %v3167 = vld [vmem:[%s19 + $0x98] sm:$0xf]
    %v3168 = vld [vmem:[%s19 + $0x9c] sm:$0xff]
    %v3169 = vld [vmem:[%s19 + $0xa4] sm:$0xf]
    %v3170 = vld [vmem:[%s19 + $0xa8] sm:$0xff]
    %v3171 = vld [vmem:[%s19 + $0xb0] sm:$0xf]
    %v3172 = vld [vmem:[%s19 + $0xb4] sm:$0xff]
    %v3173 = vld [vmem:[%s19 + $0xbc] sm:$0xf]
    %v3174 = vld [vmem:[%s19 + $0xc0] sm:$0xff]
    %v3175 = vld [vmem:[%s19 + $0xc8] sm:$0xf]
    %v3176 = vld [vmem:[%s19 + $0xcc] sm:$0xff]
    %v3177 = vld [vmem:[%s19 + $0xd4] sm:$0xf]
    %v3178 = vld [vmem:[%s19 + $0xd8] sm:$0xff]
    %v3179 = vld [vmem:[%s19 + $0xe0] sm:$0xf]
    %v3180 = vld [vmem:[%s19 + $0xe4] sm:$0xff]
    %v3181 = vld [vmem:[%s19 + $0xec] sm:$0xf]
    %v3182 = vld [vmem:[%s19 + $0xf0] sm:$0xff]
    %v3183 = vld [vmem:[%s19 + $0xf8] sm:$0xf]
    %v3184 = vld [vmem:[%s19 + $0xfc] sm:$0xff]
    %v3185 = vld [vmem:[%s19 + $0x104] sm:$0xf]
    %v3186 = vld [vmem:[%s19 + $0x108] sm:$0xff]
    %v3187 = vld [vmem:[%s19 + $0x110] sm:$0xf]
    %v3188 = vld [vmem:[%s19 + $0x114] sm:$0xff]
    %v3189 = vld [vmem:[%s19 + $0x11c] sm:$0xf]
    %v3190 = vld [vmem:[%s19 + $0x120] sm:$0xff]
    %v3191 = vld [vmem:[%s19 + $0x128] sm:$0xf]
    %v3192 = vld [vmem:[%s19 + $0x12c] sm:$0xff]
    %v3193 = vld [vmem:[%s19 + $0x134] sm:$0xf]
    %v3194 = vld [vmem:[%s19 + $0x138] sm:$0xff]
    %v3195 = vld [vmem:[%s19 + $0x140] sm:$0xf]
    %v3196 = vld [vmem:[%s19 + $0x144] sm:$0xff]
    %v3197 = vld [vmem:[%s19 + $0x14c] sm:$0xf]
    %v3198 = vld [vmem:[%s19 + $0x150] sm:$0xff]
    %v3199 = vld [vmem:[%s19 + $0x158] sm:$0xf]
    %v3200 = vld [vmem:[%s19 + $0x15c] sm:$0xff]
    %v3201 = vld [vmem:[%s19 + $0x164] sm:$0xf]
    %v3202 = vld [vmem:[%s19 + $0x168] sm:$0xff]
    %v3203 = vld [vmem:[%s19 + $0x170] sm:$0xf]
    %v3204 = vld [vmem:[%s19 + $0x174] sm:$0xff]
    %v3205 = vld [vmem:[%s19 + $0x17c] sm:$0xf]
    %v3206 = vld [vmem:[%s20] sm:$0x7]
    %v3208 = vlaneseq
    %v3209 = vshrl.u32 %v3208, 7
    %v3210 = vsub.s32 0, %v3209
    %v3211 = vrot.slane %v3206, %v3210
    %v3212 = vlaneseq
    %v3213 = vshrl.u32 %v3212, 7
    %v3214 = vsub.s32 1, %v3213
    %v3215 = vrot.slane %v3206, %v3214
    %v3216 = vlaneseq
    %v3217 = vshrl.u32 %v3216, 7
    %v3218 = vsub.s32 2, %v3217
    %v3219 = vrot.slane %v3206, %v3218
    %v3287 = vunpack.c.l.b16 %v3142
    %v3288 = vunpack.c.h.b16 %v3142
    %v3289 = vunpack.c.l.b16 %v3143
    %v3290 = vunpack.c.l.b16 %v3144
    %v3291 = vunpack.c.h.b16 %v3144
    %v3292 = vunpack.c.l.b16 %v3145
    %v3293 = vunpack.c.l.b16 %v3146
    %v3294 = vunpack.c.h.b16 %v3146
    %v3295 = vunpack.c.l.b16 %v3147
    %v3296 = vunpack.c.l.b16 %v3148
    %v3297 = vunpack.c.h.b16 %v3148
    %v3298 = vunpack.c.l.b16 %v3149
    %v3299 = vunpack.c.l.b16 %v3150
    %v3300 = vunpack.c.h.b16 %v3150
    %v3301 = vunpack.c.l.b16 %v3151
    %v3302 = vunpack.c.l.b16 %v3152
    %v3303 = vunpack.c.h.b16 %v3152
    %v3304 = vunpack.c.l.b16 %v3153
    %v3305 = vunpack.c.l.b16 %v3154
    %v3306 = vunpack.c.h.b16 %v3154
    %v3307 = vunpack.c.l.b16 %v3155
    %v3308 = vunpack.c.l.b16 %v3156
    %v3309 = vunpack.c.h.b16 %v3156
    %v3310 = vunpack.c.l.b16 %v3157
    %v3311 = vunpack.c.l.b16 %v3158
    %v3312 = vunpack.c.h.b16 %v3158
    %v3313 = vunpack.c.l.b16 %v3159
    %v3314 = vunpack.c.l.b16 %v3160
    %v3315 = vunpack.c.h.b16 %v3160
    %v3316 = vunpack.c.l.b16 %v3161
    %v3317 = vunpack.c.l.b16 %v3162
    %v3318 = vunpack.c.h.b16 %v3162
    %v3319 = vunpack.c.l.b16 %v3163
    %v3320 = vunpack.c.l.b16 %v3164
    %v3321 = vunpack.c.h.b16 %v3164
    %v3322 = vunpack.c.l.b16 %v3165
    %v3323 = vunpack.c.l.b16 %v3166
    %v3324 = vunpack.c.h.b16 %v3166
    %v3325 = vunpack.c.l.b16 %v3167
    %v3326 = vunpack.c.l.b16 %v3168
    %v3327 = vunpack.c.h.b16 %v3168
    %v3328 = vunpack.c.l.b16 %v3169
    %v3329 = vunpack.c.l.b16 %v3170
    %v3330 = vunpack.c.h.b16 %v3170
    %v3331 = vunpack.c.l.b16 %v3171
    %v3332 = vunpack.c.l.b16 %v3172
    %v3333 = vunpack.c.h.b16 %v3172
    %v3334 = vunpack.c.l.b16 %v3173
    %v3335 = vunpack.c.l.b16 %v3174
    %v3336 = vunpack.c.h.b16 %v3174
    %v3337 = vunpack.c.l.b16 %v3175
    %v3338 = vunpack.c.l.b16 %v3176
    %v3339 = vunpack.c.h.b16 %v3176
    %v3340 = vunpack.c.l.b16 %v3177
    %v3341 = vunpack.c.l.b16 %v3178
    %v3342 = vunpack.c.h.b16 %v3178
    %v3343 = vunpack.c.l.b16 %v3179
    %v3344 = vunpack.c.l.b16 %v3180
    %v3345 = vunpack.c.h.b16 %v3180
    %v3346 = vunpack.c.l.b16 %v3181
    %v3347 = vunpack.c.l.b16 %v3182
    %v3348 = vunpack.c.h.b16 %v3182
    %v3349 = vunpack.c.l.b16 %v3183
    %v3350 = vunpack.c.l.b16 %v3184
    %v3351 = vunpack.c.h.b16 %v3184
    %v3352 = vunpack.c.l.b16 %v3185
    %v3353 = vunpack.c.l.b16 %v3186
    %v3354 = vunpack.c.h.b16 %v3186
    %v3355 = vunpack.c.l.b16 %v3187
    %v3356 = vunpack.c.l.b16 %v3188
    %v3357 = vunpack.c.h.b16 %v3188
    %v3358 = vunpack.c.l.b16 %v3189
    %v3359 = vunpack.c.l.b16 %v3190
    %v3360 = vunpack.c.h.b16 %v3190
    %v3361 = vunpack.c.l.b16 %v3191
    %v3362 = vunpack.c.l.b16 %v3192
    %v3363 = vunpack.c.h.b16 %v3192
    %v3364 = vunpack.c.l.b16 %v3193
    %v3365 = vunpack.c.l.b16 %v3194
    %v3366 = vunpack.c.h.b16 %v3194
    %v3367 = vunpack.c.l.b16 %v3195
    %v3368 = vunpack.c.l.b16 %v3196
    %v3369 = vunpack.c.h.b16 %v3196
    %v3370 = vunpack.c.l.b16 %v3197
    %v3371 = vunpack.c.l.b16 %v3198
    %v3372 = vunpack.c.h.b16 %v3198
    %v3373 = vunpack.c.l.b16 %v3199
    %v3374 = vunpack.c.l.b16 %v3200
    %v3375 = vunpack.c.h.b16 %v3200
    %v3376 = vunpack.c.l.b16 %v3201
    %v3377 = vunpack.c.l.b16 %v3202
    %v3378 = vunpack.c.h.b16 %v3202
    %v3379 = vunpack.c.l.b16 %v3203
    %v3380 = vunpack.c.l.b16 %v3204
    %v3381 = vunpack.c.h.b16 %v3204
    %v3382 = vunpack.c.l.b16 %v3205
    %v3383 = vpack.c.b16 %v3290, %v3287
    %v3384 = vpack.c.b16 %v3291, %v3288
    %v3385 = vpack.c.b16 %v3292, %v3289
    %v3386 = vpack.c.b16 %v3296, %v3293
    %v3387 = vpack.c.b16 %v3297, %v3294
    %v3388 = vpack.c.b16 %v3298, %v3295
    %v3389 = vpack.c.b16 %v3302, %v3299
    %v3390 = vpack.c.b16 %v3303, %v3300
    %v3391 = vpack.c.b16 %v3304, %v3301
    %v3392 = vpack.c.b16 %v3308, %v3305
    %v3393 = vpack.c.b16 %v3309, %v3306
    %v3394 = vpack.c.b16 %v3310, %v3307
    %v3395 = vpack.c.b16 %v3314, %v3311
    %v3396 = vpack.c.b16 %v3315, %v3312
    %v3397 = vpack.c.b16 %v3316, %v3313
    %v3398 = vpack.c.b16 %v3320, %v3317
    %v3399 = vpack.c.b16 %v3321, %v3318
    %v3400 = vpack.c.b16 %v3322, %v3319
    %v3401 = vpack.c.b16 %v3326, %v3323
    %v3402 = vpack.c.b16 %v3327, %v3324
    %v3403 = vpack.c.b16 %v3328, %v3325
    %v3404 = vpack.c.b16 %v3332, %v3329
    %v3405 = vpack.c.b16 %v3333, %v3330
    %v3406 = vpack.c.b16 %v3334, %v3331
    %v3407 = vpack.c.b16 %v3338, %v3335
    %v3408 = vpack.c.b16 %v3339, %v3336
    %v3409 = vpack.c.b16 %v3340, %v3337
    %v3410 = vpack.c.b16 %v3344, %v3341
    %v3411 = vpack.c.b16 %v3345, %v3342
    %v3412 = vpack.c.b16 %v3346, %v3343
    %v3413 = vpack.c.b16 %v3350, %v3347
    %v3414 = vpack.c.b16 %v3351, %v3348
    %v3415 = vpack.c.b16 %v3352, %v3349
    %v3416 = vpack.c.b16 %v3356, %v3353
    %v3417 = vpack.c.b16 %v3357, %v3354
    %v3418 = vpack.c.b16 %v3358, %v3355
    %v3419 = vpack.c.b16 %v3362, %v3359
    %v3420 = vpack.c.b16 %v3363, %v3360
    %v3421 = vpack.c.b16 %v3364, %v3361
    %v3422 = vpack.c.b16 %v3368, %v3365
    %v3423 = vpack.c.b16 %v3369, %v3366
    %v3424 = vpack.c.b16 %v3370, %v3367
    %v3425 = vpack.c.b16 %v3374, %v3371
    %v3426 = vpack.c.b16 %v3375, %v3372
    %v3427 = vpack.c.b16 %v3376, %v3373
    %v3428 = vpack.c.b16 %v3380, %v3377
    %v3429 = vpack.c.b16 %v3381, %v3378
    %v3430 = vpack.c.b16 %v3382, %v3379
    %3479 = vmatprep.subr.bf16.mxu0 %v3384
    %3480 = vmatpush1.bf16.msra.mxu0 %v3383
    %3481 = vmatprep.subr.bf16.mxu0 %v3387
    %3482 = vmatpush1.bf16.msra.mxu0 %v3386
    %3483 = vmatprep.subr.bf16.mxu0 %v3390
    %3484 = vmatpush1.bf16.msra.mxu0 %v3389
    %3485 = vmatprep.subr.bf16.mxu0 %v3393
    %3486 = vmatpush1.bf16.msra.mxu0 %v3392
    %3487 = vmatprep.subr.bf16.mxu0 %v3396
    %3488 = vmatpush1.bf16.msra.mxu0 %v3395
    %3489 = vmatprep.subr.bf16.mxu0 %v3399
    %3490 = vmatpush1.bf16.msra.mxu0 %v3398
    %3491 = vmatprep.subr.bf16.mxu0 %v3402
    %3492 = vmatpush1.bf16.msra.mxu0 %v3401
    %3493 = vmatprep.subr.bf16.mxu0 %v3405
    %3494 = vmatpush1.bf16.msra.mxu0 %v3404
    %3495 = vmatprep.subr.bf16.mxu0 %v3408
    %3496 = vmatpush1.bf16.msra.mxu0 %v3407
    %3497 = vmatprep.subr.bf16.mxu0 %v3411
    %3498 = vmatpush1.bf16.msra.mxu0 %v3410
    %3499 = vmatprep.subr.bf16.mxu0 %v3414
    %3500 = vmatpush1.bf16.msra.mxu0 %v3413
    %3501 = vmatprep.subr.bf16.mxu0 %v3417
    %3502 = vmatpush1.bf16.msra.mxu0 %v3416
    %3503 = vmatprep.subr.bf16.mxu0 %v3420
    %3504 = vmatpush1.bf16.msra.mxu0 %v3419
    %3505 = vmatprep.subr.bf16.mxu0 %v3423
    %3506 = vmatpush1.bf16.msra.mxu0 %v3422
    %3507 = vmatprep.subr.bf16.mxu0 %v3426
    %3508 = vmatpush1.bf16.msra.mxu0 %v3425
    %3509 = vmatprep.subr.bf16.mxu0 %v3429
    %3510 = vmatpush1.bf16.msra.mxu0 %v3428
    %3511 = vmatprep.mubr.bf16.mxu0 %v3127
    %3512 = vmatmul.mubr.bf16.gmra.mrb[0].mxu0 %v3126
    %v3513 = vpop.f32.mrb[0].mxu0
    %v3514 = vadd.f32 %v3211, %v3513
    %v3515 = vpop.f32.mrb[0].mxu0
    %v3516 = vadd.f32 %v3215, %v3515
    %v3517 = vpop.f32.mrb[0].mxu0
    %v3518 = vadd.f32 %v3211, %v3517
    %v3519 = vpop.f32.mrb[0].mxu0
    %v3520 = vadd.f32 %v3215, %v3519
    %3521 = vmatprep.mubr.bf16.mxu0 %v3129
    %3522 = vmatmul.mubr.bf16.gmra.mrb[0].mxu0 %v3128
    %v3523 = vpop.f32.mrb[0].mxu0
    %v3524 = vadd.f32 %v3211, %v3523
    %v3525 = vpop.f32.mrb[0].mxu0
    %v3526 = vadd.f32 %v3215, %v3525
    %v3527 = vpop.f32.mrb[0].mxu0
    %v3528 = vadd.f32 %v3211, %v3527
    %v3529 = vpop.f32.mrb[0].mxu0
    %v3530 = vadd.f32 %v3215, %v3529
    %3531 = vmatprep.mubr.bf16.mxu0 %v3131
    %3532 = vmatmul.mubr.bf16.gmra.mrb[0].mxu0 %v3130
    %v3533 = vpop.f32.mrb[0].mxu0
    %v3534 = vadd.f32 %v3211, %v3533
    %v3535 = vpop.f32.mrb[0].mxu0
    %v3536 = vadd.f32 %v3215, %v3535
    %v3537 = vpop.f32.mrb[0].mxu0
    %v3538 = vadd.f32 %v3211, %v3537
    %v3539 = vpop.f32.mrb[0].mxu0
    %v3540 = vadd.f32 %v3215, %v3539
    %3541 = vmatprep.mubr.bf16.mxu0 %v3133
    %3542 = vmatmul.mubr.bf16.gmra.mrb[0].mxu0 %v3132
    %v3543 = vpop.f32.mrb[0].mxu0
    %v3544 = vadd.f32 %v3211, %v3543
    %v3545 = vpop.f32.mrb[0].mxu0
    %v3546 = vadd.f32 %v3215, %v3545
    %v3547 = vpop.f32.mrb[0].mxu0
    %v3548 = vadd.f32 %v3211, %v3547
    %v3549 = vpop.f32.mrb[0].mxu0
    %v3550 = vadd.f32 %v3215, %v3549
    %3551 = vmatprep.mubr.bf16.mxu0 %v3135
    %3552 = vmatmul.mubr.bf16.gmra.mrb[0].mxu0 %v3134
    %v3553 = vpop.f32.mrb[0].mxu0
    %v3554 = vadd.f32 %v3211, %v3553
    %v3555 = vpop.f32.mrb[0].mxu0
    %v3556 = vadd.f32 %v3215, %v3555
    %v3557 = vpop.f32.mrb[0].mxu0
    %v3558 = vadd.f32 %v3211, %v3557
    %v3559 = vpop.f32.mrb[0].mxu0
    %v3560 = vadd.f32 %v3215, %v3559
    %3561 = vmatprep.mubr.bf16.mxu0 %v3137
    %3562 = vmatmul.mubr.bf16.gmra.mrb[0].mxu0 %v3136
    %v3563 = vpop.f32.mrb[0].mxu0
    %v3564 = vadd.f32 %v3211, %v3563
    %v3565 = vpop.f32.mrb[0].mxu0
    %v3566 = vadd.f32 %v3215, %v3565
    %v3567 = vpop.f32.mrb[0].mxu0
    %v3568 = vadd.f32 %v3211, %v3567
    %v3569 = vpop.f32.mrb[0].mxu0
    %v3570 = vadd.f32 %v3215, %v3569
    %3571 = vmatprep.mubr.bf16.mxu0 %v3139
    %3572 = vmatmul.mubr.bf16.gmra.mrb[0].mxu0 %v3138
    %v3573 = vpop.f32.mrb[0].mxu0
    %v3574 = vadd.f32 %v3211, %v3573
    %v3575 = vpop.f32.mrb[0].mxu0
    %v3576 = vadd.f32 %v3215, %v3575
    %v3577 = vpop.f32.mrb[0].mxu0
    %v3578 = vadd.f32 %v3211, %v3577
    %v3579 = vpop.f32.mrb[0].mxu0
    %v3580 = vadd.f32 %v3215, %v3579
    %3581 = vmatprep.mubr.bf16.mxu0 %v3141
    %3582 = vmatmul.mubr.bf16.gmra.mrb[0].mxu0 %v3140
    %v3583 = vpop.f32.mrb[0].mxu0
    %v3584 = vadd.f32 %v3211, %v3583
    %v3585 = vpop.f32.mrb[0].mxu0
    %v3586 = vadd.f32 %v3215, %v3585
    %v3587 = vpop.f32.mrb[0].mxu0
    %v3588 = vadd.f32 %v3211, %v3587
    %v3589 = vpop.f32.mrb[0].mxu0
    %v3590 = vadd.f32 %v3215, %v3589
    %3591 = vdwg.mxu0
    %3592 = vmatprep.subr.bf16.mxu0 0
    %3593 = vmatpush1.bf16.msra.mxu0 %v3385
    %3594 = vmatprep.subr.bf16.mxu0 0
    %3595 = vmatpush1.bf16.msra.mxu0 %v3388
    %3596 = vmatprep.subr.bf16.mxu0 0
    %3597 = vmatpush1.bf16.msra.mxu0 %v3391
    %3598 = vmatprep.subr.bf16.mxu0 0
    %3599 = vmatpush1.bf16.msra.mxu0 %v3394
    %3600 = vmatprep.subr.bf16.mxu0 0
    %3601 = vmatpush1.bf16.msra.mxu0 %v3397
    %3602 = vmatprep.subr.bf16.mxu0 0
    %3603 = vmatpush1.bf16.msra.mxu0 %v3400
    %3604 = vmatprep.subr.bf16.mxu0 0
    %3605 = vmatpush1.bf16.msra.mxu0 %v3403
    %3606 = vmatprep.subr.bf16.mxu0 0
    %3607 = vmatpush1.bf16.msra.mxu0 %v3406
    %3608 = vmatprep.subr.bf16.mxu0 0
    %3609 = vmatpush1.bf16.msra.mxu0 %v3409
    %3610 = vmatprep.subr.bf16.mxu0 0
    %3611 = vmatpush1.bf16.msra.mxu0 %v3412
    %3612 = vmatprep.subr.bf16.mxu0 0
    %3613 = vmatpush1.bf16.msra.mxu0 %v3415
    %3614 = vmatprep.subr.bf16.mxu0 0
    %3615 = vmatpush1.bf16.msra.mxu0 %v3418
    %3616 = vmatprep.subr.bf16.mxu0 0
    %3617 = vmatpush1.bf16.msra.mxu0 %v3421
    %3618 = vmatprep.subr.bf16.mxu0 0
    %3619 = vmatpush1.bf16.msra.mxu0 %v3424
    %3620 = vmatprep.subr.bf16.mxu0 0
    %3621 = vmatpush1.bf16.msra.mxu0 %v3427
    %3622 = vmatprep.subr.bf16.mxu0 0
    %3623 = vmatpush1.bf16.msra.mxu0 %v3430
    %3624 = vmatprep.mubr.bf16.mxu0 %v3127
    %3625 = vmatmul.mubr.bf16.gmra.mrb[0].mxu0 %v3126
    %v3626 = vpop.f32.mrb[0].mxu0
    %v3627 = vadd.f32 %v3219, %v3626
    %v3628 = vpop.f32.mrb[0].mxu0
    %v3629 = vpop.f32.mrb[0].mxu0
    %v3630 = vadd.f32 %v3219, %v3629
    %v3631 = vpop.f32.mrb[0].mxu0
    %3632 = vmatprep.mubr.bf16.mxu0 %v3129
    %3633 = vmatmul.mubr.bf16.gmra.mrb[0].mxu0 %v3128
    %v3634 = vpop.f32.mrb[0].mxu0
    %v3635 = vadd.f32 %v3219, %v3634
    %v3636 = vpop.f32.mrb[0].mxu0
    %v3637 = vpop.f32.mrb[0].mxu0
    %v3638 = vadd.f32 %v3219, %v3637
    %v3639 = vpop.f32.mrb[0].mxu0
    %3640 = vmatprep.mubr.bf16.mxu0 %v3131
    %3641 = vmatmul.mubr.bf16.gmra.mrb[0].mxu0 %v3130
    %v3642 = vpop.f32.mrb[0].mxu0
    %v3643 = vadd.f32 %v3219, %v3642
    %v3644 = vpop.f32.mrb[0].mxu0
    %v3645 = vpop.f32.mrb[0].mxu0
    %v3646 = vadd.f32 %v3219, %v3645
    %v3647 = vpop.f32.mrb[0].mxu0
    %3648 = vmatprep.mubr.bf16.mxu0 %v3133
    %3649 = vmatmul.mubr.bf16.gmra.mrb[0].mxu0 %v3132
    %v3650 = vpop.f32.mrb[0].mxu0
    %v3651 = vadd.f32 %v3219, %v3650
    %v3652 = vpop.f32.mrb[0].mxu0
    %v3653 = vpop.f32.mrb[0].mxu0
    %v3654 = vadd.f32 %v3219, %v3653
    %v3655 = vpop.f32.mrb[0].mxu0
    %3656 = vmatprep.mubr.bf16.mxu0 %v3135
    %3657 = vmatmul.mubr.bf16.gmra.mrb[0].mxu0 %v3134
    %v3658 = vpop.f32.mrb[0].mxu0
    %v3659 = vadd.f32 %v3219, %v3658
    %v3660 = vpop.f32.mrb[0].mxu0
    %v3661 = vpop.f32.mrb[0].mxu0
    %v3662 = vadd.f32 %v3219, %v3661
    %v3663 = vpop.f32.mrb[0].mxu0
    %3664 = vmatprep.mubr.bf16.mxu0 %v3137
    %3665 = vmatmul.mubr.bf16.gmra.mrb[0].mxu0 %v3136
    %v3666 = vpop.f32.mrb[0].mxu0
    %v3667 = vadd.f32 %v3219, %v3666
    %v3668 = vpop.f32.mrb[0].mxu0
    %v3669 = vpop.f32.mrb[0].mxu0
    %v3670 = vadd.f32 %v3219, %v3669
    %v3671 = vpop.f32.mrb[0].mxu0
    %3672 = vmatprep.mubr.bf16.mxu0 %v3139
    %3673 = vmatmul.mubr.bf16.gmra.mrb[0].mxu0 %v3138
    %v3674 = vpop.f32.mrb[0].mxu0
    %v3675 = vadd.f32 %v3219, %v3674
    %v3676 = vpop.f32.mrb[0].mxu0
    %v3677 = vpop.f32.mrb[0].mxu0
    %v3678 = vadd.f32 %v3219, %v3677
    %v3679 = vpop.f32.mrb[0].mxu0
    %3680 = vmatprep.mubr.bf16.mxu0 %v3141
    %3681 = vmatmul.mubr.bf16.gmra.mrb[0].mxu0 %v3140
    %v3682 = vpop.f32.mrb[0].mxu0
    %v3683 = vadd.f32 %v3219, %v3682
    %v3684 = vpop.f32.mrb[0].mxu0
    %v3685 = vpop.f32.mrb[0].mxu0
    %v3686 = vadd.f32 %v3219, %v3685
    %v3687 = vpop.f32.mrb[0].mxu0
    %3688 = vdwg.mxu0
    %v3689 = vpack.c.bf16 %v3518, %v3514
    %v3690 = vpack.c.bf16 %v3520, %v3516
    %v3691 = vpack.c.bf16 %v3528, %v3524
    %v3692 = vpack.c.bf16 %v3530, %v3526
    %v3693 = vpack.c.bf16 %v3538, %v3534
    %v3694 = vpack.c.bf16 %v3540, %v3536
    %v3695 = vpack.c.bf16 %v3548, %v3544
    %v3696 = vpack.c.bf16 %v3550, %v3546
    %v3697 = vpack.c.bf16 %v3558, %v3554
    %v3698 = vpack.c.bf16 %v3560, %v3556
    %v3699 = vpack.c.bf16 %v3568, %v3564
    %v3700 = vpack.c.bf16 %v3570, %v3566
    %v3701 = vpack.c.bf16 %v3578, %v3574
    %v3702 = vpack.c.bf16 %v3580, %v3576
    %v3703 = vpack.c.bf16 %v3588, %v3584
    %v3704 = vpack.c.bf16 %v3590, %v3586
    %v3705 = vld [vmem:[%s21] sm:$0xf]
    %v3706 = vld [vmem:[%s21 + $0x4] sm:$0xf]
    %v3707 = vld [vmem:[%s21 + $0x8] sm:$0xf]
    %v3708 = vld [vmem:[%s21 + $0xc] sm:$0xf]
    %v3709 = vld [vmem:[%s21 + $0x10] sm:$0xf]
    %v3710 = vld [vmem:[%s21 + $0x14] sm:$0xf]
    %v3711 = vld [vmem:[%s21 + $0x18] sm:$0xf]
    %v3712 = vld [vmem:[%s21 + $0x1c] sm:$0xf]
    %v3713 = vld [vmem:[%s21 + $0x20] sm:$0xf]
    %v3714 = vld [vmem:[%s21 + $0x24] sm:$0xf]
    %v3715 = vld [vmem:[%s21 + $0x28] sm:$0xf]
    %v3716 = vld [vmem:[%s21 + $0x2c] sm:$0xf]
    %v3717 = vld [vmem:[%s21 + $0x30] sm:$0xf]
    %v3718 = vld [vmem:[%s21 + $0x34] sm:$0xf]
    %v3719 = vld [vmem:[%s21 + $0x38] sm:$0xf]
    %v3720 = vld [vmem:[%s21 + $0x3c] sm:$0xf]
    %v3721 = vld [vmem:[%s21 + $0x40] sm:$0xf]
    %v3722 = vld [vmem:[%s21 + $0x44] sm:$0xf]
    %v3723 = vld [vmem:[%s21 + $0x48] sm:$0xf]
    %v3724 = vld [vmem:[%s21 + $0x4c] sm:$0xf]
    %v3725 = vld [vmem:[%s21 + $0x50] sm:$0xf]
    %v3726 = vld [vmem:[%s21 + $0x54] sm:$0xf]
    %v3727 = vld [vmem:[%s21 + $0x58] sm:$0xf]
    %v3728 = vld [vmem:[%s21 + $0x5c] sm:$0xf]
    %v3729 = vld [vmem:[%s21 + $0x60] sm:$0xf]
    %v3730 = vld [vmem:[%s21 + $0x64] sm:$0xf]
    %v3731 = vld [vmem:[%s21 + $0x68] sm:$0xf]
    %v3732 = vld [vmem:[%s21 + $0x6c] sm:$0xf]
    %v3733 = vld [vmem:[%s21 + $0x70] sm:$0xf]
    %v3734 = vld [vmem:[%s21 + $0x74] sm:$0xf]
    %v3735 = vld [vmem:[%s21 + $0x78] sm:$0xf]
    %v3736 = vld [vmem:[%s21 + $0x7c] sm:$0xf]
    %v3737 = vld [vmem:[%s1] sm:$0xf]
    %v3738 = vld [vmem:[%s1 + $0x4] sm:$0xf]
    %v3739 = vld [vmem:[%s1 + $0x8] sm:$0xf]
    %v3740 = vld [vmem:[%s1 + $0xc] sm:$0xf]
    %v3741 = vld [vmem:[%s1 + $0x10] sm:$0xf]
    %v3742 = vld [vmem:[%s1 + $0x14] sm:$0xf]
    %v3743 = vld [vmem:[%s1 + $0x18] sm:$0xf]
    %v3744 = vld [vmem:[%s1 + $0x1c] sm:$0xf]
    %v3745 = vld [vmem:[%s1 + $0x20] sm:$0xf]
    %v3746 = vld [vmem:[%s1 + $0x24] sm:$0xf]
    %v3747 = vld [vmem:[%s1 + $0x28] sm:$0xf]
    %v3748 = vld [vmem:[%s1 + $0x2c] sm:$0xf]
    %v3749 = vld [vmem:[%s1 + $0x30] sm:$0xf]
    %v3750 = vld [vmem:[%s1 + $0x34] sm:$0xf]
    %v3751 = vld [vmem:[%s1 + $0x38] sm:$0xf]
    %v3752 = vld [vmem:[%s1 + $0x3c] sm:$0xf]
    %v3753 = vunpack.c.l.bf16 %v3737
    %v3754 = vunpack.c.l.bf16 %v3738
    %v3755 = vunpack.c.l.bf16 %v3739
    %v3756 = vunpack.c.l.bf16 %v3740
    %v3757 = vunpack.c.l.bf16 %v3741
    %v3758 = vunpack.c.l.bf16 %v3742
    %v3759 = vunpack.c.l.bf16 %v3743
    %v3760 = vunpack.c.l.bf16 %v3744
    %v3761 = vunpack.c.l.bf16 %v3745
    %v3762 = vunpack.c.l.bf16 %v3746
    %v3763 = vunpack.c.l.bf16 %v3747
    %v3764 = vunpack.c.l.bf16 %v3748
    %v3765 = vunpack.c.l.bf16 %v3749
    %v3766 = vunpack.c.l.bf16 %v3750
    %v3767 = vunpack.c.l.bf16 %v3751
    %v3768 = vunpack.c.l.bf16 %v3752
    %v3801 = vunpack.c.l.b16 %v3705
    %v3802 = vunpack.c.l.b16 %v3706
    %v3803 = vunpack.c.l.b16 %v3707
    %v3804 = vunpack.c.l.b16 %v3708
    %v3805 = vunpack.c.l.b16 %v3709
    %v3806 = vunpack.c.l.b16 %v3710
    %v3807 = vunpack.c.l.b16 %v3711
    %v3808 = vunpack.c.l.b16 %v3712
    %v3809 = vunpack.c.l.b16 %v3713
    %v3810 = vunpack.c.l.b16 %v3714
    %v3811 = vunpack.c.l.b16 %v3715
    %v3812 = vunpack.c.l.b16 %v3716
    %v3813 = vunpack.c.l.b16 %v3717
    %v3814 = vunpack.c.l.b16 %v3718
    %v3815 = vunpack.c.l.b16 %v3719
    %v3816 = vunpack.c.l.b16 %v3720
    %v3817 = vunpack.c.l.b16 %v3721
    %v3818 = vunpack.c.l.b16 %v3722
    %v3819 = vunpack.c.l.b16 %v3723
    %v3820 = vunpack.c.l.b16 %v3724
    %v3821 = vunpack.c.l.b16 %v3725
    %v3822 = vunpack.c.l.b16 %v3726
    %v3823 = vunpack.c.l.b16 %v3727
    %v3824 = vunpack.c.l.b16 %v3728
    %v3825 = vunpack.c.l.b16 %v3729
    %v3826 = vunpack.c.l.b16 %v3730
    %v3827 = vunpack.c.l.b16 %v3731
    %v3828 = vunpack.c.l.b16 %v3732
    %v3829 = vunpack.c.l.b16 %v3733
    %v3830 = vunpack.c.l.b16 %v3734
    %v3831 = vunpack.c.l.b16 %v3735
    %v3832 = vunpack.c.l.b16 %v3736
    %v3833 = vpack.c.b16 %v3802, %v3801
    %v3834 = vpack.c.b16 %v3804, %v3803
    %v3835 = vpack.c.b16 %v3806, %v3805
    %v3836 = vpack.c.b16 %v3808, %v3807
    %v3837 = vpack.c.b16 %v3810, %v3809
    %v3838 = vpack.c.b16 %v3812, %v3811
    %v3839 = vpack.c.b16 %v3814, %v3813
    %v3840 = vpack.c.b16 %v3816, %v3815
    %v3841 = vpack.c.b16 %v3818, %v3817
    %v3842 = vpack.c.b16 %v3820, %v3819
    %v3843 = vpack.c.b16 %v3822, %v3821
    %v3844 = vpack.c.b16 %v3824, %v3823
    %v3845 = vpack.c.b16 %v3826, %v3825
    %v3846 = vpack.c.b16 %v3828, %v3827
    %v3847 = vpack.c.b16 %v3830, %v3829
    %v3848 = vpack.c.b16 %v3832, %v3831
    %3865 = vmatprep.subr.bf16.mxu0 0
    %3866 = vmatpush1.bf16.msra.mxu0 %v3833
    %3867 = vmatprep.subr.bf16.mxu0 0
    %3868 = vmatpush1.bf16.msra.mxu0 %v3834
    %3869 = vmatprep.subr.bf16.mxu0 0
    %3870 = vmatpush1.bf16.msra.mxu0 %v3835
    %3871 = vmatprep.subr.bf16.mxu0 0
    %3872 = vmatpush1.bf16.msra.mxu0 %v3836
    %3873 = vmatprep.subr.bf16.mxu0 0
    %3874 = vmatpush1.bf16.msra.mxu0 %v3837
    %3875 = vmatprep.subr.bf16.mxu0 0
    %3876 = vmatpush1.bf16.msra.mxu0 %v3838
    %3877 = vmatprep.subr.bf16.mxu0 0
    %3878 = vmatpush1.bf16.msra.mxu0 %v3839
    %3879 = vmatprep.subr.bf16.mxu0 0
    %3880 = vmatpush1.bf16.msra.mxu0 %v3840
    %3881 = vmatprep.subr.bf16.mxu0 0
    %3882 = vmatpush1.bf16.msra.mxu0 %v3841
    %3883 = vmatprep.subr.bf16.mxu0 0
    %3884 = vmatpush1.bf16.msra.mxu0 %v3842
    %3885 = vmatprep.subr.bf16.mxu0 0
    %3886 = vmatpush1.bf16.msra.mxu0 %v3843
    %3887 = vmatprep.subr.bf16.mxu0 0
    %3888 = vmatpush1.bf16.msra.mxu0 %v3844
    %3889 = vmatprep.subr.bf16.mxu0 0
    %3890 = vmatpush1.bf16.msra.mxu0 %v3845
    %3891 = vmatprep.subr.bf16.mxu0 0
    %3892 = vmatpush1.bf16.msra.mxu0 %v3846
    %3893 = vmatprep.subr.bf16.mxu0 0
    %3894 = vmatpush1.bf16.msra.mxu0 %v3847
    %3895 = vmatprep.subr.bf16.mxu0 0
    %3896 = vmatpush1.bf16.msra.mxu0 %v3848
    %3897 = vmatprep.mubr.bf16.mxu0 %v3690
    %3898 = vmatmul.mubr.bf16.gmra.mrb[0].mxu0 %v3689
    %v3899 = vpop.f32.mrb[0].mxu0
    %v3900 = vadd.f32 %v3753, %v3899
    %v3901 = vpop.f32.mrb[0].mxu0
    %v3902 = vpop.f32.mrb[0].mxu0
    %v3903 = vadd.f32 %v3754, %v3902
    %v3904 = vpop.f32.mrb[0].mxu0
    %3905 = vmatprep.mubr.bf16.mxu0 %v3692
    %3906 = vmatmul.mubr.bf16.gmra.mrb[0].mxu0 %v3691
    %v3907 = vpop.f32.mrb[0].mxu0
    %v3908 = vadd.f32 %v3755, %v3907
    %v3909 = vpop.f32.mrb[0].mxu0
    %v3910 = vpop.f32.mrb[0].mxu0
    %v3911 = vadd.f32 %v3756, %v3910
    %v3912 = vpop.f32.mrb[0].mxu0
    %3913 = vmatprep.mubr.bf16.mxu0 %v3694
    %3914 = vmatmul.mubr.bf16.gmra.mrb[0].mxu0 %v3693
    %v3915 = vpop.f32.mrb[0].mxu0
    %v3916 = vadd.f32 %v3757, %v3915
    %v3917 = vpop.f32.mrb[0].mxu0
    %v3918 = vpop.f32.mrb[0].mxu0
    %v3919 = vadd.f32 %v3758, %v3918
    %v3920 = vpop.f32.mrb[0].mxu0
    %3921 = vmatprep.mubr.bf16.mxu0 %v3696
    %3922 = vmatmul.mubr.bf16.gmra.mrb[0].mxu0 %v3695
    %v3923 = vpop.f32.mrb[0].mxu0
    %v3924 = vadd.f32 %v3759, %v3923
    %v3925 = vpop.f32.mrb[0].mxu0
    %v3926 = vpop.f32.mrb[0].mxu0
    %v3927 = vadd.f32 %v3760, %v3926
    %v3928 = vpop.f32.mrb[0].mxu0
    %3929 = vmatprep.mubr.bf16.mxu0 %v3698
    %3930 = vmatmul.mubr.bf16.gmra.mrb[0].mxu0 %v3697
    %v3931 = vpop.f32.mrb[0].mxu0
    %v3932 = vadd.f32 %v3761, %v3931
    %v3933 = vpop.f32.mrb[0].mxu0
    %v3934 = vpop.f32.mrb[0].mxu0
    %v3935 = vadd.f32 %v3762, %v3934
    %v3936 = vpop.f32.mrb[0].mxu0
    %3937 = vmatprep.mubr.bf16.mxu0 %v3700
    %3938 = vmatmul.mubr.bf16.gmra.mrb[0].mxu0 %v3699
    %v3939 = vpop.f32.mrb[0].mxu0
    %v3940 = vadd.f32 %v3763, %v3939
    %v3941 = vpop.f32.mrb[0].mxu0
    %v3942 = vpop.f32.mrb[0].mxu0
    %v3943 = vadd.f32 %v3764, %v3942
    %v3944 = vpop.f32.mrb[0].mxu0
    %3945 = vmatprep.mubr.bf16.mxu0 %v3702
    %3946 = vmatmul.mubr.bf16.gmra.mrb[0].mxu0 %v3701
    %v3947 = vpop.f32.mrb[0].mxu0
    %v3948 = vadd.f32 %v3765, %v3947
    %v3949 = vpop.f32.mrb[0].mxu0
    %v3950 = vpop.f32.mrb[0].mxu0
    %v3951 = vadd.f32 %v3766, %v3950
    %v3952 = vpop.f32.mrb[0].mxu0
    %3953 = vmatprep.mubr.bf16.mxu0 %v3704
    %3954 = vmatmul.mubr.bf16.gmra.mrb[0].mxu0 %v3703
    %v3955 = vpop.f32.mrb[0].mxu0
    %v3956 = vadd.f32 %v3767, %v3955
    %v3957 = vpop.f32.mrb[0].mxu0
    %v3958 = vpop.f32.mrb[0].mxu0
    %v3959 = vadd.f32 %v3768, %v3958
    %v3960 = vpop.f32.mrb[0].mxu0
    %3961 = vdwg.mxu0
    %v3962 = vmax.f32 %v3900, 0.0
    %v3963 = vmax.f32 %v3903, 0.0
    %v3964 = vmax.f32 %v3908, 0.0
    %v3965 = vmax.f32 %v3911, 0.0
    %v3966 = vmax.f32 %v3916, 0.0
    %v3967 = vmax.f32 %v3919, 0.0
    %v3968 = vmax.f32 %v3924, 0.0
    %v3969 = vmax.f32 %v3927, 0.0
    %v3970 = vmax.f32 %v3932, 0.0
    %v3971 = vmax.f32 %v3935, 0.0
    %v3972 = vmax.f32 %v3940, 0.0
    %v3973 = vmax.f32 %v3943, 0.0
    %v3974 = vmax.f32 %v3948, 0.0
    %v3975 = vmax.f32 %v3951, 0.0
    %v3976 = vmax.f32 %v3956, 0.0
    %v3977 = vmax.f32 %v3959, 0.0
    %v3978 = vpack.c.bf16 %v3963, %v3962
    %v3979 = vpack.c.bf16 %v3965, %v3964
    %v3980 = vpack.c.bf16 %v3967, %v3966
    %v3981 = vpack.c.bf16 %v3969, %v3968
    %v3982 = vpack.c.bf16 %v3971, %v3970
    %v3983 = vpack.c.bf16 %v3973, %v3972
    %v3984 = vpack.c.bf16 %v3975, %v3974
    %v3985 = vpack.c.bf16 %v3977, %v3976
    %v3986 = vld [vmem:[%s22] sm:$0xf]
    %v3987 = vld [vmem:[%s22 + $0x4] sm:$0xf]
    %v3988 = vld [vmem:[%s22 + $0x8] sm:$0xf]
    %v3989 = vld [vmem:[%s22 + $0xc] sm:$0xf]
    %v3990 = vld [vmem:[%s22 + $0x10] sm:$0xf]
    %v3991 = vld [vmem:[%s22 + $0x14] sm:$0xf]
    %v3992 = vld [vmem:[%s22 + $0x18] sm:$0xf]
    %v3993 = vld [vmem:[%s22 + $0x1c] sm:$0xf]
    %v3994 = vld [vmem:[%s22 + $0x20] sm:$0xf]
    %v3995 = vld [vmem:[%s22 + $0x24] sm:$0xf]
    %v3996 = vld [vmem:[%s22 + $0x28] sm:$0xf]
    %v3997 = vld [vmem:[%s22 + $0x2c] sm:$0xf]
    %v3998 = vld [vmem:[%s22 + $0x30] sm:$0xf]
    %v3999 = vld [vmem:[%s22 + $0x34] sm:$0xf]
    %v4000 = vld [vmem:[%s22 + $0x38] sm:$0xf]
    %v4001 = vld [vmem:[%s22 + $0x3c] sm:$0xf]
    %v4002 = vld [vmem:[%s23] sm:$0x1]
    %v4004 = vlaneseq
    %v4005 = vshrl.u32 %v4004, 7
    %v4006 = vsub.s32 0, %v4005
    %v4007 = vrot.slane %v4002, %v4006
    %v4025 = vunpack.c.l.b16 %v3986
    %v4026 = vunpack.c.l.b16 %v3987
    %v4027 = vunpack.c.l.b16 %v3988
    %v4028 = vunpack.c.l.b16 %v3989
    %v4029 = vunpack.c.l.b16 %v3990
    %v4030 = vunpack.c.l.b16 %v3991
    %v4031 = vunpack.c.l.b16 %v3992
    %v4032 = vunpack.c.l.b16 %v3993
    %v4033 = vunpack.c.l.b16 %v3994
    %v4034 = vunpack.c.l.b16 %v3995
    %v4035 = vunpack.c.l.b16 %v3996
    %v4036 = vunpack.c.l.b16 %v3997
    %v4037 = vunpack.c.l.b16 %v3998
    %v4038 = vunpack.c.l.b16 %v3999
    %v4039 = vunpack.c.l.b16 %v4000
    %v4040 = vunpack.c.l.b16 %v4001
    %v4041 = vpack.c.b16 %v4026, %v4025
    %v4042 = vpack.c.b16 %v4028, %v4027
    %v4043 = vpack.c.b16 %v4030, %v4029
    %v4044 = vpack.c.b16 %v4032, %v4031
    %v4045 = vpack.c.b16 %v4034, %v4033
    %v4046 = vpack.c.b16 %v4036, %v4035
    %v4047 = vpack.c.b16 %v4038, %v4037
    %v4048 = vpack.c.b16 %v4040, %v4039
    %4057 = vmatprep.subr.bf16.mxu0 0
    %4058 = vmatpush1.bf16.msra.mxu0 %v4041
    %4059 = vmatprep.subr.bf16.mxu0 0
    %4060 = vmatpush1.bf16.msra.mxu0 %v4042
    %4061 = vmatprep.subr.bf16.mxu0 0
    %4062 = vmatpush1.bf16.msra.mxu0 %v4043
    %4063 = vmatprep.subr.bf16.mxu0 0
    %4064 = vmatpush1.bf16.msra.mxu0 %v4044
    %4065 = vmatprep.subr.bf16.mxu0 0
    %4066 = vmatpush1.bf16.msra.mxu0 %v4045
    %4067 = vmatprep.subr.bf16.mxu0 0
    %4068 = vmatpush1.bf16.msra.mxu0 %v4046
    %4069 = vmatprep.subr.bf16.mxu0 0
    %4070 = vmatpush1.bf16.msra.mxu0 %v4047
    %4071 = vmatprep.subr.bf16.mxu0 0
    %4072 = vmatpush1.bf16.msra.mxu0 %v4048
    %4073 = vmatprep.subr.bf16.mxu0 0
    %4074 = vmatpush1.bf16.msra.mxu0 0
    %4075 = vmatprep.subr.bf16.mxu0 0
    %4076 = vmatpush1.bf16.msra.mxu0 0
    %4077 = vmatprep.subr.bf16.mxu0 0
    %4078 = vmatpush1.bf16.msra.mxu0 0
    %4079 = vmatprep.subr.bf16.mxu0 0
    %4080 = vmatpush1.bf16.msra.mxu0 0
    %4081 = vmatprep.subr.bf16.mxu0 0
    %4082 = vmatpush1.bf16.msra.mxu0 0
    %4083 = vmatprep.subr.bf16.mxu0 0
    %4084 = vmatpush1.bf16.msra.mxu0 0
    %4085 = vmatprep.subr.bf16.mxu0 0
    %4086 = vmatpush1.bf16.msra.mxu0 0
    %4087 = vmatprep.subr.bf16.mxu0 0
    %4088 = vmatpush1.bf16.msra.mxu0 0
    %4089 = vmatprep.mubr.bf16.mxu0 0
    %4090 = vmatmul.mubr.bf16.gmra.mrb[0].mxu0 %v3978
    %v4091 = vpop.f32.mrb[0].mxu0
    %v4092 = vadd.f32 %v4007, %v4091
    %v4093 = vpop.f32.mrb[0].mxu0
    %v4094 = vpop.f32.mrb[0].mxu0
    %v4095 = vadd.f32 %v4007, %v4094
    %v4096 = vpop.f32.mrb[0].mxu0
    %4097 = vmatprep.mubr.bf16.mxu0 0
    %4098 = vmatmul.mubr.bf16.gmra.mrb[0].mxu0 %v3979
    %v4099 = vpop.f32.mrb[0].mxu0
    %v4100 = vadd.f32 %v4007, %v4099
    %v4101 = vpop.f32.mrb[0].mxu0
    %v4102 = vpop.f32.mrb[0].mxu0
    %v4103 = vadd.f32 %v4007, %v4102
    %v4104 = vpop.f32.mrb[0].mxu0
    %4105 = vmatprep.mubr.bf16.mxu0 0
    %4106 = vmatmul.mubr.bf16.gmra.mrb[0].mxu0 %v3980
    %v4107 = vpop.f32.mrb[0].mxu0
    %v4108 = vadd.f32 %v4007, %v4107
    %v4109 = vpop.f32.mrb[0].mxu0
    %v4110 = vpop.f32.mrb[0].mxu0
    %v4111 = vadd.f32 %v4007, %v4110
    %v4112 = vpop.f32.mrb[0].mxu0
    %4113 = vmatprep.mubr.bf16.mxu0 0
    %4114 = vmatmul.mubr.bf16.gmra.mrb[0].mxu0 %v3981
    %v4115 = vpop.f32.mrb[0].mxu0
    %v4116 = vadd.f32 %v4007, %v4115
    %v4117 = vpop.f32.mrb[0].mxu0
    %v4118 = vpop.f32.mrb[0].mxu0
    %v4119 = vadd.f32 %v4007, %v4118
    %v4120 = vpop.f32.mrb[0].mxu0
    %4121 = vmatprep.mubr.bf16.mxu0 0
    %4122 = vmatmul.mubr.bf16.gmra.mrb[0].mxu0 %v3982
    %v4123 = vpop.f32.mrb[0].mxu0
    %v4124 = vadd.f32 %v4007, %v4123
    %v4125 = vpop.f32.mrb[0].mxu0
    %v4126 = vpop.f32.mrb[0].mxu0
    %v4127 = vadd.f32 %v4007, %v4126
    %v4128 = vpop.f32.mrb[0].mxu0
    %4129 = vmatprep.mubr.bf16.mxu0 0
    %4130 = vmatmul.mubr.bf16.gmra.mrb[0].mxu0 %v3983
    %v4131 = vpop.f32.mrb[0].mxu0
    %v4132 = vadd.f32 %v4007, %v4131
    %v4133 = vpop.f32.mrb[0].mxu0
    %v4134 = vpop.f32.mrb[0].mxu0
    %v4135 = vadd.f32 %v4007, %v4134
    %v4136 = vpop.f32.mrb[0].mxu0
    %4137 = vmatprep.mubr.bf16.mxu0 0
    %4138 = vmatmul.mubr.bf16.gmra.mrb[0].mxu0 %v3984
    %v4139 = vpop.f32.mrb[0].mxu0
    %v4140 = vadd.f32 %v4007, %v4139
    %v4141 = vpop.f32.mrb[0].mxu0
    %v4142 = vpop.f32.mrb[0].mxu0
    %v4143 = vadd.f32 %v4007, %v4142
    %v4144 = vpop.f32.mrb[0].mxu0
    %4145 = vmatprep.mubr.bf16.mxu0 0
    %4146 = vmatmul.mubr.bf16.gmra.mrb[0].mxu0 %v3985
    %v4147 = vpop.f32.mrb[0].mxu0
    %v4148 = vadd.f32 %v4007, %v4147
    %v4149 = vpop.f32.mrb[0].mxu0
    %v4150 = vpop.f32.mrb[0].mxu0
    %v4151 = vadd.f32 %v4007, %v4150
    %v4152 = vpop.f32.mrb[0].mxu0
    %4153 = vdwg.mxu0
    %v4154 = vlaneseq
    %v4155 = vand.u32 %v4154, 127
    %vm4156 = vcmp.eq.s32.totalorder %v4155, 3
    %4158 = vset.pattern.permute.xlu0 0
    %4159 = vperm.xlu0 %4158, %v3627
    %v4160 = vpop.permute.xlu0 %4159
    %4163 = vset.pattern.permute.xlu0 0
    %4164 = vperm.xlu0 %4163, %v3630
    %v4165 = vpop.permute.xlu0 %4164
    %4168 = vset.pattern.permute.xlu0 0
    %4169 = vperm.xlu0 %4168, %v3635
    %v4170 = vpop.permute.xlu0 %4169
    %4173 = vset.pattern.permute.xlu0 0
    %4174 = vperm.xlu0 %4173, %v3638
    %v4175 = vpop.permute.xlu0 %4174
    %4178 = vset.pattern.permute.xlu0 0
    %4179 = vperm.xlu0 %4178, %v3643
    %v4180 = vpop.permute.xlu0 %4179
    %4183 = vset.pattern.permute.xlu0 0
    %4184 = vperm.xlu0 %4183, %v3646
    %v4185 = vpop.permute.xlu0 %4184
    %4188 = vset.pattern.permute.xlu0 0
    %4189 = vperm.xlu0 %4188, %v3651
    %v4190 = vpop.permute.xlu0 %4189
    %4193 = vset.pattern.permute.xlu0 0
    %4194 = vperm.xlu0 %4193, %v3654
    %v4195 = vpop.permute.xlu0 %4194
    %4198 = vset.pattern.permute.xlu0 0
    %4199 = vperm.xlu0 %4198, %v3659
    %v4200 = vpop.permute.xlu0 %4199
    %4203 = vset.pattern.permute.xlu0 0
    %4204 = vperm.xlu0 %4203, %v3662
    %v4205 = vpop.permute.xlu0 %4204
    %4208 = vset.pattern.permute.xlu0 0
    %4209 = vperm.xlu0 %4208, %v3667
    %v4210 = vpop.permute.xlu0 %4209
    %4213 = vset.pattern.permute.xlu0 0
    %4214 = vperm.xlu0 %4213, %v3670
    %v4215 = vpop.permute.xlu0 %4214
    %4218 = vset.pattern.permute.xlu0 0
    %4219 = vperm.xlu0 %4218, %v3675
    %v4220 = vpop.permute.xlu0 %4219
    %4223 = vset.pattern.permute.xlu0 0
    %4224 = vperm.xlu0 %4223, %v3678
    %v4225 = vpop.permute.xlu0 %4224
    %4228 = vset.pattern.permute.xlu0 0
    %4229 = vperm.xlu0 %4228, %v3683
    %v4230 = vpop.permute.xlu0 %4229
    %4233 = vset.pattern.permute.xlu0 0
    %4234 = vperm.xlu0 %4233, %v3686
    %v4235 = vpop.permute.xlu0 %4234
    %v4237 = vsel %vm4156, %v4160, %v4092
    %v4238 = vsel %vm4156, %v4165, %v4095
    %v4239 = vsel %vm4156, %v4170, %v4100
    %v4240 = vsel %vm4156, %v4175, %v4103
    %v4241 = vsel %vm4156, %v4180, %v4108
    %v4242 = vsel %vm4156, %v4185, %v4111
    %v4243 = vsel %vm4156, %v4190, %v4116
    %v4244 = vsel %vm4156, %v4195, %v4119
    %v4245 = vsel %vm4156, %v4200, %v4124
    %v4246 = vsel %vm4156, %v4205, %v4127
    %v4247 = vsel %vm4156, %v4210, %v4132
    %v4248 = vsel %vm4156, %v4215, %v4135
    %v4249 = vsel %vm4156, %v4220, %v4140
    %v4250 = vsel %vm4156, %v4225, %v4143
    %v4251 = vsel %vm4156, %v4230, %v4148
    %v4252 = vsel %vm4156, %v4235, %v4151
    %vm4253 = vcmask 64512
    %4254 = vst.msk [vmem:[%s24] sm:$0xff] %vm4253, %v4237
    %4255 = vst.msk [vmem:[%s24 + $0x8] sm:$0xff] %vm4253, %v4238
    %4256 = vst.msk [vmem:[%s24 + $0x10] sm:$0xff] %vm4253, %v4239
    %4257 = vst.msk [vmem:[%s24 + $0x18] sm:$0xff] %vm4253, %v4240
    %4258 = vst.msk [vmem:[%s24 + $0x20] sm:$0xff] %vm4253, %v4241
    %4259 = vst.msk [vmem:[%s24 + $0x28] sm:$0xff] %vm4253, %v4242
    %4260 = vst.msk [vmem:[%s24 + $0x30] sm:$0xff] %vm4253, %v4243
    %4261 = vst.msk [vmem:[%s24 + $0x38] sm:$0xff] %vm4253, %v4244
    %4262 = vst.msk [vmem:[%s24 + $0x40] sm:$0xff] %vm4253, %v4245
    %4263 = vst.msk [vmem:[%s24 + $0x48] sm:$0xff] %vm4253, %v4246
    %4264 = vst.msk [vmem:[%s24 + $0x50] sm:$0xff] %vm4253, %v4247
    %4265 = vst.msk [vmem:[%s24 + $0x58] sm:$0xff] %vm4253, %v4248
    %4266 = vst.msk [vmem:[%s24 + $0x60] sm:$0xff] %vm4253, %v4249
    %4267 = vst.msk [vmem:[%s24 + $0x68] sm:$0xff] %vm4253, %v4250
    %4268 = vst.msk [vmem:[%s24 + $0x70] sm:$0xff] %vm4253, %v4251
    %4269 = vst.msk [vmem:[%s24 + $0x78] sm:$0xff] %vm4253, %v4252
    // Predicated region
    $region102: #{nerf_forward.2} parent=1 // pred_check
      _
    $region103: #{nerf_forward.2} parent=1 // pred_check_branch
      %4271 = sbr.rel (0) target = $region105
    $region104: #{nerf_forward.2} parent=1 // pred_region
      _
    $region105: #{nerf_forward.2} parent=1 // pred_fallthru
      _
    // Predicated region
    $region106: #{nerf_forward.2} parent=1 // pred_check
      _
    $region107: #{nerf_forward.2} parent=1 // pred_check_branch
      %4273 = sbr.rel (0) target = $region109
    $region108: #{nerf_forward.2} parent=1 // pred_region
      _
    $region109: #{nerf_forward.2} parent=1 // pred_fallthru
      _
    %4274 = vsyncpa [#allocation3], 1

// kernel: nerf_forward.3
$region0: #{nerf_forward.3}
  #allocation0 [shape = 'u32[]', space=smem, size = 0x4, offset = 0x4, fixed_abs, tag = 'smem constant byte address 0x4 - core index']
  #allocation1 [shape = 'u32[144,128]{1,0:T(1,128)}', space=vmem, size = 0x12000, scoped, tag = 'internal scratch']
  %s0 = inlined_call_operand.vmem [shape: bf16[384,64], index: 0, kind: input, shape index: {}]
  %s1 = inlined_call_operand.vmem [shape: bf16[384,128], index: 1, kind: input, shape index: {}]
  %s2 = inlined_call_operand.vmem [shape: bf16[64,256], index: 2, kind: input, shape index: {}]
  %s3 = inlined_call_operand.vmem [shape: f32[1,256], index: 3, kind: input, shape index: {}]
  %s4 = inlined_call_operand.vmem [shape: bf16[256,256], index: 4, kind: input, shape index: {}]
  %s5 = inlined_call_operand.vmem [shape: f32[1,256], index: 5, kind: input, shape index: {}]
  %s6 = inlined_call_operand.vmem [shape: bf16[256,256], index: 6, kind: input, shape index: {}]
  %s7 = inlined_call_operand.vmem [shape: f32[1,256], index: 7, kind: input, shape index: {}]
  %s8 = inlined_call_operand.vmem [shape: bf16[256,256], index: 8, kind: input, shape index: {}]
  %s9 = inlined_call_operand.vmem [shape: f32[1,256], index: 9, kind: input, shape index: {}]
  %s10 = inlined_call_operand.vmem [shape: bf16[256,256], index: 10, kind: input, shape index: {}]
  %s11 = inlined_call_operand.vmem [shape: f32[1,256], index: 11, kind: input, shape index: {}]
  %s12 = inlined_call_operand.vmem [shape: bf16[256,256], index: 12, kind: input, shape index: {}]
  %s13 = inlined_call_operand.vmem [shape: bf16[64,256], index: 13, kind: input, shape index: {}]
  %s14 = inlined_call_operand.vmem [shape: f32[1,256], index: 14, kind: input, shape index: {}]
  %s15 = inlined_call_operand.vmem [shape: bf16[256,256], index: 15, kind: input, shape index: {}]
  %s16 = inlined_call_operand.vmem [shape: f32[1,256], index: 16, kind: input, shape index: {}]
  %s17 = inlined_call_operand.vmem [shape: bf16[256,256], index: 17, kind: input, shape index: {}]
  %s18 = inlined_call_operand.vmem [shape: f32[1,256], index: 18, kind: input, shape index: {}]
  %s19 = inlined_call_operand.vmem [shape: bf16[256,384], index: 19, kind: input, shape index: {}]
  %s20 = inlined_call_operand.vmem [shape: f32[1,384], index: 20, kind: input, shape index: {}]
  %s21 = inlined_call_operand.vmem [shape: bf16[256,128], index: 21, kind: input, shape index: {}]
  %s22 = inlined_call_operand.vmem [shape: bf16[128,8], index: 22, kind: input, shape index: {}]
  %s23 = inlined_call_operand.vmem [shape: f32[1,8], index: 23, kind: input, shape index: {}]
  %s24 = inlined_call_operand.vmem [shape: f32[384,8], index: 24, kind: output, shape index: {}]
  %s25 = sld [smem:[#allocation0]]
  $region177: #{nerf_forward.3} parent=0
    _
  %s27 = ssub.s32 1, %s25
  %s28 = scalar_select 0, %s27, %s25
  $region1: #{nerf_forward.3} parent=0
    #allocation2 [shape = 'u8[262144]{0}', space=vmem, size = 0x40000, scoped, tag = 'output window, operand 0']
    loop: start=0, step=1, limit=4
    $region2: #{nerf_forward.3} parent=1 // loop_pre_header
      _
    $region3: #{nerf_forward.3} parent=1 // loop_header
      %s30 = sphi 0, %s34
      %p31 = scmp.ge.s32.totalorder %s30, 4
      %s40 = sphi 0, %s42
      %s43 = sphi 0, %s40
      %s44 = sphi 0, %s43
      %s60 = sphi 0, %s44
      %s66 = sphi 0, %s68
      %s69 = sphi 0, %s66
      %s70 = sphi 0, %s69
      %s86 = sphi 0, %s70
      %s90 = sphi 0, %s90
      %s92 = sphi 0, %s90
      %s93 = sphi 0, %s92
      %s107 = sphi 0, %s93
      %s111 = sphi 0, %s111
      %s113 = sphi 0, %s111
      %s114 = sphi 0, %s113
      %s128 = sphi 0, %s114
      %s132 = sphi 0, %s132
      %s134 = sphi 0, %s132
      %s135 = sphi 0, %s134
      %s149 = sphi 0, %s135
      %s153 = sphi 0, %s153
      %s155 = sphi 0, %s153
      %s156 = sphi 0, %s155
      %s170 = sphi 0, %s156
      %s174 = sphi 0, %s174
      %s176 = sphi 0, %s174
      %s177 = sphi 0, %s176
      %s191 = sphi 0, %s177
      %s195 = sphi 0, %s195
      %s197 = sphi 0, %s195
      %s198 = sphi 0, %s197
      %s212 = sphi 0, %s198
      %s216 = sphi 0, %s216
      %s218 = sphi 0, %s216
      %s219 = sphi 0, %s218
      %s233 = sphi 0, %s219
      %s237 = sphi 0, %s237
      %s239 = sphi 0, %s237
      %s240 = sphi 0, %s239
      %s254 = sphi 0, %s240
      %s258 = sphi 0, %s258
      %s260 = sphi 0, %s258
      %s261 = sphi 0, %s260
      %s275 = sphi 0, %s261
      %s279 = sphi 0, %s279
      %s281 = sphi 0, %s279
      %s282 = sphi 0, %s281
      %s296 = sphi 0, %s282
      %s300 = sphi 0, %s300
      %s302 = sphi 0, %s300
      %s303 = sphi 0, %s302
      %s317 = sphi 0, %s303
      %s321 = sphi 0, %s321
      %s323 = sphi 0, %s321
      %s324 = sphi 0, %s323
      %s338 = sphi 0, %s324
      %s342 = sphi 0, %s342
      %s344 = sphi 0, %s342
      %s345 = sphi 0, %s344
      %s359 = sphi 0, %s345
      %s363 = sphi 0, %s363
      %s365 = sphi 0, %s363
      %s366 = sphi 0, %s365
      %s380 = sphi 0, %s366
      %s384 = sphi 0, %s384
      %s386 = sphi 0, %s384
      %s387 = sphi 0, %s386
      %s401 = sphi 0, %s387
      %s405 = sphi 0, %s405
      %s407 = sphi 0, %s405
      %s408 = sphi 0, %s407
      %s422 = sphi 0, %s408
      %s426 = sphi 0, %s426
      %s428 = sphi 0, %s426
      %s429 = sphi 0, %s428
      %s443 = sphi 0, %s429
      %s447 = sphi 0, %s447
      %s449 = sphi 0, %s447
      %s450 = sphi 0, %s449
      %s464 = sphi 0, %s450
      %s468 = sphi 0, %s468
      %s470 = sphi 0, %s468
      %s471 = sphi 0, %s470
      %s485 = sphi 0, %s471
      %s489 = sphi 0, %s489
      %s491 = sphi 0, %s489
      %s492 = sphi 0, %s491
      %s506 = sphi 0, %s492
      %s510 = sphi 0, %s510
      %s512 = sphi 0, %s510
      %s513 = sphi 0, %s512
      %s527 = sphi 0, %s513
      %s531 = sphi 0, %s531
      %s533 = sphi 0, %s531
      %s534 = sphi 0, %s533
      %s548 = sphi 0, %s534
      %s554 = sphi 0, %s556
      %s557 = sphi 0, %s554
      %s558 = sphi 0, %s557
      %s574 = sphi 0, %s558
    $region4: #{nerf_forward.3} parent=1 // loop_header_branch
      %33 = sbr.rel (%p31) target = $region8
    $region5: #{nerf_forward.3} parent=1 // loop_body
      %s35 = ssub.s32 %s30, 1
      %s36 = ssub.s32 %s30, 2
      %s37 = sadd.s32 %s30, 1
      %s38 = ssub.s32 %s30, %s37
      %p39 = scmp.eq.s32.totalorder %s38, 0
      %s41 = sadd.s32 %s40, 1
      %s42 = scalar_select %p39, %s40, %s41
      %p45 = pneg %p39
      %p46 = scmp.eq.s32.totalorder %s30, 1
      %p47 = por %p45, %p46
      %p48 = scmp.ne.s32.totalorder %s40, %s43
      %p49 = scmp.eq.s32.totalorder %s30, 0
      %p50 = por %p48, %p49
      %p51 = scmp.ne.s32.totalorder %s40, %s43
      %p52 = scmp.eq.s32.totalorder %s35, 1
      %p53 = por %p51, %p52
      %p54 = scmp.ne.s32.totalorder %s43, %s44
      %p55 = scmp.eq.s32.totalorder %s35, 0
      %p56 = por %p54, %p55
      %p57 = scmp.ne.s32.totalorder %s43, %s44
      %p58 = scmp.eq.s32.totalorder %s36, 1
      %p59 = por %p57, %p58
      %p61 = scmp.ne.s32.totalorder %s44, %s60
      %p62 = scmp.eq.s32.totalorder %s36, 0
      %p63 = por %p61, %p62
      %s64 = ssub.s32 %s30, %s37
      %p65 = scmp.eq.s32.totalorder %s64, 0
      %s67 = sadd.s32 %s66, 1
      %s68 = scalar_select %p65, %s66, %s67
      %p71 = pneg %p65
      %p72 = scmp.eq.s32.totalorder %s30, 1
      %p73 = por %p71, %p72
      %p74 = scmp.ne.s32.totalorder %s66, %s69
      %p75 = scmp.eq.s32.totalorder %s30, 0
      %p76 = por %p74, %p75
      %p77 = scmp.ne.s32.totalorder %s66, %s69
      %p78 = scmp.eq.s32.totalorder %s35, 1
      %p79 = por %p77, %p78
      %p80 = scmp.ne.s32.totalorder %s69, %s70
      %p81 = scmp.eq.s32.totalorder %s35, 0
      %p82 = por %p80, %p81
      %p83 = scmp.ne.s32.totalorder %s69, %s70
      %p84 = scmp.eq.s32.totalorder %s36, 1
      %p85 = por %p83, %p84
      %p87 = scmp.ne.s32.totalorder %s70, %s86
      %p88 = scmp.eq.s32.totalorder %s36, 0
      %p89 = por %p87, %p88
      %s91 = sadd.s32 %s90, 1
      %p94 = scmp.eq.s32.totalorder %s30, 1
      %p95 = scmp.ne.s32.totalorder %s90, %s92
      %p96 = scmp.eq.s32.totalorder %s30, 0
      %p97 = por %p95, %p96
      %p98 = scmp.ne.s32.totalorder %s90, %s92
      %p99 = scmp.eq.s32.totalorder %s35, 1
      %p100 = por %p98, %p99
      %p101 = scmp.ne.s32.totalorder %s92, %s93
      %p102 = scmp.eq.s32.totalorder %s35, 0
      %p103 = por %p101, %p102
      %p104 = scmp.ne.s32.totalorder %s92, %s93
      %p105 = scmp.eq.s32.totalorder %s36, 1
      %p106 = por %p104, %p105
      %p108 = scmp.ne.s32.totalorder %s93, %s107
      %p109 = scmp.eq.s32.totalorder %s36, 0
      %p110 = por %p108, %p109
      %s112 = sadd.s32 %s111, 1
      %p115 = scmp.eq.s32.totalorder %s30, 1
      %p116 = scmp.ne.s32.totalorder %s111, %s113
      %p117 = scmp.eq.s32.totalorder %s30, 0
      %p118 = por %p116, %p117
      %p119 = scmp.ne.s32.totalorder %s111, %s113
      %p120 = scmp.eq.s32.totalorder %s35, 1
      %p121 = por %p119, %p120
      %p122 = scmp.ne.s32.totalorder %s113, %s114
      %p123 = scmp.eq.s32.totalorder %s35, 0
      %p124 = por %p122, %p123
      %p125 = scmp.ne.s32.totalorder %s113, %s114
      %p126 = scmp.eq.s32.totalorder %s36, 1
      %p127 = por %p125, %p126
      %p129 = scmp.ne.s32.totalorder %s114, %s128
      %p130 = scmp.eq.s32.totalorder %s36, 0
      %p131 = por %p129, %p130
      %s133 = sadd.s32 %s132, 1
      %p136 = scmp.eq.s32.totalorder %s30, 1
      %p137 = scmp.ne.s32.totalorder %s132, %s134
      %p138 = scmp.eq.s32.totalorder %s30, 0
      %p139 = por %p137, %p138
      %p140 = scmp.ne.s32.totalorder %s132, %s134
      %p141 = scmp.eq.s32.totalorder %s35, 1
      %p142 = por %p140, %p141
      %p143 = scmp.ne.s32.totalorder %s134, %s135
      %p144 = scmp.eq.s32.totalorder %s35, 0
      %p145 = por %p143, %p144
      %p146 = scmp.ne.s32.totalorder %s134, %s135
      %p147 = scmp.eq.s32.totalorder %s36, 1
      %p148 = por %p146, %p147
      %p150 = scmp.ne.s32.totalorder %s135, %s149
      %p151 = scmp.eq.s32.totalorder %s36, 0
      %p152 = por %p150, %p151
      %s154 = sadd.s32 %s153, 1
      %p157 = scmp.eq.s32.totalorder %s30, 1
      %p158 = scmp.ne.s32.totalorder %s153, %s155
      %p159 = scmp.eq.s32.totalorder %s30, 0
      %p160 = por %p158, %p159
      %p161 = scmp.ne.s32.totalorder %s153, %s155
      %p162 = scmp.eq.s32.totalorder %s35, 1
      %p163 = por %p161, %p162
      %p164 = scmp.ne.s32.totalorder %s155, %s156
      %p165 = scmp.eq.s32.totalorder %s35, 0
      %p166 = por %p164, %p165
      %p167 = scmp.ne.s32.totalorder %s155, %s156
      %p168 = scmp.eq.s32.totalorder %s36, 1
      %p169 = por %p167, %p168
      %p171 = scmp.ne.s32.totalorder %s156, %s170
      %p172 = scmp.eq.s32.totalorder %s36, 0
      %p173 = por %p171, %p172
      %s175 = sadd.s32 %s174, 1
      %p178 = scmp.eq.s32.totalorder %s30, 1
      %p179 = scmp.ne.s32.totalorder %s174, %s176
      %p180 = scmp.eq.s32.totalorder %s30, 0
      %p181 = por %p179, %p180
      %p182 = scmp.ne.s32.totalorder %s174, %s176
      %p183 = scmp.eq.s32.totalorder %s35, 1
      %p184 = por %p182, %p183
      %p185 = scmp.ne.s32.totalorder %s176, %s177
      %p186 = scmp.eq.s32.totalorder %s35, 0
      %p187 = por %p185, %p186
      %p188 = scmp.ne.s32.totalorder %s176, %s177
      %p189 = scmp.eq.s32.totalorder %s36, 1
      %p190 = por %p188, %p189
      %p192 = scmp.ne.s32.totalorder %s177, %s191
      %p193 = scmp.eq.s32.totalorder %s36, 0
      %p194 = por %p192, %p193
      %s196 = sadd.s32 %s195, 1
      %p199 = scmp.eq.s32.totalorder %s30, 1
      %p200 = scmp.ne.s32.totalorder %s195, %s197
      %p201 = scmp.eq.s32.totalorder %s30, 0
      %p202 = por %p200, %p201
      %p203 = scmp.ne.s32.totalorder %s195, %s197
      %p204 = scmp.eq.s32.totalorder %s35, 1
      %p205 = por %p203, %p204
      %p206 = scmp.ne.s32.totalorder %s197, %s198
      %p207 = scmp.eq.s32.totalorder %s35, 0
      %p208 = por %p206, %p207
      %p209 = scmp.ne.s32.totalorder %s197, %s198
      %p210 = scmp.eq.s32.totalorder %s36, 1
      %p211 = por %p209, %p210
      %p213 = scmp.ne.s32.totalorder %s198, %s212
      %p214 = scmp.eq.s32.totalorder %s36, 0
      %p215 = por %p213, %p214
      %s217 = sadd.s32 %s216, 1
      %p220 = scmp.eq.s32.totalorder %s30, 1
      %p221 = scmp.ne.s32.totalorder %s216, %s218
      %p222 = scmp.eq.s32.totalorder %s30, 0
      %p223 = por %p221, %p222
      %p224 = scmp.ne.s32.totalorder %s216, %s218
      %p225 = scmp.eq.s32.totalorder %s35, 1
      %p226 = por %p224, %p225
      %p227 = scmp.ne.s32.totalorder %s218, %s219
      %p228 = scmp.eq.s32.totalorder %s35, 0
      %p229 = por %p227, %p228
      %p230 = scmp.ne.s32.totalorder %s218, %s219
      %p231 = scmp.eq.s32.totalorder %s36, 1
      %p232 = por %p230, %p231
      %p234 = scmp.ne.s32.totalorder %s219, %s233
      %p235 = scmp.eq.s32.totalorder %s36, 0
      %p236 = por %p234, %p235
      %s238 = sadd.s32 %s237, 1
      %p241 = scmp.eq.s32.totalorder %s30, 1
      %p242 = scmp.ne.s32.totalorder %s237, %s239
      %p243 = scmp.eq.s32.totalorder %s30, 0
      %p244 = por %p242, %p243
      %p245 = scmp.ne.s32.totalorder %s237, %s239
      %p246 = scmp.eq.s32.totalorder %s35, 1
      %p247 = por %p245, %p246
      %p248 = scmp.ne.s32.totalorder %s239, %s240
      %p249 = scmp.eq.s32.totalorder %s35, 0
      %p250 = por %p248, %p249
      %p251 = scmp.ne.s32.totalorder %s239, %s240
      %p252 = scmp.eq.s32.totalorder %s36, 1
      %p253 = por %p251, %p252
      %p255 = scmp.ne.s32.totalorder %s240, %s254
      %p256 = scmp.eq.s32.totalorder %s36, 0
      %p257 = por %p255, %p256
      %s259 = sadd.s32 %s258, 1
      %p262 = scmp.eq.s32.totalorder %s30, 1
      %p263 = scmp.ne.s32.totalorder %s258, %s260
      %p264 = scmp.eq.s32.totalorder %s30, 0
      %p265 = por %p263, %p264
      %p266 = scmp.ne.s32.totalorder %s258, %s260
      %p267 = scmp.eq.s32.totalorder %s35, 1
      %p268 = por %p266, %p267
      %p269 = scmp.ne.s32.totalorder %s260, %s261
      %p270 = scmp.eq.s32.totalorder %s35, 0
      %p271 = por %p269, %p270
      %p272 = scmp.ne.s32.totalorder %s260, %s261
      %p273 = scmp.eq.s32.totalorder %s36, 1
      %p274 = por %p272, %p273
      %p276 = scmp.ne.s32.totalorder %s261, %s275
      %p277 = scmp.eq.s32.totalorder %s36, 0
      %p278 = por %p276, %p277
      %s280 = sadd.s32 %s279, 1
      %p283 = scmp.eq.s32.totalorder %s30, 1
      %p284 = scmp.ne.s32.totalorder %s279, %s281
      %p285 = scmp.eq.s32.totalorder %s30, 0
      %p286 = por %p284, %p285
      %p287 = scmp.ne.s32.totalorder %s279, %s281
      %p288 = scmp.eq.s32.totalorder %s35, 1
      %p289 = por %p287, %p288
      %p290 = scmp.ne.s32.totalorder %s281, %s282
      %p291 = scmp.eq.s32.totalorder %s35, 0
      %p292 = por %p290, %p291
      %p293 = scmp.ne.s32.totalorder %s281, %s282
      %p294 = scmp.eq.s32.totalorder %s36, 1
      %p295 = por %p293, %p294
      %p297 = scmp.ne.s32.totalorder %s282, %s296
      %p298 = scmp.eq.s32.totalorder %s36, 0
      %p299 = por %p297, %p298
      %s301 = sadd.s32 %s300, 1
      %p304 = scmp.eq.s32.totalorder %s30, 1
      %p305 = scmp.ne.s32.totalorder %s300, %s302
      %p306 = scmp.eq.s32.totalorder %s30, 0
      %p307 = por %p305, %p306
      %p308 = scmp.ne.s32.totalorder %s300, %s302
      %p309 = scmp.eq.s32.totalorder %s35, 1
      %p310 = por %p308, %p309
      %p311 = scmp.ne.s32.totalorder %s302, %s303
      %p312 = scmp.eq.s32.totalorder %s35, 0
      %p313 = por %p311, %p312
      %p314 = scmp.ne.s32.totalorder %s302, %s303
      %p315 = scmp.eq.s32.totalorder %s36, 1
      %p316 = por %p314, %p315
      %p318 = scmp.ne.s32.totalorder %s303, %s317
      %p319 = scmp.eq.s32.totalorder %s36, 0
      %p320 = por %p318, %p319
      %s322 = sadd.s32 %s321, 1
      %p325 = scmp.eq.s32.totalorder %s30, 1
      %p326 = scmp.ne.s32.totalorder %s321, %s323
      %p327 = scmp.eq.s32.totalorder %s30, 0
      %p328 = por %p326, %p327
      %p329 = scmp.ne.s32.totalorder %s321, %s323
      %p330 = scmp.eq.s32.totalorder %s35, 1
      %p331 = por %p329, %p330
      %p332 = scmp.ne.s32.totalorder %s323, %s324
      %p333 = scmp.eq.s32.totalorder %s35, 0
      %p334 = por %p332, %p333
      %p335 = scmp.ne.s32.totalorder %s323, %s324
      %p336 = scmp.eq.s32.totalorder %s36, 1
      %p337 = por %p335, %p336
      %p339 = scmp.ne.s32.totalorder %s324, %s338
      %p340 = scmp.eq.s32.totalorder %s36, 0
      %p341 = por %p339, %p340
      %s343 = sadd.s32 %s342, 1
      %p346 = scmp.eq.s32.totalorder %s30, 1
      %p347 = scmp.ne.s32.totalorder %s342, %s344
      %p348 = scmp.eq.s32.totalorder %s30, 0
      %p349 = por %p347, %p348
      %p350 = scmp.ne.s32.totalorder %s342, %s344
      %p351 = scmp.eq.s32.totalorder %s35, 1
      %p352 = por %p350, %p351
      %p353 = scmp.ne.s32.totalorder %s344, %s345
      %p354 = scmp.eq.s32.totalorder %s35, 0
      %p355 = por %p353, %p354
      %p356 = scmp.ne.s32.totalorder %s344, %s345
      %p357 = scmp.eq.s32.totalorder %s36, 1
      %p358 = por %p356, %p357
      %p360 = scmp.ne.s32.totalorder %s345, %s359
      %p361 = scmp.eq.s32.totalorder %s36, 0
      %p362 = por %p360, %p361
      %s364 = sadd.s32 %s363, 1
      %p367 = scmp.eq.s32.totalorder %s30, 1
      %p368 = scmp.ne.s32.totalorder %s363, %s365
      %p369 = scmp.eq.s32.totalorder %s30, 0
      %p370 = por %p368, %p369
      %p371 = scmp.ne.s32.totalorder %s363, %s365
      %p372 = scmp.eq.s32.totalorder %s35, 1
      %p373 = por %p371, %p372
      %p374 = scmp.ne.s32.totalorder %s365, %s366
      %p375 = scmp.eq.s32.totalorder %s35, 0
      %p376 = por %p374, %p375
      %p377 = scmp.ne.s32.totalorder %s365, %s366
      %p378 = scmp.eq.s32.totalorder %s36, 1
      %p379 = por %p377, %p378
      %p381 = scmp.ne.s32.totalorder %s366, %s380
      %p382 = scmp.eq.s32.totalorder %s36, 0
      %p383 = por %p381, %p382
      %s385 = sadd.s32 %s384, 1
      %p388 = scmp.eq.s32.totalorder %s30, 1
      %p389 = scmp.ne.s32.totalorder %s384, %s386
      %p390 = scmp.eq.s32.totalorder %s30, 0
      %p391 = por %p389, %p390
      %p392 = scmp.ne.s32.totalorder %s384, %s386
      %p393 = scmp.eq.s32.totalorder %s35, 1
      %p394 = por %p392, %p393
      %p395 = scmp.ne.s32.totalorder %s386, %s387
      %p396 = scmp.eq.s32.totalorder %s35, 0
      %p397 = por %p395, %p396
      %p398 = scmp.ne.s32.totalorder %s386, %s387
      %p399 = scmp.eq.s32.totalorder %s36, 1
      %p400 = por %p398, %p399
      %p402 = scmp.ne.s32.totalorder %s387, %s401
      %p403 = scmp.eq.s32.totalorder %s36, 0
      %p404 = por %p402, %p403
      %s406 = sadd.s32 %s405, 1
      %p409 = scmp.eq.s32.totalorder %s30, 1
      %p410 = scmp.ne.s32.totalorder %s405, %s407
      %p411 = scmp.eq.s32.totalorder %s30, 0
      %p412 = por %p410, %p411
      %p413 = scmp.ne.s32.totalorder %s405, %s407
      %p414 = scmp.eq.s32.totalorder %s35, 1
      %p415 = por %p413, %p414
      %p416 = scmp.ne.s32.totalorder %s407, %s408
      %p417 = scmp.eq.s32.totalorder %s35, 0
      %p418 = por %p416, %p417
      %p419 = scmp.ne.s32.totalorder %s407, %s408
      %p420 = scmp.eq.s32.totalorder %s36, 1
      %p421 = por %p419, %p420
      %p423 = scmp.ne.s32.totalorder %s408, %s422
      %p424 = scmp.eq.s32.totalorder %s36, 0
      %p425 = por %p423, %p424
      %s427 = sadd.s32 %s426, 1
      %p430 = scmp.eq.s32.totalorder %s30, 1
      %p431 = scmp.ne.s32.totalorder %s426, %s428
      %p432 = scmp.eq.s32.totalorder %s30, 0
      %p433 = por %p431, %p432
      %p434 = scmp.ne.s32.totalorder %s426, %s428
      %p435 = scmp.eq.s32.totalorder %s35, 1
      %p436 = por %p434, %p435
      %p437 = scmp.ne.s32.totalorder %s428, %s429
      %p438 = scmp.eq.s32.totalorder %s35, 0
      %p439 = por %p437, %p438
      %p440 = scmp.ne.s32.totalorder %s428, %s429
      %p441 = scmp.eq.s32.totalorder %s36, 1
      %p442 = por %p440, %p441
      %p444 = scmp.ne.s32.totalorder %s429, %s443
      %p445 = scmp.eq.s32.totalorder %s36, 0
      %p446 = por %p444, %p445
      %s448 = sadd.s32 %s447, 1
      %p451 = scmp.eq.s32.totalorder %s30, 1
      %p452 = scmp.ne.s32.totalorder %s447, %s449
      %p453 = scmp.eq.s32.totalorder %s30, 0
      %p454 = por %p452, %p453
      %p455 = scmp.ne.s32.totalorder %s447, %s449
      %p456 = scmp.eq.s32.totalorder %s35, 1
      %p457 = por %p455, %p456
      %p458 = scmp.ne.s32.totalorder %s449, %s450
      %p459 = scmp.eq.s32.totalorder %s35, 0
      %p460 = por %p458, %p459
      %p461 = scmp.ne.s32.totalorder %s449, %s450
      %p462 = scmp.eq.s32.totalorder %s36, 1
      %p463 = por %p461, %p462
      %p465 = scmp.ne.s32.totalorder %s450, %s464
      %p466 = scmp.eq.s32.totalorder %s36, 0
      %p467 = por %p465, %p466
      %s469 = sadd.s32 %s468, 1
      %p472 = scmp.eq.s32.totalorder %s30, 1
      %p473 = scmp.ne.s32.totalorder %s468, %s470
      %p474 = scmp.eq.s32.totalorder %s30, 0
      %p475 = por %p473, %p474
      %p476 = scmp.ne.s32.totalorder %s468, %s470
      %p477 = scmp.eq.s32.totalorder %s35, 1
      %p478 = por %p476, %p477
      %p479 = scmp.ne.s32.totalorder %s470, %s471
      %p480 = scmp.eq.s32.totalorder %s35, 0
      %p481 = por %p479, %p480
      %p482 = scmp.ne.s32.totalorder %s470, %s471
      %p483 = scmp.eq.s32.totalorder %s36, 1
      %p484 = por %p482, %p483
      %p486 = scmp.ne.s32.totalorder %s471, %s485
      %p487 = scmp.eq.s32.totalorder %s36, 0
      %p488 = por %p486, %p487
      %s490 = sadd.s32 %s489, 1
      %p493 = scmp.eq.s32.totalorder %s30, 1
      %p494 = scmp.ne.s32.totalorder %s489, %s491
      %p495 = scmp.eq.s32.totalorder %s30, 0
      %p496 = por %p494, %p495
      %p497 = scmp.ne.s32.totalorder %s489, %s491
      %p498 = scmp.eq.s32.totalorder %s35, 1
      %p499 = por %p497, %p498
      %p500 = scmp.ne.s32.totalorder %s491, %s492
      %p501 = scmp.eq.s32.totalorder %s35, 0
      %p502 = por %p500, %p501
      %p503 = scmp.ne.s32.totalorder %s491, %s492
      %p504 = scmp.eq.s32.totalorder %s36, 1
      %p505 = por %p503, %p504
      %p507 = scmp.ne.s32.totalorder %s492, %s506
      %p508 = scmp.eq.s32.totalorder %s36, 0
      %p509 = por %p507, %p508
      %s511 = sadd.s32 %s510, 1
      %p514 = scmp.eq.s32.totalorder %s30, 1
      %p515 = scmp.ne.s32.totalorder %s510, %s512
      %p516 = scmp.eq.s32.totalorder %s30, 0
      %p517 = por %p515, %p516
      %p518 = scmp.ne.s32.totalorder %s510, %s512
      %p519 = scmp.eq.s32.totalorder %s35, 1
      %p520 = por %p518, %p519
      %p521 = scmp.ne.s32.totalorder %s512, %s513
      %p522 = scmp.eq.s32.totalorder %s35, 0
      %p523 = por %p521, %p522
      %p524 = scmp.ne.s32.totalorder %s512, %s513
      %p525 = scmp.eq.s32.totalorder %s36, 1
      %p526 = por %p524, %p525
      %p528 = scmp.ne.s32.totalorder %s513, %s527
      %p529 = scmp.eq.s32.totalorder %s36, 0
      %p530 = por %p528, %p529
      %s532 = sadd.s32 %s531, 1
      %p535 = scmp.eq.s32.totalorder %s30, 1
      %p536 = scmp.ne.s32.totalorder %s531, %s533
      %p537 = scmp.eq.s32.totalorder %s30, 0
      %p538 = por %p536, %p537
      %p539 = scmp.ne.s32.totalorder %s531, %s533
      %p540 = scmp.eq.s32.totalorder %s35, 1
      %p541 = por %p539, %p540
      %p542 = scmp.ne.s32.totalorder %s533, %s534
      %p543 = scmp.eq.s32.totalorder %s35, 0
      %p544 = por %p542, %p543
      %p545 = scmp.ne.s32.totalorder %s533, %s534
      %p546 = scmp.eq.s32.totalorder %s36, 1
      %p547 = por %p545, %p546
      %p549 = scmp.ne.s32.totalorder %s534, %s548
      %p550 = scmp.eq.s32.totalorder %s36, 0
      %p551 = por %p549, %p550
      %s552 = ssub.s32 %s30, %s37
      %p553 = scmp.eq.s32.totalorder %s552, 0
      %s555 = sadd.s32 %s554, 1
      %s556 = scalar_select %p553, %s554, %s555
      %p559 = pneg %p553
      %p560 = scmp.eq.s32.totalorder %s30, 1
      %p561 = por %p559, %p560
      %p562 = scmp.ne.s32.totalorder %s554, %s557
      %p563 = scmp.eq.s32.totalorder %s30, 0
      %p564 = por %p562, %p563
      %p565 = scmp.ne.s32.totalorder %s554, %s557
      %p566 = scmp.eq.s32.totalorder %s35, 1
      %p567 = por %p565, %p566
      %p568 = scmp.ne.s32.totalorder %s557, %s558
      %p569 = scmp.eq.s32.totalorder %s35, 0
      %p570 = por %p568, %p569
      %p571 = scmp.ne.s32.totalorder %s557, %s558
      %p572 = scmp.eq.s32.totalorder %s36, 1
      %p573 = por %p571, %p572
      %p575 = scmp.ne.s32.totalorder %s558, %s574
      %p576 = scmp.eq.s32.totalorder %s36, 0
      %p577 = por %p575, %p576
      %p578 = scmp.le.s32.totalorder 1, %s30
      %p579 = scmp.lt.s32.totalorder %s30, 3
      %p580 = pnand %p578, %p579
      %p581 = pneg %p580
      // Predicated region
      $region9: #{nerf_forward.3} parent=5 // pred_check
        _
      $region10: #{nerf_forward.3} parent=5 // pred_check_branch
        %583 = sbr.rel (%p580) target = $region12
      $region11: #{nerf_forward.3} parent=5 // pred_region
        %s584 = ssub.s32 %s30, 1
        // Predicated region
        $region13: #{nerf_forward.3} parent=11 // pred_check
          %p585 = pneg %p103
        $region14: #{nerf_forward.3} parent=11 // pred_check_branch
          %587 = sbr.rel (%p585) target = $region16
        $region15: #{nerf_forward.3} parent=11 // pred_region
          _
        $region16: #{nerf_forward.3} parent=11 // pred_fallthru
          _
        // Predicated region
        $region17: #{nerf_forward.3} parent=11 // pred_check
          %p588 = pneg %p124
        $region18: #{nerf_forward.3} parent=11 // pred_check_branch
          %590 = sbr.rel (%p588) target = $region20
        $region19: #{nerf_forward.3} parent=11 // pred_region
          _
        $region20: #{nerf_forward.3} parent=11 // pred_fallthru
          _
        // Predicated region
        $region21: #{nerf_forward.3} parent=11 // pred_check
          %p591 = pneg %p145
        $region22: #{nerf_forward.3} parent=11 // pred_check_branch
          %593 = sbr.rel (%p591) target = $region24
        $region23: #{nerf_forward.3} parent=11 // pred_region
          _
        $region24: #{nerf_forward.3} parent=11 // pred_fallthru
          _
        // Predicated region
        $region25: #{nerf_forward.3} parent=11 // pred_check
          %p594 = pneg %p166
        $region26: #{nerf_forward.3} parent=11 // pred_check_branch
          %596 = sbr.rel (%p594) target = $region28
        $region27: #{nerf_forward.3} parent=11 // pred_region
          _
        $region28: #{nerf_forward.3} parent=11 // pred_fallthru
          _
        // Predicated region
        $region29: #{nerf_forward.3} parent=11 // pred_check
          %p597 = pneg %p187
        $region30: #{nerf_forward.3} parent=11 // pred_check_branch
          %599 = sbr.rel (%p597) target = $region32
        $region31: #{nerf_forward.3} parent=11 // pred_region
          _
        $region32: #{nerf_forward.3} parent=11 // pred_fallthru
          _
        // Predicated region
        $region33: #{nerf_forward.3} parent=11 // pred_check
          %p600 = pneg %p208
        $region34: #{nerf_forward.3} parent=11 // pred_check_branch
          %602 = sbr.rel (%p600) target = $region36
        $region35: #{nerf_forward.3} parent=11 // pred_region
          _
        $region36: #{nerf_forward.3} parent=11 // pred_fallthru
          _
        // Predicated region
        $region37: #{nerf_forward.3} parent=11 // pred_check
          %p603 = pneg %p229
        $region38: #{nerf_forward.3} parent=11 // pred_check_branch
          %605 = sbr.rel (%p603) target = $region40
        $region39: #{nerf_forward.3} parent=11 // pred_region
          _
        $region40: #{nerf_forward.3} parent=11 // pred_fallthru
          _
        // Predicated region
        $region41: #{nerf_forward.3} parent=11 // pred_check
          %p606 = pneg %p250
        $region42: #{nerf_forward.3} parent=11 // pred_check_branch
          %608 = sbr.rel (%p606) target = $region44
        $region43: #{nerf_forward.3} parent=11 // pred_region
          _
        $region44: #{nerf_forward.3} parent=11 // pred_fallthru
          _
        // Predicated region
        $region45: #{nerf_forward.3} parent=11 // pred_check
          %p609 = pneg %p271
        $region46: #{nerf_forward.3} parent=11 // pred_check_branch
          %611 = sbr.rel (%p609) target = $region48
        $region47: #{nerf_forward.3} parent=11 // pred_region
          _
        $region48: #{nerf_forward.3} parent=11 // pred_fallthru
          _
        // Predicated region
        $region49: #{nerf_forward.3} parent=11 // pred_check
          %p612 = pneg %p292
        $region50: #{nerf_forward.3} parent=11 // pred_check_branch
          %614 = sbr.rel (%p612) target = $region52
        $region51: #{nerf_forward.3} parent=11 // pred_region
          _
        $region52: #{nerf_forward.3} parent=11 // pred_fallthru
          _
        // Predicated region
        $region53: #{nerf_forward.3} parent=11 // pred_check
          %p615 = pneg %p313
        $region54: #{nerf_forward.3} parent=11 // pred_check_branch
          %617 = sbr.rel (%p615) target = $region56
        $region55: #{nerf_forward.3} parent=11 // pred_region
          _
        $region56: #{nerf_forward.3} parent=11 // pred_fallthru
          _
        // Predicated region
        $region57: #{nerf_forward.3} parent=11 // pred_check
          %p618 = pneg %p334
        $region58: #{nerf_forward.3} parent=11 // pred_check_branch
          %620 = sbr.rel (%p618) target = $region60
        $region59: #{nerf_forward.3} parent=11 // pred_region
          _
        $region60: #{nerf_forward.3} parent=11 // pred_fallthru
          _
        // Predicated region
        $region61: #{nerf_forward.3} parent=11 // pred_check
          %p621 = pneg %p355
        $region62: #{nerf_forward.3} parent=11 // pred_check_branch
          %623 = sbr.rel (%p621) target = $region64
        $region63: #{nerf_forward.3} parent=11 // pred_region
          _
        $region64: #{nerf_forward.3} parent=11 // pred_fallthru
          _
        // Predicated region
        $region65: #{nerf_forward.3} parent=11 // pred_check
          %p624 = pneg %p376
        $region66: #{nerf_forward.3} parent=11 // pred_check_branch
          %626 = sbr.rel (%p624) target = $region68
        $region67: #{nerf_forward.3} parent=11 // pred_region
          _
        $region68: #{nerf_forward.3} parent=11 // pred_fallthru
          _
        // Predicated region
        $region69: #{nerf_forward.3} parent=11 // pred_check
          %p627 = pneg %p397
        $region70: #{nerf_forward.3} parent=11 // pred_check_branch
          %629 = sbr.rel (%p627) target = $region72
        $region71: #{nerf_forward.3} parent=11 // pred_region
          _
        $region72: #{nerf_forward.3} parent=11 // pred_fallthru
          _
        // Predicated region
        $region73: #{nerf_forward.3} parent=11 // pred_check
          %p630 = pneg %p418
        $region74: #{nerf_forward.3} parent=11 // pred_check_branch
          %632 = sbr.rel (%p630) target = $region76
        $region75: #{nerf_forward.3} parent=11 // pred_region
          _
        $region76: #{nerf_forward.3} parent=11 // pred_fallthru
          _
        // Predicated region
        $region77: #{nerf_forward.3} parent=11 // pred_check
          %p633 = pneg %p439
        $region78: #{nerf_forward.3} parent=11 // pred_check_branch
          %635 = sbr.rel (%p633) target = $region80
        $region79: #{nerf_forward.3} parent=11 // pred_region
          _
        $region80: #{nerf_forward.3} parent=11 // pred_fallthru
          _
        // Predicated region
        $region81: #{nerf_forward.3} parent=11 // pred_check
          %p636 = pneg %p460
        $region82: #{nerf_forward.3} parent=11 // pred_check_branch
          %638 = sbr.rel (%p636) target = $region84
        $region83: #{nerf_forward.3} parent=11 // pred_region
          _
        $region84: #{nerf_forward.3} parent=11 // pred_fallthru
          _
        // Predicated region
        $region85: #{nerf_forward.3} parent=11 // pred_check
          %p639 = pneg %p481
        $region86: #{nerf_forward.3} parent=11 // pred_check_branch
          %641 = sbr.rel (%p639) target = $region88
        $region87: #{nerf_forward.3} parent=11 // pred_region
          _
        $region88: #{nerf_forward.3} parent=11 // pred_fallthru
          _
        // Predicated region
        $region89: #{nerf_forward.3} parent=11 // pred_check
          %p642 = pneg %p502
        $region90: #{nerf_forward.3} parent=11 // pred_check_branch
          %644 = sbr.rel (%p642) target = $region92
        $region91: #{nerf_forward.3} parent=11 // pred_region
          _
        $region92: #{nerf_forward.3} parent=11 // pred_fallthru
          _
        // Predicated region
        $region93: #{nerf_forward.3} parent=11 // pred_check
          %p645 = pneg %p523
        $region94: #{nerf_forward.3} parent=11 // pred_check_branch
          %647 = sbr.rel (%p645) target = $region96
        $region95: #{nerf_forward.3} parent=11 // pred_region
          _
        $region96: #{nerf_forward.3} parent=11 // pred_fallthru
          _
        // Predicated region
        $region97: #{nerf_forward.3} parent=11 // pred_check
          %p648 = pneg %p544
        $region98: #{nerf_forward.3} parent=11 // pred_check_branch
          %650 = sbr.rel (%p648) target = $region100
        $region99: #{nerf_forward.3} parent=11 // pred_region
          _
        $region100: #{nerf_forward.3} parent=11 // pred_fallthru
          _
      $region12: #{nerf_forward.3} parent=5 // pred_fallthru
        _
      %p651 = scmp.lt.s32.totalorder %s30, 2
      // Predicated region
      $region101: #{nerf_forward.3} parent=5 // pred_check
        %p652 = pneg %p651
      $region102: #{nerf_forward.3} parent=5 // pred_check_branch
        %654 = sbr.rel (%p652) target = $region104
      $region103: #{nerf_forward.3} parent=5 // pred_region
        // Predicated region
        $region105: #{nerf_forward.3} parent=103 // pred_check
          %p655 = pneg %p50
        $region106: #{nerf_forward.3} parent=103 // pred_check_branch
          %657 = sbr.rel (%p655) target = $region108
        $region107: #{nerf_forward.3} parent=103 // pred_region
          %s658 = smul.u32 32, %s30
          %s659 = ssub.s32 48, %s658
          %p660 = scmp.lt.s32.totalorder %s659, 32
          %s661 = scalar_select %p660, %s659, 32
          %s662 = smul.u32 64, %s661
          %p663 = scmp.lt.s32.totalorder %s658, 47
          %s664 = scalar_select %p663, %s658, 47
          %s665 = smul.addr %s664, 4
          %s666 = scalar_lea.vmem %s0, %s665
          %s667 = smul.u32 32, %s30
          %s668 = ssub.s32 48, %s667
          %p669 = scmp.lt.s32.totalorder %s668, 32
          %s670 = scalar_select %p669, %s668, 32
          %s671 = smul.u32 64, %s670
        $region108: #{nerf_forward.3} parent=103 // pred_fallthru
          _
        // Predicated region
        $region109: #{nerf_forward.3} parent=103 // pred_check
          %p672 = pneg %p76
        $region110: #{nerf_forward.3} parent=103 // pred_check_branch
          %674 = sbr.rel (%p672) target = $region112
        $region111: #{nerf_forward.3} parent=103 // pred_region
          %s675 = smul.u32 32, %s30
          %s676 = ssub.s32 48, %s675
          %p677 = scmp.lt.s32.totalorder %s676, 32
          %s678 = scalar_select %p677, %s676, 32
          %s679 = smul.u32 64, %s678
          %p680 = scmp.lt.s32.totalorder %s675, 47
          %s681 = scalar_select %p680, %s675, 47
          %s682 = smul.addr %s681, 4
          %s683 = scalar_lea.vmem %s1, %s682
          %s684 = smul.u32 32, %s30
          %s685 = ssub.s32 48, %s684
          %p686 = scmp.lt.s32.totalorder %s685, 32
          %s687 = scalar_select %p686, %s685, 32
          %s688 = smul.u32 64, %s687
        $region112: #{nerf_forward.3} parent=103 // pred_fallthru
          _
      $region104: #{nerf_forward.3} parent=5 // pred_fallthru
        _
      %p689 = scmp.le.s32.totalorder 1, %s30
      %p690 = scmp.lt.s32.totalorder %s30, 3
      %p691 = pnand %p689, %p690
      %p692 = pneg %p691
      // Predicated region
      $region113: #{nerf_forward.3} parent=5 // pred_check
        _
      $region114: #{nerf_forward.3} parent=5 // pred_check_branch
        %694 = sbr.rel (%p691) target = $region116
      $region115: #{nerf_forward.3} parent=5 // pred_region
        %s695 = ssub.s32 %s30, 1
        %s696 = smul.u32 32, %s35
        %s697 = ssub.s32 48, %s696
        %p698 = scmp.lt.s32.totalorder %s697, 32
        %s699 = scalar_select %p698, %s697, 32
        %s700 = smul.u32 64, %s699
        %p701 = scmp.lt.s32.totalorder %s696, 47
        %s702 = scalar_select %p701, %s696, 47
        %s703 = smul.addr %s702, 4
        %s704 = scalar_lea.vmem %s0, %s703
        %p705 = pneg %p56
        %p706 = pneg %p53
        %s707 = smul.u32 32, %s35
        %s708 = ssub.s32 48, %s707
        %p709 = scmp.lt.s32.totalorder %s708, 32
        %s710 = scalar_select %p709, %s708, 32
        %s711 = smul.u32 64, %s710
        %p712 = scmp.lt.s32.totalorder %s707, 47
        %s713 = scalar_select %p712, %s707, 47
        %s714 = smul.addr %s713, 4
        %s715 = scalar_lea.vmem %s1, %s714
        %p716 = pneg %p82
        %p717 = pneg %p79
        %p718 = pneg %p103
        %p719 = pneg %p100
        %p720 = pneg %p124
        %p721 = pneg %p121
        %p722 = pneg %p145
        %p723 = pneg %p142
        %p724 = pneg %p166
        %p725 = pneg %p163
        %p726 = pneg %p187
        %p727 = pneg %p184
        %p728 = pneg %p208
        %p729 = pneg %p205
        %p730 = pneg %p229
        %p731 = pneg %p226
        %p732 = pneg %p250
        %p733 = pneg %p247
        %p734 = pneg %p271
        %p735 = pneg %p268
        %p736 = pneg %p292
        %p737 = pneg %p289
        %p738 = pneg %p313
        %p739 = pneg %p310
        %p740 = pneg %p334
        %p741 = pneg %p331
        %p742 = pneg %p355
        %p743 = pneg %p352
        %p744 = pneg %p376
        %p745 = pneg %p373
        %p746 = pneg %p397
        %p747 = pneg %p394
        %p748 = pneg %p418
        %p749 = pneg %p415
        %p750 = pneg %p439
        %p751 = pneg %p436
        %p752 = pneg %p460
        %p753 = pneg %p457
        %p754 = pneg %p481
        %p755 = pneg %p478
        %p756 = pneg %p502
        %p757 = pneg %p499
        %p758 = pneg %p523
        %p759 = pneg %p520
        %p760 = pneg %p544
        %p761 = pneg %p541
        %p762 = pneg %p570
        %p763 = pneg %p567
        %s764 = sand.u32 %s557, 1
        %s765 = sand.u32 %s557, 1
        %s766 = smul.addr %s765, 256
        %s767 = scalar_lea.vmem [#allocation2], %s766
        %s768 = smul.u32 32, %s35
        %s769 = ssub.s32 48, %s768
        %p770 = scmp.lt.s32.totalorder %s769, 32
        %s771 = scalar_select %p770, %s769, 32
        %s772 = smul.u32 64, %s771
        %p773 = scmp.lt.s32.totalorder %s768, 47
        %s774 = scalar_select %p773, %s768, 47
        %s775 = smul.addr %s774, 4
        %s776 = scalar_lea.vmem %s0, %s775
        %s777 = smul.u32 32, %s35
        %s778 = ssub.s32 48, %s777
        %p779 = scmp.lt.s32.totalorder %s778, 32
        %s780 = scalar_select %p779, %s778, 32
        %s781 = smul.u32 64, %s780
        %s782 = smul.u32 32, %s35
        %s783 = ssub.s32 48, %s782
        %p784 = scmp.lt.s32.totalorder %s783, 32
        %s785 = scalar_select %p784, %s783, 32
        %s786 = smul.u32 64, %s785
        %p787 = scmp.lt.s32.totalorder %s782, 47
        %s788 = scalar_select %p787, %s782, 47
        %s789 = smul.addr %s788, 4
        %s790 = scalar_lea.vmem %s1, %s789
        %s791 = smul.u32 32, %s35
        %s792 = ssub.s32 48, %s791
        %p793 = scmp.lt.s32.totalorder %s792, 32
        %s794 = scalar_select %p793, %s792, 32
        %s795 = smul.u32 64, %s794
        %s796 = smul.u32 32, %s35
        %s797 = ssub.s32 48, %s796
        %p798 = scmp.lt.s32.totalorder %s797, 32
        %s799 = scalar_select %p798, %s797, 32
        %s800 = smul.u32 128, %s799
        %v802 = vld [vmem:[%s776] sm:$0xf]
        %v803 = vld [vmem:[%s776 + $0x4] sm:$0xf]
        %v804 = vld [vmem:[%s776 + $0x8] sm:$0xf]
        %v805 = vld [vmem:[%s776 + $0xc] sm:$0xf]
        %v806 = vld [vmem:[%s776 + $0x10] sm:$0xf]
        %v807 = vld [vmem:[%s776 + $0x14] sm:$0xf]
        %v808 = vld [vmem:[%s776 + $0x18] sm:$0xf]
        %v809 = vld [vmem:[%s776 + $0x1c] sm:$0xf]
        %v810 = vld [vmem:[%s776 + $0x20] sm:$0xf]
        %v811 = vld [vmem:[%s776 + $0x24] sm:$0xf]
        %v812 = vld [vmem:[%s776 + $0x28] sm:$0xf]
        %v813 = vld [vmem:[%s776 + $0x2c] sm:$0xf]
        %v814 = vld [vmem:[%s776 + $0x30] sm:$0xf]
        %v815 = vld [vmem:[%s776 + $0x34] sm:$0xf]
        %v816 = vld [vmem:[%s776 + $0x38] sm:$0xf]
        %v817 = vld [vmem:[%s776 + $0x3c] sm:$0xf]
        %v818 = vld [vmem:[%s776 + $0x40] sm:$0xf]
        %v819 = vld [vmem:[%s776 + $0x44] sm:$0xf]
        %v820 = vld [vmem:[%s776 + $0x48] sm:$0xf]
        %v821 = vld [vmem:[%s776 + $0x4c] sm:$0xf]
        %v822 = vld [vmem:[%s776 + $0x50] sm:$0xf]
        %v823 = vld [vmem:[%s776 + $0x54] sm:$0xf]
        %v824 = vld [vmem:[%s776 + $0x58] sm:$0xf]
        %v825 = vld [vmem:[%s776 + $0x5c] sm:$0xf]
        %v826 = vld [vmem:[%s776 + $0x60] sm:$0xf]
        %v827 = vld [vmem:[%s776 + $0x64] sm:$0xf]
        %v828 = vld [vmem:[%s776 + $0x68] sm:$0xf]
        %v829 = vld [vmem:[%s776 + $0x6c] sm:$0xf]
        %v830 = vld [vmem:[%s776 + $0x70] sm:$0xf]
        %v831 = vld [vmem:[%s776 + $0x74] sm:$0xf]
        %v832 = vld [vmem:[%s776 + $0x78] sm:$0xf]
        %v833 = vld [vmem:[%s776 + $0x7c] sm:$0xf]
        %v834 = vld [vmem:[%s2] sm:$0xff]
        %v835 = vld [vmem:[%s2 + $0x8] sm:$0xff]
        %v836 = vld [vmem:[%s2 + $0x10] sm:$0xff]
        %v837 = vld [vmem:[%s2 + $0x18] sm:$0xff]
        %v838 = vld [vmem:[%s2 + $0x20] sm:$0xff]
        %v839 = vld [vmem:[%s2 + $0x28] sm:$0xff]
        %v840 = vld [vmem:[%s2 + $0x30] sm:$0xff]
        %v841 = vld [vmem:[%s2 + $0x38] sm:$0xff]
        %v842 = vld [vmem:[%s3] sm:$0x3]
        %v844 = vlaneseq
        %v845 = vshrl.u32 %v844, 7
        %v846 = vsub.s32 0, %v845
        %v847 = vrot.slane %v842, %v846
        %v848 = vlaneseq
        %v849 = vshrl.u32 %v848, 7
        %v850 = vsub.s32 1, %v849
        %v851 = vrot.slane %v842, %v850
        %v886 = vunpack.c.l.b16 %v802
        %v887 = vunpack.c.l.b16 %v803
        %v888 = vunpack.c.l.b16 %v804
        %v889 = vunpack.c.l.b16 %v805
        %v890 = vunpack.c.l.b16 %v806
        %v891 = vunpack.c.l.b16 %v807
        %v892 = vunpack.c.l.b16 %v808
        %v893 = vunpack.c.l.b16 %v809
        %v894 = vunpack.c.l.b16 %v810
        %v895 = vunpack.c.l.b16 %v811
        %v896 = vunpack.c.l.b16 %v812
        %v897 = vunpack.c.l.b16 %v813
        %v898 = vunpack.c.l.b16 %v814
        %v899 = vunpack.c.l.b16 %v815
        %v900 = vunpack.c.l.b16 %v816
        %v901 = vunpack.c.l.b16 %v817
        %v902 = vunpack.c.l.b16 %v818
        %v903 = vunpack.c.l.b16 %v819
        %v904 = vunpack.c.l.b16 %v820
        %v905 = vunpack.c.l.b16 %v821
        %v906 = vunpack.c.l.b16 %v822
        %v907 = vunpack.c.l.b16 %v823
        %v908 = vunpack.c.l.b16 %v824
        %v909 = vunpack.c.l.b16 %v825
        %v910 = vunpack.c.l.b16 %v826
        %v911 = vunpack.c.l.b16 %v827
        %v912 = vunpack.c.l.b16 %v828
        %v913 = vunpack.c.l.b16 %v829
        %v914 = vunpack.c.l.b16 %v830
        %v915 = vunpack.c.l.b16 %v831
        %v916 = vunpack.c.l.b16 %v832
        %v917 = vunpack.c.l.b16 %v833
        %v918 = vpack.c.b16 %v887, %v886
        %v919 = vpack.c.b16 %v889, %v888
        %v920 = vpack.c.b16 %v891, %v890
        %v921 = vpack.c.b16 %v893, %v892
        %v922 = vpack.c.b16 %v895, %v894
        %v923 = vpack.c.b16 %v897, %v896
        %v924 = vpack.c.b16 %v899, %v898
        %v925 = vpack.c.b16 %v901, %v900
        %v926 = vpack.c.b16 %v903, %v902
        %v927 = vpack.c.b16 %v905, %v904
        %v928 = vpack.c.b16 %v907, %v906
        %v929 = vpack.c.b16 %v909, %v908
        %v930 = vpack.c.b16 %v911, %v910
        %v931 = vpack.c.b16 %v913, %v912
        %v932 = vpack.c.b16 %v915, %v914
        %v933 = vpack.c.b16 %v917, %v916
        %v942 = vunpack.c.l.b16 %v834
        %v943 = vunpack.c.h.b16 %v834
        %v944 = vunpack.c.l.b16 %v835
        %v945 = vunpack.c.h.b16 %v835
        %v946 = vunpack.c.l.b16 %v836
        %v947 = vunpack.c.h.b16 %v836
        %v948 = vunpack.c.l.b16 %v837
        %v949 = vunpack.c.h.b16 %v837
        %v950 = vunpack.c.l.b16 %v838
        %v951 = vunpack.c.h.b16 %v838
        %v952 = vunpack.c.l.b16 %v839
        %v953 = vunpack.c.h.b16 %v839
        %v954 = vunpack.c.l.b16 %v840
        %v955 = vunpack.c.h.b16 %v840
        %v956 = vunpack.c.l.b16 %v841
        %v957 = vunpack.c.h.b16 %v841
        %v958 = vpack.c.b16 %v944, %v942
        %v959 = vpack.c.b16 %v945, %v943
        %v960 = vpack.c.b16 %v948, %v946
        %v961 = vpack.c.b16 %v949, %v947
        %v962 = vpack.c.b16 %v952, %v950
        %v963 = vpack.c.b16 %v953, %v951
        %v964 = vpack.c.b16 %v956, %v954
        %v965 = vpack.c.b16 %v957, %v955
        %vm974 = vcmask 523264
        %v976 = vsel %vm974, %v918, 0
        %v979 = vsel %vm974, %v919, 0
        %v982 = vsel %vm974, %v920, 0
        %v985 = vsel %vm974, %v921, 0
        %v988 = vsel %vm974, %v922, 0
        %v991 = vsel %vm974, %v923, 0
        %v994 = vsel %vm974, %v924, 0
        %v997 = vsel %vm974, %v925, 0
        %v1000 = vsel %vm974, %v926, 0
        %v1003 = vsel %vm974, %v927, 0
        %v1006 = vsel %vm974, %v928, 0
        %v1009 = vsel %vm974, %v929, 0
        %v1012 = vsel %vm974, %v930, 0
        %v1015 = vsel %vm974, %v931, 0
        %v1018 = vsel %vm974, %v932, 0
        %v1021 = vsel %vm974, %v933, 0
        %1023 = vmatprep.subr.bf16.mxu0 %v959
        %1024 = vmatpush1.bf16.msra.mxu0 %v958
        %1025 = vmatprep.subr.bf16.mxu0 %v961
        %1026 = vmatpush1.bf16.msra.mxu0 %v960
        %1027 = vmatprep.subr.bf16.mxu0 %v963
        %1028 = vmatpush1.bf16.msra.mxu0 %v962
        %1029 = vmatprep.subr.bf16.mxu0 %v965
        %1030 = vmatpush1.bf16.msra.mxu0 %v964
        %1031 = vmatprep.subr.bf16.mxu0 0
        %1032 = vmatpush1.bf16.msra.mxu0 0
        %1033 = vmatprep.subr.bf16.mxu0 0
        %1034 = vmatpush1.bf16.msra.mxu0 0
        %1035 = vmatprep.subr.bf16.mxu0 0
        %1036 = vmatpush1.bf16.msra.mxu0 0
        %1037 = vmatprep.subr.bf16.mxu0 0
        %1038 = vmatpush1.bf16.msra.mxu0 0
        %1039 = vmatprep.subr.bf16.mxu0 0
        %1040 = vmatpush1.bf16.msra.mxu0 0
        %1041 = vmatprep.subr.bf16.mxu0 0
        %1042 = vmatpush1.bf16.msra.mxu0 0
        %1043 = vmatprep.subr.bf16.mxu0 0
        %1044 = vmatpush1.bf16.msra.mxu0 0
        %1045 = vmatprep.subr.bf16.mxu0 0
        %1046 = vmatpush1.bf16.msra.mxu0 0
        %1047 = vmatprep.subr.bf16.mxu0 0
        %1048 = vmatpush1.bf16.msra.mxu0 0
        %1049 = vmatprep.subr.bf16.mxu0 0
        %1050 = vmatpush1.bf16.msra.mxu0 0
        %1051 = vmatprep.subr.bf16.mxu0 0
        %1052 = vmatpush1.bf16.msra.mxu0 0
        %1053 = vmatprep.subr.bf16.mxu0 0
        %1054 = vmatpush1.bf16.msra.mxu0 0
        %1055 = vmatprep.mubr.bf16.mxu0 0
        %1056 = vmatmul.mubr.bf16.gmra.mrb[0].mxu0 %v976
        %v1057 = vpop.f32.mrb[0].mxu0
        %v1058 = vadd.f32 %v847, %v1057
        %v1059 = vpop.f32.mrb[0].mxu0
        %v1060 = vadd.f32 %v851, %v1059
        %v1061 = vpop.f32.mrb[0].mxu0
        %v1062 = vadd.f32 %v847, %v1061
        %v1063 = vpop.f32.mrb[0].mxu0
        %v1064 = vadd.f32 %v851, %v1063
        %1065 = vmatprep.mubr.bf16.mxu0 0
        %1066 = vmatmul.mubr.bf16.gmra.mrb[0].mxu0 %v979
        %v1067 = vpop.f32.mrb[0].mxu0
        %v1068 = vadd.f32 %v847, %v1067
        %v1069 = vpop.f32.mrb[0].mxu0
        %v1070 = vadd.f32 %v851, %v1069
        %v1071 = vpop.f32.mrb[0].mxu0
        %v1072 = vadd.f32 %v847, %v1071
        %v1073 = vpop.f32.mrb[0].mxu0
        %v1074 = vadd.f32 %v851, %v1073
        %1075 = vmatprep.mubr.bf16.mxu0 0
        %1076 = vmatmul.mubr.bf16.gmra.mrb[0].mxu0 %v982
        %v1077 = vpop.f32.mrb[0].mxu0
        %v1078 = vadd.f32 %v847, %v1077
        %v1079 = vpop.f32.mrb[0].mxu0
        %v1080 = vadd.f32 %v851, %v1079
        %v1081 = vpop.f32.mrb[0].mxu0
        %v1082 = vadd.f32 %v847, %v1081
        %v1083 = vpop.f32.mrb[0].mxu0
        %v1084 = vadd.f32 %v851, %v1083
        %1085 = vmatprep.mubr.bf16.mxu0 0
        %1086 = vmatmul.mubr.bf16.gmra.mrb[0].mxu0 %v985
        %v1087 = vpop.f32.mrb[0].mxu0
        %v1088 = vadd.f32 %v847, %v1087
        %v1089 = vpop.f32.mrb[0].mxu0
        %v1090 = vadd.f32 %v851, %v1089
        %v1091 = vpop.f32.mrb[0].mxu0
        %v1092 = vadd.f32 %v847, %v1091
        %v1093 = vpop.f32.mrb[0].mxu0
        %v1094 = vadd.f32 %v851, %v1093
        %1095 = vmatprep.mubr.bf16.mxu0 0
        %1096 = vmatmul.mubr.bf16.gmra.mrb[0].mxu0 %v988
        %v1097 = vpop.f32.mrb[0].mxu0
        %v1098 = vadd.f32 %v847, %v1097
        %v1099 = vpop.f32.mrb[0].mxu0
        %v1100 = vadd.f32 %v851, %v1099
        %v1101 = vpop.f32.mrb[0].mxu0
        %v1102 = vadd.f32 %v847, %v1101
        %v1103 = vpop.f32.mrb[0].mxu0
        %v1104 = vadd.f32 %v851, %v1103
        %1105 = vmatprep.mubr.bf16.mxu0 0
        %1106 = vmatmul.mubr.bf16.gmra.mrb[0].mxu0 %v991
        %v1107 = vpop.f32.mrb[0].mxu0
        %v1108 = vadd.f32 %v847, %v1107
        %v1109 = vpop.f32.mrb[0].mxu0
        %v1110 = vadd.f32 %v851, %v1109
        %v1111 = vpop.f32.mrb[0].mxu0
        %v1112 = vadd.f32 %v847, %v1111
        %v1113 = vpop.f32.mrb[0].mxu0
        %v1114 = vadd.f32 %v851, %v1113
        %1115 = vmatprep.mubr.bf16.mxu0 0
        %1116 = vmatmul.mubr.bf16.gmra.mrb[0].mxu0 %v994
        %v1117 = vpop.f32.mrb[0].mxu0
        %v1118 = vadd.f32 %v847, %v1117
        %v1119 = vpop.f32.mrb[0].mxu0
        %v1120 = vadd.f32 %v851, %v1119
        %v1121 = vpop.f32.mrb[0].mxu0
        %v1122 = vadd.f32 %v847, %v1121
        %v1123 = vpop.f32.mrb[0].mxu0
        %v1124 = vadd.f32 %v851, %v1123
        %1125 = vmatprep.mubr.bf16.mxu0 0
        %1126 = vmatmul.mubr.bf16.gmra.mrb[0].mxu0 %v997
        %v1127 = vpop.f32.mrb[0].mxu0
        %v1128 = vadd.f32 %v847, %v1127
        %v1129 = vpop.f32.mrb[0].mxu0
        %v1130 = vadd.f32 %v851, %v1129
        %v1131 = vpop.f32.mrb[0].mxu0
        %v1132 = vadd.f32 %v847, %v1131
        %v1133 = vpop.f32.mrb[0].mxu0
        %v1134 = vadd.f32 %v851, %v1133
        %1135 = vmatprep.mubr.bf16.mxu0 0
        %1136 = vmatmul.mubr.bf16.gmra.mrb[0].mxu0 %v1000
        %v1137 = vpop.f32.mrb[0].mxu0
        %v1138 = vadd.f32 %v847, %v1137
        %v1139 = vpop.f32.mrb[0].mxu0
        %v1140 = vadd.f32 %v851, %v1139
        %v1141 = vpop.f32.mrb[0].mxu0
        %v1142 = vadd.f32 %v847, %v1141
        %v1143 = vpop.f32.mrb[0].mxu0
        %v1144 = vadd.f32 %v851, %v1143
        %1145 = vmatprep.mubr.bf16.mxu0 0
        %1146 = vmatmul.mubr.bf16.gmra.mrb[0].mxu0 %v1003
        %v1147 = vpop.f32.mrb[0].mxu0
        %v1148 = vadd.f32 %v847, %v1147
        %v1149 = vpop.f32.mrb[0].mxu0
        %v1150 = vadd.f32 %v851, %v1149
        %v1151 = vpop.f32.mrb[0].mxu0
        %v1152 = vadd.f32 %v847, %v1151
        %v1153 = vpop.f32.mrb[0].mxu0
        %v1154 = vadd.f32 %v851, %v1153
        %1155 = vmatprep.mubr.bf16.mxu0 0
        %1156 = vmatmul.mubr.bf16.gmra.mrb[0].mxu0 %v1006
        %v1157 = vpop.f32.mrb[0].mxu0
        %v1158 = vadd.f32 %v847, %v1157
        %v1159 = vpop.f32.mrb[0].mxu0
        %v1160 = vadd.f32 %v851, %v1159
        %v1161 = vpop.f32.mrb[0].mxu0
        %v1162 = vadd.f32 %v847, %v1161
        %v1163 = vpop.f32.mrb[0].mxu0
        %v1164 = vadd.f32 %v851, %v1163
        %1165 = vmatprep.mubr.bf16.mxu0 0
        %1166 = vmatmul.mubr.bf16.gmra.mrb[0].mxu0 %v1009
        %v1167 = vpop.f32.mrb[0].mxu0
        %v1168 = vadd.f32 %v847, %v1167
        %v1169 = vpop.f32.mrb[0].mxu0
        %v1170 = vadd.f32 %v851, %v1169
        %v1171 = vpop.f32.mrb[0].mxu0
        %v1172 = vadd.f32 %v847, %v1171
        %v1173 = vpop.f32.mrb[0].mxu0
        %v1174 = vadd.f32 %v851, %v1173
        %1175 = vmatprep.mubr.bf16.mxu0 0
        %1176 = vmatmul.mubr.bf16.gmra.mrb[0].mxu0 %v1012
        %v1177 = vpop.f32.mrb[0].mxu0
        %v1178 = vadd.f32 %v847, %v1177
        %v1179 = vpop.f32.mrb[0].mxu0
        %v1180 = vadd.f32 %v851, %v1179
        %v1181 = vpop.f32.mrb[0].mxu0
        %v1182 = vadd.f32 %v847, %v1181
        %v1183 = vpop.f32.mrb[0].mxu0
        %v1184 = vadd.f32 %v851, %v1183
        %1185 = vmatprep.mubr.bf16.mxu0 0
        %1186 = vmatmul.mubr.bf16.gmra.mrb[0].mxu0 %v1015
        %v1187 = vpop.f32.mrb[0].mxu0
        %v1188 = vadd.f32 %v847, %v1187
        %v1189 = vpop.f32.mrb[0].mxu0
        %v1190 = vadd.f32 %v851, %v1189
        %v1191 = vpop.f32.mrb[0].mxu0
        %v1192 = vadd.f32 %v847, %v1191
        %v1193 = vpop.f32.mrb[0].mxu0
        %v1194 = vadd.f32 %v851, %v1193
        %1195 = vmatprep.mubr.bf16.mxu0 0
        %1196 = vmatmul.mubr.bf16.gmra.mrb[0].mxu0 %v1018
        %v1197 = vpop.f32.mrb[0].mxu0
        %v1198 = vadd.f32 %v847, %v1197
        %v1199 = vpop.f32.mrb[0].mxu0
        %v1200 = vadd.f32 %v851, %v1199
        %v1201 = vpop.f32.mrb[0].mxu0
        %v1202 = vadd.f32 %v847, %v1201
        %v1203 = vpop.f32.mrb[0].mxu0
        %v1204 = vadd.f32 %v851, %v1203
        %1205 = vmatprep.mubr.bf16.mxu0 0
        %1206 = vmatmul.mubr.bf16.gmra.mrb[0].mxu0 %v1021
        %v1207 = vpop.f32.mrb[0].mxu0
        %v1208 = vadd.f32 %v847, %v1207
        %v1209 = vpop.f32.mrb[0].mxu0
        %v1210 = vadd.f32 %v851, %v1209
        %v1211 = vpop.f32.mrb[0].mxu0
        %v1212 = vadd.f32 %v847, %v1211
        %v1213 = vpop.f32.mrb[0].mxu0
        %v1214 = vadd.f32 %v851, %v1213
        %1215 = vdwg.mxu0
        %v1216 = vmax.f32 %v1058, 0.0
        %v1217 = vmax.f32 %v1060, 0.0
        %v1218 = vmax.f32 %v1062, 0.0
        %v1219 = vmax.f32 %v1064, 0.0
        %v1220 = vmax.f32 %v1068, 0.0
        %v1221 = vmax.f32 %v1070, 0.0
        %v1222 = vmax.f32 %v1072, 0.0
        %v1223 = vmax.f32 %v1074, 0.0
        %v1224 = vmax.f32 %v1078, 0.0
        %v1225 = vmax.f32 %v1080, 0.0
        %v1226 = vmax.f32 %v1082, 0.0
        %v1227 = vmax.f32 %v1084, 0.0
        %v1228 = vmax.f32 %v1088, 0.0
        %v1229 = vmax.f32 %v1090, 0.0
        %v1230 = vmax.f32 %v1092, 0.0
        %v1231 = vmax.f32 %v1094, 0.0
        %v1232 = vmax.f32 %v1098, 0.0
        %v1233 = vmax.f32 %v1100, 0.0
        %v1234 = vmax.f32 %v1102, 0.0
        %v1235 = vmax.f32 %v1104, 0.0
        %v1236 = vmax.f32 %v1108, 0.0
        %v1237 = vmax.f32 %v1110, 0.0
        %v1238 = vmax.f32 %v1112, 0.0
        %v1239 = vmax.f32 %v1114, 0.0
        %v1240 = vmax.f32 %v1118, 0.0
        %v1241 = vmax.f32 %v1120, 0.0
        %v1242 = vmax.f32 %v1122, 0.0
        %v1243 = vmax.f32 %v1124, 0.0
        %v1244 = vmax.f32 %v1128, 0.0
        %v1245 = vmax.f32 %v1130, 0.0
        %v1246 = vmax.f32 %v1132, 0.0
        %v1247 = vmax.f32 %v1134, 0.0
        %v1248 = vmax.f32 %v1138, 0.0
        %v1249 = vmax.f32 %v1140, 0.0
        %v1250 = vmax.f32 %v1142, 0.0
        %v1251 = vmax.f32 %v1144, 0.0
        %v1252 = vmax.f32 %v1148, 0.0
        %v1253 = vmax.f32 %v1150, 0.0
        %v1254 = vmax.f32 %v1152, 0.0
        %v1255 = vmax.f32 %v1154, 0.0
        %v1256 = vmax.f32 %v1158, 0.0
        %v1257 = vmax.f32 %v1160, 0.0
        %v1258 = vmax.f32 %v1162, 0.0
        %v1259 = vmax.f32 %v1164, 0.0
        %v1260 = vmax.f32 %v1168, 0.0
        %v1261 = vmax.f32 %v1170, 0.0
        %v1262 = vmax.f32 %v1172, 0.0
        %v1263 = vmax.f32 %v1174, 0.0
        %v1264 = vmax.f32 %v1178, 0.0
        %v1265 = vmax.f32 %v1180, 0.0
        %v1266 = vmax.f32 %v1182, 0.0
        %v1267 = vmax.f32 %v1184, 0.0
        %v1268 = vmax.f32 %v1188, 0.0
        %v1269 = vmax.f32 %v1190, 0.0
        %v1270 = vmax.f32 %v1192, 0.0
        %v1271 = vmax.f32 %v1194, 0.0
        %v1272 = vmax.f32 %v1198, 0.0
        %v1273 = vmax.f32 %v1200, 0.0
        %v1274 = vmax.f32 %v1202, 0.0
        %v1275 = vmax.f32 %v1204, 0.0
        %v1276 = vmax.f32 %v1208, 0.0
        %v1277 = vmax.f32 %v1210, 0.0
        %v1278 = vmax.f32 %v1212, 0.0
        %v1279 = vmax.f32 %v1214, 0.0
        %v1280 = vpack.c.bf16 %v1218, %v1216
        %v1281 = vpack.c.bf16 %v1219, %v1217
        %v1282 = vpack.c.bf16 %v1222, %v1220
        %v1283 = vpack.c.bf16 %v1223, %v1221
        %v1284 = vpack.c.bf16 %v1226, %v1224
        %v1285 = vpack.c.bf16 %v1227, %v1225
        %v1286 = vpack.c.bf16 %v1230, %v1228
        %v1287 = vpack.c.bf16 %v1231, %v1229
        %v1288 = vpack.c.bf16 %v1234, %v1232
        %v1289 = vpack.c.bf16 %v1235, %v1233
        %v1290 = vpack.c.bf16 %v1238, %v1236
        %v1291 = vpack.c.bf16 %v1239, %v1237
        %v1292 = vpack.c.bf16 %v1242, %v1240
        %v1293 = vpack.c.bf16 %v1243, %v1241
        %v1294 = vpack.c.bf16 %v1246, %v1244
        %v1295 = vpack.c.bf16 %v1247, %v1245
        %v1296 = vpack.c.bf16 %v1250, %v1248
        %v1297 = vpack.c.bf16 %v1251, %v1249
        %v1298 = vpack.c.bf16 %v1254, %v1252
        %v1299 = vpack.c.bf16 %v1255, %v1253
        %v1300 = vpack.c.bf16 %v1258, %v1256
        %v1301 = vpack.c.bf16 %v1259, %v1257
        %v1302 = vpack.c.bf16 %v1262, %v1260
        %v1303 = vpack.c.bf16 %v1263, %v1261
        %v1304 = vpack.c.bf16 %v1266, %v1264
        %v1305 = vpack.c.bf16 %v1267, %v1265
        %v1306 = vpack.c.bf16 %v1270, %v1268
        %v1307 = vpack.c.bf16 %v1271, %v1269
        %v1308 = vpack.c.bf16 %v1274, %v1272
        %v1309 = vpack.c.bf16 %v1275, %v1273
        %v1310 = vpack.c.bf16 %v1278, %v1276
        %v1311 = vpack.c.bf16 %v1279, %v1277
        %v1312 = vld [vmem:[%s4] sm:$0xff]
        %v1313 = vld [vmem:[%s4 + $0x8] sm:$0xff]
        %v1314 = vld [vmem:[%s4 + $0x10] sm:$0xff]
        %v1315 = vld [vmem:[%s4 + $0x18] sm:$0xff]
        %v1316 = vld [vmem:[%s4 + $0x20] sm:$0xff]
        %v1317 = vld [vmem:[%s4 + $0x28] sm:$0xff]
        %v1318 = vld [vmem:[%s4 + $0x30] sm:$0xff]
        %v1319 = vld [vmem:[%s4 + $0x38] sm:$0xff]
        %v1320 = vld [vmem:[%s4 + $0x40] sm:$0xff]
        %v1321 = vld [vmem:[%s4 + $0x48] sm:$0xff]
        %v1322 = vld [vmem:[%s4 + $0x50] sm:$0xff]
        %v1323 = vld [vmem:[%s4 + $0x58] sm:$0xff]
        %v1324 = vld [vmem:[%s4 + $0x60] sm:$0xff]
        %v1325 = vld [vmem:[%s4 + $0x68] sm:$0xff]
        %v1326 = vld [vmem:[%s4 + $0x70] sm:$0xff]
        %v1327 = vld [vmem:[%s4 + $0x78] sm:$0xff]
        %v1328 = vld [vmem:[%s4 + $0x80] sm:$0xff]
        %v1329 = vld [vmem:[%s4 + $0x88] sm:$0xff]
        %v1330 = vld [vmem:[%s4 + $0x90] sm:$0xff]
        %v1331 = vld [vmem:[%s4 + $0x98] sm:$0xff]
        %v1332 = vld [vmem:[%s4 + $0xa0] sm:$0xff]
        %v1333 = vld [vmem:[%s4 + $0xa8] sm:$0xff]
        %v1334 = vld [vmem:[%s4 + $0xb0] sm:$0xff]
        %v1335 = vld [vmem:[%s4 + $0xb8] sm:$0xff]
        %v1336 = vld [vmem:[%s4 + $0xc0] sm:$0xff]
        %v1337 = vld [vmem:[%s4 + $0xc8] sm:$0xff]
        %v1338 = vld [vmem:[%s4 + $0xd0] sm:$0xff]
        %v1339 = vld [vmem:[%s4 + $0xd8] sm:$0xff]
        %v1340 = vld [vmem:[%s4 + $0xe0] sm:$0xff]
        %v1341 = vld [vmem:[%s4 + $0xe8] sm:$0xff]
        %v1342 = vld [vmem:[%s4 + $0xf0] sm:$0xff]
        %v1343 = vld [vmem:[%s4 + $0xf8] sm:$0xff]
        %v1344 = vld [vmem:[%s5] sm:$0x3]
        %v1346 = vlaneseq
        %v1347 = vshrl.u32 %v1346, 7
        %v1348 = vsub.s32 0, %v1347
        %v1349 = vrot.slane %v1344, %v1348
        %v1350 = vlaneseq
        %v1351 = vshrl.u32 %v1350, 7
        %v1352 = vsub.s32 1, %v1351
        %v1353 = vrot.slane %v1344, %v1352
        %v1388 = vunpack.c.l.b16 %v1312
        %v1389 = vunpack.c.h.b16 %v1312
        %v1390 = vunpack.c.l.b16 %v1313
        %v1391 = vunpack.c.h.b16 %v1313
        %v1392 = vunpack.c.l.b16 %v1314
        %v1393 = vunpack.c.h.b16 %v1314
        %v1394 = vunpack.c.l.b16 %v1315
        %v1395 = vunpack.c.h.b16 %v1315
        %v1396 = vunpack.c.l.b16 %v1316
        %v1397 = vunpack.c.h.b16 %v1316
        %v1398 = vunpack.c.l.b16 %v1317
        %v1399 = vunpack.c.h.b16 %v1317
        %v1400 = vunpack.c.l.b16 %v1318
        %v1401 = vunpack.c.h.b16 %v1318
        %v1402 = vunpack.c.l.b16 %v1319
        %v1403 = vunpack.c.h.b16 %v1319
        %v1404 = vunpack.c.l.b16 %v1320
        %v1405 = vunpack.c.h.b16 %v1320
        %v1406 = vunpack.c.l.b16 %v1321
        %v1407 = vunpack.c.h.b16 %v1321
        %v1408 = vunpack.c.l.b16 %v1322
        %v1409 = vunpack.c.h.b16 %v1322
        %v1410 = vunpack.c.l.b16 %v1323
        %v1411 = vunpack.c.h.b16 %v1323
        %v1412 = vunpack.c.l.b16 %v1324
        %v1413 = vunpack.c.h.b16 %v1324
        %v1414 = vunpack.c.l.b16 %v1325
        %v1415 = vunpack.c.h.b16 %v1325
        %v1416 = vunpack.c.l.b16 %v1326
        %v1417 = vunpack.c.h.b16 %v1326
        %v1418 = vunpack.c.l.b16 %v1327
        %v1419 = vunpack.c.h.b16 %v1327
        %v1420 = vunpack.c.l.b16 %v1328
        %v1421 = vunpack.c.h.b16 %v1328
        %v1422 = vunpack.c.l.b16 %v1329
        %v1423 = vunpack.c.h.b16 %v1329
        %v1424 = vunpack.c.l.b16 %v1330
        %v1425 = vunpack.c.h.b16 %v1330
        %v1426 = vunpack.c.l.b16 %v1331
        %v1427 = vunpack.c.h.b16 %v1331
        %v1428 = vunpack.c.l.b16 %v1332
        %v1429 = vunpack.c.h.b16 %v1332
        %v1430 = vunpack.c.l.b16 %v1333
        %v1431 = vunpack.c.h.b16 %v1333
        %v1432 = vunpack.c.l.b16 %v1334
        %v1433 = vunpack.c.h.b16 %v1334
        %v1434 = vunpack.c.l.b16 %v1335
        %v1435 = vunpack.c.h.b16 %v1335
        %v1436 = vunpack.c.l.b16 %v1336
        %v1437 = vunpack.c.h.b16 %v1336
        %v1438 = vunpack.c.l.b16 %v1337
        %v1439 = vunpack.c.h.b16 %v1337
        %v1440 = vunpack.c.l.b16 %v1338
        %v1441 = vunpack.c.h.b16 %v1338
        %v1442 = vunpack.c.l.b16 %v1339
        %v1443 = vunpack.c.h.b16 %v1339
        %v1444 = vunpack.c.l.b16 %v1340
        %v1445 = vunpack.c.h.b16 %v1340
        %v1446 = vunpack.c.l.b16 %v1341
        %v1447 = vunpack.c.h.b16 %v1341
        %v1448 = vunpack.c.l.b16 %v1342
        %v1449 = vunpack.c.h.b16 %v1342
        %v1450 = vunpack.c.l.b16 %v1343
        %v1451 = vunpack.c.h.b16 %v1343
        %v1452 = vpack.c.b16 %v1390, %v1388
        %v1453 = vpack.c.b16 %v1391, %v1389
        %v1454 = vpack.c.b16 %v1394, %v1392
        %v1455 = vpack.c.b16 %v1395, %v1393
        %v1456 = vpack.c.b16 %v1398, %v1396
        %v1457 = vpack.c.b16 %v1399, %v1397
        %v1458 = vpack.c.b16 %v1402, %v1400
        %v1459 = vpack.c.b16 %v1403, %v1401
        %v1460 = vpack.c.b16 %v1406, %v1404
        %v1461 = vpack.c.b16 %v1407, %v1405
        %v1462 = vpack.c.b16 %v1410, %v1408
        %v1463 = vpack.c.b16 %v1411, %v1409
        %v1464 = vpack.c.b16 %v1414, %v1412
        %v1465 = vpack.c.b16 %v1415, %v1413
        %v1466 = vpack.c.b16 %v1418, %v1416
        %v1467 = vpack.c.b16 %v1419, %v1417
        %v1468 = vpack.c.b16 %v1422, %v1420
        %v1469 = vpack.c.b16 %v1423, %v1421
        %v1470 = vpack.c.b16 %v1426, %v1424
        %v1471 = vpack.c.b16 %v1427, %v1425
        %v1472 = vpack.c.b16 %v1430, %v1428
        %v1473 = vpack.c.b16 %v1431, %v1429
        %v1474 = vpack.c.b16 %v1434, %v1432
        %v1475 = vpack.c.b16 %v1435, %v1433
        %v1476 = vpack.c.b16 %v1438, %v1436
        %v1477 = vpack.c.b16 %v1439, %v1437
        %v1478 = vpack.c.b16 %v1442, %v1440
        %v1479 = vpack.c.b16 %v1443, %v1441
        %v1480 = vpack.c.b16 %v1446, %v1444
        %v1481 = vpack.c.b16 %v1447, %v1445
        %v1482 = vpack.c.b16 %v1450, %v1448
        %v1483 = vpack.c.b16 %v1451, %v1449
        %1516 = vmatprep.subr.bf16.mxu0 %v1453
        %1517 = vmatpush1.bf16.msra.mxu0 %v1452
        %1518 = vmatprep.subr.bf16.mxu0 %v1455
        %1519 = vmatpush1.bf16.msra.mxu0 %v1454
        %1520 = vmatprep.subr.bf16.mxu0 %v1457
        %1521 = vmatpush1.bf16.msra.mxu0 %v1456
        %1522 = vmatprep.subr.bf16.mxu0 %v1459
        %1523 = vmatpush1.bf16.msra.mxu0 %v1458
        %1524 = vmatprep.subr.bf16.mxu0 %v1461
        %1525 = vmatpush1.bf16.msra.mxu0 %v1460
        %1526 = vmatprep.subr.bf16.mxu0 %v1463
        %1527 = vmatpush1.bf16.msra.mxu0 %v1462
        %1528 = vmatprep.subr.bf16.mxu0 %v1465
        %1529 = vmatpush1.bf16.msra.mxu0 %v1464
        %1530 = vmatprep.subr.bf16.mxu0 %v1467
        %1531 = vmatpush1.bf16.msra.mxu0 %v1466
        %1532 = vmatprep.subr.bf16.mxu0 %v1469
        %1533 = vmatpush1.bf16.msra.mxu0 %v1468
        %1534 = vmatprep.subr.bf16.mxu0 %v1471
        %1535 = vmatpush1.bf16.msra.mxu0 %v1470
        %1536 = vmatprep.subr.bf16.mxu0 %v1473
        %1537 = vmatpush1.bf16.msra.mxu0 %v1472
        %1538 = vmatprep.subr.bf16.mxu0 %v1475
        %1539 = vmatpush1.bf16.msra.mxu0 %v1474
        %1540 = vmatprep.subr.bf16.mxu0 %v1477
        %1541 = vmatpush1.bf16.msra.mxu0 %v1476
        %1542 = vmatprep.subr.bf16.mxu0 %v1479
        %1543 = vmatpush1.bf16.msra.mxu0 %v1478
        %1544 = vmatprep.subr.bf16.mxu0 %v1481
        %1545 = vmatpush1.bf16.msra.mxu0 %v1480
        %1546 = vmatprep.subr.bf16.mxu0 %v1483
        %1547 = vmatpush1.bf16.msra.mxu0 %v1482
        %1548 = vmatprep.mubr.bf16.mxu0 %v1281
        %1549 = vmatmul.mubr.bf16.gmra.mrb[0].mxu0 %v1280
        %v1550 = vpop.f32.mrb[0].mxu0
        %v1551 = vadd.f32 %v1349, %v1550
        %v1552 = vpop.f32.mrb[0].mxu0
        %v1553 = vadd.f32 %v1353, %v1552
        %v1554 = vpop.f32.mrb[0].mxu0
        %v1555 = vadd.f32 %v1349, %v1554
        %v1556 = vpop.f32.mrb[0].mxu0
        %v1557 = vadd.f32 %v1353, %v1556
        %1558 = vmatprep.mubr.bf16.mxu0 %v1283
        %1559 = vmatmul.mubr.bf16.gmra.mrb[0].mxu0 %v1282
        %v1560 = vpop.f32.mrb[0].mxu0
        %v1561 = vadd.f32 %v1349, %v1560
        %v1562 = vpop.f32.mrb[0].mxu0
        %v1563 = vadd.f32 %v1353, %v1562
        %v1564 = vpop.f32.mrb[0].mxu0
        %v1565 = vadd.f32 %v1349, %v1564
        %v1566 = vpop.f32.mrb[0].mxu0
        %v1567 = vadd.f32 %v1353, %v1566
        %1568 = vmatprep.mubr.bf16.mxu0 %v1285
        %1569 = vmatmul.mubr.bf16.gmra.mrb[0].mxu0 %v1284
        %v1570 = vpop.f32.mrb[0].mxu0
        %v1571 = vadd.f32 %v1349, %v1570
        %v1572 = vpop.f32.mrb[0].mxu0
        %v1573 = vadd.f32 %v1353, %v1572
        %v1574 = vpop.f32.mrb[0].mxu0
        %v1575 = vadd.f32 %v1349, %v1574
        %v1576 = vpop.f32.mrb[0].mxu0
        %v1577 = vadd.f32 %v1353, %v1576
        %1578 = vmatprep.mubr.bf16.mxu0 %v1287
        %1579 = vmatmul.mubr.bf16.gmra.mrb[0].mxu0 %v1286
        %v1580 = vpop.f32.mrb[0].mxu0
        %v1581 = vadd.f32 %v1349, %v1580
        %v1582 = vpop.f32.mrb[0].mxu0
        %v1583 = vadd.f32 %v1353, %v1582
        %v1584 = vpop.f32.mrb[0].mxu0
        %v1585 = vadd.f32 %v1349, %v1584
        %v1586 = vpop.f32.mrb[0].mxu0
        %v1587 = vadd.f32 %v1353, %v1586
        %1588 = vmatprep.mubr.bf16.mxu0 %v1289
        %1589 = vmatmul.mubr.bf16.gmra.mrb[0].mxu0 %v1288
        %v1590 = vpop.f32.mrb[0].mxu0
        %v1591 = vadd.f32 %v1349, %v1590
        %v1592 = vpop.f32.mrb[0].mxu0
        %v1593 = vadd.f32 %v1353, %v1592
        %v1594 = vpop.f32.mrb[0].mxu0
        %v1595 = vadd.f32 %v1349, %v1594
        %v1596 = vpop.f32.mrb[0].mxu0
        %v1597 = vadd.f32 %v1353, %v1596
        %1598 = vmatprep.mubr.bf16.mxu0 %v1291
        %1599 = vmatmul.mubr.bf16.gmra.mrb[0].mxu0 %v1290
        %v1600 = vpop.f32.mrb[0].mxu0
        %v1601 = vadd.f32 %v1349, %v1600
        %v1602 = vpop.f32.mrb[0].mxu0
        %v1603 = vadd.f32 %v1353, %v1602
        %v1604 = vpop.f32.mrb[0].mxu0
        %v1605 = vadd.f32 %v1349, %v1604
        %v1606 = vpop.f32.mrb[0].mxu0
        %v1607 = vadd.f32 %v1353, %v1606
        %1608 = vmatprep.mubr.bf16.mxu0 %v1293
        %1609 = vmatmul.mubr.bf16.gmra.mrb[0].mxu0 %v1292
        %v1610 = vpop.f32.mrb[0].mxu0
        %v1611 = vadd.f32 %v1349, %v1610
        %v1612 = vpop.f32.mrb[0].mxu0
        %v1613 = vadd.f32 %v1353, %v1612
        %v1614 = vpop.f32.mrb[0].mxu0
        %v1615 = vadd.f32 %v1349, %v1614
        %v1616 = vpop.f32.mrb[0].mxu0
        %v1617 = vadd.f32 %v1353, %v1616
        %1618 = vmatprep.mubr.bf16.mxu0 %v1295
        %1619 = vmatmul.mubr.bf16.gmra.mrb[0].mxu0 %v1294
        %v1620 = vpop.f32.mrb[0].mxu0
        %v1621 = vadd.f32 %v1349, %v1620
        %v1622 = vpop.f32.mrb[0].mxu0
        %v1623 = vadd.f32 %v1353, %v1622
        %v1624 = vpop.f32.mrb[0].mxu0
        %v1625 = vadd.f32 %v1349, %v1624
        %v1626 = vpop.f32.mrb[0].mxu0
        %v1627 = vadd.f32 %v1353, %v1626
        %1628 = vmatprep.mubr.bf16.mxu0 %v1297
        %1629 = vmatmul.mubr.bf16.gmra.mrb[0].mxu0 %v1296
        %v1630 = vpop.f32.mrb[0].mxu0
        %v1631 = vadd.f32 %v1349, %v1630
        %v1632 = vpop.f32.mrb[0].mxu0
        %v1633 = vadd.f32 %v1353, %v1632
        %v1634 = vpop.f32.mrb[0].mxu0
        %v1635 = vadd.f32 %v1349, %v1634
        %v1636 = vpop.f32.mrb[0].mxu0
        %v1637 = vadd.f32 %v1353, %v1636
        %1638 = vmatprep.mubr.bf16.mxu0 %v1299
        %1639 = vmatmul.mubr.bf16.gmra.mrb[0].mxu0 %v1298
        %v1640 = vpop.f32.mrb[0].mxu0
        %v1641 = vadd.f32 %v1349, %v1640
        %v1642 = vpop.f32.mrb[0].mxu0
        %v1643 = vadd.f32 %v1353, %v1642
        %v1644 = vpop.f32.mrb[0].mxu0
        %v1645 = vadd.f32 %v1349, %v1644
        %v1646 = vpop.f32.mrb[0].mxu0
        %v1647 = vadd.f32 %v1353, %v1646
        %1648 = vmatprep.mubr.bf16.mxu0 %v1301
        %1649 = vmatmul.mubr.bf16.gmra.mrb[0].mxu0 %v1300
        %v1650 = vpop.f32.mrb[0].mxu0
        %v1651 = vadd.f32 %v1349, %v1650
        %v1652 = vpop.f32.mrb[0].mxu0
        %v1653 = vadd.f32 %v1353, %v1652
        %v1654 = vpop.f32.mrb[0].mxu0
        %v1655 = vadd.f32 %v1349, %v1654
        %v1656 = vpop.f32.mrb[0].mxu0
        %v1657 = vadd.f32 %v1353, %v1656
        %1658 = vmatprep.mubr.bf16.mxu0 %v1303
        %1659 = vmatmul.mubr.bf16.gmra.mrb[0].mxu0 %v1302
        %v1660 = vpop.f32.mrb[0].mxu0
        %v1661 = vadd.f32 %v1349, %v1660
        %v1662 = vpop.f32.mrb[0].mxu0
        %v1663 = vadd.f32 %v1353, %v1662
        %v1664 = vpop.f32.mrb[0].mxu0
        %v1665 = vadd.f32 %v1349, %v1664
        %v1666 = vpop.f32.mrb[0].mxu0
        %v1667 = vadd.f32 %v1353, %v1666
        %1668 = vmatprep.mubr.bf16.mxu0 %v1305
        %1669 = vmatmul.mubr.bf16.gmra.mrb[0].mxu0 %v1304
        %v1670 = vpop.f32.mrb[0].mxu0
        %v1671 = vadd.f32 %v1349, %v1670
        %v1672 = vpop.f32.mrb[0].mxu0
        %v1673 = vadd.f32 %v1353, %v1672
        %v1674 = vpop.f32.mrb[0].mxu0
        %v1675 = vadd.f32 %v1349, %v1674
        %v1676 = vpop.f32.mrb[0].mxu0
        %v1677 = vadd.f32 %v1353, %v1676
        %1678 = vmatprep.mubr.bf16.mxu0 %v1307
        %1679 = vmatmul.mubr.bf16.gmra.mrb[0].mxu0 %v1306
        %v1680 = vpop.f32.mrb[0].mxu0
        %v1681 = vadd.f32 %v1349, %v1680
        %v1682 = vpop.f32.mrb[0].mxu0
        %v1683 = vadd.f32 %v1353, %v1682
        %v1684 = vpop.f32.mrb[0].mxu0
        %v1685 = vadd.f32 %v1349, %v1684
        %v1686 = vpop.f32.mrb[0].mxu0
        %v1687 = vadd.f32 %v1353, %v1686
        %1688 = vmatprep.mubr.bf16.mxu0 %v1309
        %1689 = vmatmul.mubr.bf16.gmra.mrb[0].mxu0 %v1308
        %v1690 = vpop.f32.mrb[0].mxu0
        %v1691 = vadd.f32 %v1349, %v1690
        %v1692 = vpop.f32.mrb[0].mxu0
        %v1693 = vadd.f32 %v1353, %v1692
        %v1694 = vpop.f32.mrb[0].mxu0
        %v1695 = vadd.f32 %v1349, %v1694
        %v1696 = vpop.f32.mrb[0].mxu0
        %v1697 = vadd.f32 %v1353, %v1696
        %1698 = vmatprep.mubr.bf16.mxu0 %v1311
        %1699 = vmatmul.mubr.bf16.gmra.mrb[0].mxu0 %v1310
        %v1700 = vpop.f32.mrb[0].mxu0
        %v1701 = vadd.f32 %v1349, %v1700
        %v1702 = vpop.f32.mrb[0].mxu0
        %v1703 = vadd.f32 %v1353, %v1702
        %v1704 = vpop.f32.mrb[0].mxu0
        %v1705 = vadd.f32 %v1349, %v1704
        %v1706 = vpop.f32.mrb[0].mxu0
        %v1707 = vadd.f32 %v1353, %v1706
        %1708 = vdwg.mxu0
        %v1709 = vmax.f32 %v1551, 0.0
        %v1710 = vmax.f32 %v1553, 0.0
        %v1711 = vmax.f32 %v1555, 0.0
        %v1712 = vmax.f32 %v1557, 0.0
        %v1713 = vmax.f32 %v1561, 0.0
        %v1714 = vmax.f32 %v1563, 0.0
        %v1715 = vmax.f32 %v1565, 0.0
        %v1716 = vmax.f32 %v1567, 0.0
        %v1717 = vmax.f32 %v1571, 0.0
        %v1718 = vmax.f32 %v1573, 0.0
        %v1719 = vmax.f32 %v1575, 0.0
        %v1720 = vmax.f32 %v1577, 0.0
        %v1721 = vmax.f32 %v1581, 0.0
        %v1722 = vmax.f32 %v1583, 0.0
        %v1723 = vmax.f32 %v1585, 0.0
        %v1724 = vmax.f32 %v1587, 0.0
        %v1725 = vmax.f32 %v1591, 0.0
        %v1726 = vmax.f32 %v1593, 0.0
        %v1727 = vmax.f32 %v1595, 0.0
        %v1728 = vmax.f32 %v1597, 0.0
        %v1729 = vmax.f32 %v1601, 0.0
        %v1730 = vmax.f32 %v1603, 0.0
        %v1731 = vmax.f32 %v1605, 0.0
        %v1732 = vmax.f32 %v1607, 0.0
        %v1733 = vmax.f32 %v1611, 0.0
        %v1734 = vmax.f32 %v1613, 0.0
        %v1735 = vmax.f32 %v1615, 0.0
        %v1736 = vmax.f32 %v1617, 0.0
        %v1737 = vmax.f32 %v1621, 0.0
        %v1738 = vmax.f32 %v1623, 0.0
        %v1739 = vmax.f32 %v1625, 0.0
        %v1740 = vmax.f32 %v1627, 0.0
        %v1741 = vmax.f32 %v1631, 0.0
        %v1742 = vmax.f32 %v1633, 0.0
        %v1743 = vmax.f32 %v1635, 0.0
        %v1744 = vmax.f32 %v1637, 0.0
        %v1745 = vmax.f32 %v1641, 0.0
        %v1746 = vmax.f32 %v1643, 0.0
        %v1747 = vmax.f32 %v1645, 0.0
        %v1748 = vmax.f32 %v1647, 0.0
        %v1749 = vmax.f32 %v1651, 0.0
        %v1750 = vmax.f32 %v1653, 0.0
        %v1751 = vmax.f32 %v1655, 0.0
        %v1752 = vmax.f32 %v1657, 0.0
        %v1753 = vmax.f32 %v1661, 0.0
        %v1754 = vmax.f32 %v1663, 0.0
        %v1755 = vmax.f32 %v1665, 0.0
        %v1756 = vmax.f32 %v1667, 0.0
        %v1757 = vmax.f32 %v1671, 0.0
        %v1758 = vmax.f32 %v1673, 0.0
        %v1759 = vmax.f32 %v1675, 0.0
        %v1760 = vmax.f32 %v1677, 0.0
        %v1761 = vmax.f32 %v1681, 0.0
        %v1762 = vmax.f32 %v1683, 0.0
        %v1763 = vmax.f32 %v1685, 0.0
        %v1764 = vmax.f32 %v1687, 0.0
        %v1765 = vmax.f32 %v1691, 0.0
        %v1766 = vmax.f32 %v1693, 0.0
        %v1767 = vmax.f32 %v1695, 0.0
        %v1768 = vmax.f32 %v1697, 0.0
        %v1769 = vmax.f32 %v1701, 0.0
        %v1770 = vmax.f32 %v1703, 0.0
        %v1771 = vmax.f32 %v1705, 0.0
        %v1772 = vmax.f32 %v1707, 0.0
        %v1773 = vpack.c.bf16 %v1711, %v1709
        %v1774 = vpack.c.bf16 %v1712, %v1710
        %v1775 = vpack.c.bf16 %v1715, %v1713
        %v1776 = vpack.c.bf16 %v1716, %v1714
        %v1777 = vpack.c.bf16 %v1719, %v1717
        %v1778 = vpack.c.bf16 %v1720, %v1718
        %v1779 = vpack.c.bf16 %v1723, %v1721
        %v1780 = vpack.c.bf16 %v1724, %v1722
        %v1781 = vpack.c.bf16 %v1727, %v1725
        %v1782 = vpack.c.bf16 %v1728, %v1726
        %v1783 = vpack.c.bf16 %v1731, %v1729
        %v1784 = vpack.c.bf16 %v1732, %v1730
        %v1785 = vpack.c.bf16 %v1735, %v1733
        %v1786 = vpack.c.bf16 %v1736, %v1734
        %v1787 = vpack.c.bf16 %v1739, %v1737
        %v1788 = vpack.c.bf16 %v1740, %v1738
        %v1789 = vpack.c.bf16 %v1743, %v1741
        %v1790 = vpack.c.bf16 %v1744, %v1742
        %v1791 = vpack.c.bf16 %v1747, %v1745
        %v1792 = vpack.c.bf16 %v1748, %v1746
        %v1793 = vpack.c.bf16 %v1751, %v1749
        %v1794 = vpack.c.bf16 %v1752, %v1750
        %v1795 = vpack.c.bf16 %v1755, %v1753
        %v1796 = vpack.c.bf16 %v1756, %v1754
        %v1797 = vpack.c.bf16 %v1759, %v1757
        %v1798 = vpack.c.bf16 %v1760, %v1758
        %v1799 = vpack.c.bf16 %v1763, %v1761
        %v1800 = vpack.c.bf16 %v1764, %v1762
        %v1801 = vpack.c.bf16 %v1767, %v1765
        %v1802 = vpack.c.bf16 %v1768, %v1766
        %v1803 = vpack.c.bf16 %v1771, %v1769
        %v1804 = vpack.c.bf16 %v1772, %v1770
        %v1805 = vld [vmem:[%s6] sm:$0xff]
        %v1806 = vld [vmem:[%s6 + $0x8] sm:$0xff]
        %v1807 = vld [vmem:[%s6 + $0x10] sm:$0xff]
        %v1808 = vld [vmem:[%s6 + $0x18] sm:$0xff]
        %v1809 = vld [vmem:[%s6 + $0x20] sm:$0xff]
        %v1810 = vld [vmem:[%s6 + $0x28] sm:$0xff]
        %v1811 = vld [vmem:[%s6 + $0x30] sm:$0xff]
        %v1812 = vld [vmem:[%s6 + $0x38] sm:$0xff]
        %v1813 = vld [vmem:[%s6 + $0x40] sm:$0xff]
        %v1814 = vld [vmem:[%s6 + $0x48] sm:$0xff]
        %v1815 = vld [vmem:[%s6 + $0x50] sm:$0xff]
        %v1816 = vld [vmem:[%s6 + $0x58] sm:$0xff]
        %v1817 = vld [vmem:[%s6 + $0x60] sm:$0xff]
        %v1818 = vld [vmem:[%s6 + $0x68] sm:$0xff]
        %v1819 = vld [vmem:[%s6 + $0x70] sm:$0xff]
        %v1820 = vld [vmem:[%s6 + $0x78] sm:$0xff]
        %v1821 = vld [vmem:[%s6 + $0x80] sm:$0xff]
        %v1822 = vld [vmem:[%s6 + $0x88] sm:$0xff]
        %v1823 = vld [vmem:[%s6 + $0x90] sm:$0xff]
        %v1824 = vld [vmem:[%s6 + $0x98] sm:$0xff]
        %v1825 = vld [vmem:[%s6 + $0xa0] sm:$0xff]
        %v1826 = vld [vmem:[%s6 + $0xa8] sm:$0xff]
        %v1827 = vld [vmem:[%s6 + $0xb0] sm:$0xff]
        %v1828 = vld [vmem:[%s6 + $0xb8] sm:$0xff]
        %v1829 = vld [vmem:[%s6 + $0xc0] sm:$0xff]
        %v1830 = vld [vmem:[%s6 + $0xc8] sm:$0xff]
        %v1831 = vld [vmem:[%s6 + $0xd0] sm:$0xff]
        %v1832 = vld [vmem:[%s6 + $0xd8] sm:$0xff]
        %v1833 = vld [vmem:[%s6 + $0xe0] sm:$0xff]
        %v1834 = vld [vmem:[%s6 + $0xe8] sm:$0xff]
        %v1835 = vld [vmem:[%s6 + $0xf0] sm:$0xff]
        %v1836 = vld [vmem:[%s6 + $0xf8] sm:$0xff]
        %v1837 = vld [vmem:[%s7] sm:$0x3]
        %v1839 = vlaneseq
        %v1840 = vshrl.u32 %v1839, 7
        %v1841 = vsub.s32 0, %v1840
        %v1842 = vrot.slane %v1837, %v1841
        %v1843 = vlaneseq
        %v1844 = vshrl.u32 %v1843, 7
        %v1845 = vsub.s32 1, %v1844
        %v1846 = vrot.slane %v1837, %v1845
        %v1881 = vunpack.c.l.b16 %v1805
        %v1882 = vunpack.c.h.b16 %v1805
        %v1883 = vunpack.c.l.b16 %v1806
        %v1884 = vunpack.c.h.b16 %v1806
        %v1885 = vunpack.c.l.b16 %v1807
        %v1886 = vunpack.c.h.b16 %v1807
        %v1887 = vunpack.c.l.b16 %v1808
        %v1888 = vunpack.c.h.b16 %v1808
        %v1889 = vunpack.c.l.b16 %v1809
        %v1890 = vunpack.c.h.b16 %v1809
        %v1891 = vunpack.c.l.b16 %v1810
        %v1892 = vunpack.c.h.b16 %v1810
        %v1893 = vunpack.c.l.b16 %v1811
        %v1894 = vunpack.c.h.b16 %v1811
        %v1895 = vunpack.c.l.b16 %v1812
        %v1896 = vunpack.c.h.b16 %v1812
        %v1897 = vunpack.c.l.b16 %v1813
        %v1898 = vunpack.c.h.b16 %v1813
        %v1899 = vunpack.c.l.b16 %v1814
        %v1900 = vunpack.c.h.b16 %v1814
        %v1901 = vunpack.c.l.b16 %v1815
        %v1902 = vunpack.c.h.b16 %v1815
        %v1903 = vunpack.c.l.b16 %v1816
        %v1904 = vunpack.c.h.b16 %v1816
        %v1905 = vunpack.c.l.b16 %v1817
        %v1906 = vunpack.c.h.b16 %v1817
        %v1907 = vunpack.c.l.b16 %v1818
        %v1908 = vunpack.c.h.b16 %v1818
        %v1909 = vunpack.c.l.b16 %v1819
        %v1910 = vunpack.c.h.b16 %v1819
        %v1911 = vunpack.c.l.b16 %v1820
        %v1912 = vunpack.c.h.b16 %v1820
        %v1913 = vunpack.c.l.b16 %v1821
        %v1914 = vunpack.c.h.b16 %v1821
        %v1915 = vunpack.c.l.b16 %v1822
        %v1916 = vunpack.c.h.b16 %v1822
        %v1917 = vunpack.c.l.b16 %v1823
        %v1918 = vunpack.c.h.b16 %v1823
        %v1919 = vunpack.c.l.b16 %v1824
        %v1920 = vunpack.c.h.b16 %v1824
        %v1921 = vunpack.c.l.b16 %v1825
        %v1922 = vunpack.c.h.b16 %v1825
        %v1923 = vunpack.c.l.b16 %v1826
        %v1924 = vunpack.c.h.b16 %v1826
        %v1925 = vunpack.c.l.b16 %v1827
        %v1926 = vunpack.c.h.b16 %v1827
        %v1927 = vunpack.c.l.b16 %v1828
        %v1928 = vunpack.c.h.b16 %v1828
        %v1929 = vunpack.c.l.b16 %v1829
        %v1930 = vunpack.c.h.b16 %v1829
        %v1931 = vunpack.c.l.b16 %v1830
        %v1932 = vunpack.c.h.b16 %v1830
        %v1933 = vunpack.c.l.b16 %v1831
        %v1934 = vunpack.c.h.b16 %v1831
        %v1935 = vunpack.c.l.b16 %v1832
        %v1936 = vunpack.c.h.b16 %v1832
        %v1937 = vunpack.c.l.b16 %v1833
        %v1938 = vunpack.c.h.b16 %v1833
        %v1939 = vunpack.c.l.b16 %v1834
        %v1940 = vunpack.c.h.b16 %v1834
        %v1941 = vunpack.c.l.b16 %v1835
        %v1942 = vunpack.c.h.b16 %v1835
        %v1943 = vunpack.c.l.b16 %v1836
        %v1944 = vunpack.c.h.b16 %v1836
        %v1945 = vpack.c.b16 %v1883, %v1881
        %v1946 = vpack.c.b16 %v1884, %v1882
        %v1947 = vpack.c.b16 %v1887, %v1885
        %v1948 = vpack.c.b16 %v1888, %v1886
        %v1949 = vpack.c.b16 %v1891, %v1889
        %v1950 = vpack.c.b16 %v1892, %v1890
        %v1951 = vpack.c.b16 %v1895, %v1893
        %v1952 = vpack.c.b16 %v1896, %v1894
        %v1953 = vpack.c.b16 %v1899, %v1897
        %v1954 = vpack.c.b16 %v1900, %v1898
        %v1955 = vpack.c.b16 %v1903, %v1901
        %v1956 = vpack.c.b16 %v1904, %v1902
        %v1957 = vpack.c.b16 %v1907, %v1905
        %v1958 = vpack.c.b16 %v1908, %v1906
        %v1959 = vpack.c.b16 %v1911, %v1909
        %v1960 = vpack.c.b16 %v1912, %v1910
        %v1961 = vpack.c.b16 %v1915, %v1913
        %v1962 = vpack.c.b16 %v1916, %v1914
        %v1963 = vpack.c.b16 %v1919, %v1917
        %v1964 = vpack.c.b16 %v1920, %v1918
        %v1965 = vpack.c.b16 %v1923, %v1921
        %v1966 = vpack.c.b16 %v1924, %v1922
        %v1967 = vpack.c.b16 %v1927, %v1925
        %v1968 = vpack.c.b16 %v1928, %v1926
        %v1969 = vpack.c.b16 %v1931, %v1929
        %v1970 = vpack.c.b16 %v1932, %v1930
        %v1971 = vpack.c.b16 %v1935, %v1933
        %v1972 = vpack.c.b16 %v1936, %v1934
        %v1973 = vpack.c.b16 %v1939, %v1937
        %v1974 = vpack.c.b16 %v1940, %v1938
        %v1975 = vpack.c.b16 %v1943, %v1941
        %v1976 = vpack.c.b16 %v1944, %v1942
        %2009 = vmatprep.subr.bf16.mxu0 %v1946
        %2010 = vmatpush1.bf16.msra.mxu0 %v1945
        %2011 = vmatprep.subr.bf16.mxu0 %v1948
        %2012 = vmatpush1.bf16.msra.mxu0 %v1947
        %2013 = vmatprep.subr.bf16.mxu0 %v1950
        %2014 = vmatpush1.bf16.msra.mxu0 %v1949
        %2015 = vmatprep.subr.bf16.mxu0 %v1952
        %2016 = vmatpush1.bf16.msra.mxu0 %v1951
        %2017 = vmatprep.subr.bf16.mxu0 %v1954
        %2018 = vmatpush1.bf16.msra.mxu0 %v1953
        %2019 = vmatprep.subr.bf16.mxu0 %v1956
        %2020 = vmatpush1.bf16.msra.mxu0 %v1955
        %2021 = vmatprep.subr.bf16.mxu0 %v1958
        %2022 = vmatpush1.bf16.msra.mxu0 %v1957
        %2023 = vmatprep.subr.bf16.mxu0 %v1960
        %2024 = vmatpush1.bf16.msra.mxu0 %v1959
        %2025 = vmatprep.subr.bf16.mxu0 %v1962
        %2026 = vmatpush1.bf16.msra.mxu0 %v1961
        %2027 = vmatprep.subr.bf16.mxu0 %v1964
        %2028 = vmatpush1.bf16.msra.mxu0 %v1963
        %2029 = vmatprep.subr.bf16.mxu0 %v1966
        %2030 = vmatpush1.bf16.msra.mxu0 %v1965
        %2031 = vmatprep.subr.bf16.mxu0 %v1968
        %2032 = vmatpush1.bf16.msra.mxu0 %v1967
        %2033 = vmatprep.subr.bf16.mxu0 %v1970
        %2034 = vmatpush1.bf16.msra.mxu0 %v1969
        %2035 = vmatprep.subr.bf16.mxu0 %v1972
        %2036 = vmatpush1.bf16.msra.mxu0 %v1971
        %2037 = vmatprep.subr.bf16.mxu0 %v1974
        %2038 = vmatpush1.bf16.msra.mxu0 %v1973
        %2039 = vmatprep.subr.bf16.mxu0 %v1976
        %2040 = vmatpush1.bf16.msra.mxu0 %v1975
        %2041 = vmatprep.mubr.bf16.mxu0 %v1774
        %2042 = vmatmul.mubr.bf16.gmra.mrb[0].mxu0 %v1773
        %v2043 = vpop.f32.mrb[0].mxu0
        %v2044 = vadd.f32 %v1842, %v2043
        %v2045 = vpop.f32.mrb[0].mxu0
        %v2046 = vadd.f32 %v1846, %v2045
        %v2047 = vpop.f32.mrb[0].mxu0
        %v2048 = vadd.f32 %v1842, %v2047
        %v2049 = vpop.f32.mrb[0].mxu0
        %v2050 = vadd.f32 %v1846, %v2049
        %2051 = vmatprep.mubr.bf16.mxu0 %v1776
        %2052 = vmatmul.mubr.bf16.gmra.mrb[0].mxu0 %v1775
        %v2053 = vpop.f32.mrb[0].mxu0
        %v2054 = vadd.f32 %v1842, %v2053
        %v2055 = vpop.f32.mrb[0].mxu0
        %v2056 = vadd.f32 %v1846, %v2055
        %v2057 = vpop.f32.mrb[0].mxu0
        %v2058 = vadd.f32 %v1842, %v2057
        %v2059 = vpop.f32.mrb[0].mxu0
        %v2060 = vadd.f32 %v1846, %v2059
        %2061 = vmatprep.mubr.bf16.mxu0 %v1778
        %2062 = vmatmul.mubr.bf16.gmra.mrb[0].mxu0 %v1777
        %v2063 = vpop.f32.mrb[0].mxu0
        %v2064 = vadd.f32 %v1842, %v2063
        %v2065 = vpop.f32.mrb[0].mxu0
        %v2066 = vadd.f32 %v1846, %v2065
        %v2067 = vpop.f32.mrb[0].mxu0
        %v2068 = vadd.f32 %v1842, %v2067
        %v2069 = vpop.f32.mrb[0].mxu0
        %v2070 = vadd.f32 %v1846, %v2069
        %2071 = vmatprep.mubr.bf16.mxu0 %v1780
        %2072 = vmatmul.mubr.bf16.gmra.mrb[0].mxu0 %v1779
        %v2073 = vpop.f32.mrb[0].mxu0
        %v2074 = vadd.f32 %v1842, %v2073
        %v2075 = vpop.f32.mrb[0].mxu0
        %v2076 = vadd.f32 %v1846, %v2075
        %v2077 = vpop.f32.mrb[0].mxu0
        %v2078 = vadd.f32 %v1842, %v2077
        %v2079 = vpop.f32.mrb[0].mxu0
        %v2080 = vadd.f32 %v1846, %v2079
        %2081 = vmatprep.mubr.bf16.mxu0 %v1782
        %2082 = vmatmul.mubr.bf16.gmra.mrb[0].mxu0 %v1781
        %v2083 = vpop.f32.mrb[0].mxu0
        %v2084 = vadd.f32 %v1842, %v2083
        %v2085 = vpop.f32.mrb[0].mxu0
        %v2086 = vadd.f32 %v1846, %v2085
        %v2087 = vpop.f32.mrb[0].mxu0
        %v2088 = vadd.f32 %v1842, %v2087
        %v2089 = vpop.f32.mrb[0].mxu0
        %v2090 = vadd.f32 %v1846, %v2089
        %2091 = vmatprep.mubr.bf16.mxu0 %v1784
        %2092 = vmatmul.mubr.bf16.gmra.mrb[0].mxu0 %v1783
        %v2093 = vpop.f32.mrb[0].mxu0
        %v2094 = vadd.f32 %v1842, %v2093
        %v2095 = vpop.f32.mrb[0].mxu0
        %v2096 = vadd.f32 %v1846, %v2095
        %v2097 = vpop.f32.mrb[0].mxu0
        %v2098 = vadd.f32 %v1842, %v2097
        %v2099 = vpop.f32.mrb[0].mxu0
        %v2100 = vadd.f32 %v1846, %v2099
        %2101 = vmatprep.mubr.bf16.mxu0 %v1786
        %2102 = vmatmul.mubr.bf16.gmra.mrb[0].mxu0 %v1785
        %v2103 = vpop.f32.mrb[0].mxu0
        %v2104 = vadd.f32 %v1842, %v2103
        %v2105 = vpop.f32.mrb[0].mxu0
        %v2106 = vadd.f32 %v1846, %v2105
        %v2107 = vpop.f32.mrb[0].mxu0
        %v2108 = vadd.f32 %v1842, %v2107
        %v2109 = vpop.f32.mrb[0].mxu0
        %v2110 = vadd.f32 %v1846, %v2109
        %2111 = vmatprep.mubr.bf16.mxu0 %v1788
        %2112 = vmatmul.mubr.bf16.gmra.mrb[0].mxu0 %v1787
        %v2113 = vpop.f32.mrb[0].mxu0
        %v2114 = vadd.f32 %v1842, %v2113
        %v2115 = vpop.f32.mrb[0].mxu0
        %v2116 = vadd.f32 %v1846, %v2115
        %v2117 = vpop.f32.mrb[0].mxu0
        %v2118 = vadd.f32 %v1842, %v2117
        %v2119 = vpop.f32.mrb[0].mxu0
        %v2120 = vadd.f32 %v1846, %v2119
        %2121 = vmatprep.mubr.bf16.mxu0 %v1790
        %2122 = vmatmul.mubr.bf16.gmra.mrb[0].mxu0 %v1789
        %v2123 = vpop.f32.mrb[0].mxu0
        %v2124 = vadd.f32 %v1842, %v2123
        %v2125 = vpop.f32.mrb[0].mxu0
        %v2126 = vadd.f32 %v1846, %v2125
        %v2127 = vpop.f32.mrb[0].mxu0
        %v2128 = vadd.f32 %v1842, %v2127
        %v2129 = vpop.f32.mrb[0].mxu0
        %v2130 = vadd.f32 %v1846, %v2129
        %2131 = vmatprep.mubr.bf16.mxu0 %v1792
        %2132 = vmatmul.mubr.bf16.gmra.mrb[0].mxu0 %v1791
        %v2133 = vpop.f32.mrb[0].mxu0
        %v2134 = vadd.f32 %v1842, %v2133
        %v2135 = vpop.f32.mrb[0].mxu0
        %v2136 = vadd.f32 %v1846, %v2135
        %v2137 = vpop.f32.mrb[0].mxu0
        %v2138 = vadd.f32 %v1842, %v2137
        %v2139 = vpop.f32.mrb[0].mxu0
        %v2140 = vadd.f32 %v1846, %v2139
        %2141 = vmatprep.mubr.bf16.mxu0 %v1794
        %2142 = vmatmul.mubr.bf16.gmra.mrb[0].mxu0 %v1793
        %v2143 = vpop.f32.mrb[0].mxu0
        %v2144 = vadd.f32 %v1842, %v2143
        %v2145 = vpop.f32.mrb[0].mxu0
        %v2146 = vadd.f32 %v1846, %v2145
        %v2147 = vpop.f32.mrb[0].mxu0
        %v2148 = vadd.f32 %v1842, %v2147
        %v2149 = vpop.f32.mrb[0].mxu0
        %v2150 = vadd.f32 %v1846, %v2149
        %2151 = vmatprep.mubr.bf16.mxu0 %v1796
        %2152 = vmatmul.mubr.bf16.gmra.mrb[0].mxu0 %v1795
        %v2153 = vpop.f32.mrb[0].mxu0
        %v2154 = vadd.f32 %v1842, %v2153
        %v2155 = vpop.f32.mrb[0].mxu0
        %v2156 = vadd.f32 %v1846, %v2155
        %v2157 = vpop.f32.mrb[0].mxu0
        %v2158 = vadd.f32 %v1842, %v2157
        %v2159 = vpop.f32.mrb[0].mxu0
        %v2160 = vadd.f32 %v1846, %v2159
        %2161 = vmatprep.mubr.bf16.mxu0 %v1798
        %2162 = vmatmul.mubr.bf16.gmra.mrb[0].mxu0 %v1797
        %v2163 = vpop.f32.mrb[0].mxu0
        %v2164 = vadd.f32 %v1842, %v2163
        %v2165 = vpop.f32.mrb[0].mxu0
        %v2166 = vadd.f32 %v1846, %v2165
        %v2167 = vpop.f32.mrb[0].mxu0
        %v2168 = vadd.f32 %v1842, %v2167
        %v2169 = vpop.f32.mrb[0].mxu0
        %v2170 = vadd.f32 %v1846, %v2169
        %2171 = vmatprep.mubr.bf16.mxu0 %v1800
        %2172 = vmatmul.mubr.bf16.gmra.mrb[0].mxu0 %v1799
        %v2173 = vpop.f32.mrb[0].mxu0
        %v2174 = vadd.f32 %v1842, %v2173
        %v2175 = vpop.f32.mrb[0].mxu0
        %v2176 = vadd.f32 %v1846, %v2175
        %v2177 = vpop.f32.mrb[0].mxu0
        %v2178 = vadd.f32 %v1842, %v2177
        %v2179 = vpop.f32.mrb[0].mxu0
        %v2180 = vadd.f32 %v1846, %v2179
        %2181 = vmatprep.mubr.bf16.mxu0 %v1802
        %2182 = vmatmul.mubr.bf16.gmra.mrb[0].mxu0 %v1801
        %v2183 = vpop.f32.mrb[0].mxu0
        %v2184 = vadd.f32 %v1842, %v2183
        %v2185 = vpop.f32.mrb[0].mxu0
        %v2186 = vadd.f32 %v1846, %v2185
        %v2187 = vpop.f32.mrb[0].mxu0
        %v2188 = vadd.f32 %v1842, %v2187
        %v2189 = vpop.f32.mrb[0].mxu0
        %v2190 = vadd.f32 %v1846, %v2189
        %2191 = vmatprep.mubr.bf16.mxu0 %v1804
        %2192 = vmatmul.mubr.bf16.gmra.mrb[0].mxu0 %v1803
        %v2193 = vpop.f32.mrb[0].mxu0
        %v2194 = vadd.f32 %v1842, %v2193
        %v2195 = vpop.f32.mrb[0].mxu0
        %v2196 = vadd.f32 %v1846, %v2195
        %v2197 = vpop.f32.mrb[0].mxu0
        %v2198 = vadd.f32 %v1842, %v2197
        %v2199 = vpop.f32.mrb[0].mxu0
        %v2200 = vadd.f32 %v1846, %v2199
        %2201 = vdwg.mxu0
        %v2202 = vmax.f32 %v2044, 0.0
        %v2203 = vmax.f32 %v2046, 0.0
        %v2204 = vmax.f32 %v2048, 0.0
        %v2205 = vmax.f32 %v2050, 0.0
        %v2206 = vmax.f32 %v2054, 0.0
        %v2207 = vmax.f32 %v2056, 0.0
        %v2208 = vmax.f32 %v2058, 0.0
        %v2209 = vmax.f32 %v2060, 0.0
        %v2210 = vmax.f32 %v2064, 0.0
        %v2211 = vmax.f32 %v2066, 0.0
        %v2212 = vmax.f32 %v2068, 0.0
        %v2213 = vmax.f32 %v2070, 0.0
        %v2214 = vmax.f32 %v2074, 0.0
        %v2215 = vmax.f32 %v2076, 0.0
        %v2216 = vmax.f32 %v2078, 0.0
        %v2217 = vmax.f32 %v2080, 0.0
        %v2218 = vmax.f32 %v2084, 0.0
        %v2219 = vmax.f32 %v2086, 0.0
        %v2220 = vmax.f32 %v2088, 0.0
        %v2221 = vmax.f32 %v2090, 0.0
        %v2222 = vmax.f32 %v2094, 0.0
        %v2223 = vmax.f32 %v2096, 0.0
        %v2224 = vmax.f32 %v2098, 0.0
        %v2225 = vmax.f32 %v2100, 0.0
        %v2226 = vmax.f32 %v2104, 0.0
        %v2227 = vmax.f32 %v2106, 0.0
        %v2228 = vmax.f32 %v2108, 0.0
        %v2229 = vmax.f32 %v2110, 0.0
        %v2230 = vmax.f32 %v2114, 0.0
        %v2231 = vmax.f32 %v2116, 0.0
        %v2232 = vmax.f32 %v2118, 0.0
        %v2233 = vmax.f32 %v2120, 0.0
        %v2234 = vmax.f32 %v2124, 0.0
        %v2235 = vmax.f32 %v2126, 0.0
        %v2236 = vmax.f32 %v2128, 0.0
        %v2237 = vmax.f32 %v2130, 0.0
        %v2238 = vmax.f32 %v2134, 0.0
        %v2239 = vmax.f32 %v2136, 0.0
        %v2240 = vmax.f32 %v2138, 0.0
        %v2241 = vmax.f32 %v2140, 0.0
        %v2242 = vmax.f32 %v2144, 0.0
        %v2243 = vmax.f32 %v2146, 0.0
        %v2244 = vmax.f32 %v2148, 0.0
        %v2245 = vmax.f32 %v2150, 0.0
        %v2246 = vmax.f32 %v2154, 0.0
        %v2247 = vmax.f32 %v2156, 0.0
        %v2248 = vmax.f32 %v2158, 0.0
        %v2249 = vmax.f32 %v2160, 0.0
        %v2250 = vmax.f32 %v2164, 0.0
        %v2251 = vmax.f32 %v2166, 0.0
        %v2252 = vmax.f32 %v2168, 0.0
        %v2253 = vmax.f32 %v2170, 0.0
        %v2254 = vmax.f32 %v2174, 0.0
        %v2255 = vmax.f32 %v2176, 0.0
        %v2256 = vmax.f32 %v2178, 0.0
        %v2257 = vmax.f32 %v2180, 0.0
        %v2258 = vmax.f32 %v2184, 0.0
        %v2259 = vmax.f32 %v2186, 0.0
        %v2260 = vmax.f32 %v2188, 0.0
        %v2261 = vmax.f32 %v2190, 0.0
        %v2262 = vmax.f32 %v2194, 0.0
        %v2263 = vmax.f32 %v2196, 0.0
        %v2264 = vmax.f32 %v2198, 0.0
        %v2265 = vmax.f32 %v2200, 0.0
        %v2266 = vpack.c.bf16 %v2204, %v2202
        %v2267 = vpack.c.bf16 %v2205, %v2203
        %v2268 = vpack.c.bf16 %v2208, %v2206
        %v2269 = vpack.c.bf16 %v2209, %v2207
        %v2270 = vpack.c.bf16 %v2212, %v2210
        %v2271 = vpack.c.bf16 %v2213, %v2211
        %v2272 = vpack.c.bf16 %v2216, %v2214
        %v2273 = vpack.c.bf16 %v2217, %v2215
        %v2274 = vpack.c.bf16 %v2220, %v2218
        %v2275 = vpack.c.bf16 %v2221, %v2219
        %v2276 = vpack.c.bf16 %v2224, %v2222
        %v2277 = vpack.c.bf16 %v2225, %v2223
        %v2278 = vpack.c.bf16 %v2228, %v2226
        %v2279 = vpack.c.bf16 %v2229, %v2227
        %v2280 = vpack.c.bf16 %v2232, %v2230
        %v2281 = vpack.c.bf16 %v2233, %v2231
        %v2282 = vpack.c.bf16 %v2236, %v2234
        %v2283 = vpack.c.bf16 %v2237, %v2235
        %v2284 = vpack.c.bf16 %v2240, %v2238
        %v2285 = vpack.c.bf16 %v2241, %v2239
        %v2286 = vpack.c.bf16 %v2244, %v2242
        %v2287 = vpack.c.bf16 %v2245, %v2243
        %v2288 = vpack.c.bf16 %v2248, %v2246
        %v2289 = vpack.c.bf16 %v2249, %v2247
        %v2290 = vpack.c.bf16 %v2252, %v2250
        %v2291 = vpack.c.bf16 %v2253, %v2251
        %v2292 = vpack.c.bf16 %v2256, %v2254
        %v2293 = vpack.c.bf16 %v2257, %v2255
        %v2294 = vpack.c.bf16 %v2260, %v2258
        %v2295 = vpack.c.bf16 %v2261, %v2259
        %v2296 = vpack.c.bf16 %v2264, %v2262
        %v2297 = vpack.c.bf16 %v2265, %v2263
        %v2298 = vld [vmem:[%s8] sm:$0xff]
        %v2299 = vld [vmem:[%s8 + $0x8] sm:$0xff]
        %v2300 = vld [vmem:[%s8 + $0x10] sm:$0xff]
        %v2301 = vld [vmem:[%s8 + $0x18] sm:$0xff]
        %v2302 = vld [vmem:[%s8 + $0x20] sm:$0xff]
        %v2303 = vld [vmem:[%s8 + $0x28] sm:$0xff]
        %v2304 = vld [vmem:[%s8 + $0x30] sm:$0xff]
        %v2305 = vld [vmem:[%s8 + $0x38] sm:$0xff]
        %v2306 = vld [vmem:[%s8 + $0x40] sm:$0xff]
        %v2307 = vld [vmem:[%s8 + $0x48] sm:$0xff]
        %v2308 = vld [vmem:[%s8 + $0x50] sm:$0xff]
        %v2309 = vld [vmem:[%s8 + $0x58] sm:$0xff]
        %v2310 = vld [vmem:[%s8 + $0x60] sm:$0xff]
        %v2311 = vld [vmem:[%s8 + $0x68] sm:$0xff]
        %v2312 = vld [vmem:[%s8 + $0x70] sm:$0xff]
        %v2313 = vld [vmem:[%s8 + $0x78] sm:$0xff]
        %v2314 = vld [vmem:[%s8 + $0x80] sm:$0xff]
        %v2315 = vld [vmem:[%s8 + $0x88] sm:$0xff]
        %v2316 = vld [vmem:[%s8 + $0x90] sm:$0xff]
        %v2317 = vld [vmem:[%s8 + $0x98] sm:$0xff]
        %v2318 = vld [vmem:[%s8 + $0xa0] sm:$0xff]
        %v2319 = vld [vmem:[%s8 + $0xa8] sm:$0xff]
        %v2320 = vld [vmem:[%s8 + $0xb0] sm:$0xff]
        %v2321 = vld [vmem:[%s8 + $0xb8] sm:$0xff]
        %v2322 = vld [vmem:[%s8 + $0xc0] sm:$0xff]
        %v2323 = vld [vmem:[%s8 + $0xc8] sm:$0xff]
        %v2324 = vld [vmem:[%s8 + $0xd0] sm:$0xff]
        %v2325 = vld [vmem:[%s8 + $0xd8] sm:$0xff]
        %v2326 = vld [vmem:[%s8 + $0xe0] sm:$0xff]
        %v2327 = vld [vmem:[%s8 + $0xe8] sm:$0xff]
        %v2328 = vld [vmem:[%s8 + $0xf0] sm:$0xff]
        %v2329 = vld [vmem:[%s8 + $0xf8] sm:$0xff]
        %v2330 = vld [vmem:[%s9] sm:$0x3]
        %v2332 = vlaneseq
        %v2333 = vshrl.u32 %v2332, 7
        %v2334 = vsub.s32 0, %v2333
        %v2335 = vrot.slane %v2330, %v2334
        %v2336 = vlaneseq
        %v2337 = vshrl.u32 %v2336, 7
        %v2338 = vsub.s32 1, %v2337
        %v2339 = vrot.slane %v2330, %v2338
        %v2374 = vunpack.c.l.b16 %v2298
        %v2375 = vunpack.c.h.b16 %v2298
        %v2376 = vunpack.c.l.b16 %v2299
        %v2377 = vunpack.c.h.b16 %v2299
        %v2378 = vunpack.c.l.b16 %v2300
        %v2379 = vunpack.c.h.b16 %v2300
        %v2380 = vunpack.c.l.b16 %v2301
        %v2381 = vunpack.c.h.b16 %v2301
        %v2382 = vunpack.c.l.b16 %v2302
        %v2383 = vunpack.c.h.b16 %v2302
        %v2384 = vunpack.c.l.b16 %v2303
        %v2385 = vunpack.c.h.b16 %v2303
        %v2386 = vunpack.c.l.b16 %v2304
        %v2387 = vunpack.c.h.b16 %v2304
        %v2388 = vunpack.c.l.b16 %v2305
        %v2389 = vunpack.c.h.b16 %v2305
        %v2390 = vunpack.c.l.b16 %v2306
        %v2391 = vunpack.c.h.b16 %v2306
        %v2392 = vunpack.c.l.b16 %v2307
        %v2393 = vunpack.c.h.b16 %v2307
        %v2394 = vunpack.c.l.b16 %v2308
        %v2395 = vunpack.c.h.b16 %v2308
        %v2396 = vunpack.c.l.b16 %v2309
        %v2397 = vunpack.c.h.b16 %v2309
        %v2398 = vunpack.c.l.b16 %v2310
        %v2399 = vunpack.c.h.b16 %v2310
        %v2400 = vunpack.c.l.b16 %v2311
        %v2401 = vunpack.c.h.b16 %v2311
        %v2402 = vunpack.c.l.b16 %v2312
        %v2403 = vunpack.c.h.b16 %v2312
        %v2404 = vunpack.c.l.b16 %v2313
        %v2405 = vunpack.c.h.b16 %v2313
        %v2406 = vunpack.c.l.b16 %v2314
        %v2407 = vunpack.c.h.b16 %v2314
        %v2408 = vunpack.c.l.b16 %v2315
        %v2409 = vunpack.c.h.b16 %v2315
        %v2410 = vunpack.c.l.b16 %v2316
        %v2411 = vunpack.c.h.b16 %v2316
        %v2412 = vunpack.c.l.b16 %v2317
        %v2413 = vunpack.c.h.b16 %v2317
        %v2414 = vunpack.c.l.b16 %v2318
        %v2415 = vunpack.c.h.b16 %v2318
        %v2416 = vunpack.c.l.b16 %v2319
        %v2417 = vunpack.c.h.b16 %v2319
        %v2418 = vunpack.c.l.b16 %v2320
        %v2419 = vunpack.c.h.b16 %v2320
        %v2420 = vunpack.c.l.b16 %v2321
        %v2421 = vunpack.c.h.b16 %v2321
        %v2422 = vunpack.c.l.b16 %v2322
        %v2423 = vunpack.c.h.b16 %v2322
        %v2424 = vunpack.c.l.b16 %v2323
        %v2425 = vunpack.c.h.b16 %v2323
        %v2426 = vunpack.c.l.b16 %v2324
        %v2427 = vunpack.c.h.b16 %v2324
        %v2428 = vunpack.c.l.b16 %v2325
        %v2429 = vunpack.c.h.b16 %v2325
        %v2430 = vunpack.c.l.b16 %v2326
        %v2431 = vunpack.c.h.b16 %v2326
        %v2432 = vunpack.c.l.b16 %v2327
        %v2433 = vunpack.c.h.b16 %v2327
        %v2434 = vunpack.c.l.b16 %v2328
        %v2435 = vunpack.c.h.b16 %v2328
        %v2436 = vunpack.c.l.b16 %v2329
        %v2437 = vunpack.c.h.b16 %v2329
        %v2438 = vpack.c.b16 %v2376, %v2374
        %v2439 = vpack.c.b16 %v2377, %v2375
        %v2440 = vpack.c.b16 %v2380, %v2378
        %v2441 = vpack.c.b16 %v2381, %v2379
        %v2442 = vpack.c.b16 %v2384, %v2382
        %v2443 = vpack.c.b16 %v2385, %v2383
        %v2444 = vpack.c.b16 %v2388, %v2386
        %v2445 = vpack.c.b16 %v2389, %v2387
        %v2446 = vpack.c.b16 %v2392, %v2390
        %v2447 = vpack.c.b16 %v2393, %v2391
        %v2448 = vpack.c.b16 %v2396, %v2394
        %v2449 = vpack.c.b16 %v2397, %v2395
        %v2450 = vpack.c.b16 %v2400, %v2398
        %v2451 = vpack.c.b16 %v2401, %v2399
        %v2452 = vpack.c.b16 %v2404, %v2402
        %v2453 = vpack.c.b16 %v2405, %v2403
        %v2454 = vpack.c.b16 %v2408, %v2406
        %v2455 = vpack.c.b16 %v2409, %v2407
        %v2456 = vpack.c.b16 %v2412, %v2410
        %v2457 = vpack.c.b16 %v2413, %v2411
        %v2458 = vpack.c.b16 %v2416, %v2414
        %v2459 = vpack.c.b16 %v2417, %v2415
        %v2460 = vpack.c.b16 %v2420, %v2418
        %v2461 = vpack.c.b16 %v2421, %v2419
        %v2462 = vpack.c.b16 %v2424, %v2422
        %v2463 = vpack.c.b16 %v2425, %v2423
        %v2464 = vpack.c.b16 %v2428, %v2426
        %v2465 = vpack.c.b16 %v2429, %v2427
        %v2466 = vpack.c.b16 %v2432, %v2430
        %v2467 = vpack.c.b16 %v2433, %v2431
        %v2468 = vpack.c.b16 %v2436, %v2434
        %v2469 = vpack.c.b16 %v2437, %v2435
        %2502 = vmatprep.subr.bf16.mxu0 %v2439
        %2503 = vmatpush1.bf16.msra.mxu0 %v2438
        %2504 = vmatprep.subr.bf16.mxu0 %v2441
        %2505 = vmatpush1.bf16.msra.mxu0 %v2440
        %2506 = vmatprep.subr.bf16.mxu0 %v2443
        %2507 = vmatpush1.bf16.msra.mxu0 %v2442
        %2508 = vmatprep.subr.bf16.mxu0 %v2445
        %2509 = vmatpush1.bf16.msra.mxu0 %v2444
        %2510 = vmatprep.subr.bf16.mxu0 %v2447
        %2511 = vmatpush1.bf16.msra.mxu0 %v2446
        %2512 = vmatprep.subr.bf16.mxu0 %v2449
        %2513 = vmatpush1.bf16.msra.mxu0 %v2448
        %2514 = vmatprep.subr.bf16.mxu0 %v2451
        %2515 = vmatpush1.bf16.msra.mxu0 %v2450
        %2516 = vmatprep.subr.bf16.mxu0 %v2453
        %2517 = vmatpush1.bf16.msra.mxu0 %v2452
        %2518 = vmatprep.subr.bf16.mxu0 %v2455
        %2519 = vmatpush1.bf16.msra.mxu0 %v2454
        %2520 = vmatprep.subr.bf16.mxu0 %v2457
        %2521 = vmatpush1.bf16.msra.mxu0 %v2456
        %2522 = vmatprep.subr.bf16.mxu0 %v2459
        %2523 = vmatpush1.bf16.msra.mxu0 %v2458
        %2524 = vmatprep.subr.bf16.mxu0 %v2461
        %2525 = vmatpush1.bf16.msra.mxu0 %v2460
        %2526 = vmatprep.subr.bf16.mxu0 %v2463
        %2527 = vmatpush1.bf16.msra.mxu0 %v2462
        %2528 = vmatprep.subr.bf16.mxu0 %v2465
        %2529 = vmatpush1.bf16.msra.mxu0 %v2464
        %2530 = vmatprep.subr.bf16.mxu0 %v2467
        %2531 = vmatpush1.bf16.msra.mxu0 %v2466
        %2532 = vmatprep.subr.bf16.mxu0 %v2469
        %2533 = vmatpush1.bf16.msra.mxu0 %v2468
        %2534 = vmatprep.mubr.bf16.mxu0 %v2267
        %2535 = vmatmul.mubr.bf16.gmra.mrb[0].mxu0 %v2266
        %v2536 = vpop.f32.mrb[0].mxu0
        %v2537 = vadd.f32 %v2335, %v2536
        %v2538 = vpop.f32.mrb[0].mxu0
        %v2539 = vadd.f32 %v2339, %v2538
        %v2540 = vpop.f32.mrb[0].mxu0
        %v2541 = vadd.f32 %v2335, %v2540
        %v2542 = vpop.f32.mrb[0].mxu0
        %v2543 = vadd.f32 %v2339, %v2542
        %2544 = vmatprep.mubr.bf16.mxu0 %v2269
        %2545 = vmatmul.mubr.bf16.gmra.mrb[0].mxu0 %v2268
        %v2546 = vpop.f32.mrb[0].mxu0
        %v2547 = vadd.f32 %v2335, %v2546
        %v2548 = vpop.f32.mrb[0].mxu0
        %v2549 = vadd.f32 %v2339, %v2548
        %v2550 = vpop.f32.mrb[0].mxu0
        %v2551 = vadd.f32 %v2335, %v2550
        %v2552 = vpop.f32.mrb[0].mxu0
        %v2553 = vadd.f32 %v2339, %v2552
        %2554 = vmatprep.mubr.bf16.mxu0 %v2271
        %2555 = vmatmul.mubr.bf16.gmra.mrb[0].mxu0 %v2270
        %v2556 = vpop.f32.mrb[0].mxu0
        %v2557 = vadd.f32 %v2335, %v2556
        %v2558 = vpop.f32.mrb[0].mxu0
        %v2559 = vadd.f32 %v2339, %v2558
        %v2560 = vpop.f32.mrb[0].mxu0
        %v2561 = vadd.f32 %v2335, %v2560
        %v2562 = vpop.f32.mrb[0].mxu0
        %v2563 = vadd.f32 %v2339, %v2562
        %2564 = vmatprep.mubr.bf16.mxu0 %v2273
        %2565 = vmatmul.mubr.bf16.gmra.mrb[0].mxu0 %v2272
        %v2566 = vpop.f32.mrb[0].mxu0
        %v2567 = vadd.f32 %v2335, %v2566
        %v2568 = vpop.f32.mrb[0].mxu0
        %v2569 = vadd.f32 %v2339, %v2568
        %v2570 = vpop.f32.mrb[0].mxu0
        %v2571 = vadd.f32 %v2335, %v2570
        %v2572 = vpop.f32.mrb[0].mxu0
        %v2573 = vadd.f32 %v2339, %v2572
        %2574 = vmatprep.mubr.bf16.mxu0 %v2275
        %2575 = vmatmul.mubr.bf16.gmra.mrb[0].mxu0 %v2274
        %v2576 = vpop.f32.mrb[0].mxu0
        %v2577 = vadd.f32 %v2335, %v2576
        %v2578 = vpop.f32.mrb[0].mxu0
        %v2579 = vadd.f32 %v2339, %v2578
        %v2580 = vpop.f32.mrb[0].mxu0
        %v2581 = vadd.f32 %v2335, %v2580
        %v2582 = vpop.f32.mrb[0].mxu0
        %v2583 = vadd.f32 %v2339, %v2582
        %2584 = vmatprep.mubr.bf16.mxu0 %v2277
        %2585 = vmatmul.mubr.bf16.gmra.mrb[0].mxu0 %v2276
        %v2586 = vpop.f32.mrb[0].mxu0
        %v2587 = vadd.f32 %v2335, %v2586
        %v2588 = vpop.f32.mrb[0].mxu0
        %v2589 = vadd.f32 %v2339, %v2588
        %v2590 = vpop.f32.mrb[0].mxu0
        %v2591 = vadd.f32 %v2335, %v2590
        %v2592 = vpop.f32.mrb[0].mxu0
        %v2593 = vadd.f32 %v2339, %v2592
        %2594 = vmatprep.mubr.bf16.mxu0 %v2279
        %2595 = vmatmul.mubr.bf16.gmra.mrb[0].mxu0 %v2278
        %v2596 = vpop.f32.mrb[0].mxu0
        %v2597 = vadd.f32 %v2335, %v2596
        %v2598 = vpop.f32.mrb[0].mxu0
        %v2599 = vadd.f32 %v2339, %v2598
        %v2600 = vpop.f32.mrb[0].mxu0
        %v2601 = vadd.f32 %v2335, %v2600
        %v2602 = vpop.f32.mrb[0].mxu0
        %v2603 = vadd.f32 %v2339, %v2602
        %2604 = vmatprep.mubr.bf16.mxu0 %v2281
        %2605 = vmatmul.mubr.bf16.gmra.mrb[0].mxu0 %v2280
        %v2606 = vpop.f32.mrb[0].mxu0
        %v2607 = vadd.f32 %v2335, %v2606
        %v2608 = vpop.f32.mrb[0].mxu0
        %v2609 = vadd.f32 %v2339, %v2608
        %v2610 = vpop.f32.mrb[0].mxu0
        %v2611 = vadd.f32 %v2335, %v2610
        %v2612 = vpop.f32.mrb[0].mxu0
        %v2613 = vadd.f32 %v2339, %v2612
        %2614 = vmatprep.mubr.bf16.mxu0 %v2283
        %2615 = vmatmul.mubr.bf16.gmra.mrb[0].mxu0 %v2282
        %v2616 = vpop.f32.mrb[0].mxu0
        %v2617 = vadd.f32 %v2335, %v2616
        %v2618 = vpop.f32.mrb[0].mxu0
        %v2619 = vadd.f32 %v2339, %v2618
        %v2620 = vpop.f32.mrb[0].mxu0
        %v2621 = vadd.f32 %v2335, %v2620
        %v2622 = vpop.f32.mrb[0].mxu0
        %v2623 = vadd.f32 %v2339, %v2622
        %2624 = vmatprep.mubr.bf16.mxu0 %v2285
        %2625 = vmatmul.mubr.bf16.gmra.mrb[0].mxu0 %v2284
        %v2626 = vpop.f32.mrb[0].mxu0
        %v2627 = vadd.f32 %v2335, %v2626
        %v2628 = vpop.f32.mrb[0].mxu0
        %v2629 = vadd.f32 %v2339, %v2628
        %v2630 = vpop.f32.mrb[0].mxu0
        %v2631 = vadd.f32 %v2335, %v2630
        %v2632 = vpop.f32.mrb[0].mxu0
        %v2633 = vadd.f32 %v2339, %v2632
        %2634 = vmatprep.mubr.bf16.mxu0 %v2287
        %2635 = vmatmul.mubr.bf16.gmra.mrb[0].mxu0 %v2286
        %v2636 = vpop.f32.mrb[0].mxu0
        %v2637 = vadd.f32 %v2335, %v2636
        %v2638 = vpop.f32.mrb[0].mxu0
        %v2639 = vadd.f32 %v2339, %v2638
        %v2640 = vpop.f32.mrb[0].mxu0
        %v2641 = vadd.f32 %v2335, %v2640
        %v2642 = vpop.f32.mrb[0].mxu0
        %v2643 = vadd.f32 %v2339, %v2642
        %2644 = vmatprep.mubr.bf16.mxu0 %v2289
        %2645 = vmatmul.mubr.bf16.gmra.mrb[0].mxu0 %v2288
        %v2646 = vpop.f32.mrb[0].mxu0
        %v2647 = vadd.f32 %v2335, %v2646
        %v2648 = vpop.f32.mrb[0].mxu0
        %v2649 = vadd.f32 %v2339, %v2648
        %v2650 = vpop.f32.mrb[0].mxu0
        %v2651 = vadd.f32 %v2335, %v2650
        %v2652 = vpop.f32.mrb[0].mxu0
        %v2653 = vadd.f32 %v2339, %v2652
        %2654 = vmatprep.mubr.bf16.mxu0 %v2291
        %2655 = vmatmul.mubr.bf16.gmra.mrb[0].mxu0 %v2290
        %v2656 = vpop.f32.mrb[0].mxu0
        %v2657 = vadd.f32 %v2335, %v2656
        %v2658 = vpop.f32.mrb[0].mxu0
        %v2659 = vadd.f32 %v2339, %v2658
        %v2660 = vpop.f32.mrb[0].mxu0
        %v2661 = vadd.f32 %v2335, %v2660
        %v2662 = vpop.f32.mrb[0].mxu0
        %v2663 = vadd.f32 %v2339, %v2662
        %2664 = vmatprep.mubr.bf16.mxu0 %v2293
        %2665 = vmatmul.mubr.bf16.gmra.mrb[0].mxu0 %v2292
        %v2666 = vpop.f32.mrb[0].mxu0
        %v2667 = vadd.f32 %v2335, %v2666
        %v2668 = vpop.f32.mrb[0].mxu0
        %v2669 = vadd.f32 %v2339, %v2668
        %v2670 = vpop.f32.mrb[0].mxu0
        %v2671 = vadd.f32 %v2335, %v2670
        %v2672 = vpop.f32.mrb[0].mxu0
        %v2673 = vadd.f32 %v2339, %v2672
        %2674 = vmatprep.mubr.bf16.mxu0 %v2295
        %2675 = vmatmul.mubr.bf16.gmra.mrb[0].mxu0 %v2294
        %v2676 = vpop.f32.mrb[0].mxu0
        %v2677 = vadd.f32 %v2335, %v2676
        %v2678 = vpop.f32.mrb[0].mxu0
        %v2679 = vadd.f32 %v2339, %v2678
        %v2680 = vpop.f32.mrb[0].mxu0
        %v2681 = vadd.f32 %v2335, %v2680
        %v2682 = vpop.f32.mrb[0].mxu0
        %v2683 = vadd.f32 %v2339, %v2682
        %2684 = vmatprep.mubr.bf16.mxu0 %v2297
        %2685 = vmatmul.mubr.bf16.gmra.mrb[0].mxu0 %v2296
        %v2686 = vpop.f32.mrb[0].mxu0
        %v2687 = vadd.f32 %v2335, %v2686
        %v2688 = vpop.f32.mrb[0].mxu0
        %v2689 = vadd.f32 %v2339, %v2688
        %v2690 = vpop.f32.mrb[0].mxu0
        %v2691 = vadd.f32 %v2335, %v2690
        %v2692 = vpop.f32.mrb[0].mxu0
        %v2693 = vadd.f32 %v2339, %v2692
        %2694 = vdwg.mxu0
        %v2695 = vmax.f32 %v2537, 0.0
        %v2696 = vmax.f32 %v2539, 0.0
        %v2697 = vmax.f32 %v2541, 0.0
        %v2698 = vmax.f32 %v2543, 0.0
        %v2699 = vmax.f32 %v2547, 0.0
        %v2700 = vmax.f32 %v2549, 0.0
        %v2701 = vmax.f32 %v2551, 0.0
        %v2702 = vmax.f32 %v2553, 0.0
        %v2703 = vmax.f32 %v2557, 0.0
        %v2704 = vmax.f32 %v2559, 0.0
        %v2705 = vmax.f32 %v2561, 0.0
        %v2706 = vmax.f32 %v2563, 0.0
        %v2707 = vmax.f32 %v2567, 0.0
        %v2708 = vmax.f32 %v2569, 0.0
        %v2709 = vmax.f32 %v2571, 0.0
        %v2710 = vmax.f32 %v2573, 0.0
        %v2711 = vmax.f32 %v2577, 0.0
        %v2712 = vmax.f32 %v2579, 0.0
        %v2713 = vmax.f32 %v2581, 0.0
        %v2714 = vmax.f32 %v2583, 0.0
        %v2715 = vmax.f32 %v2587, 0.0
        %v2716 = vmax.f32 %v2589, 0.0
        %v2717 = vmax.f32 %v2591, 0.0
        %v2718 = vmax.f32 %v2593, 0.0
        %v2719 = vmax.f32 %v2597, 0.0
        %v2720 = vmax.f32 %v2599, 0.0
        %v2721 = vmax.f32 %v2601, 0.0
        %v2722 = vmax.f32 %v2603, 0.0
        %v2723 = vmax.f32 %v2607, 0.0
        %v2724 = vmax.f32 %v2609, 0.0
        %v2725 = vmax.f32 %v2611, 0.0
        %v2726 = vmax.f32 %v2613, 0.0
        %v2727 = vmax.f32 %v2617, 0.0
        %v2728 = vmax.f32 %v2619, 0.0
        %v2729 = vmax.f32 %v2621, 0.0
        %v2730 = vmax.f32 %v2623, 0.0
        %v2731 = vmax.f32 %v2627, 0.0
        %v2732 = vmax.f32 %v2629, 0.0
        %v2733 = vmax.f32 %v2631, 0.0
        %v2734 = vmax.f32 %v2633, 0.0
        %v2735 = vmax.f32 %v2637, 0.0
        %v2736 = vmax.f32 %v2639, 0.0
        %v2737 = vmax.f32 %v2641, 0.0
        %v2738 = vmax.f32 %v2643, 0.0
        %v2739 = vmax.f32 %v2647, 0.0
        %v2740 = vmax.f32 %v2649, 0.0
        %v2741 = vmax.f32 %v2651, 0.0
        %v2742 = vmax.f32 %v2653, 0.0
        %v2743 = vmax.f32 %v2657, 0.0
        %v2744 = vmax.f32 %v2659, 0.0
        %v2745 = vmax.f32 %v2661, 0.0
        %v2746 = vmax.f32 %v2663, 0.0
        %v2747 = vmax.f32 %v2667, 0.0
        %v2748 = vmax.f32 %v2669, 0.0
        %v2749 = vmax.f32 %v2671, 0.0
        %v2750 = vmax.f32 %v2673, 0.0
        %v2751 = vmax.f32 %v2677, 0.0
        %v2752 = vmax.f32 %v2679, 0.0
        %v2753 = vmax.f32 %v2681, 0.0
        %v2754 = vmax.f32 %v2683, 0.0
        %v2755 = vmax.f32 %v2687, 0.0
        %v2756 = vmax.f32 %v2689, 0.0
        %v2757 = vmax.f32 %v2691, 0.0
        %v2758 = vmax.f32 %v2693, 0.0
        %v2759 = vpack.c.bf16 %v2697, %v2695
        %v2760 = vpack.c.bf16 %v2698, %v2696
        %v2761 = vpack.c.bf16 %v2701, %v2699
        %v2762 = vpack.c.bf16 %v2702, %v2700
        %v2763 = vpack.c.bf16 %v2705, %v2703
        %v2764 = vpack.c.bf16 %v2706, %v2704
        %v2765 = vpack.c.bf16 %v2709, %v2707
        %v2766 = vpack.c.bf16 %v2710, %v2708
        %v2767 = vpack.c.bf16 %v2713, %v2711
        %v2768 = vpack.c.bf16 %v2714, %v2712
        %v2769 = vpack.c.bf16 %v2717, %v2715
        %v2770 = vpack.c.bf16 %v2718, %v2716
        %v2771 = vpack.c.bf16 %v2721, %v2719
        %v2772 = vpack.c.bf16 %v2722, %v2720
        %v2773 = vpack.c.bf16 %v2725, %v2723
        %v2774 = vpack.c.bf16 %v2726, %v2724
        %v2775 = vpack.c.bf16 %v2729, %v2727
        %v2776 = vpack.c.bf16 %v2730, %v2728
        %v2777 = vpack.c.bf16 %v2733, %v2731
        %v2778 = vpack.c.bf16 %v2734, %v2732
        %v2779 = vpack.c.bf16 %v2737, %v2735
        %v2780 = vpack.c.bf16 %v2738, %v2736
        %v2781 = vpack.c.bf16 %v2741, %v2739
        %v2782 = vpack.c.bf16 %v2742, %v2740
        %v2783 = vpack.c.bf16 %v2745, %v2743
        %v2784 = vpack.c.bf16 %v2746, %v2744
        %v2785 = vpack.c.bf16 %v2749, %v2747
        %v2786 = vpack.c.bf16 %v2750, %v2748
        %v2787 = vpack.c.bf16 %v2753, %v2751
        %v2788 = vpack.c.bf16 %v2754, %v2752
        %v2789 = vpack.c.bf16 %v2757, %v2755
        %v2790 = vpack.c.bf16 %v2758, %v2756
        %v2791 = vld [vmem:[%s10] sm:$0xff]
        %v2792 = vld [vmem:[%s10 + $0x8] sm:$0xff]
        %v2793 = vld [vmem:[%s10 + $0x10] sm:$0xff]
        %v2794 = vld [vmem:[%s10 + $0x18] sm:$0xff]
        %v2795 = vld [vmem:[%s10 + $0x20] sm:$0xff]
        %v2796 = vld [vmem:[%s10 + $0x28] sm:$0xff]
        %v2797 = vld [vmem:[%s10 + $0x30] sm:$0xff]
        %v2798 = vld [vmem:[%s10 + $0x38] sm:$0xff]
        %v2799 = vld [vmem:[%s10 + $0x40] sm:$0xff]
        %v2800 = vld [vmem:[%s10 + $0x48] sm:$0xff]
        %v2801 = vld [vmem:[%s10 + $0x50] sm:$0xff]
        %v2802 = vld [vmem:[%s10 + $0x58] sm:$0xff]
        %v2803 = vld [vmem:[%s10 + $0x60] sm:$0xff]
        %v2804 = vld [vmem:[%s10 + $0x68] sm:$0xff]
        %v2805 = vld [vmem:[%s10 + $0x70] sm:$0xff]
        %v2806 = vld [vmem:[%s10 + $0x78] sm:$0xff]
        %v2807 = vld [vmem:[%s10 + $0x80] sm:$0xff]
        %v2808 = vld [vmem:[%s10 + $0x88] sm:$0xff]
        %v2809 = vld [vmem:[%s10 + $0x90] sm:$0xff]
        %v2810 = vld [vmem:[%s10 + $0x98] sm:$0xff]
        %v2811 = vld [vmem:[%s10 + $0xa0] sm:$0xff]
        %v2812 = vld [vmem:[%s10 + $0xa8] sm:$0xff]
        %v2813 = vld [vmem:[%s10 + $0xb0] sm:$0xff]
        %v2814 = vld [vmem:[%s10 + $0xb8] sm:$0xff]
        %v2815 = vld [vmem:[%s10 + $0xc0] sm:$0xff]
        %v2816 = vld [vmem:[%s10 + $0xc8] sm:$0xff]
        %v2817 = vld [vmem:[%s10 + $0xd0] sm:$0xff]
        %v2818 = vld [vmem:[%s10 + $0xd8] sm:$0xff]
        %v2819 = vld [vmem:[%s10 + $0xe0] sm:$0xff]
        %v2820 = vld [vmem:[%s10 + $0xe8] sm:$0xff]
        %v2821 = vld [vmem:[%s10 + $0xf0] sm:$0xff]
        %v2822 = vld [vmem:[%s10 + $0xf8] sm:$0xff]
        %v2823 = vld [vmem:[%s11] sm:$0x3]
        %v2825 = vlaneseq
        %v2826 = vshrl.u32 %v2825, 7
        %v2827 = vsub.s32 0, %v2826
        %v2828 = vrot.slane %v2823, %v2827
        %v2829 = vlaneseq
        %v2830 = vshrl.u32 %v2829, 7
        %v2831 = vsub.s32 1, %v2830
        %v2832 = vrot.slane %v2823, %v2831
        %v2867 = vunpack.c.l.b16 %v2791
        %v2868 = vunpack.c.h.b16 %v2791
        %v2869 = vunpack.c.l.b16 %v2792
        %v2870 = vunpack.c.h.b16 %v2792
        %v2871 = vunpack.c.l.b16 %v2793
        %v2872 = vunpack.c.h.b16 %v2793
        %v2873 = vunpack.c.l.b16 %v2794
        %v2874 = vunpack.c.h.b16 %v2794
        %v2875 = vunpack.c.l.b16 %v2795
        %v2876 = vunpack.c.h.b16 %v2795
        %v2877 = vunpack.c.l.b16 %v2796
        %v2878 = vunpack.c.h.b16 %v2796
        %v2879 = vunpack.c.l.b16 %v2797
        %v2880 = vunpack.c.h.b16 %v2797
        %v2881 = vunpack.c.l.b16 %v2798
        %v2882 = vunpack.c.h.b16 %v2798
        %v2883 = vunpack.c.l.b16 %v2799
        %v2884 = vunpack.c.h.b16 %v2799
        %v2885 = vunpack.c.l.b16 %v2800
        %v2886 = vunpack.c.h.b16 %v2800
        %v2887 = vunpack.c.l.b16 %v2801
        %v2888 = vunpack.c.h.b16 %v2801
        %v2889 = vunpack.c.l.b16 %v2802
        %v2890 = vunpack.c.h.b16 %v2802
        %v2891 = vunpack.c.l.b16 %v2803
        %v2892 = vunpack.c.h.b16 %v2803
        %v2893 = vunpack.c.l.b16 %v2804
        %v2894 = vunpack.c.h.b16 %v2804
        %v2895 = vunpack.c.l.b16 %v2805
        %v2896 = vunpack.c.h.b16 %v2805
        %v2897 = vunpack.c.l.b16 %v2806
        %v2898 = vunpack.c.h.b16 %v2806
        %v2899 = vunpack.c.l.b16 %v2807
        %v2900 = vunpack.c.h.b16 %v2807
        %v2901 = vunpack.c.l.b16 %v2808
        %v2902 = vunpack.c.h.b16 %v2808
        %v2903 = vunpack.c.l.b16 %v2809
        %v2904 = vunpack.c.h.b16 %v2809
        %v2905 = vunpack.c.l.b16 %v2810
        %v2906 = vunpack.c.h.b16 %v2810
        %v2907 = vunpack.c.l.b16 %v2811
        %v2908 = vunpack.c.h.b16 %v2811
        %v2909 = vunpack.c.l.b16 %v2812
        %v2910 = vunpack.c.h.b16 %v2812
        %v2911 = vunpack.c.l.b16 %v2813
        %v2912 = vunpack.c.h.b16 %v2813
        %v2913 = vunpack.c.l.b16 %v2814
        %v2914 = vunpack.c.h.b16 %v2814
        %v2915 = vunpack.c.l.b16 %v2815
        %v2916 = vunpack.c.h.b16 %v2815
        %v2917 = vunpack.c.l.b16 %v2816
        %v2918 = vunpack.c.h.b16 %v2816
        %v2919 = vunpack.c.l.b16 %v2817
        %v2920 = vunpack.c.h.b16 %v2817
        %v2921 = vunpack.c.l.b16 %v2818
        %v2922 = vunpack.c.h.b16 %v2818
        %v2923 = vunpack.c.l.b16 %v2819
        %v2924 = vunpack.c.h.b16 %v2819
        %v2925 = vunpack.c.l.b16 %v2820
        %v2926 = vunpack.c.h.b16 %v2820
        %v2927 = vunpack.c.l.b16 %v2821
        %v2928 = vunpack.c.h.b16 %v2821
        %v2929 = vunpack.c.l.b16 %v2822
        %v2930 = vunpack.c.h.b16 %v2822
        %v2931 = vpack.c.b16 %v2869, %v2867
        %v2932 = vpack.c.b16 %v2870, %v2868
        %v2933 = vpack.c.b16 %v2873, %v2871
        %v2934 = vpack.c.b16 %v2874, %v2872
        %v2935 = vpack.c.b16 %v2877, %v2875
        %v2936 = vpack.c.b16 %v2878, %v2876
        %v2937 = vpack.c.b16 %v2881, %v2879
        %v2938 = vpack.c.b16 %v2882, %v2880
        %v2939 = vpack.c.b16 %v2885, %v2883
        %v2940 = vpack.c.b16 %v2886, %v2884
        %v2941 = vpack.c.b16 %v2889, %v2887
        %v2942 = vpack.c.b16 %v2890, %v2888
        %v2943 = vpack.c.b16 %v2893, %v2891
        %v2944 = vpack.c.b16 %v2894, %v2892
        %v2945 = vpack.c.b16 %v2897, %v2895
        %v2946 = vpack.c.b16 %v2898, %v2896
        %v2947 = vpack.c.b16 %v2901, %v2899
        %v2948 = vpack.c.b16 %v2902, %v2900
        %v2949 = vpack.c.b16 %v2905, %v2903
        %v2950 = vpack.c.b16 %v2906, %v2904
        %v2951 = vpack.c.b16 %v2909, %v2907
        %v2952 = vpack.c.b16 %v2910, %v2908
        %v2953 = vpack.c.b16 %v2913, %v2911
        %v2954 = vpack.c.b16 %v2914, %v2912
        %v2955 = vpack.c.b16 %v2917, %v2915
        %v2956 = vpack.c.b16 %v2918, %v2916
        %v2957 = vpack.c.b16 %v2921, %v2919
        %v2958 = vpack.c.b16 %v2922, %v2920
        %v2959 = vpack.c.b16 %v2925, %v2923
        %v2960 = vpack.c.b16 %v2926, %v2924
        %v2961 = vpack.c.b16 %v2929, %v2927
        %v2962 = vpack.c.b16 %v2930, %v2928
        %2995 = vmatprep.subr.bf16.mxu0 %v2932
        %2996 = vmatpush1.bf16.msra.mxu0 %v2931
        %2997 = vmatprep.subr.bf16.mxu0 %v2934
        %2998 = vmatpush1.bf16.msra.mxu0 %v2933
        %2999 = vmatprep.subr.bf16.mxu0 %v2936
        %3000 = vmatpush1.bf16.msra.mxu0 %v2935
        %3001 = vmatprep.subr.bf16.mxu0 %v2938
        %3002 = vmatpush1.bf16.msra.mxu0 %v2937
        %3003 = vmatprep.subr.bf16.mxu0 %v2940
        %3004 = vmatpush1.bf16.msra.mxu0 %v2939
        %3005 = vmatprep.subr.bf16.mxu0 %v2942
        %3006 = vmatpush1.bf16.msra.mxu0 %v2941
        %3007 = vmatprep.subr.bf16.mxu0 %v2944
        %3008 = vmatpush1.bf16.msra.mxu0 %v2943
        %3009 = vmatprep.subr.bf16.mxu0 %v2946
        %3010 = vmatpush1.bf16.msra.mxu0 %v2945
        %3011 = vmatprep.subr.bf16.mxu0 %v2948
        %3012 = vmatpush1.bf16.msra.mxu0 %v2947
        %3013 = vmatprep.subr.bf16.mxu0 %v2950
        %3014 = vmatpush1.bf16.msra.mxu0 %v2949
        %3015 = vmatprep.subr.bf16.mxu0 %v2952
        %3016 = vmatpush1.bf16.msra.mxu0 %v2951
        %3017 = vmatprep.subr.bf16.mxu0 %v2954
        %3018 = vmatpush1.bf16.msra.mxu0 %v2953
        %3019 = vmatprep.subr.bf16.mxu0 %v2956
        %3020 = vmatpush1.bf16.msra.mxu0 %v2955
        %3021 = vmatprep.subr.bf16.mxu0 %v2958
        %3022 = vmatpush1.bf16.msra.mxu0 %v2957
        %3023 = vmatprep.subr.bf16.mxu0 %v2960
        %3024 = vmatpush1.bf16.msra.mxu0 %v2959
        %3025 = vmatprep.subr.bf16.mxu0 %v2962
        %3026 = vmatpush1.bf16.msra.mxu0 %v2961
        %3027 = vmatprep.mubr.bf16.mxu0 %v2760
        %3028 = vmatmul.mubr.bf16.gmra.mrb[0].mxu0 %v2759
        %v3029 = vpop.f32.mrb[0].mxu0
        %v3030 = vadd.f32 %v2828, %v3029
        %v3031 = vpop.f32.mrb[0].mxu0
        %v3032 = vadd.f32 %v2832, %v3031
        %v3033 = vpop.f32.mrb[0].mxu0
        %v3034 = vadd.f32 %v2828, %v3033
        %v3035 = vpop.f32.mrb[0].mxu0
        %v3036 = vadd.f32 %v2832, %v3035
        %3037 = vmatprep.mubr.bf16.mxu0 %v2762
        %3038 = vmatmul.mubr.bf16.gmra.mrb[0].mxu0 %v2761
        %v3039 = vpop.f32.mrb[0].mxu0
        %v3040 = vadd.f32 %v2828, %v3039
        %v3041 = vpop.f32.mrb[0].mxu0
        %v3042 = vadd.f32 %v2832, %v3041
        %v3043 = vpop.f32.mrb[0].mxu0
        %v3044 = vadd.f32 %v2828, %v3043
        %v3045 = vpop.f32.mrb[0].mxu0
        %v3046 = vadd.f32 %v2832, %v3045
        %3047 = vmatprep.mubr.bf16.mxu0 %v2764
        %3048 = vmatmul.mubr.bf16.gmra.mrb[0].mxu0 %v2763
        %v3049 = vpop.f32.mrb[0].mxu0
        %v3050 = vadd.f32 %v2828, %v3049
        %v3051 = vpop.f32.mrb[0].mxu0
        %v3052 = vadd.f32 %v2832, %v3051
        %v3053 = vpop.f32.mrb[0].mxu0
        %v3054 = vadd.f32 %v2828, %v3053
        %v3055 = vpop.f32.mrb[0].mxu0
        %v3056 = vadd.f32 %v2832, %v3055
        %3057 = vmatprep.mubr.bf16.mxu0 %v2766
        %3058 = vmatmul.mubr.bf16.gmra.mrb[0].mxu0 %v2765
        %v3059 = vpop.f32.mrb[0].mxu0
        %v3060 = vadd.f32 %v2828, %v3059
        %v3061 = vpop.f32.mrb[0].mxu0
        %v3062 = vadd.f32 %v2832, %v3061
        %v3063 = vpop.f32.mrb[0].mxu0
        %v3064 = vadd.f32 %v2828, %v3063
        %v3065 = vpop.f32.mrb[0].mxu0
        %v3066 = vadd.f32 %v2832, %v3065
        %3067 = vmatprep.mubr.bf16.mxu0 %v2768
        %3068 = vmatmul.mubr.bf16.gmra.mrb[0].mxu0 %v2767
        %v3069 = vpop.f32.mrb[0].mxu0
        %v3070 = vadd.f32 %v2828, %v3069
        %v3071 = vpop.f32.mrb[0].mxu0
        %v3072 = vadd.f32 %v2832, %v3071
        %v3073 = vpop.f32.mrb[0].mxu0
        %v3074 = vadd.f32 %v2828, %v3073
        %v3075 = vpop.f32.mrb[0].mxu0
        %v3076 = vadd.f32 %v2832, %v3075
        %3077 = vmatprep.mubr.bf16.mxu0 %v2770
        %3078 = vmatmul.mubr.bf16.gmra.mrb[0].mxu0 %v2769
        %v3079 = vpop.f32.mrb[0].mxu0
        %v3080 = vadd.f32 %v2828, %v3079
        %v3081 = vpop.f32.mrb[0].mxu0
        %v3082 = vadd.f32 %v2832, %v3081
        %v3083 = vpop.f32.mrb[0].mxu0
        %v3084 = vadd.f32 %v2828, %v3083
        %v3085 = vpop.f32.mrb[0].mxu0
        %v3086 = vadd.f32 %v2832, %v3085
        %3087 = vmatprep.mubr.bf16.mxu0 %v2772
        %3088 = vmatmul.mubr.bf16.gmra.mrb[0].mxu0 %v2771
        %v3089 = vpop.f32.mrb[0].mxu0
        %v3090 = vadd.f32 %v2828, %v3089
        %v3091 = vpop.f32.mrb[0].mxu0
        %v3092 = vadd.f32 %v2832, %v3091
        %v3093 = vpop.f32.mrb[0].mxu0
        %v3094 = vadd.f32 %v2828, %v3093
        %v3095 = vpop.f32.mrb[0].mxu0
        %v3096 = vadd.f32 %v2832, %v3095
        %3097 = vmatprep.mubr.bf16.mxu0 %v2774
        %3098 = vmatmul.mubr.bf16.gmra.mrb[0].mxu0 %v2773
        %v3099 = vpop.f32.mrb[0].mxu0
        %v3100 = vadd.f32 %v2828, %v3099
        %v3101 = vpop.f32.mrb[0].mxu0
        %v3102 = vadd.f32 %v2832, %v3101
        %v3103 = vpop.f32.mrb[0].mxu0
        %v3104 = vadd.f32 %v2828, %v3103
        %v3105 = vpop.f32.mrb[0].mxu0
        %v3106 = vadd.f32 %v2832, %v3105
        %3107 = vmatprep.mubr.bf16.mxu0 %v2776
        %3108 = vmatmul.mubr.bf16.gmra.mrb[0].mxu0 %v2775
        %v3109 = vpop.f32.mrb[0].mxu0
        %v3110 = vadd.f32 %v2828, %v3109
        %v3111 = vpop.f32.mrb[0].mxu0
        %v3112 = vadd.f32 %v2832, %v3111
        %v3113 = vpop.f32.mrb[0].mxu0
        %v3114 = vadd.f32 %v2828, %v3113
        %v3115 = vpop.f32.mrb[0].mxu0
        %v3116 = vadd.f32 %v2832, %v3115
        %3117 = vmatprep.mubr.bf16.mxu0 %v2778
        %3118 = vmatmul.mubr.bf16.gmra.mrb[0].mxu0 %v2777
        %v3119 = vpop.f32.mrb[0].mxu0
        %v3120 = vadd.f32 %v2828, %v3119
        %v3121 = vpop.f32.mrb[0].mxu0
        %v3122 = vadd.f32 %v2832, %v3121
        %v3123 = vpop.f32.mrb[0].mxu0
        %v3124 = vadd.f32 %v2828, %v3123
        %v3125 = vpop.f32.mrb[0].mxu0
        %v3126 = vadd.f32 %v2832, %v3125
        %3127 = vmatprep.mubr.bf16.mxu0 %v2780
        %3128 = vmatmul.mubr.bf16.gmra.mrb[0].mxu0 %v2779
        %v3129 = vpop.f32.mrb[0].mxu0
        %v3130 = vadd.f32 %v2828, %v3129
        %v3131 = vpop.f32.mrb[0].mxu0
        %v3132 = vadd.f32 %v2832, %v3131
        %v3133 = vpop.f32.mrb[0].mxu0
        %v3134 = vadd.f32 %v2828, %v3133
        %v3135 = vpop.f32.mrb[0].mxu0
        %v3136 = vadd.f32 %v2832, %v3135
        %3137 = vmatprep.mubr.bf16.mxu0 %v2782
        %3138 = vmatmul.mubr.bf16.gmra.mrb[0].mxu0 %v2781
        %v3139 = vpop.f32.mrb[0].mxu0
        %v3140 = vadd.f32 %v2828, %v3139
        %v3141 = vpop.f32.mrb[0].mxu0
        %v3142 = vadd.f32 %v2832, %v3141
        %v3143 = vpop.f32.mrb[0].mxu0
        %v3144 = vadd.f32 %v2828, %v3143
        %v3145 = vpop.f32.mrb[0].mxu0
        %v3146 = vadd.f32 %v2832, %v3145
        %3147 = vmatprep.mubr.bf16.mxu0 %v2784
        %3148 = vmatmul.mubr.bf16.gmra.mrb[0].mxu0 %v2783
        %v3149 = vpop.f32.mrb[0].mxu0
        %v3150 = vadd.f32 %v2828, %v3149
        %v3151 = vpop.f32.mrb[0].mxu0
        %v3152 = vadd.f32 %v2832, %v3151
        %v3153 = vpop.f32.mrb[0].mxu0
        %v3154 = vadd.f32 %v2828, %v3153
        %v3155 = vpop.f32.mrb[0].mxu0
        %v3156 = vadd.f32 %v2832, %v3155
        %3157 = vmatprep.mubr.bf16.mxu0 %v2786
        %3158 = vmatmul.mubr.bf16.gmra.mrb[0].mxu0 %v2785
        %v3159 = vpop.f32.mrb[0].mxu0
        %v3160 = vadd.f32 %v2828, %v3159
        %v3161 = vpop.f32.mrb[0].mxu0
        %v3162 = vadd.f32 %v2832, %v3161
        %v3163 = vpop.f32.mrb[0].mxu0
        %v3164 = vadd.f32 %v2828, %v3163
        %v3165 = vpop.f32.mrb[0].mxu0
        %v3166 = vadd.f32 %v2832, %v3165
        %3167 = vmatprep.mubr.bf16.mxu0 %v2788
        %3168 = vmatmul.mubr.bf16.gmra.mrb[0].mxu0 %v2787
        %v3169 = vpop.f32.mrb[0].mxu0
        %v3170 = vadd.f32 %v2828, %v3169
        %v3171 = vpop.f32.mrb[0].mxu0
        %v3172 = vadd.f32 %v2832, %v3171
        %v3173 = vpop.f32.mrb[0].mxu0
        %v3174 = vadd.f32 %v2828, %v3173
        %v3175 = vpop.f32.mrb[0].mxu0
        %v3176 = vadd.f32 %v2832, %v3175
        %3177 = vmatprep.mubr.bf16.mxu0 %v2790
        %3178 = vmatmul.mubr.bf16.gmra.mrb[0].mxu0 %v2789
        %v3179 = vpop.f32.mrb[0].mxu0
        %v3180 = vadd.f32 %v2828, %v3179
        %v3181 = vpop.f32.mrb[0].mxu0
        %v3182 = vadd.f32 %v2832, %v3181
        %v3183 = vpop.f32.mrb[0].mxu0
        %v3184 = vadd.f32 %v2828, %v3183
        %v3185 = vpop.f32.mrb[0].mxu0
        %v3186 = vadd.f32 %v2832, %v3185
        %3187 = vdwg.mxu0
        %v3188 = vmax.f32 %v3030, 0.0
        %v3189 = vmax.f32 %v3032, 0.0
        %v3190 = vmax.f32 %v3034, 0.0
        %v3191 = vmax.f32 %v3036, 0.0
        %v3192 = vmax.f32 %v3040, 0.0
        %v3193 = vmax.f32 %v3042, 0.0
        %v3194 = vmax.f32 %v3044, 0.0
        %v3195 = vmax.f32 %v3046, 0.0
        %v3196 = vmax.f32 %v3050, 0.0
        %v3197 = vmax.f32 %v3052, 0.0
        %v3198 = vmax.f32 %v3054, 0.0
        %v3199 = vmax.f32 %v3056, 0.0
        %v3200 = vmax.f32 %v3060, 0.0
        %v3201 = vmax.f32 %v3062, 0.0
        %v3202 = vmax.f32 %v3064, 0.0
        %v3203 = vmax.f32 %v3066, 0.0
        %v3204 = vmax.f32 %v3070, 0.0
        %v3205 = vmax.f32 %v3072, 0.0
        %v3206 = vmax.f32 %v3074, 0.0
        %v3207 = vmax.f32 %v3076, 0.0
        %v3208 = vmax.f32 %v3080, 0.0
        %v3209 = vmax.f32 %v3082, 0.0
        %v3210 = vmax.f32 %v3084, 0.0
        %v3211 = vmax.f32 %v3086, 0.0
        %v3212 = vmax.f32 %v3090, 0.0
        %v3213 = vmax.f32 %v3092, 0.0
        %v3214 = vmax.f32 %v3094, 0.0
        %v3215 = vmax.f32 %v3096, 0.0
        %v3216 = vmax.f32 %v3100, 0.0
        %v3217 = vmax.f32 %v3102, 0.0
        %v3218 = vmax.f32 %v3104, 0.0
        %v3219 = vmax.f32 %v3106, 0.0
        %v3220 = vmax.f32 %v3110, 0.0
        %v3221 = vmax.f32 %v3112, 0.0
        %v3222 = vmax.f32 %v3114, 0.0
        %v3223 = vmax.f32 %v3116, 0.0
        %v3224 = vmax.f32 %v3120, 0.0
        %v3225 = vmax.f32 %v3122, 0.0
        %v3226 = vmax.f32 %v3124, 0.0
        %v3227 = vmax.f32 %v3126, 0.0
        %v3228 = vmax.f32 %v3130, 0.0
        %v3229 = vmax.f32 %v3132, 0.0
        %v3230 = vmax.f32 %v3134, 0.0
        %v3231 = vmax.f32 %v3136, 0.0
        %v3232 = vmax.f32 %v3140, 0.0
        %v3233 = vmax.f32 %v3142, 0.0
        %v3234 = vmax.f32 %v3144, 0.0
        %v3235 = vmax.f32 %v3146, 0.0
        %v3236 = vmax.f32 %v3150, 0.0
        %v3237 = vmax.f32 %v3152, 0.0
        %v3238 = vmax.f32 %v3154, 0.0
        %v3239 = vmax.f32 %v3156, 0.0
        %v3240 = vmax.f32 %v3160, 0.0
        %v3241 = vmax.f32 %v3162, 0.0
        %v3242 = vmax.f32 %v3164, 0.0
        %v3243 = vmax.f32 %v3166, 0.0
        %v3244 = vmax.f32 %v3170, 0.0
        %v3245 = vmax.f32 %v3172, 0.0
        %v3246 = vmax.f32 %v3174, 0.0
        %v3247 = vmax.f32 %v3176, 0.0
        %v3248 = vmax.f32 %v3180, 0.0
        %v3249 = vmax.f32 %v3182, 0.0
        %v3250 = vmax.f32 %v3184, 0.0
        %v3251 = vmax.f32 %v3186, 0.0
        %v3252 = vpack.c.bf16 %v3190, %v3188
        %v3253 = vpack.c.bf16 %v3191, %v3189
        %v3254 = vpack.c.bf16 %v3194, %v3192
        %v3255 = vpack.c.bf16 %v3195, %v3193
        %v3256 = vpack.c.bf16 %v3198, %v3196
        %v3257 = vpack.c.bf16 %v3199, %v3197
        %v3258 = vpack.c.bf16 %v3202, %v3200
        %v3259 = vpack.c.bf16 %v3203, %v3201
        %v3260 = vpack.c.bf16 %v3206, %v3204
        %v3261 = vpack.c.bf16 %v3207, %v3205
        %v3262 = vpack.c.bf16 %v3210, %v3208
        %v3263 = vpack.c.bf16 %v3211, %v3209
        %v3264 = vpack.c.bf16 %v3214, %v3212
        %v3265 = vpack.c.bf16 %v3215, %v3213
        %v3266 = vpack.c.bf16 %v3218, %v3216
        %v3267 = vpack.c.bf16 %v3219, %v3217
        %v3268 = vpack.c.bf16 %v3222, %v3220
        %v3269 = vpack.c.bf16 %v3223, %v3221
        %v3270 = vpack.c.bf16 %v3226, %v3224
        %v3271 = vpack.c.bf16 %v3227, %v3225
        %v3272 = vpack.c.bf16 %v3230, %v3228
        %v3273 = vpack.c.bf16 %v3231, %v3229
        %v3274 = vpack.c.bf16 %v3234, %v3232
        %v3275 = vpack.c.bf16 %v3235, %v3233
        %v3276 = vpack.c.bf16 %v3238, %v3236
        %v3277 = vpack.c.bf16 %v3239, %v3237
        %v3278 = vpack.c.bf16 %v3242, %v3240
        %v3279 = vpack.c.bf16 %v3243, %v3241
        %v3280 = vpack.c.bf16 %v3246, %v3244
        %v3281 = vpack.c.bf16 %v3247, %v3245
        %v3282 = vpack.c.bf16 %v3250, %v3248
        %v3283 = vpack.c.bf16 %v3251, %v3249
        %v3284 = vld [vmem:[%s12] sm:$0xff]
        %v3285 = vld [vmem:[%s12 + $0x8] sm:$0xff]
        %v3286 = vld [vmem:[%s12 + $0x10] sm:$0xff]
        %v3287 = vld [vmem:[%s12 + $0x18] sm:$0xff]
        %v3288 = vld [vmem:[%s12 + $0x20] sm:$0xff]
        %v3289 = vld [vmem:[%s12 + $0x28] sm:$0xff]
        %v3290 = vld [vmem:[%s12 + $0x30] sm:$0xff]
        %v3291 = vld [vmem:[%s12 + $0x38] sm:$0xff]
        %v3292 = vld [vmem:[%s12 + $0x40] sm:$0xff]
        %v3293 = vld [vmem:[%s12 + $0x48] sm:$0xff]
        %v3294 = vld [vmem:[%s12 + $0x50] sm:$0xff]
        %v3295 = vld [vmem:[%s12 + $0x58] sm:$0xff]
        %v3296 = vld [vmem:[%s12 + $0x60] sm:$0xff]
        %v3297 = vld [vmem:[%s12 + $0x68] sm:$0xff]
        %v3298 = vld [vmem:[%s12 + $0x70] sm:$0xff]
        %v3299 = vld [vmem:[%s12 + $0x78] sm:$0xff]
        %v3300 = vld [vmem:[%s12 + $0x80] sm:$0xff]
        %v3301 = vld [vmem:[%s12 + $0x88] sm:$0xff]
        %v3302 = vld [vmem:[%s12 + $0x90] sm:$0xff]
        %v3303 = vld [vmem:[%s12 + $0x98] sm:$0xff]
        %v3304 = vld [vmem:[%s12 + $0xa0] sm:$0xff]
        %v3305 = vld [vmem:[%s12 + $0xa8] sm:$0xff]
        %v3306 = vld [vmem:[%s12 + $0xb0] sm:$0xff]
        %v3307 = vld [vmem:[%s12 + $0xb8] sm:$0xff]
        %v3308 = vld [vmem:[%s12 + $0xc0] sm:$0xff]
        %v3309 = vld [vmem:[%s12 + $0xc8] sm:$0xff]
        %v3310 = vld [vmem:[%s12 + $0xd0] sm:$0xff]
        %v3311 = vld [vmem:[%s12 + $0xd8] sm:$0xff]
        %v3312 = vld [vmem:[%s12 + $0xe0] sm:$0xff]
        %v3313 = vld [vmem:[%s12 + $0xe8] sm:$0xff]
        %v3314 = vld [vmem:[%s12 + $0xf0] sm:$0xff]
        %v3315 = vld [vmem:[%s12 + $0xf8] sm:$0xff]
        %v3316 = vld [vmem:[%s13] sm:$0xff]
        %v3317 = vld [vmem:[%s13 + $0x8] sm:$0xff]
        %v3318 = vld [vmem:[%s13 + $0x10] sm:$0xff]
        %v3319 = vld [vmem:[%s13 + $0x18] sm:$0xff]
        %v3320 = vld [vmem:[%s13 + $0x20] sm:$0xff]
        %v3321 = vld [vmem:[%s13 + $0x28] sm:$0xff]
        %v3322 = vld [vmem:[%s13 + $0x30] sm:$0xff]
        %v3323 = vld [vmem:[%s13 + $0x38] sm:$0xff]
        %v3332 = vunpack.c.l.b16 %v3316
        %v3333 = vunpack.c.h.b16 %v3316
        %v3334 = vunpack.c.l.b16 %v3317
        %v3335 = vunpack.c.h.b16 %v3317
        %v3336 = vunpack.c.l.b16 %v3318
        %v3337 = vunpack.c.h.b16 %v3318
        %v3338 = vunpack.c.l.b16 %v3319
        %v3339 = vunpack.c.h.b16 %v3319
        %v3340 = vunpack.c.l.b16 %v3320
        %v3341 = vunpack.c.h.b16 %v3320
        %v3342 = vunpack.c.l.b16 %v3321
        %v3343 = vunpack.c.h.b16 %v3321
        %v3344 = vunpack.c.l.b16 %v3322
        %v3345 = vunpack.c.h.b16 %v3322
        %v3346 = vunpack.c.l.b16 %v3323
        %v3347 = vunpack.c.h.b16 %v3323
        %v3348 = vpack.c.b16 %v3334, %v3332
        %v3349 = vpack.c.b16 %v3335, %v3333
        %v3350 = vpack.c.b16 %v3338, %v3336
        %v3351 = vpack.c.b16 %v3339, %v3337
        %v3352 = vpack.c.b16 %v3342, %v3340
        %v3353 = vpack.c.b16 %v3343, %v3341
        %v3354 = vpack.c.b16 %v3346, %v3344
        %v3355 = vpack.c.b16 %v3347, %v3345
        %3364 = vmatprep.subr.bf16.mxu0 %v3349
        %3365 = vmatpush1.bf16.msra.mxu0 %v3348
        %3366 = vmatprep.subr.bf16.mxu0 %v3351
        %3367 = vmatpush1.bf16.msra.mxu0 %v3350
        %3368 = vmatprep.subr.bf16.mxu0 %v3353
        %3369 = vmatpush1.bf16.msra.mxu0 %v3352
        %3370 = vmatprep.subr.bf16.mxu0 %v3355
        %3371 = vmatpush1.bf16.msra.mxu0 %v3354
        %3372 = vmatprep.subr.bf16.mxu0 0
        %3373 = vmatpush1.bf16.msra.mxu0 0
        %3374 = vmatprep.subr.bf16.mxu0 0
        %3375 = vmatpush1.bf16.msra.mxu0 0
        %3376 = vmatprep.subr.bf16.mxu0 0
        %3377 = vmatpush1.bf16.msra.mxu0 0
        %3378 = vmatprep.subr.bf16.mxu0 0
        %3379 = vmatpush1.bf16.msra.mxu0 0
        %3380 = vmatprep.subr.bf16.mxu0 0
        %3381 = vmatpush1.bf16.msra.mxu0 0
        %3382 = vmatprep.subr.bf16.mxu0 0
        %3383 = vmatpush1.bf16.msra.mxu0 0
        %3384 = vmatprep.subr.bf16.mxu0 0
        %3385 = vmatpush1.bf16.msra.mxu0 0
        %3386 = vmatprep.subr.bf16.mxu0 0
        %3387 = vmatpush1.bf16.msra.mxu0 0
        %3388 = vmatprep.subr.bf16.mxu0 0
        %3389 = vmatpush1.bf16.msra.mxu0 0
        %3390 = vmatprep.subr.bf16.mxu0 0
        %3391 = vmatpush1.bf16.msra.mxu0 0
        %3392 = vmatprep.subr.bf16.mxu0 0
        %3393 = vmatpush1.bf16.msra.mxu0 0
        %3394 = vmatprep.subr.bf16.mxu0 0
        %3395 = vmatpush1.bf16.msra.mxu0 0
        %3396 = vmatprep.mubr.bf16.mxu0 0
        %3397 = vmatmul.mubr.bf16.gmra.mrb[0].mxu0 %v976
        %v3398 = vpop.f32.mrb[0].mxu0
        %v3399 = vadd.f32 0.0, %v3398
        %v3400 = vpop.f32.mrb[0].mxu0
        %v3401 = vadd.f32 0.0, %v3400
        %v3402 = vpop.f32.mrb[0].mxu0
        %v3403 = vadd.f32 0.0, %v3402
        %v3404 = vpop.f32.mrb[0].mxu0
        %v3405 = vadd.f32 0.0, %v3404
        %3406 = vmatprep.mubr.bf16.mxu0 0
        %3407 = vmatmul.mubr.bf16.gmra.mrb[0].mxu0 %v979
        %v3408 = vpop.f32.mrb[0].mxu0
        %v3409 = vadd.f32 0.0, %v3408
        %v3410 = vpop.f32.mrb[0].mxu0
        %v3411 = vadd.f32 0.0, %v3410
        %v3412 = vpop.f32.mrb[0].mxu0
        %v3413 = vadd.f32 0.0, %v3412
        %v3414 = vpop.f32.mrb[0].mxu0
        %v3415 = vadd.f32 0.0, %v3414
        %3416 = vmatprep.mubr.bf16.mxu0 0
        %3417 = vmatmul.mubr.bf16.gmra.mrb[0].mxu0 %v982
        %v3418 = vpop.f32.mrb[0].mxu0
        %v3419 = vadd.f32 0.0, %v3418
        %v3420 = vpop.f32.mrb[0].mxu0
        %v3421 = vadd.f32 0.0, %v3420
        %v3422 = vpop.f32.mrb[0].mxu0
        %v3423 = vadd.f32 0.0, %v3422
        %v3424 = vpop.f32.mrb[0].mxu0
        %v3425 = vadd.f32 0.0, %v3424
        %3426 = vmatprep.mubr.bf16.mxu0 0
        %3427 = vmatmul.mubr.bf16.gmra.mrb[0].mxu0 %v985
        %v3428 = vpop.f32.mrb[0].mxu0
        %v3429 = vadd.f32 0.0, %v3428
        %v3430 = vpop.f32.mrb[0].mxu0
        %v3431 = vadd.f32 0.0, %v3430
        %v3432 = vpop.f32.mrb[0].mxu0
        %v3433 = vadd.f32 0.0, %v3432
        %v3434 = vpop.f32.mrb[0].mxu0
        %v3435 = vadd.f32 0.0, %v3434
        %3436 = vmatprep.mubr.bf16.mxu0 0
        %3437 = vmatmul.mubr.bf16.gmra.mrb[0].mxu0 %v988
        %v3438 = vpop.f32.mrb[0].mxu0
        %v3439 = vadd.f32 0.0, %v3438
        %v3440 = vpop.f32.mrb[0].mxu0
        %v3441 = vadd.f32 0.0, %v3440
        %v3442 = vpop.f32.mrb[0].mxu0
        %v3443 = vadd.f32 0.0, %v3442
        %v3444 = vpop.f32.mrb[0].mxu0
        %v3445 = vadd.f32 0.0, %v3444
        %3446 = vmatprep.mubr.bf16.mxu0 0
        %3447 = vmatmul.mubr.bf16.gmra.mrb[0].mxu0 %v991
        %v3448 = vpop.f32.mrb[0].mxu0
        %v3449 = vadd.f32 0.0, %v3448
        %v3450 = vpop.f32.mrb[0].mxu0
        %v3451 = vadd.f32 0.0, %v3450
        %v3452 = vpop.f32.mrb[0].mxu0
        %v3453 = vadd.f32 0.0, %v3452
        %v3454 = vpop.f32.mrb[0].mxu0
        %v3455 = vadd.f32 0.0, %v3454
        %3456 = vmatprep.mubr.bf16.mxu0 0
        %3457 = vmatmul.mubr.bf16.gmra.mrb[0].mxu0 %v994
        %v3458 = vpop.f32.mrb[0].mxu0
        %v3459 = vadd.f32 0.0, %v3458
        %v3460 = vpop.f32.mrb[0].mxu0
        %v3461 = vadd.f32 0.0, %v3460
        %v3462 = vpop.f32.mrb[0].mxu0
        %v3463 = vadd.f32 0.0, %v3462
        %v3464 = vpop.f32.mrb[0].mxu0
        %v3465 = vadd.f32 0.0, %v3464
        %3466 = vmatprep.mubr.bf16.mxu0 0
        %3467 = vmatmul.mubr.bf16.gmra.mrb[0].mxu0 %v997
        %v3468 = vpop.f32.mrb[0].mxu0
        %v3469 = vadd.f32 0.0, %v3468
        %v3470 = vpop.f32.mrb[0].mxu0
        %v3471 = vadd.f32 0.0, %v3470
        %v3472 = vpop.f32.mrb[0].mxu0
        %v3473 = vadd.f32 0.0, %v3472
        %v3474 = vpop.f32.mrb[0].mxu0
        %v3475 = vadd.f32 0.0, %v3474
        %3476 = vmatprep.mubr.bf16.mxu0 0
        %3477 = vmatmul.mubr.bf16.gmra.mrb[0].mxu0 %v1000
        %v3478 = vpop.f32.mrb[0].mxu0
        %v3479 = vadd.f32 0.0, %v3478
        %v3480 = vpop.f32.mrb[0].mxu0
        %v3481 = vadd.f32 0.0, %v3480
        %v3482 = vpop.f32.mrb[0].mxu0
        %v3483 = vadd.f32 0.0, %v3482
        %v3484 = vpop.f32.mrb[0].mxu0
        %v3485 = vadd.f32 0.0, %v3484
        %3486 = vmatprep.mubr.bf16.mxu0 0
        %3487 = vmatmul.mubr.bf16.gmra.mrb[0].mxu0 %v1003
        %v3488 = vpop.f32.mrb[0].mxu0
        %v3489 = vadd.f32 0.0, %v3488
        %v3490 = vpop.f32.mrb[0].mxu0
        %v3491 = vadd.f32 0.0, %v3490
        %v3492 = vpop.f32.mrb[0].mxu0
        %v3493 = vadd.f32 0.0, %v3492
        %v3494 = vpop.f32.mrb[0].mxu0
        %v3495 = vadd.f32 0.0, %v3494
        %3496 = vmatprep.mubr.bf16.mxu0 0
        %3497 = vmatmul.mubr.bf16.gmra.mrb[0].mxu0 %v1006
        %v3498 = vpop.f32.mrb[0].mxu0
        %v3499 = vadd.f32 0.0, %v3498
        %v3500 = vpop.f32.mrb[0].mxu0
        %v3501 = vadd.f32 0.0, %v3500
        %v3502 = vpop.f32.mrb[0].mxu0
        %v3503 = vadd.f32 0.0, %v3502
        %v3504 = vpop.f32.mrb[0].mxu0
        %v3505 = vadd.f32 0.0, %v3504
        %3506 = vmatprep.mubr.bf16.mxu0 0
        %3507 = vmatmul.mubr.bf16.gmra.mrb[0].mxu0 %v1009
        %v3508 = vpop.f32.mrb[0].mxu0
        %v3509 = vadd.f32 0.0, %v3508
        %v3510 = vpop.f32.mrb[0].mxu0
        %v3511 = vadd.f32 0.0, %v3510
        %v3512 = vpop.f32.mrb[0].mxu0
        %v3513 = vadd.f32 0.0, %v3512
        %v3514 = vpop.f32.mrb[0].mxu0
        %v3515 = vadd.f32 0.0, %v3514
        %3516 = vmatprep.mubr.bf16.mxu0 0
        %3517 = vmatmul.mubr.bf16.gmra.mrb[0].mxu0 %v1012
        %v3518 = vpop.f32.mrb[0].mxu0
        %v3519 = vadd.f32 0.0, %v3518
        %v3520 = vpop.f32.mrb[0].mxu0
        %v3521 = vadd.f32 0.0, %v3520
        %v3522 = vpop.f32.mrb[0].mxu0
        %v3523 = vadd.f32 0.0, %v3522
        %v3524 = vpop.f32.mrb[0].mxu0
        %v3525 = vadd.f32 0.0, %v3524
        %3526 = vmatprep.mubr.bf16.mxu0 0
        %3527 = vmatmul.mubr.bf16.gmra.mrb[0].mxu0 %v1015
        %v3528 = vpop.f32.mrb[0].mxu0
        %v3529 = vadd.f32 0.0, %v3528
        %v3530 = vpop.f32.mrb[0].mxu0
        %v3531 = vadd.f32 0.0, %v3530
        %v3532 = vpop.f32.mrb[0].mxu0
        %v3533 = vadd.f32 0.0, %v3532
        %v3534 = vpop.f32.mrb[0].mxu0
        %v3535 = vadd.f32 0.0, %v3534
        %3536 = vmatprep.mubr.bf16.mxu0 0
        %3537 = vmatmul.mubr.bf16.gmra.mrb[0].mxu0 %v1018
        %v3538 = vpop.f32.mrb[0].mxu0
        %v3539 = vadd.f32 0.0, %v3538
        %v3540 = vpop.f32.mrb[0].mxu0
        %v3541 = vadd.f32 0.0, %v3540
        %v3542 = vpop.f32.mrb[0].mxu0
        %v3543 = vadd.f32 0.0, %v3542
        %v3544 = vpop.f32.mrb[0].mxu0
        %v3545 = vadd.f32 0.0, %v3544
        %3546 = vmatprep.mubr.bf16.mxu0 0
        %3547 = vmatmul.mubr.bf16.gmra.mrb[0].mxu0 %v1021
        %v3548 = vpop.f32.mrb[0].mxu0
        %v3549 = vadd.f32 0.0, %v3548
        %v3550 = vpop.f32.mrb[0].mxu0
        %v3551 = vadd.f32 0.0, %v3550
        %v3552 = vpop.f32.mrb[0].mxu0
        %v3553 = vadd.f32 0.0, %v3552
        %v3554 = vpop.f32.mrb[0].mxu0
        %v3555 = vadd.f32 0.0, %v3554
        %3556 = vdwg.mxu0
        %v3589 = vunpack.c.l.b16 %v3284
        %v3590 = vunpack.c.h.b16 %v3284
        %v3591 = vunpack.c.l.b16 %v3285
        %v3592 = vunpack.c.h.b16 %v3285
        %v3593 = vunpack.c.l.b16 %v3286
        %v3594 = vunpack.c.h.b16 %v3286
        %v3595 = vunpack.c.l.b16 %v3287
        %v3596 = vunpack.c.h.b16 %v3287
        %v3597 = vunpack.c.l.b16 %v3288
        %v3598 = vunpack.c.h.b16 %v3288
        %v3599 = vunpack.c.l.b16 %v3289
        %v3600 = vunpack.c.h.b16 %v3289
        %v3601 = vunpack.c.l.b16 %v3290
        %v3602 = vunpack.c.h.b16 %v3290
        %v3603 = vunpack.c.l.b16 %v3291
        %v3604 = vunpack.c.h.b16 %v3291
        %v3605 = vunpack.c.l.b16 %v3292
        %v3606 = vunpack.c.h.b16 %v3292
        %v3607 = vunpack.c.l.b16 %v3293
        %v3608 = vunpack.c.h.b16 %v3293
        %v3609 = vunpack.c.l.b16 %v3294
        %v3610 = vunpack.c.h.b16 %v3294
        %v3611 = vunpack.c.l.b16 %v3295
        %v3612 = vunpack.c.h.b16 %v3295
        %v3613 = vunpack.c.l.b16 %v3296
        %v3614 = vunpack.c.h.b16 %v3296
        %v3615 = vunpack.c.l.b16 %v3297
        %v3616 = vunpack.c.h.b16 %v3297
        %v3617 = vunpack.c.l.b16 %v3298
        %v3618 = vunpack.c.h.b16 %v3298
        %v3619 = vunpack.c.l.b16 %v3299
        %v3620 = vunpack.c.h.b16 %v3299
        %v3621 = vunpack.c.l.b16 %v3300
        %v3622 = vunpack.c.h.b16 %v3300
        %v3623 = vunpack.c.l.b16 %v3301
        %v3624 = vunpack.c.h.b16 %v3301
        %v3625 = vunpack.c.l.b16 %v3302
        %v3626 = vunpack.c.h.b16 %v3302
        %v3627 = vunpack.c.l.b16 %v3303
        %v3628 = vunpack.c.h.b16 %v3303
        %v3629 = vunpack.c.l.b16 %v3304
        %v3630 = vunpack.c.h.b16 %v3304
        %v3631 = vunpack.c.l.b16 %v3305
        %v3632 = vunpack.c.h.b16 %v3305
        %v3633 = vunpack.c.l.b16 %v3306
        %v3634 = vunpack.c.h.b16 %v3306
        %v3635 = vunpack.c.l.b16 %v3307
        %v3636 = vunpack.c.h.b16 %v3307
        %v3637 = vunpack.c.l.b16 %v3308
        %v3638 = vunpack.c.h.b16 %v3308
        %v3639 = vunpack.c.l.b16 %v3309
        %v3640 = vunpack.c.h.b16 %v3309
        %v3641 = vunpack.c.l.b16 %v3310
        %v3642 = vunpack.c.h.b16 %v3310
        %v3643 = vunpack.c.l.b16 %v3311
        %v3644 = vunpack.c.h.b16 %v3311
        %v3645 = vunpack.c.l.b16 %v3312
        %v3646 = vunpack.c.h.b16 %v3312
        %v3647 = vunpack.c.l.b16 %v3313
        %v3648 = vunpack.c.h.b16 %v3313
        %v3649 = vunpack.c.l.b16 %v3314
        %v3650 = vunpack.c.h.b16 %v3314
        %v3651 = vunpack.c.l.b16 %v3315
        %v3652 = vunpack.c.h.b16 %v3315
        %v3653 = vpack.c.b16 %v3591, %v3589
        %v3654 = vpack.c.b16 %v3592, %v3590
        %v3655 = vpack.c.b16 %v3595, %v3593
        %v3656 = vpack.c.b16 %v3596, %v3594
        %v3657 = vpack.c.b16 %v3599, %v3597
        %v3658 = vpack.c.b16 %v3600, %v3598
        %v3659 = vpack.c.b16 %v3603, %v3601
        %v3660 = vpack.c.b16 %v3604, %v3602
        %v3661 = vpack.c.b16 %v3607, %v3605
        %v3662 = vpack.c.b16 %v3608, %v3606
        %v3663 = vpack.c.b16 %v3611, %v3609
        %v3664 = vpack.c.b16 %v3612, %v3610
        %v3665 = vpack.c.b16 %v3615, %v3613
        %v3666 = vpack.c.b16 %v3616, %v3614
        %v3667 = vpack.c.b16 %v3619, %v3617
        %v3668 = vpack.c.b16 %v3620, %v3618
        %v3669 = vpack.c.b16 %v3623, %v3621
        %v3670 = vpack.c.b16 %v3624, %v3622
        %v3671 = vpack.c.b16 %v3627, %v3625
        %v3672 = vpack.c.b16 %v3628, %v3626
        %v3673 = vpack.c.b16 %v3631, %v3629
        %v3674 = vpack.c.b16 %v3632, %v3630
        %v3675 = vpack.c.b16 %v3635, %v3633
        %v3676 = vpack.c.b16 %v3636, %v3634
        %v3677 = vpack.c.b16 %v3639, %v3637
        %v3678 = vpack.c.b16 %v3640, %v3638
        %v3679 = vpack.c.b16 %v3643, %v3641
        %v3680 = vpack.c.b16 %v3644, %v3642
        %v3681 = vpack.c.b16 %v3647, %v3645
        %v3682 = vpack.c.b16 %v3648, %v3646
        %v3683 = vpack.c.b16 %v3651, %v3649
        %v3684 = vpack.c.b16 %v3652, %v3650
        %3717 = vmatprep.subr.bf16.mxu0 %v3654
        %3718 = vmatpush1.bf16.msra.mxu0 %v3653
        %3719 = vmatprep.subr.bf16.mxu0 %v3656
        %3720 = vmatpush1.bf16.msra.mxu0 %v3655
        %3721 = vmatprep.subr.bf16.mxu0 %v3658
        %3722 = vmatpush1.bf16.msra.mxu0 %v3657
        %3723 = vmatprep.subr.bf16.mxu0 %v3660
        %3724 = vmatpush1.bf16.msra.mxu0 %v3659
        %3725 = vmatprep.subr.bf16.mxu0 %v3662
        %3726 = vmatpush1.bf16.msra.mxu0 %v3661
        %3727 = vmatprep.subr.bf16.mxu0 %v3664
        %3728 = vmatpush1.bf16.msra.mxu0 %v3663
        %3729 = vmatprep.subr.bf16.mxu0 %v3666
        %3730 = vmatpush1.bf16.msra.mxu0 %v3665
        %3731 = vmatprep.subr.bf16.mxu0 %v3668
        %3732 = vmatpush1.bf16.msra.mxu0 %v3667
        %3733 = vmatprep.subr.bf16.mxu0 %v3670
        %3734 = vmatpush1.bf16.msra.mxu0 %v3669
        %3735 = vmatprep.subr.bf16.mxu0 %v3672
        %3736 = vmatpush1.bf16.msra.mxu0 %v3671
        %3737 = vmatprep.subr.bf16.mxu0 %v3674
        %3738 = vmatpush1.bf16.msra.mxu0 %v3673
        %3739 = vmatprep.subr.bf16.mxu0 %v3676
        %3740 = vmatpush1.bf16.msra.mxu0 %v3675
        %3741 = vmatprep.subr.bf16.mxu0 %v3678
        %3742 = vmatpush1.bf16.msra.mxu0 %v3677
        %3743 = vmatprep.subr.bf16.mxu0 %v3680
        %3744 = vmatpush1.bf16.msra.mxu0 %v3679
        %3745 = vmatprep.subr.bf16.mxu0 %v3682
        %3746 = vmatpush1.bf16.msra.mxu0 %v3681
        %3747 = vmatprep.subr.bf16.mxu0 %v3684
        %3748 = vmatpush1.bf16.msra.mxu0 %v3683
        %3749 = vmatprep.mubr.bf16.mxu0 %v3253
        %3750 = vmatmul.mubr.bf16.gmra.mrb[0].mxu0 %v3252
        %v3751 = vpop.f32.mrb[0].mxu0
        %v3752 = vadd.f32 %v3399, %v3751
        %v3753 = vpop.f32.mrb[0].mxu0
        %v3754 = vadd.f32 %v3401, %v3753
        %v3755 = vpop.f32.mrb[0].mxu0
        %v3756 = vadd.f32 %v3403, %v3755
        %v3757 = vpop.f32.mrb[0].mxu0
        %v3758 = vadd.f32 %v3405, %v3757
        %3759 = vmatprep.mubr.bf16.mxu0 %v3255
        %3760 = vmatmul.mubr.bf16.gmra.mrb[0].mxu0 %v3254
        %v3761 = vpop.f32.mrb[0].mxu0
        %v3762 = vadd.f32 %v3409, %v3761
        %v3763 = vpop.f32.mrb[0].mxu0
        %v3764 = vadd.f32 %v3411, %v3763
        %v3765 = vpop.f32.mrb[0].mxu0
        %v3766 = vadd.f32 %v3413, %v3765
        %v3767 = vpop.f32.mrb[0].mxu0
        %v3768 = vadd.f32 %v3415, %v3767
        %3769 = vmatprep.mubr.bf16.mxu0 %v3257
        %3770 = vmatmul.mubr.bf16.gmra.mrb[0].mxu0 %v3256
        %v3771 = vpop.f32.mrb[0].mxu0
        %v3772 = vadd.f32 %v3419, %v3771
        %v3773 = vpop.f32.mrb[0].mxu0
        %v3774 = vadd.f32 %v3421, %v3773
        %v3775 = vpop.f32.mrb[0].mxu0
        %v3776 = vadd.f32 %v3423, %v3775
        %v3777 = vpop.f32.mrb[0].mxu0
        %v3778 = vadd.f32 %v3425, %v3777
        %3779 = vmatprep.mubr.bf16.mxu0 %v3259
        %3780 = vmatmul.mubr.bf16.gmra.mrb[0].mxu0 %v3258
        %v3781 = vpop.f32.mrb[0].mxu0
        %v3782 = vadd.f32 %v3429, %v3781
        %v3783 = vpop.f32.mrb[0].mxu0
        %v3784 = vadd.f32 %v3431, %v3783
        %v3785 = vpop.f32.mrb[0].mxu0
        %v3786 = vadd.f32 %v3433, %v3785
        %v3787 = vpop.f32.mrb[0].mxu0
        %v3788 = vadd.f32 %v3435, %v3787
        %3789 = vmatprep.mubr.bf16.mxu0 %v3261
        %3790 = vmatmul.mubr.bf16.gmra.mrb[0].mxu0 %v3260
        %v3791 = vpop.f32.mrb[0].mxu0
        %v3792 = vadd.f32 %v3439, %v3791
        %v3793 = vpop.f32.mrb[0].mxu0
        %v3794 = vadd.f32 %v3441, %v3793
        %v3795 = vpop.f32.mrb[0].mxu0
        %v3796 = vadd.f32 %v3443, %v3795
        %v3797 = vpop.f32.mrb[0].mxu0
        %v3798 = vadd.f32 %v3445, %v3797
        %3799 = vmatprep.mubr.bf16.mxu0 %v3263
        %3800 = vmatmul.mubr.bf16.gmra.mrb[0].mxu0 %v3262
        %v3801 = vpop.f32.mrb[0].mxu0
        %v3802 = vadd.f32 %v3449, %v3801
        %v3803 = vpop.f32.mrb[0].mxu0
        %v3804 = vadd.f32 %v3451, %v3803
        %v3805 = vpop.f32.mrb[0].mxu0
        %v3806 = vadd.f32 %v3453, %v3805
        %v3807 = vpop.f32.mrb[0].mxu0
        %v3808 = vadd.f32 %v3455, %v3807
        %3809 = vmatprep.mubr.bf16.mxu0 %v3265
        %3810 = vmatmul.mubr.bf16.gmra.mrb[0].mxu0 %v3264
        %v3811 = vpop.f32.mrb[0].mxu0
        %v3812 = vadd.f32 %v3459, %v3811
        %v3813 = vpop.f32.mrb[0].mxu0
        %v3814 = vadd.f32 %v3461, %v3813
        %v3815 = vpop.f32.mrb[0].mxu0
        %v3816 = vadd.f32 %v3463, %v3815
        %v3817 = vpop.f32.mrb[0].mxu0
        %v3818 = vadd.f32 %v3465, %v3817
        %3819 = vmatprep.mubr.bf16.mxu0 %v3267
        %3820 = vmatmul.mubr.bf16.gmra.mrb[0].mxu0 %v3266
        %v3821 = vpop.f32.mrb[0].mxu0
        %v3822 = vadd.f32 %v3469, %v3821
        %v3823 = vpop.f32.mrb[0].mxu0
        %v3824 = vadd.f32 %v3471, %v3823
        %v3825 = vpop.f32.mrb[0].mxu0
        %v3826 = vadd.f32 %v3473, %v3825
        %v3827 = vpop.f32.mrb[0].mxu0
        %v3828 = vadd.f32 %v3475, %v3827
        %3829 = vmatprep.mubr.bf16.mxu0 %v3269
        %3830 = vmatmul.mubr.bf16.gmra.mrb[0].mxu0 %v3268
        %v3831 = vpop.f32.mrb[0].mxu0
        %v3832 = vadd.f32 %v3479, %v3831
        %v3833 = vpop.f32.mrb[0].mxu0
        %v3834 = vadd.f32 %v3481, %v3833
        %v3835 = vpop.f32.mrb[0].mxu0
        %v3836 = vadd.f32 %v3483, %v3835
        %v3837 = vpop.f32.mrb[0].mxu0
        %v3838 = vadd.f32 %v3485, %v3837
        %3839 = vmatprep.mubr.bf16.mxu0 %v3271
        %3840 = vmatmul.mubr.bf16.gmra.mrb[0].mxu0 %v3270
        %v3841 = vpop.f32.mrb[0].mxu0
        %v3842 = vadd.f32 %v3489, %v3841
        %v3843 = vpop.f32.mrb[0].mxu0
        %v3844 = vadd.f32 %v3491, %v3843
        %v3845 = vpop.f32.mrb[0].mxu0
        %v3846 = vadd.f32 %v3493, %v3845
        %v3847 = vpop.f32.mrb[0].mxu0
        %v3848 = vadd.f32 %v3495, %v3847
        %3849 = vmatprep.mubr.bf16.mxu0 %v3273
        %3850 = vmatmul.mubr.bf16.gmra.mrb[0].mxu0 %v3272
        %v3851 = vpop.f32.mrb[0].mxu0
        %v3852 = vadd.f32 %v3499, %v3851
        %v3853 = vpop.f32.mrb[0].mxu0
        %v3854 = vadd.f32 %v3501, %v3853
        %v3855 = vpop.f32.mrb[0].mxu0
        %v3856 = vadd.f32 %v3503, %v3855
        %v3857 = vpop.f32.mrb[0].mxu0
        %v3858 = vadd.f32 %v3505, %v3857
        %3859 = vmatprep.mubr.bf16.mxu0 %v3275
        %3860 = vmatmul.mubr.bf16.gmra.mrb[0].mxu0 %v3274
        %v3861 = vpop.f32.mrb[0].mxu0
        %v3862 = vadd.f32 %v3509, %v3861
        %v3863 = vpop.f32.mrb[0].mxu0
        %v3864 = vadd.f32 %v3511, %v3863
        %v3865 = vpop.f32.mrb[0].mxu0
        %v3866 = vadd.f32 %v3513, %v3865
        %v3867 = vpop.f32.mrb[0].mxu0
        %v3868 = vadd.f32 %v3515, %v3867
        %3869 = vmatprep.mubr.bf16.mxu0 %v3277
        %3870 = vmatmul.mubr.bf16.gmra.mrb[0].mxu0 %v3276
        %v3871 = vpop.f32.mrb[0].mxu0
        %v3872 = vadd.f32 %v3519, %v3871
        %v3873 = vpop.f32.mrb[0].mxu0
        %v3874 = vadd.f32 %v3521, %v3873
        %v3875 = vpop.f32.mrb[0].mxu0
        %v3876 = vadd.f32 %v3523, %v3875
        %v3877 = vpop.f32.mrb[0].mxu0
        %v3878 = vadd.f32 %v3525, %v3877
        %3879 = vmatprep.mubr.bf16.mxu0 %v3279
        %3880 = vmatmul.mubr.bf16.gmra.mrb[0].mxu0 %v3278
        %v3881 = vpop.f32.mrb[0].mxu0
        %v3882 = vadd.f32 %v3529, %v3881
        %v3883 = vpop.f32.mrb[0].mxu0
        %v3884 = vadd.f32 %v3531, %v3883
        %v3885 = vpop.f32.mrb[0].mxu0
        %v3886 = vadd.f32 %v3533, %v3885
        %v3887 = vpop.f32.mrb[0].mxu0
        %v3888 = vadd.f32 %v3535, %v3887
        %3889 = vmatprep.mubr.bf16.mxu0 %v3281
        %3890 = vmatmul.mubr.bf16.gmra.mrb[0].mxu0 %v3280
        %v3891 = vpop.f32.mrb[0].mxu0
        %v3892 = vadd.f32 %v3539, %v3891
        %v3893 = vpop.f32.mrb[0].mxu0
        %v3894 = vadd.f32 %v3541, %v3893
        %v3895 = vpop.f32.mrb[0].mxu0
        %v3896 = vadd.f32 %v3543, %v3895
        %v3897 = vpop.f32.mrb[0].mxu0
        %v3898 = vadd.f32 %v3545, %v3897
        %3899 = vmatprep.mubr.bf16.mxu0 %v3283
        %3900 = vmatmul.mubr.bf16.gmra.mrb[0].mxu0 %v3282
        %v3901 = vpop.f32.mrb[0].mxu0
        %v3902 = vadd.f32 %v3549, %v3901
        %v3903 = vpop.f32.mrb[0].mxu0
        %v3904 = vadd.f32 %v3551, %v3903
        %v3905 = vpop.f32.mrb[0].mxu0
        %v3906 = vadd.f32 %v3553, %v3905
        %v3907 = vpop.f32.mrb[0].mxu0
        %v3908 = vadd.f32 %v3555, %v3907
        %3909 = vdwg.mxu0
        %v3910 = vld [vmem:[%s14] sm:$0x3]
        %v3912 = vlaneseq
        %v3913 = vshrl.u32 %v3912, 7
        %v3914 = vsub.s32 0, %v3913
        %v3915 = vrot.slane %v3910, %v3914
        %v3916 = vlaneseq
        %v3917 = vshrl.u32 %v3916, 7
        %v3918 = vsub.s32 1, %v3917
        %v3919 = vrot.slane %v3910, %v3918
        %v3922 = vadd.f32 %v3752, %v3915
        %v3923 = vadd.f32 %v3754, %v3919
        %v3924 = vadd.f32 %v3756, %v3915
        %v3925 = vadd.f32 %v3758, %v3919
        %v3926 = vadd.f32 %v3762, %v3915
        %v3927 = vadd.f32 %v3764, %v3919
        %v3928 = vadd.f32 %v3766, %v3915
        %v3929 = vadd.f32 %v3768, %v3919
        %v3930 = vadd.f32 %v3772, %v3915
        %v3931 = vadd.f32 %v3774, %v3919
        %v3932 = vadd.f32 %v3776, %v3915
        %v3933 = vadd.f32 %v3778, %v3919
        %v3934 = vadd.f32 %v3782, %v3915
        %v3935 = vadd.f32 %v3784, %v3919
        %v3936 = vadd.f32 %v3786, %v3915
        %v3937 = vadd.f32 %v3788, %v3919
        %v3938 = vadd.f32 %v3792, %v3915
        %v3939 = vadd.f32 %v3794, %v3919
        %v3940 = vadd.f32 %v3796, %v3915
        %v3941 = vadd.f32 %v3798, %v3919
        %v3942 = vadd.f32 %v3802, %v3915
        %v3943 = vadd.f32 %v3804, %v3919
        %v3944 = vadd.f32 %v3806, %v3915
        %v3945 = vadd.f32 %v3808, %v3919
        %v3946 = vadd.f32 %v3812, %v3915
        %v3947 = vadd.f32 %v3814, %v3919
        %v3948 = vadd.f32 %v3816, %v3915
        %v3949 = vadd.f32 %v3818, %v3919
        %v3950 = vadd.f32 %v3822, %v3915
        %v3951 = vadd.f32 %v3824, %v3919
        %v3952 = vadd.f32 %v3826, %v3915
        %v3953 = vadd.f32 %v3828, %v3919
        %v3954 = vadd.f32 %v3832, %v3915
        %v3955 = vadd.f32 %v3834, %v3919
        %v3956 = vadd.f32 %v3836, %v3915
        %v3957 = vadd.f32 %v3838, %v3919
        %v3958 = vadd.f32 %v3842, %v3915
        %v3959 = vadd.f32 %v3844, %v3919
        %v3960 = vadd.f32 %v3846, %v3915
        %v3961 = vadd.f32 %v3848, %v3919
        %v3962 = vadd.f32 %v3852, %v3915
        %v3963 = vadd.f32 %v3854, %v3919
        %v3964 = vadd.f32 %v3856, %v3915
        %v3965 = vadd.f32 %v3858, %v3919
        %v3966 = vadd.f32 %v3862, %v3915
        %v3967 = vadd.f32 %v3864, %v3919
        %v3968 = vadd.f32 %v3866, %v3915
        %v3969 = vadd.f32 %v3868, %v3919
        %v3970 = vadd.f32 %v3872, %v3915
        %v3971 = vadd.f32 %v3874, %v3919
        %v3972 = vadd.f32 %v3876, %v3915
        %v3973 = vadd.f32 %v3878, %v3919
        %v3974 = vadd.f32 %v3882, %v3915
        %v3975 = vadd.f32 %v3884, %v3919
        %v3976 = vadd.f32 %v3886, %v3915
        %v3977 = vadd.f32 %v3888, %v3919
        %v3978 = vadd.f32 %v3892, %v3915
        %v3979 = vadd.f32 %v3894, %v3919
        %v3980 = vadd.f32 %v3896, %v3915
        %v3981 = vadd.f32 %v3898, %v3919
        %v3982 = vadd.f32 %v3902, %v3915
        %v3983 = vadd.f32 %v3904, %v3919
        %v3984 = vadd.f32 %v3906, %v3915
        %v3985 = vadd.f32 %v3908, %v3919
        %v3986 = vmax.f32 %v3922, 0.0
        %v3987 = vmax.f32 %v3923, 0.0
        %v3988 = vmax.f32 %v3924, 0.0
        %v3989 = vmax.f32 %v3925, 0.0
        %v3990 = vmax.f32 %v3926, 0.0
        %v3991 = vmax.f32 %v3927, 0.0
        %v3992 = vmax.f32 %v3928, 0.0
        %v3993 = vmax.f32 %v3929, 0.0
        %v3994 = vmax.f32 %v3930, 0.0
        %v3995 = vmax.f32 %v3931, 0.0
        %v3996 = vmax.f32 %v3932, 0.0
        %v3997 = vmax.f32 %v3933, 0.0
        %v3998 = vmax.f32 %v3934, 0.0
        %v3999 = vmax.f32 %v3935, 0.0
        %v4000 = vmax.f32 %v3936, 0.0
        %v4001 = vmax.f32 %v3937, 0.0
        %v4002 = vmax.f32 %v3938, 0.0
        %v4003 = vmax.f32 %v3939, 0.0
        %v4004 = vmax.f32 %v3940, 0.0
        %v4005 = vmax.f32 %v3941, 0.0
        %v4006 = vmax.f32 %v3942, 0.0
        %v4007 = vmax.f32 %v3943, 0.0
        %v4008 = vmax.f32 %v3944, 0.0
        %v4009 = vmax.f32 %v3945, 0.0
        %v4010 = vmax.f32 %v3946, 0.0
        %v4011 = vmax.f32 %v3947, 0.0
        %v4012 = vmax.f32 %v3948, 0.0
        %v4013 = vmax.f32 %v3949, 0.0
        %v4014 = vmax.f32 %v3950, 0.0
        %v4015 = vmax.f32 %v3951, 0.0
        %v4016 = vmax.f32 %v3952, 0.0
        %v4017 = vmax.f32 %v3953, 0.0
        %v4018 = vmax.f32 %v3954, 0.0
        %v4019 = vmax.f32 %v3955, 0.0
        %v4020 = vmax.f32 %v3956, 0.0
        %v4021 = vmax.f32 %v3957, 0.0
        %v4022 = vmax.f32 %v3958, 0.0
        %v4023 = vmax.f32 %v3959, 0.0
        %v4024 = vmax.f32 %v3960, 0.0
        %v4025 = vmax.f32 %v3961, 0.0
        %v4026 = vmax.f32 %v3962, 0.0
        %v4027 = vmax.f32 %v3963, 0.0
        %v4028 = vmax.f32 %v3964, 0.0
        %v4029 = vmax.f32 %v3965, 0.0
        %v4030 = vmax.f32 %v3966, 0.0
        %v4031 = vmax.f32 %v3967, 0.0
        %v4032 = vmax.f32 %v3968, 0.0
        %v4033 = vmax.f32 %v3969, 0.0
        %v4034 = vmax.f32 %v3970, 0.0
        %v4035 = vmax.f32 %v3971, 0.0
        %v4036 = vmax.f32 %v3972, 0.0
        %v4037 = vmax.f32 %v3973, 0.0
        %v4038 = vmax.f32 %v3974, 0.0
        %v4039 = vmax.f32 %v3975, 0.0
        %v4040 = vmax.f32 %v3976, 0.0
        %v4041 = vmax.f32 %v3977, 0.0
        %v4042 = vmax.f32 %v3978, 0.0
        %v4043 = vmax.f32 %v3979, 0.0
        %v4044 = vmax.f32 %v3980, 0.0
        %v4045 = vmax.f32 %v3981, 0.0
        %v4046 = vmax.f32 %v3982, 0.0
        %v4047 = vmax.f32 %v3983, 0.0
        %v4048 = vmax.f32 %v3984, 0.0
        %v4049 = vmax.f32 %v3985, 0.0
        %v4050 = vpack.c.bf16 %v3988, %v3986
        %v4051 = vpack.c.bf16 %v3989, %v3987
        %v4052 = vpack.c.bf16 %v3992, %v3990
        %v4053 = vpack.c.bf16 %v3993, %v3991
        %v4054 = vpack.c.bf16 %v3996, %v3994
        %v4055 = vpack.c.bf16 %v3997, %v3995
        %v4056 = vpack.c.bf16 %v4000, %v3998
        %v4057 = vpack.c.bf16 %v4001, %v3999
        %v4058 = vpack.c.bf16 %v4004, %v4002
        %v4059 = vpack.c.bf16 %v4005, %v4003
        %v4060 = vpack.c.bf16 %v4008, %v4006
        %v4061 = vpack.c.bf16 %v4009, %v4007
        %v4062 = vpack.c.bf16 %v4012, %v4010
        %v4063 = vpack.c.bf16 %v4013, %v4011
        %v4064 = vpack.c.bf16 %v4016, %v4014
        %v4065 = vpack.c.bf16 %v4017, %v4015
        %v4066 = vpack.c.bf16 %v4020, %v4018
        %v4067 = vpack.c.bf16 %v4021, %v4019
        %v4068 = vpack.c.bf16 %v4024, %v4022
        %v4069 = vpack.c.bf16 %v4025, %v4023
        %v4070 = vpack.c.bf16 %v4028, %v4026
        %v4071 = vpack.c.bf16 %v4029, %v4027
        %v4072 = vpack.c.bf16 %v4032, %v4030
        %v4073 = vpack.c.bf16 %v4033, %v4031
        %v4074 = vpack.c.bf16 %v4036, %v4034
        %v4075 = vpack.c.bf16 %v4037, %v4035
        %v4076 = vpack.c.bf16 %v4040, %v4038
        %v4077 = vpack.c.bf16 %v4041, %v4039
        %v4078 = vpack.c.bf16 %v4044, %v4042
        %v4079 = vpack.c.bf16 %v4045, %v4043
        %v4080 = vpack.c.bf16 %v4048, %v4046
        %v4081 = vpack.c.bf16 %v4049, %v4047
        %v4082 = vld [vmem:[%s15] sm:$0xff]
        %v4083 = vld [vmem:[%s15 + $0x8] sm:$0xff]
        %v4084 = vld [vmem:[%s15 + $0x10] sm:$0xff]
        %v4085 = vld [vmem:[%s15 + $0x18] sm:$0xff]
        %v4086 = vld [vmem:[%s15 + $0x20] sm:$0xff]
        %v4087 = vld [vmem:[%s15 + $0x28] sm:$0xff]
        %v4088 = vld [vmem:[%s15 + $0x30] sm:$0xff]
        %v4089 = vld [vmem:[%s15 + $0x38] sm:$0xff]
        %v4090 = vld [vmem:[%s15 + $0x40] sm:$0xff]
        %v4091 = vld [vmem:[%s15 + $0x48] sm:$0xff]
        %v4092 = vld [vmem:[%s15 + $0x50] sm:$0xff]
        %v4093 = vld [vmem:[%s15 + $0x58] sm:$0xff]
        %v4094 = vld [vmem:[%s15 + $0x60] sm:$0xff]
        %v4095 = vld [vmem:[%s15 + $0x68] sm:$0xff]
        %v4096 = vld [vmem:[%s15 + $0x70] sm:$0xff]
        %v4097 = vld [vmem:[%s15 + $0x78] sm:$0xff]
        %v4098 = vld [vmem:[%s15 + $0x80] sm:$0xff]
        %v4099 = vld [vmem:[%s15 + $0x88] sm:$0xff]
        %v4100 = vld [vmem:[%s15 + $0x90] sm:$0xff]
        %v4101 = vld [vmem:[%s15 + $0x98] sm:$0xff]
        %v4102 = vld [vmem:[%s15 + $0xa0] sm:$0xff]
        %v4103 = vld [vmem:[%s15 + $0xa8] sm:$0xff]
        %v4104 = vld [vmem:[%s15 + $0xb0] sm:$0xff]
        %v4105 = vld [vmem:[%s15 + $0xb8] sm:$0xff]
        %v4106 = vld [vmem:[%s15 + $0xc0] sm:$0xff]
        %v4107 = vld [vmem:[%s15 + $0xc8] sm:$0xff]
        %v4108 = vld [vmem:[%s15 + $0xd0] sm:$0xff]
        %v4109 = vld [vmem:[%s15 + $0xd8] sm:$0xff]
        %v4110 = vld [vmem:[%s15 + $0xe0] sm:$0xff]
        %v4111 = vld [vmem:[%s15 + $0xe8] sm:$0xff]
        %v4112 = vld [vmem:[%s15 + $0xf0] sm:$0xff]
        %v4113 = vld [vmem:[%s15 + $0xf8] sm:$0xff]
        %v4114 = vld [vmem:[%s16] sm:$0x3]
        %v4116 = vlaneseq
        %v4117 = vshrl.u32 %v4116, 7
        %v4118 = vsub.s32 0, %v4117
        %v4119 = vrot.slane %v4114, %v4118
        %v4120 = vlaneseq
        %v4121 = vshrl.u32 %v4120, 7
        %v4122 = vsub.s32 1, %v4121
        %v4123 = vrot.slane %v4114, %v4122
        %v4158 = vunpack.c.l.b16 %v4082
        %v4159 = vunpack.c.h.b16 %v4082
        %v4160 = vunpack.c.l.b16 %v4083
        %v4161 = vunpack.c.h.b16 %v4083
        %v4162 = vunpack.c.l.b16 %v4084
        %v4163 = vunpack.c.h.b16 %v4084
        %v4164 = vunpack.c.l.b16 %v4085
        %v4165 = vunpack.c.h.b16 %v4085
        %v4166 = vunpack.c.l.b16 %v4086
        %v4167 = vunpack.c.h.b16 %v4086
        %v4168 = vunpack.c.l.b16 %v4087
        %v4169 = vunpack.c.h.b16 %v4087
        %v4170 = vunpack.c.l.b16 %v4088
        %v4171 = vunpack.c.h.b16 %v4088
        %v4172 = vunpack.c.l.b16 %v4089
        %v4173 = vunpack.c.h.b16 %v4089
        %v4174 = vunpack.c.l.b16 %v4090
        %v4175 = vunpack.c.h.b16 %v4090
        %v4176 = vunpack.c.l.b16 %v4091
        %v4177 = vunpack.c.h.b16 %v4091
        %v4178 = vunpack.c.l.b16 %v4092
        %v4179 = vunpack.c.h.b16 %v4092
        %v4180 = vunpack.c.l.b16 %v4093
        %v4181 = vunpack.c.h.b16 %v4093
        %v4182 = vunpack.c.l.b16 %v4094
        %v4183 = vunpack.c.h.b16 %v4094
        %v4184 = vunpack.c.l.b16 %v4095
        %v4185 = vunpack.c.h.b16 %v4095
        %v4186 = vunpack.c.l.b16 %v4096
        %v4187 = vunpack.c.h.b16 %v4096
        %v4188 = vunpack.c.l.b16 %v4097
        %v4189 = vunpack.c.h.b16 %v4097
        %v4190 = vunpack.c.l.b16 %v4098
        %v4191 = vunpack.c.h.b16 %v4098
        %v4192 = vunpack.c.l.b16 %v4099
        %v4193 = vunpack.c.h.b16 %v4099
        %v4194 = vunpack.c.l.b16 %v4100
        %v4195 = vunpack.c.h.b16 %v4100
        %v4196 = vunpack.c.l.b16 %v4101
        %v4197 = vunpack.c.h.b16 %v4101
        %v4198 = vunpack.c.l.b16 %v4102
        %v4199 = vunpack.c.h.b16 %v4102
        %v4200 = vunpack.c.l.b16 %v4103
        %v4201 = vunpack.c.h.b16 %v4103
        %v4202 = vunpack.c.l.b16 %v4104
        %v4203 = vunpack.c.h.b16 %v4104
        %v4204 = vunpack.c.l.b16 %v4105
        %v4205 = vunpack.c.h.b16 %v4105
        %v4206 = vunpack.c.l.b16 %v4106
        %v4207 = vunpack.c.h.b16 %v4106
        %v4208 = vunpack.c.l.b16 %v4107
        %v4209 = vunpack.c.h.b16 %v4107
        %v4210 = vunpack.c.l.b16 %v4108
        %v4211 = vunpack.c.h.b16 %v4108
        %v4212 = vunpack.c.l.b16 %v4109
        %v4213 = vunpack.c.h.b16 %v4109
        %v4214 = vunpack.c.l.b16 %v4110
        %v4215 = vunpack.c.h.b16 %v4110
        %v4216 = vunpack.c.l.b16 %v4111
        %v4217 = vunpack.c.h.b16 %v4111
        %v4218 = vunpack.c.l.b16 %v4112
        %v4219 = vunpack.c.h.b16 %v4112
        %v4220 = vunpack.c.l.b16 %v4113
        %v4221 = vunpack.c.h.b16 %v4113
        %v4222 = vpack.c.b16 %v4160, %v4158
        %v4223 = vpack.c.b16 %v4161, %v4159
        %v4224 = vpack.c.b16 %v4164, %v4162
        %v4225 = vpack.c.b16 %v4165, %v4163
        %v4226 = vpack.c.b16 %v4168, %v4166
        %v4227 = vpack.c.b16 %v4169, %v4167
        %v4228 = vpack.c.b16 %v4172, %v4170
        %v4229 = vpack.c.b16 %v4173, %v4171
        %v4230 = vpack.c.b16 %v4176, %v4174
        %v4231 = vpack.c.b16 %v4177, %v4175
        %v4232 = vpack.c.b16 %v4180, %v4178
        %v4233 = vpack.c.b16 %v4181, %v4179
        %v4234 = vpack.c.b16 %v4184, %v4182
        %v4235 = vpack.c.b16 %v4185, %v4183
        %v4236 = vpack.c.b16 %v4188, %v4186
        %v4237 = vpack.c.b16 %v4189, %v4187
        %v4238 = vpack.c.b16 %v4192, %v4190
        %v4239 = vpack.c.b16 %v4193, %v4191
        %v4240 = vpack.c.b16 %v4196, %v4194
        %v4241 = vpack.c.b16 %v4197, %v4195
        %v4242 = vpack.c.b16 %v4200, %v4198
        %v4243 = vpack.c.b16 %v4201, %v4199
        %v4244 = vpack.c.b16 %v4204, %v4202
        %v4245 = vpack.c.b16 %v4205, %v4203
        %v4246 = vpack.c.b16 %v4208, %v4206
        %v4247 = vpack.c.b16 %v4209, %v4207
        %v4248 = vpack.c.b16 %v4212, %v4210
        %v4249 = vpack.c.b16 %v4213, %v4211
        %v4250 = vpack.c.b16 %v4216, %v4214
        %v4251 = vpack.c.b16 %v4217, %v4215
        %v4252 = vpack.c.b16 %v4220, %v4218
        %v4253 = vpack.c.b16 %v4221, %v4219
        %4286 = vmatprep.subr.bf16.mxu0 %v4223
        %4287 = vmatpush1.bf16.msra.mxu0 %v4222
        %4288 = vmatprep.subr.bf16.mxu0 %v4225
        %4289 = vmatpush1.bf16.msra.mxu0 %v4224
        %4290 = vmatprep.subr.bf16.mxu0 %v4227
        %4291 = vmatpush1.bf16.msra.mxu0 %v4226
        %4292 = vmatprep.subr.bf16.mxu0 %v4229
        %4293 = vmatpush1.bf16.msra.mxu0 %v4228
        %4294 = vmatprep.subr.bf16.mxu0 %v4231
        %4295 = vmatpush1.bf16.msra.mxu0 %v4230
        %4296 = vmatprep.subr.bf16.mxu0 %v4233
        %4297 = vmatpush1.bf16.msra.mxu0 %v4232
        %4298 = vmatprep.subr.bf16.mxu0 %v4235
        %4299 = vmatpush1.bf16.msra.mxu0 %v4234
        %4300 = vmatprep.subr.bf16.mxu0 %v4237
        %4301 = vmatpush1.bf16.msra.mxu0 %v4236
        %4302 = vmatprep.subr.bf16.mxu0 %v4239
        %4303 = vmatpush1.bf16.msra.mxu0 %v4238
        %4304 = vmatprep.subr.bf16.mxu0 %v4241
        %4305 = vmatpush1.bf16.msra.mxu0 %v4240
        %4306 = vmatprep.subr.bf16.mxu0 %v4243
        %4307 = vmatpush1.bf16.msra.mxu0 %v4242
        %4308 = vmatprep.subr.bf16.mxu0 %v4245
        %4309 = vmatpush1.bf16.msra.mxu0 %v4244
        %4310 = vmatprep.subr.bf16.mxu0 %v4247
        %4311 = vmatpush1.bf16.msra.mxu0 %v4246
        %4312 = vmatprep.subr.bf16.mxu0 %v4249
        %4313 = vmatpush1.bf16.msra.mxu0 %v4248
        %4314 = vmatprep.subr.bf16.mxu0 %v4251
        %4315 = vmatpush1.bf16.msra.mxu0 %v4250
        %4316 = vmatprep.subr.bf16.mxu0 %v4253
        %4317 = vmatpush1.bf16.msra.mxu0 %v4252
        %4318 = vmatprep.mubr.bf16.mxu0 %v4051
        %4319 = vmatmul.mubr.bf16.gmra.mrb[0].mxu0 %v4050
        %v4320 = vpop.f32.mrb[0].mxu0
        %v4321 = vadd.f32 %v4119, %v4320
        %v4322 = vpop.f32.mrb[0].mxu0
        %v4323 = vadd.f32 %v4123, %v4322
        %v4324 = vpop.f32.mrb[0].mxu0
        %v4325 = vadd.f32 %v4119, %v4324
        %v4326 = vpop.f32.mrb[0].mxu0
        %v4327 = vadd.f32 %v4123, %v4326
        %4328 = vmatprep.mubr.bf16.mxu0 %v4053
        %4329 = vmatmul.mubr.bf16.gmra.mrb[0].mxu0 %v4052
        %v4330 = vpop.f32.mrb[0].mxu0
        %v4331 = vadd.f32 %v4119, %v4330
        %v4332 = vpop.f32.mrb[0].mxu0
        %v4333 = vadd.f32 %v4123, %v4332
        %v4334 = vpop.f32.mrb[0].mxu0
        %v4335 = vadd.f32 %v4119, %v4334
        %v4336 = vpop.f32.mrb[0].mxu0
        %v4337 = vadd.f32 %v4123, %v4336
        %4338 = vmatprep.mubr.bf16.mxu0 %v4055
        %4339 = vmatmul.mubr.bf16.gmra.mrb[0].mxu0 %v4054
        %v4340 = vpop.f32.mrb[0].mxu0
        %v4341 = vadd.f32 %v4119, %v4340
        %v4342 = vpop.f32.mrb[0].mxu0
        %v4343 = vadd.f32 %v4123, %v4342
        %v4344 = vpop.f32.mrb[0].mxu0
        %v4345 = vadd.f32 %v4119, %v4344
        %v4346 = vpop.f32.mrb[0].mxu0
        %v4347 = vadd.f32 %v4123, %v4346
        %4348 = vmatprep.mubr.bf16.mxu0 %v4057
        %4349 = vmatmul.mubr.bf16.gmra.mrb[0].mxu0 %v4056
        %v4350 = vpop.f32.mrb[0].mxu0
        %v4351 = vadd.f32 %v4119, %v4350
        %v4352 = vpop.f32.mrb[0].mxu0
        %v4353 = vadd.f32 %v4123, %v4352
        %v4354 = vpop.f32.mrb[0].mxu0
        %v4355 = vadd.f32 %v4119, %v4354
        %v4356 = vpop.f32.mrb[0].mxu0
        %v4357 = vadd.f32 %v4123, %v4356
        %4358 = vmatprep.mubr.bf16.mxu0 %v4059
        %4359 = vmatmul.mubr.bf16.gmra.mrb[0].mxu0 %v4058
        %v4360 = vpop.f32.mrb[0].mxu0
        %v4361 = vadd.f32 %v4119, %v4360
        %v4362 = vpop.f32.mrb[0].mxu0
        %v4363 = vadd.f32 %v4123, %v4362
        %v4364 = vpop.f32.mrb[0].mxu0
        %v4365 = vadd.f32 %v4119, %v4364
        %v4366 = vpop.f32.mrb[0].mxu0
        %v4367 = vadd.f32 %v4123, %v4366
        %4368 = vmatprep.mubr.bf16.mxu0 %v4061
        %4369 = vmatmul.mubr.bf16.gmra.mrb[0].mxu0 %v4060
        %v4370 = vpop.f32.mrb[0].mxu0
        %v4371 = vadd.f32 %v4119, %v4370
        %v4372 = vpop.f32.mrb[0].mxu0
        %v4373 = vadd.f32 %v4123, %v4372
        %v4374 = vpop.f32.mrb[0].mxu0
        %v4375 = vadd.f32 %v4119, %v4374
        %v4376 = vpop.f32.mrb[0].mxu0
        %v4377 = vadd.f32 %v4123, %v4376
        %4378 = vmatprep.mubr.bf16.mxu0 %v4063
        %4379 = vmatmul.mubr.bf16.gmra.mrb[0].mxu0 %v4062
        %v4380 = vpop.f32.mrb[0].mxu0
        %v4381 = vadd.f32 %v4119, %v4380
        %v4382 = vpop.f32.mrb[0].mxu0
        %v4383 = vadd.f32 %v4123, %v4382
        %v4384 = vpop.f32.mrb[0].mxu0
        %v4385 = vadd.f32 %v4119, %v4384
        %v4386 = vpop.f32.mrb[0].mxu0
        %v4387 = vadd.f32 %v4123, %v4386
        %4388 = vmatprep.mubr.bf16.mxu0 %v4065
        %4389 = vmatmul.mubr.bf16.gmra.mrb[0].mxu0 %v4064
        %v4390 = vpop.f32.mrb[0].mxu0
        %v4391 = vadd.f32 %v4119, %v4390
        %v4392 = vpop.f32.mrb[0].mxu0
        %v4393 = vadd.f32 %v4123, %v4392
        %v4394 = vpop.f32.mrb[0].mxu0
        %v4395 = vadd.f32 %v4119, %v4394
        %v4396 = vpop.f32.mrb[0].mxu0
        %v4397 = vadd.f32 %v4123, %v4396
        %4398 = vmatprep.mubr.bf16.mxu0 %v4067
        %4399 = vmatmul.mubr.bf16.gmra.mrb[0].mxu0 %v4066
        %v4400 = vpop.f32.mrb[0].mxu0
        %v4401 = vadd.f32 %v4119, %v4400
        %v4402 = vpop.f32.mrb[0].mxu0
        %v4403 = vadd.f32 %v4123, %v4402
        %v4404 = vpop.f32.mrb[0].mxu0
        %v4405 = vadd.f32 %v4119, %v4404
        %v4406 = vpop.f32.mrb[0].mxu0
        %v4407 = vadd.f32 %v4123, %v4406
        %4408 = vmatprep.mubr.bf16.mxu0 %v4069
        %4409 = vmatmul.mubr.bf16.gmra.mrb[0].mxu0 %v4068
        %v4410 = vpop.f32.mrb[0].mxu0
        %v4411 = vadd.f32 %v4119, %v4410
        %v4412 = vpop.f32.mrb[0].mxu0
        %v4413 = vadd.f32 %v4123, %v4412
        %v4414 = vpop.f32.mrb[0].mxu0
        %v4415 = vadd.f32 %v4119, %v4414
        %v4416 = vpop.f32.mrb[0].mxu0
        %v4417 = vadd.f32 %v4123, %v4416
        %4418 = vmatprep.mubr.bf16.mxu0 %v4071
        %4419 = vmatmul.mubr.bf16.gmra.mrb[0].mxu0 %v4070
        %v4420 = vpop.f32.mrb[0].mxu0
        %v4421 = vadd.f32 %v4119, %v4420
        %v4422 = vpop.f32.mrb[0].mxu0
        %v4423 = vadd.f32 %v4123, %v4422
        %v4424 = vpop.f32.mrb[0].mxu0
        %v4425 = vadd.f32 %v4119, %v4424
        %v4426 = vpop.f32.mrb[0].mxu0
        %v4427 = vadd.f32 %v4123, %v4426
        %4428 = vmatprep.mubr.bf16.mxu0 %v4073
        %4429 = vmatmul.mubr.bf16.gmra.mrb[0].mxu0 %v4072
        %v4430 = vpop.f32.mrb[0].mxu0
        %v4431 = vadd.f32 %v4119, %v4430
        %v4432 = vpop.f32.mrb[0].mxu0
        %v4433 = vadd.f32 %v4123, %v4432
        %v4434 = vpop.f32.mrb[0].mxu0
        %v4435 = vadd.f32 %v4119, %v4434
        %v4436 = vpop.f32.mrb[0].mxu0
        %v4437 = vadd.f32 %v4123, %v4436
        %4438 = vmatprep.mubr.bf16.mxu0 %v4075
        %4439 = vmatmul.mubr.bf16.gmra.mrb[0].mxu0 %v4074
        %v4440 = vpop.f32.mrb[0].mxu0
        %v4441 = vadd.f32 %v4119, %v4440
        %v4442 = vpop.f32.mrb[0].mxu0
        %v4443 = vadd.f32 %v4123, %v4442
        %v4444 = vpop.f32.mrb[0].mxu0
        %v4445 = vadd.f32 %v4119, %v4444
        %v4446 = vpop.f32.mrb[0].mxu0
        %v4447 = vadd.f32 %v4123, %v4446
        %4448 = vmatprep.mubr.bf16.mxu0 %v4077
        %4449 = vmatmul.mubr.bf16.gmra.mrb[0].mxu0 %v4076
        %v4450 = vpop.f32.mrb[0].mxu0
        %v4451 = vadd.f32 %v4119, %v4450
        %v4452 = vpop.f32.mrb[0].mxu0
        %v4453 = vadd.f32 %v4123, %v4452
        %v4454 = vpop.f32.mrb[0].mxu0
        %v4455 = vadd.f32 %v4119, %v4454
        %v4456 = vpop.f32.mrb[0].mxu0
        %v4457 = vadd.f32 %v4123, %v4456
        %4458 = vmatprep.mubr.bf16.mxu0 %v4079
        %4459 = vmatmul.mubr.bf16.gmra.mrb[0].mxu0 %v4078
        %v4460 = vpop.f32.mrb[0].mxu0
        %v4461 = vadd.f32 %v4119, %v4460
        %v4462 = vpop.f32.mrb[0].mxu0
        %v4463 = vadd.f32 %v4123, %v4462
        %v4464 = vpop.f32.mrb[0].mxu0
        %v4465 = vadd.f32 %v4119, %v4464
        %v4466 = vpop.f32.mrb[0].mxu0
        %v4467 = vadd.f32 %v4123, %v4466
        %4468 = vmatprep.mubr.bf16.mxu0 %v4081
        %4469 = vmatmul.mubr.bf16.gmra.mrb[0].mxu0 %v4080
        %v4470 = vpop.f32.mrb[0].mxu0
        %v4471 = vadd.f32 %v4119, %v4470
        %v4472 = vpop.f32.mrb[0].mxu0
        %v4473 = vadd.f32 %v4123, %v4472
        %v4474 = vpop.f32.mrb[0].mxu0
        %v4475 = vadd.f32 %v4119, %v4474
        %v4476 = vpop.f32.mrb[0].mxu0
        %v4477 = vadd.f32 %v4123, %v4476
        %4478 = vdwg.mxu0
        %v4479 = vmax.f32 %v4321, 0.0
        %v4480 = vmax.f32 %v4323, 0.0
        %v4481 = vmax.f32 %v4325, 0.0
        %v4482 = vmax.f32 %v4327, 0.0
        %v4483 = vmax.f32 %v4331, 0.0
        %v4484 = vmax.f32 %v4333, 0.0
        %v4485 = vmax.f32 %v4335, 0.0
        %v4486 = vmax.f32 %v4337, 0.0
        %v4487 = vmax.f32 %v4341, 0.0
        %v4488 = vmax.f32 %v4343, 0.0
        %v4489 = vmax.f32 %v4345, 0.0
        %v4490 = vmax.f32 %v4347, 0.0
        %v4491 = vmax.f32 %v4351, 0.0
        %v4492 = vmax.f32 %v4353, 0.0
        %v4493 = vmax.f32 %v4355, 0.0
        %v4494 = vmax.f32 %v4357, 0.0
        %v4495 = vmax.f32 %v4361, 0.0
        %v4496 = vmax.f32 %v4363, 0.0
        %v4497 = vmax.f32 %v4365, 0.0
        %v4498 = vmax.f32 %v4367, 0.0
        %v4499 = vmax.f32 %v4371, 0.0
        %v4500 = vmax.f32 %v4373, 0.0
        %v4501 = vmax.f32 %v4375, 0.0
        %v4502 = vmax.f32 %v4377, 0.0
        %v4503 = vmax.f32 %v4381, 0.0
        %v4504 = vmax.f32 %v4383, 0.0
        %v4505 = vmax.f32 %v4385, 0.0
        %v4506 = vmax.f32 %v4387, 0.0
        %v4507 = vmax.f32 %v4391, 0.0
        %v4508 = vmax.f32 %v4393, 0.0
        %v4509 = vmax.f32 %v4395, 0.0
        %v4510 = vmax.f32 %v4397, 0.0
        %v4511 = vmax.f32 %v4401, 0.0
        %v4512 = vmax.f32 %v4403, 0.0
        %v4513 = vmax.f32 %v4405, 0.0
        %v4514 = vmax.f32 %v4407, 0.0
        %v4515 = vmax.f32 %v4411, 0.0
        %v4516 = vmax.f32 %v4413, 0.0
        %v4517 = vmax.f32 %v4415, 0.0
        %v4518 = vmax.f32 %v4417, 0.0
        %v4519 = vmax.f32 %v4421, 0.0
        %v4520 = vmax.f32 %v4423, 0.0
        %v4521 = vmax.f32 %v4425, 0.0
        %v4522 = vmax.f32 %v4427, 0.0
        %v4523 = vmax.f32 %v4431, 0.0
        %v4524 = vmax.f32 %v4433, 0.0
        %v4525 = vmax.f32 %v4435, 0.0
        %v4526 = vmax.f32 %v4437, 0.0
        %v4527 = vmax.f32 %v4441, 0.0
        %v4528 = vmax.f32 %v4443, 0.0
        %v4529 = vmax.f32 %v4445, 0.0
        %v4530 = vmax.f32 %v4447, 0.0
        %v4531 = vmax.f32 %v4451, 0.0
        %v4532 = vmax.f32 %v4453, 0.0
        %v4533 = vmax.f32 %v4455, 0.0
        %v4534 = vmax.f32 %v4457, 0.0
        %v4535 = vmax.f32 %v4461, 0.0
        %v4536 = vmax.f32 %v4463, 0.0
        %v4537 = vmax.f32 %v4465, 0.0
        %v4538 = vmax.f32 %v4467, 0.0
        %v4539 = vmax.f32 %v4471, 0.0
        %v4540 = vmax.f32 %v4473, 0.0
        %v4541 = vmax.f32 %v4475, 0.0
        %v4542 = vmax.f32 %v4477, 0.0
        %v4543 = vpack.c.bf16 %v4481, %v4479
        %v4544 = vpack.c.bf16 %v4482, %v4480
        %v4545 = vpack.c.bf16 %v4485, %v4483
        %v4546 = vpack.c.bf16 %v4486, %v4484
        %v4547 = vpack.c.bf16 %v4489, %v4487
        %v4548 = vpack.c.bf16 %v4490, %v4488
        %v4549 = vpack.c.bf16 %v4493, %v4491
        %v4550 = vpack.c.bf16 %v4494, %v4492
        %v4551 = vpack.c.bf16 %v4497, %v4495
        %v4552 = vpack.c.bf16 %v4498, %v4496
        %v4553 = vpack.c.bf16 %v4501, %v4499
        %v4554 = vpack.c.bf16 %v4502, %v4500
        %v4555 = vpack.c.bf16 %v4505, %v4503
        %v4556 = vpack.c.bf16 %v4506, %v4504
        %v4557 = vpack.c.bf16 %v4509, %v4507
        %v4558 = vpack.c.bf16 %v4510, %v4508
        %v4559 = vpack.c.bf16 %v4513, %v4511
        %v4560 = vpack.c.bf16 %v4514, %v4512
        %v4561 = vpack.c.bf16 %v4517, %v4515
        %v4562 = vpack.c.bf16 %v4518, %v4516
        %v4563 = vpack.c.bf16 %v4521, %v4519
        %v4564 = vpack.c.bf16 %v4522, %v4520
        %v4565 = vpack.c.bf16 %v4525, %v4523
        %v4566 = vpack.c.bf16 %v4526, %v4524
        %v4567 = vpack.c.bf16 %v4529, %v4527
        %v4568 = vpack.c.bf16 %v4530, %v4528
        %v4569 = vpack.c.bf16 %v4533, %v4531
        %v4570 = vpack.c.bf16 %v4534, %v4532
        %v4571 = vpack.c.bf16 %v4537, %v4535
        %v4572 = vpack.c.bf16 %v4538, %v4536
        %v4573 = vpack.c.bf16 %v4541, %v4539
        %v4574 = vpack.c.bf16 %v4542, %v4540
        %v4575 = vld [vmem:[%s17] sm:$0xff]
        %v4576 = vld [vmem:[%s17 + $0x8] sm:$0xff]
        %v4577 = vld [vmem:[%s17 + $0x10] sm:$0xff]
        %v4578 = vld [vmem:[%s17 + $0x18] sm:$0xff]
        %v4579 = vld [vmem:[%s17 + $0x20] sm:$0xff]
        %v4580 = vld [vmem:[%s17 + $0x28] sm:$0xff]
        %v4581 = vld [vmem:[%s17 + $0x30] sm:$0xff]
        %v4582 = vld [vmem:[%s17 + $0x38] sm:$0xff]
        %v4583 = vld [vmem:[%s17 + $0x40] sm:$0xff]
        %v4584 = vld [vmem:[%s17 + $0x48] sm:$0xff]
        %v4585 = vld [vmem:[%s17 + $0x50] sm:$0xff]
        %v4586 = vld [vmem:[%s17 + $0x58] sm:$0xff]
        %v4587 = vld [vmem:[%s17 + $0x60] sm:$0xff]
        %v4588 = vld [vmem:[%s17 + $0x68] sm:$0xff]
        %v4589 = vld [vmem:[%s17 + $0x70] sm:$0xff]
        %v4590 = vld [vmem:[%s17 + $0x78] sm:$0xff]
        %v4591 = vld [vmem:[%s17 + $0x80] sm:$0xff]
        %v4592 = vld [vmem:[%s17 + $0x88] sm:$0xff]
        %v4593 = vld [vmem:[%s17 + $0x90] sm:$0xff]
        %v4594 = vld [vmem:[%s17 + $0x98] sm:$0xff]
        %v4595 = vld [vmem:[%s17 + $0xa0] sm:$0xff]
        %v4596 = vld [vmem:[%s17 + $0xa8] sm:$0xff]
        %v4597 = vld [vmem:[%s17 + $0xb0] sm:$0xff]
        %v4598 = vld [vmem:[%s17 + $0xb8] sm:$0xff]
        %v4599 = vld [vmem:[%s17 + $0xc0] sm:$0xff]
        %v4600 = vld [vmem:[%s17 + $0xc8] sm:$0xff]
        %v4601 = vld [vmem:[%s17 + $0xd0] sm:$0xff]
        %v4602 = vld [vmem:[%s17 + $0xd8] sm:$0xff]
        %v4603 = vld [vmem:[%s17 + $0xe0] sm:$0xff]
        %v4604 = vld [vmem:[%s17 + $0xe8] sm:$0xff]
        %v4605 = vld [vmem:[%s17 + $0xf0] sm:$0xff]
        %v4606 = vld [vmem:[%s17 + $0xf8] sm:$0xff]
        %v4607 = vld [vmem:[%s18] sm:$0x3]
        %v4609 = vlaneseq
        %v4610 = vshrl.u32 %v4609, 7
        %v4611 = vsub.s32 0, %v4610
        %v4612 = vrot.slane %v4607, %v4611
        %v4613 = vlaneseq
        %v4614 = vshrl.u32 %v4613, 7
        %v4615 = vsub.s32 1, %v4614
        %v4616 = vrot.slane %v4607, %v4615
        %v4651 = vunpack.c.l.b16 %v4575
        %v4652 = vunpack.c.h.b16 %v4575
        %v4653 = vunpack.c.l.b16 %v4576
        %v4654 = vunpack.c.h.b16 %v4576
        %v4655 = vunpack.c.l.b16 %v4577
        %v4656 = vunpack.c.h.b16 %v4577
        %v4657 = vunpack.c.l.b16 %v4578
        %v4658 = vunpack.c.h.b16 %v4578
        %v4659 = vunpack.c.l.b16 %v4579
        %v4660 = vunpack.c.h.b16 %v4579
        %v4661 = vunpack.c.l.b16 %v4580
        %v4662 = vunpack.c.h.b16 %v4580
        %v4663 = vunpack.c.l.b16 %v4581
        %v4664 = vunpack.c.h.b16 %v4581
        %v4665 = vunpack.c.l.b16 %v4582
        %v4666 = vunpack.c.h.b16 %v4582
        %v4667 = vunpack.c.l.b16 %v4583
        %v4668 = vunpack.c.h.b16 %v4583
        %v4669 = vunpack.c.l.b16 %v4584
        %v4670 = vunpack.c.h.b16 %v4584
        %v4671 = vunpack.c.l.b16 %v4585
        %v4672 = vunpack.c.h.b16 %v4585
        %v4673 = vunpack.c.l.b16 %v4586
        %v4674 = vunpack.c.h.b16 %v4586
        %v4675 = vunpack.c.l.b16 %v4587
        %v4676 = vunpack.c.h.b16 %v4587
        %v4677 = vunpack.c.l.b16 %v4588
        %v4678 = vunpack.c.h.b16 %v4588
        %v4679 = vunpack.c.l.b16 %v4589
        %v4680 = vunpack.c.h.b16 %v4589
        %v4681 = vunpack.c.l.b16 %v4590
        %v4682 = vunpack.c.h.b16 %v4590
        %v4683 = vunpack.c.l.b16 %v4591
        %v4684 = vunpack.c.h.b16 %v4591
        %v4685 = vunpack.c.l.b16 %v4592
        %v4686 = vunpack.c.h.b16 %v4592
        %v4687 = vunpack.c.l.b16 %v4593
        %v4688 = vunpack.c.h.b16 %v4593
        %v4689 = vunpack.c.l.b16 %v4594
        %v4690 = vunpack.c.h.b16 %v4594
        %v4691 = vunpack.c.l.b16 %v4595
        %v4692 = vunpack.c.h.b16 %v4595
        %v4693 = vunpack.c.l.b16 %v4596
        %v4694 = vunpack.c.h.b16 %v4596
        %v4695 = vunpack.c.l.b16 %v4597
        %v4696 = vunpack.c.h.b16 %v4597
        %v4697 = vunpack.c.l.b16 %v4598
        %v4698 = vunpack.c.h.b16 %v4598
        %v4699 = vunpack.c.l.b16 %v4599
        %v4700 = vunpack.c.h.b16 %v4599
        %v4701 = vunpack.c.l.b16 %v4600
        %v4702 = vunpack.c.h.b16 %v4600
        %v4703 = vunpack.c.l.b16 %v4601
        %v4704 = vunpack.c.h.b16 %v4601
        %v4705 = vunpack.c.l.b16 %v4602
        %v4706 = vunpack.c.h.b16 %v4602
        %v4707 = vunpack.c.l.b16 %v4603
        %v4708 = vunpack.c.h.b16 %v4603
        %v4709 = vunpack.c.l.b16 %v4604
        %v4710 = vunpack.c.h.b16 %v4604
        %v4711 = vunpack.c.l.b16 %v4605
        %v4712 = vunpack.c.h.b16 %v4605
        %v4713 = vunpack.c.l.b16 %v4606
        %v4714 = vunpack.c.h.b16 %v4606
        %v4715 = vpack.c.b16 %v4653, %v4651
        %v4716 = vpack.c.b16 %v4654, %v4652
        %v4717 = vpack.c.b16 %v4657, %v4655
        %v4718 = vpack.c.b16 %v4658, %v4656
        %v4719 = vpack.c.b16 %v4661, %v4659
        %v4720 = vpack.c.b16 %v4662, %v4660
        %v4721 = vpack.c.b16 %v4665, %v4663
        %v4722 = vpack.c.b16 %v4666, %v4664
        %v4723 = vpack.c.b16 %v4669, %v4667
        %v4724 = vpack.c.b16 %v4670, %v4668
        %v4725 = vpack.c.b16 %v4673, %v4671
        %v4726 = vpack.c.b16 %v4674, %v4672
        %v4727 = vpack.c.b16 %v4677, %v4675
        %v4728 = vpack.c.b16 %v4678, %v4676
        %v4729 = vpack.c.b16 %v4681, %v4679
        %v4730 = vpack.c.b16 %v4682, %v4680
        %v4731 = vpack.c.b16 %v4685, %v4683
        %v4732 = vpack.c.b16 %v4686, %v4684
        %v4733 = vpack.c.b16 %v4689, %v4687
        %v4734 = vpack.c.b16 %v4690, %v4688
        %v4735 = vpack.c.b16 %v4693, %v4691
        %v4736 = vpack.c.b16 %v4694, %v4692
        %v4737 = vpack.c.b16 %v4697, %v4695
        %v4738 = vpack.c.b16 %v4698, %v4696
        %v4739 = vpack.c.b16 %v4701, %v4699
        %v4740 = vpack.c.b16 %v4702, %v4700
        %v4741 = vpack.c.b16 %v4705, %v4703
        %v4742 = vpack.c.b16 %v4706, %v4704
        %v4743 = vpack.c.b16 %v4709, %v4707
        %v4744 = vpack.c.b16 %v4710, %v4708
        %v4745 = vpack.c.b16 %v4713, %v4711
        %v4746 = vpack.c.b16 %v4714, %v4712
        %4779 = vmatprep.subr.bf16.mxu0 %v4716
        %4780 = vmatpush1.bf16.msra.mxu0 %v4715
        %4781 = vmatprep.subr.bf16.mxu0 %v4718
        %4782 = vmatpush1.bf16.msra.mxu0 %v4717
        %4783 = vmatprep.subr.bf16.mxu0 %v4720
        %4784 = vmatpush1.bf16.msra.mxu0 %v4719
        %4785 = vmatprep.subr.bf16.mxu0 %v4722
        %4786 = vmatpush1.bf16.msra.mxu0 %v4721
        %4787 = vmatprep.subr.bf16.mxu0 %v4724
        %4788 = vmatpush1.bf16.msra.mxu0 %v4723
        %4789 = vmatprep.subr.bf16.mxu0 %v4726
        %4790 = vmatpush1.bf16.msra.mxu0 %v4725
        %4791 = vmatprep.subr.bf16.mxu0 %v4728
        %4792 = vmatpush1.bf16.msra.mxu0 %v4727
        %4793 = vmatprep.subr.bf16.mxu0 %v4730
        %4794 = vmatpush1.bf16.msra.mxu0 %v4729
        %4795 = vmatprep.subr.bf16.mxu0 %v4732
        %4796 = vmatpush1.bf16.msra.mxu0 %v4731
        %4797 = vmatprep.subr.bf16.mxu0 %v4734
        %4798 = vmatpush1.bf16.msra.mxu0 %v4733
        %4799 = vmatprep.subr.bf16.mxu0 %v4736
        %4800 = vmatpush1.bf16.msra.mxu0 %v4735
        %4801 = vmatprep.subr.bf16.mxu0 %v4738
        %4802 = vmatpush1.bf16.msra.mxu0 %v4737
        %4803 = vmatprep.subr.bf16.mxu0 %v4740
        %4804 = vmatpush1.bf16.msra.mxu0 %v4739
        %4805 = vmatprep.subr.bf16.mxu0 %v4742
        %4806 = vmatpush1.bf16.msra.mxu0 %v4741
        %4807 = vmatprep.subr.bf16.mxu0 %v4744
        %4808 = vmatpush1.bf16.msra.mxu0 %v4743
        %4809 = vmatprep.subr.bf16.mxu0 %v4746
        %4810 = vmatpush1.bf16.msra.mxu0 %v4745
        %4811 = vmatprep.mubr.bf16.mxu0 %v4544
        %4812 = vmatmul.mubr.bf16.gmra.mrb[0].mxu0 %v4543
        %v4813 = vpop.f32.mrb[0].mxu0
        %v4814 = vadd.f32 %v4612, %v4813
        %v4815 = vpop.f32.mrb[0].mxu0
        %v4816 = vadd.f32 %v4616, %v4815
        %v4817 = vpop.f32.mrb[0].mxu0
        %v4818 = vadd.f32 %v4612, %v4817
        %v4819 = vpop.f32.mrb[0].mxu0
        %v4820 = vadd.f32 %v4616, %v4819
        %4821 = vmatprep.mubr.bf16.mxu0 %v4546
        %4822 = vmatmul.mubr.bf16.gmra.mrb[0].mxu0 %v4545
        %v4823 = vpop.f32.mrb[0].mxu0
        %v4824 = vadd.f32 %v4612, %v4823
        %v4825 = vpop.f32.mrb[0].mxu0
        %v4826 = vadd.f32 %v4616, %v4825
        %v4827 = vpop.f32.mrb[0].mxu0
        %v4828 = vadd.f32 %v4612, %v4827
        %v4829 = vpop.f32.mrb[0].mxu0
        %v4830 = vadd.f32 %v4616, %v4829
        %4831 = vmatprep.mubr.bf16.mxu0 %v4548
        %4832 = vmatmul.mubr.bf16.gmra.mrb[0].mxu0 %v4547
        %v4833 = vpop.f32.mrb[0].mxu0
        %v4834 = vadd.f32 %v4612, %v4833
        %v4835 = vpop.f32.mrb[0].mxu0
        %v4836 = vadd.f32 %v4616, %v4835
        %v4837 = vpop.f32.mrb[0].mxu0
        %v4838 = vadd.f32 %v4612, %v4837
        %v4839 = vpop.f32.mrb[0].mxu0
        %v4840 = vadd.f32 %v4616, %v4839
        %4841 = vmatprep.mubr.bf16.mxu0 %v4550
        %4842 = vmatmul.mubr.bf16.gmra.mrb[0].mxu0 %v4549
        %v4843 = vpop.f32.mrb[0].mxu0
        %v4844 = vadd.f32 %v4612, %v4843
        %v4845 = vpop.f32.mrb[0].mxu0
        %v4846 = vadd.f32 %v4616, %v4845
        %v4847 = vpop.f32.mrb[0].mxu0
        %v4848 = vadd.f32 %v4612, %v4847
        %v4849 = vpop.f32.mrb[0].mxu0
        %v4850 = vadd.f32 %v4616, %v4849
        %4851 = vmatprep.mubr.bf16.mxu0 %v4552
        %4852 = vmatmul.mubr.bf16.gmra.mrb[0].mxu0 %v4551
        %v4853 = vpop.f32.mrb[0].mxu0
        %v4854 = vadd.f32 %v4612, %v4853
        %v4855 = vpop.f32.mrb[0].mxu0
        %v4856 = vadd.f32 %v4616, %v4855
        %v4857 = vpop.f32.mrb[0].mxu0
        %v4858 = vadd.f32 %v4612, %v4857
        %v4859 = vpop.f32.mrb[0].mxu0
        %v4860 = vadd.f32 %v4616, %v4859
        %4861 = vmatprep.mubr.bf16.mxu0 %v4554
        %4862 = vmatmul.mubr.bf16.gmra.mrb[0].mxu0 %v4553
        %v4863 = vpop.f32.mrb[0].mxu0
        %v4864 = vadd.f32 %v4612, %v4863
        %v4865 = vpop.f32.mrb[0].mxu0
        %v4866 = vadd.f32 %v4616, %v4865
        %v4867 = vpop.f32.mrb[0].mxu0
        %v4868 = vadd.f32 %v4612, %v4867
        %v4869 = vpop.f32.mrb[0].mxu0
        %v4870 = vadd.f32 %v4616, %v4869
        %4871 = vmatprep.mubr.bf16.mxu0 %v4556
        %4872 = vmatmul.mubr.bf16.gmra.mrb[0].mxu0 %v4555
        %v4873 = vpop.f32.mrb[0].mxu0
        %v4874 = vadd.f32 %v4612, %v4873
        %v4875 = vpop.f32.mrb[0].mxu0
        %v4876 = vadd.f32 %v4616, %v4875
        %v4877 = vpop.f32.mrb[0].mxu0
        %v4878 = vadd.f32 %v4612, %v4877
        %v4879 = vpop.f32.mrb[0].mxu0
        %v4880 = vadd.f32 %v4616, %v4879
        %4881 = vmatprep.mubr.bf16.mxu0 %v4558
        %4882 = vmatmul.mubr.bf16.gmra.mrb[0].mxu0 %v4557
        %v4883 = vpop.f32.mrb[0].mxu0
        %v4884 = vadd.f32 %v4612, %v4883
        %v4885 = vpop.f32.mrb[0].mxu0
        %v4886 = vadd.f32 %v4616, %v4885
        %v4887 = vpop.f32.mrb[0].mxu0
        %v4888 = vadd.f32 %v4612, %v4887
        %v4889 = vpop.f32.mrb[0].mxu0
        %v4890 = vadd.f32 %v4616, %v4889
        %4891 = vmatprep.mubr.bf16.mxu0 %v4560
        %4892 = vmatmul.mubr.bf16.gmra.mrb[0].mxu0 %v4559
        %v4893 = vpop.f32.mrb[0].mxu0
        %v4894 = vadd.f32 %v4612, %v4893
        %v4895 = vpop.f32.mrb[0].mxu0
        %v4896 = vadd.f32 %v4616, %v4895
        %v4897 = vpop.f32.mrb[0].mxu0
        %v4898 = vadd.f32 %v4612, %v4897
        %v4899 = vpop.f32.mrb[0].mxu0
        %v4900 = vadd.f32 %v4616, %v4899
        %4901 = vmatprep.mubr.bf16.mxu0 %v4562
        %4902 = vmatmul.mubr.bf16.gmra.mrb[0].mxu0 %v4561
        %v4903 = vpop.f32.mrb[0].mxu0
        %v4904 = vadd.f32 %v4612, %v4903
        %v4905 = vpop.f32.mrb[0].mxu0
        %v4906 = vadd.f32 %v4616, %v4905
        %v4907 = vpop.f32.mrb[0].mxu0
        %v4908 = vadd.f32 %v4612, %v4907
        %v4909 = vpop.f32.mrb[0].mxu0
        %v4910 = vadd.f32 %v4616, %v4909
        %4911 = vmatprep.mubr.bf16.mxu0 %v4564
        %4912 = vmatmul.mubr.bf16.gmra.mrb[0].mxu0 %v4563
        %v4913 = vpop.f32.mrb[0].mxu0
        %v4914 = vadd.f32 %v4612, %v4913
        %v4915 = vpop.f32.mrb[0].mxu0
        %v4916 = vadd.f32 %v4616, %v4915
        %v4917 = vpop.f32.mrb[0].mxu0
        %v4918 = vadd.f32 %v4612, %v4917
        %v4919 = vpop.f32.mrb[0].mxu0
        %v4920 = vadd.f32 %v4616, %v4919
        %4921 = vmatprep.mubr.bf16.mxu0 %v4566
        %4922 = vmatmul.mubr.bf16.gmra.mrb[0].mxu0 %v4565
        %v4923 = vpop.f32.mrb[0].mxu0
        %v4924 = vadd.f32 %v4612, %v4923
        %v4925 = vpop.f32.mrb[0].mxu0
        %v4926 = vadd.f32 %v4616, %v4925
        %v4927 = vpop.f32.mrb[0].mxu0
        %v4928 = vadd.f32 %v4612, %v4927
        %v4929 = vpop.f32.mrb[0].mxu0
        %v4930 = vadd.f32 %v4616, %v4929
        %4931 = vmatprep.mubr.bf16.mxu0 %v4568
        %4932 = vmatmul.mubr.bf16.gmra.mrb[0].mxu0 %v4567
        %v4933 = vpop.f32.mrb[0].mxu0
        %v4934 = vadd.f32 %v4612, %v4933
        %v4935 = vpop.f32.mrb[0].mxu0
        %v4936 = vadd.f32 %v4616, %v4935
        %v4937 = vpop.f32.mrb[0].mxu0
        %v4938 = vadd.f32 %v4612, %v4937
        %v4939 = vpop.f32.mrb[0].mxu0
        %v4940 = vadd.f32 %v4616, %v4939
        %4941 = vmatprep.mubr.bf16.mxu0 %v4570
        %4942 = vmatmul.mubr.bf16.gmra.mrb[0].mxu0 %v4569
        %v4943 = vpop.f32.mrb[0].mxu0
        %v4944 = vadd.f32 %v4612, %v4943
        %v4945 = vpop.f32.mrb[0].mxu0
        %v4946 = vadd.f32 %v4616, %v4945
        %v4947 = vpop.f32.mrb[0].mxu0
        %v4948 = vadd.f32 %v4612, %v4947
        %v4949 = vpop.f32.mrb[0].mxu0
        %v4950 = vadd.f32 %v4616, %v4949
        %4951 = vmatprep.mubr.bf16.mxu0 %v4572
        %4952 = vmatmul.mubr.bf16.gmra.mrb[0].mxu0 %v4571
        %v4953 = vpop.f32.mrb[0].mxu0
        %v4954 = vadd.f32 %v4612, %v4953
        %v4955 = vpop.f32.mrb[0].mxu0
        %v4956 = vadd.f32 %v4616, %v4955
        %v4957 = vpop.f32.mrb[0].mxu0
        %v4958 = vadd.f32 %v4612, %v4957
        %v4959 = vpop.f32.mrb[0].mxu0
        %v4960 = vadd.f32 %v4616, %v4959
        %4961 = vmatprep.mubr.bf16.mxu0 %v4574
        %4962 = vmatmul.mubr.bf16.gmra.mrb[0].mxu0 %v4573
        %v4963 = vpop.f32.mrb[0].mxu0
        %v4964 = vadd.f32 %v4612, %v4963
        %v4965 = vpop.f32.mrb[0].mxu0
        %v4966 = vadd.f32 %v4616, %v4965
        %v4967 = vpop.f32.mrb[0].mxu0
        %v4968 = vadd.f32 %v4612, %v4967
        %v4969 = vpop.f32.mrb[0].mxu0
        %v4970 = vadd.f32 %v4616, %v4969
        %4971 = vdwg.mxu0
        %v4972 = vmax.f32 %v4814, 0.0
        %v4973 = vmax.f32 %v4816, 0.0
        %v4974 = vmax.f32 %v4818, 0.0
        %v4975 = vmax.f32 %v4820, 0.0
        %v4976 = vmax.f32 %v4824, 0.0
        %v4977 = vmax.f32 %v4826, 0.0
        %v4978 = vmax.f32 %v4828, 0.0
        %v4979 = vmax.f32 %v4830, 0.0
        %v4980 = vmax.f32 %v4834, 0.0
        %v4981 = vmax.f32 %v4836, 0.0
        %v4982 = vmax.f32 %v4838, 0.0
        %v4983 = vmax.f32 %v4840, 0.0
        %v4984 = vmax.f32 %v4844, 0.0
        %v4985 = vmax.f32 %v4846, 0.0
        %v4986 = vmax.f32 %v4848, 0.0
        %v4987 = vmax.f32 %v4850, 0.0
        %v4988 = vmax.f32 %v4854, 0.0
        %v4989 = vmax.f32 %v4856, 0.0
        %v4990 = vmax.f32 %v4858, 0.0
        %v4991 = vmax.f32 %v4860, 0.0
        %v4992 = vmax.f32 %v4864, 0.0
        %v4993 = vmax.f32 %v4866, 0.0
        %v4994 = vmax.f32 %v4868, 0.0
        %v4995 = vmax.f32 %v4870, 0.0
        %v4996 = vmax.f32 %v4874, 0.0
        %v4997 = vmax.f32 %v4876, 0.0
        %v4998 = vmax.f32 %v4878, 0.0
        %v4999 = vmax.f32 %v4880, 0.0
        %v5000 = vmax.f32 %v4884, 0.0
        %v5001 = vmax.f32 %v4886, 0.0
        %v5002 = vmax.f32 %v4888, 0.0
        %v5003 = vmax.f32 %v4890, 0.0
        %v5004 = vmax.f32 %v4894, 0.0
        %v5005 = vmax.f32 %v4896, 0.0
        %v5006 = vmax.f32 %v4898, 0.0
        %v5007 = vmax.f32 %v4900, 0.0
        %v5008 = vmax.f32 %v4904, 0.0
        %v5009 = vmax.f32 %v4906, 0.0
        %v5010 = vmax.f32 %v4908, 0.0
        %v5011 = vmax.f32 %v4910, 0.0
        %v5012 = vmax.f32 %v4914, 0.0
        %v5013 = vmax.f32 %v4916, 0.0
        %v5014 = vmax.f32 %v4918, 0.0
        %v5015 = vmax.f32 %v4920, 0.0
        %v5016 = vmax.f32 %v4924, 0.0
        %v5017 = vmax.f32 %v4926, 0.0
        %v5018 = vmax.f32 %v4928, 0.0
        %v5019 = vmax.f32 %v4930, 0.0
        %v5020 = vmax.f32 %v4934, 0.0
        %v5021 = vmax.f32 %v4936, 0.0
        %v5022 = vmax.f32 %v4938, 0.0
        %v5023 = vmax.f32 %v4940, 0.0
        %v5024 = vmax.f32 %v4944, 0.0
        %v5025 = vmax.f32 %v4946, 0.0
        %v5026 = vmax.f32 %v4948, 0.0
        %v5027 = vmax.f32 %v4950, 0.0
        %v5028 = vmax.f32 %v4954, 0.0
        %v5029 = vmax.f32 %v4956, 0.0
        %v5030 = vmax.f32 %v4958, 0.0
        %v5031 = vmax.f32 %v4960, 0.0
        %v5032 = vmax.f32 %v4964, 0.0
        %v5033 = vmax.f32 %v4966, 0.0
        %v5034 = vmax.f32 %v4968, 0.0
        %v5035 = vmax.f32 %v4970, 0.0
        %v5036 = vpack.c.bf16 %v4974, %v4972
        %v5037 = vpack.c.bf16 %v4975, %v4973
        %v5038 = vpack.c.bf16 %v4978, %v4976
        %v5039 = vpack.c.bf16 %v4979, %v4977
        %v5040 = vpack.c.bf16 %v4982, %v4980
        %v5041 = vpack.c.bf16 %v4983, %v4981
        %v5042 = vpack.c.bf16 %v4986, %v4984
        %v5043 = vpack.c.bf16 %v4987, %v4985
        %v5044 = vpack.c.bf16 %v4990, %v4988
        %v5045 = vpack.c.bf16 %v4991, %v4989
        %v5046 = vpack.c.bf16 %v4994, %v4992
        %v5047 = vpack.c.bf16 %v4995, %v4993
        %v5048 = vpack.c.bf16 %v4998, %v4996
        %v5049 = vpack.c.bf16 %v4999, %v4997
        %v5050 = vpack.c.bf16 %v5002, %v5000
        %v5051 = vpack.c.bf16 %v5003, %v5001
        %v5052 = vpack.c.bf16 %v5006, %v5004
        %v5053 = vpack.c.bf16 %v5007, %v5005
        %v5054 = vpack.c.bf16 %v5010, %v5008
        %v5055 = vpack.c.bf16 %v5011, %v5009
        %v5056 = vpack.c.bf16 %v5014, %v5012
        %v5057 = vpack.c.bf16 %v5015, %v5013
        %v5058 = vpack.c.bf16 %v5018, %v5016
        %v5059 = vpack.c.bf16 %v5019, %v5017
        %v5060 = vpack.c.bf16 %v5022, %v5020
        %v5061 = vpack.c.bf16 %v5023, %v5021
        %v5062 = vpack.c.bf16 %v5026, %v5024
        %v5063 = vpack.c.bf16 %v5027, %v5025
        %v5064 = vpack.c.bf16 %v5030, %v5028
        %v5065 = vpack.c.bf16 %v5031, %v5029
        %v5066 = vpack.c.bf16 %v5034, %v5032
        %v5067 = vpack.c.bf16 %v5035, %v5033
        %v5068 = vld [vmem:[%s19] sm:$0xff]
        %v5069 = vld [vmem:[%s19 + $0x8] sm:$0xf]
        %v5070 = vld [vmem:[%s19 + $0xc] sm:$0xff]
        %v5071 = vld [vmem:[%s19 + $0x14] sm:$0xf]
        %v5072 = vld [vmem:[%s19 + $0x18] sm:$0xff]
        %v5073 = vld [vmem:[%s19 + $0x20] sm:$0xf]
        %v5074 = vld [vmem:[%s19 + $0x24] sm:$0xff]
        %v5075 = vld [vmem:[%s19 + $0x2c] sm:$0xf]
        %v5076 = vld [vmem:[%s19 + $0x30] sm:$0xff]
        %v5077 = vld [vmem:[%s19 + $0x38] sm:$0xf]
        %v5078 = vld [vmem:[%s19 + $0x3c] sm:$0xff]
        %v5079 = vld [vmem:[%s19 + $0x44] sm:$0xf]
        %v5080 = vld [vmem:[%s19 + $0x48] sm:$0xff]
        %v5081 = vld [vmem:[%s19 + $0x50] sm:$0xf]
        %v5082 = vld [vmem:[%s19 + $0x54] sm:$0xff]
        %v5083 = vld [vmem:[%s19 + $0x5c] sm:$0xf]
        %v5084 = vld [vmem:[%s19 + $0x60] sm:$0xff]
        %v5085 = vld [vmem:[%s19 + $0x68] sm:$0xf]
        %v5086 = vld [vmem:[%s19 + $0x6c] sm:$0xff]
        %v5087 = vld [vmem:[%s19 + $0x74] sm:$0xf]
        %v5088 = vld [vmem:[%s19 + $0x78] sm:$0xff]
        %v5089 = vld [vmem:[%s19 + $0x80] sm:$0xf]
        %v5090 = vld [vmem:[%s19 + $0x84] sm:$0xff]
        %v5091 = vld [vmem:[%s19 + $0x8c] sm:$0xf]
        %v5092 = vld [vmem:[%s19 + $0x90] sm:$0xff]
        %v5093 = vld [vmem:[%s19 + $0x98] sm:$0xf]
        %v5094 = vld [vmem:[%s19 + $0x9c] sm:$0xff]
        %v5095 = vld [vmem:[%s19 + $0xa4] sm:$0xf]
        %v5096 = vld [vmem:[%s19 + $0xa8] sm:$0xff]
        %v5097 = vld [vmem:[%s19 + $0xb0] sm:$0xf]
        %v5098 = vld [vmem:[%s19 + $0xb4] sm:$0xff]
        %v5099 = vld [vmem:[%s19 + $0xbc] sm:$0xf]
        %v5100 = vld [vmem:[%s19 + $0xc0] sm:$0xff]
        %v5101 = vld [vmem:[%s19 + $0xc8] sm:$0xf]
        %v5102 = vld [vmem:[%s19 + $0xcc] sm:$0xff]
        %v5103 = vld [vmem:[%s19 + $0xd4] sm:$0xf]
        %v5104 = vld [vmem:[%s19 + $0xd8] sm:$0xff]
        %v5105 = vld [vmem:[%s19 + $0xe0] sm:$0xf]
        %v5106 = vld [vmem:[%s19 + $0xe4] sm:$0xff]
        %v5107 = vld [vmem:[%s19 + $0xec] sm:$0xf]
        %v5108 = vld [vmem:[%s19 + $0xf0] sm:$0xff]
        %v5109 = vld [vmem:[%s19 + $0xf8] sm:$0xf]
        %v5110 = vld [vmem:[%s19 + $0xfc] sm:$0xff]
        %v5111 = vld [vmem:[%s19 + $0x104] sm:$0xf]
        %v5112 = vld [vmem:[%s19 + $0x108] sm:$0xff]
        %v5113 = vld [vmem:[%s19 + $0x110] sm:$0xf]
        %v5114 = vld [vmem:[%s19 + $0x114] sm:$0xff]
        %v5115 = vld [vmem:[%s19 + $0x11c] sm:$0xf]
        %v5116 = vld [vmem:[%s19 + $0x120] sm:$0xff]
        %v5117 = vld [vmem:[%s19 + $0x128] sm:$0xf]
        %v5118 = vld [vmem:[%s19 + $0x12c] sm:$0xff]
        %v5119 = vld [vmem:[%s19 + $0x134] sm:$0xf]
        %v5120 = vld [vmem:[%s19 + $0x138] sm:$0xff]
        %v5121 = vld [vmem:[%s19 + $0x140] sm:$0xf]
        %v5122 = vld [vmem:[%s19 + $0x144] sm:$0xff]
        %v5123 = vld [vmem:[%s19 + $0x14c] sm:$0xf]
        %v5124 = vld [vmem:[%s19 + $0x150] sm:$0xff]
        %v5125 = vld [vmem:[%s19 + $0x158] sm:$0xf]
        %v5126 = vld [vmem:[%s19 + $0x15c] sm:$0xff]
        %v5127 = vld [vmem:[%s19 + $0x164] sm:$0xf]
        %v5128 = vld [vmem:[%s19 + $0x168] sm:$0xff]
        %v5129 = vld [vmem:[%s19 + $0x170] sm:$0xf]
        %v5130 = vld [vmem:[%s19 + $0x174] sm:$0xff]
        %v5131 = vld [vmem:[%s19 + $0x17c] sm:$0xf]
        %v5132 = vld [vmem:[%s20] sm:$0x7]
        %v5134 = vlaneseq
        %v5135 = vshrl.u32 %v5134, 7
        %v5136 = vsub.s32 0, %v5135
        %v5137 = vrot.slane %v5132, %v5136
        %v5138 = vlaneseq
        %v5139 = vshrl.u32 %v5138, 7
        %v5140 = vsub.s32 1, %v5139
        %v5141 = vrot.slane %v5132, %v5140
        %v5142 = vlaneseq
        %v5143 = vshrl.u32 %v5142, 7
        %v5144 = vsub.s32 2, %v5143
        %v5145 = vrot.slane %v5132, %v5144
        %v5213 = vunpack.c.l.b16 %v5068
        %v5214 = vunpack.c.h.b16 %v5068
        %v5215 = vunpack.c.l.b16 %v5069
        %v5216 = vunpack.c.l.b16 %v5070
        %v5217 = vunpack.c.h.b16 %v5070
        %v5218 = vunpack.c.l.b16 %v5071
        %v5219 = vunpack.c.l.b16 %v5072
        %v5220 = vunpack.c.h.b16 %v5072
        %v5221 = vunpack.c.l.b16 %v5073
        %v5222 = vunpack.c.l.b16 %v5074
        %v5223 = vunpack.c.h.b16 %v5074
        %v5224 = vunpack.c.l.b16 %v5075
        %v5225 = vunpack.c.l.b16 %v5076
        %v5226 = vunpack.c.h.b16 %v5076
        %v5227 = vunpack.c.l.b16 %v5077
        %v5228 = vunpack.c.l.b16 %v5078
        %v5229 = vunpack.c.h.b16 %v5078
        %v5230 = vunpack.c.l.b16 %v5079
        %v5231 = vunpack.c.l.b16 %v5080
        %v5232 = vunpack.c.h.b16 %v5080
        %v5233 = vunpack.c.l.b16 %v5081
        %v5234 = vunpack.c.l.b16 %v5082
        %v5235 = vunpack.c.h.b16 %v5082
        %v5236 = vunpack.c.l.b16 %v5083
        %v5237 = vunpack.c.l.b16 %v5084
        %v5238 = vunpack.c.h.b16 %v5084
        %v5239 = vunpack.c.l.b16 %v5085
        %v5240 = vunpack.c.l.b16 %v5086
        %v5241 = vunpack.c.h.b16 %v5086
        %v5242 = vunpack.c.l.b16 %v5087
        %v5243 = vunpack.c.l.b16 %v5088
        %v5244 = vunpack.c.h.b16 %v5088
        %v5245 = vunpack.c.l.b16 %v5089
        %v5246 = vunpack.c.l.b16 %v5090
        %v5247 = vunpack.c.h.b16 %v5090
        %v5248 = vunpack.c.l.b16 %v5091
        %v5249 = vunpack.c.l.b16 %v5092
        %v5250 = vunpack.c.h.b16 %v5092
        %v5251 = vunpack.c.l.b16 %v5093
        %v5252 = vunpack.c.l.b16 %v5094
        %v5253 = vunpack.c.h.b16 %v5094
        %v5254 = vunpack.c.l.b16 %v5095
        %v5255 = vunpack.c.l.b16 %v5096
        %v5256 = vunpack.c.h.b16 %v5096
        %v5257 = vunpack.c.l.b16 %v5097
        %v5258 = vunpack.c.l.b16 %v5098
        %v5259 = vunpack.c.h.b16 %v5098
        %v5260 = vunpack.c.l.b16 %v5099
        %v5261 = vunpack.c.l.b16 %v5100
        %v5262 = vunpack.c.h.b16 %v5100
        %v5263 = vunpack.c.l.b16 %v5101
        %v5264 = vunpack.c.l.b16 %v5102
        %v5265 = vunpack.c.h.b16 %v5102
        %v5266 = vunpack.c.l.b16 %v5103
        %v5267 = vunpack.c.l.b16 %v5104
        %v5268 = vunpack.c.h.b16 %v5104
        %v5269 = vunpack.c.l.b16 %v5105
        %v5270 = vunpack.c.l.b16 %v5106
        %v5271 = vunpack.c.h.b16 %v5106
        %v5272 = vunpack.c.l.b16 %v5107
        %v5273 = vunpack.c.l.b16 %v5108
        %v5274 = vunpack.c.h.b16 %v5108
        %v5275 = vunpack.c.l.b16 %v5109
        %v5276 = vunpack.c.l.b16 %v5110
        %v5277 = vunpack.c.h.b16 %v5110
        %v5278 = vunpack.c.l.b16 %v5111
        %v5279 = vunpack.c.l.b16 %v5112
        %v5280 = vunpack.c.h.b16 %v5112
        %v5281 = vunpack.c.l.b16 %v5113
        %v5282 = vunpack.c.l.b16 %v5114
        %v5283 = vunpack.c.h.b16 %v5114
        %v5284 = vunpack.c.l.b16 %v5115
        %v5285 = vunpack.c.l.b16 %v5116
        %v5286 = vunpack.c.h.b16 %v5116
        %v5287 = vunpack.c.l.b16 %v5117
        %v5288 = vunpack.c.l.b16 %v5118
        %v5289 = vunpack.c.h.b16 %v5118
        %v5290 = vunpack.c.l.b16 %v5119
        %v5291 = vunpack.c.l.b16 %v5120
        %v5292 = vunpack.c.h.b16 %v5120
        %v5293 = vunpack.c.l.b16 %v5121
        %v5294 = vunpack.c.l.b16 %v5122
        %v5295 = vunpack.c.h.b16 %v5122
        %v5296 = vunpack.c.l.b16 %v5123
        %v5297 = vunpack.c.l.b16 %v5124
        %v5298 = vunpack.c.h.b16 %v5124
        %v5299 = vunpack.c.l.b16 %v5125
        %v5300 = vunpack.c.l.b16 %v5126
        %v5301 = vunpack.c.h.b16 %v5126
        %v5302 = vunpack.c.l.b16 %v5127
        %v5303 = vunpack.c.l.b16 %v5128
        %v5304 = vunpack.c.h.b16 %v5128
        %v5305 = vunpack.c.l.b16 %v5129
        %v5306 = vunpack.c.l.b16 %v5130
        %v5307 = vunpack.c.h.b16 %v5130
        %v5308 = vunpack.c.l.b16 %v5131
        %v5309 = vpack.c.b16 %v5216, %v5213
        %v5310 = vpack.c.b16 %v5217, %v5214
        %v5311 = vpack.c.b16 %v5218, %v5215
        %v5312 = vpack.c.b16 %v5222, %v5219
        %v5313 = vpack.c.b16 %v5223, %v5220
        %v5314 = vpack.c.b16 %v5224, %v5221
        %v5315 = vpack.c.b16 %v5228, %v5225
        %v5316 = vpack.c.b16 %v5229, %v5226
        %v5317 = vpack.c.b16 %v5230, %v5227
        %v5318 = vpack.c.b16 %v5234, %v5231
        %v5319 = vpack.c.b16 %v5235, %v5232
        %v5320 = vpack.c.b16 %v5236, %v5233
        %v5321 = vpack.c.b16 %v5240, %v5237
        %v5322 = vpack.c.b16 %v5241, %v5238
        %v5323 = vpack.c.b16 %v5242, %v5239
        %v5324 = vpack.c.b16 %v5246, %v5243
        %v5325 = vpack.c.b16 %v5247, %v5244
        %v5326 = vpack.c.b16 %v5248, %v5245
        %v5327 = vpack.c.b16 %v5252, %v5249
        %v5328 = vpack.c.b16 %v5253, %v5250
        %v5329 = vpack.c.b16 %v5254, %v5251
        %v5330 = vpack.c.b16 %v5258, %v5255
        %v5331 = vpack.c.b16 %v5259, %v5256
        %v5332 = vpack.c.b16 %v5260, %v5257
        %v5333 = vpack.c.b16 %v5264, %v5261
        %v5334 = vpack.c.b16 %v5265, %v5262
        %v5335 = vpack.c.b16 %v5266, %v5263
        %v5336 = vpack.c.b16 %v5270, %v5267
        %v5337 = vpack.c.b16 %v5271, %v5268
        %v5338 = vpack.c.b16 %v5272, %v5269
        %v5339 = vpack.c.b16 %v5276, %v5273
        %v5340 = vpack.c.b16 %v5277, %v5274
        %v5341 = vpack.c.b16 %v5278, %v5275
        %v5342 = vpack.c.b16 %v5282, %v5279
        %v5343 = vpack.c.b16 %v5283, %v5280
        %v5344 = vpack.c.b16 %v5284, %v5281
        %v5345 = vpack.c.b16 %v5288, %v5285
        %v5346 = vpack.c.b16 %v5289, %v5286
        %v5347 = vpack.c.b16 %v5290, %v5287
        %v5348 = vpack.c.b16 %v5294, %v5291
        %v5349 = vpack.c.b16 %v5295, %v5292
        %v5350 = vpack.c.b16 %v5296, %v5293
        %v5351 = vpack.c.b16 %v5300, %v5297
        %v5352 = vpack.c.b16 %v5301, %v5298
        %v5353 = vpack.c.b16 %v5302, %v5299
        %v5354 = vpack.c.b16 %v5306, %v5303
        %v5355 = vpack.c.b16 %v5307, %v5304
        %v5356 = vpack.c.b16 %v5308, %v5305
        %5405 = vmatprep.subr.bf16.mxu0 %v5310
        %5406 = vmatpush1.bf16.msra.mxu0 %v5309
        %5407 = vmatprep.subr.bf16.mxu0 %v5313
        %5408 = vmatpush1.bf16.msra.mxu0 %v5312
        %5409 = vmatprep.subr.bf16.mxu0 %v5316
        %5410 = vmatpush1.bf16.msra.mxu0 %v5315
        %5411 = vmatprep.subr.bf16.mxu0 %v5319
        %5412 = vmatpush1.bf16.msra.mxu0 %v5318
        %5413 = vmatprep.subr.bf16.mxu0 %v5322
        %5414 = vmatpush1.bf16.msra.mxu0 %v5321
        %5415 = vmatprep.subr.bf16.mxu0 %v5325
        %5416 = vmatpush1.bf16.msra.mxu0 %v5324
        %5417 = vmatprep.subr.bf16.mxu0 %v5328
        %5418 = vmatpush1.bf16.msra.mxu0 %v5327
        %5419 = vmatprep.subr.bf16.mxu0 %v5331
        %5420 = vmatpush1.bf16.msra.mxu0 %v5330
        %5421 = vmatprep.subr.bf16.mxu0 %v5334
        %5422 = vmatpush1.bf16.msra.mxu0 %v5333
        %5423 = vmatprep.subr.bf16.mxu0 %v5337
        %5424 = vmatpush1.bf16.msra.mxu0 %v5336
        %5425 = vmatprep.subr.bf16.mxu0 %v5340
        %5426 = vmatpush1.bf16.msra.mxu0 %v5339
        %5427 = vmatprep.subr.bf16.mxu0 %v5343
        %5428 = vmatpush1.bf16.msra.mxu0 %v5342
        %5429 = vmatprep.subr.bf16.mxu0 %v5346
        %5430 = vmatpush1.bf16.msra.mxu0 %v5345
        %5431 = vmatprep.subr.bf16.mxu0 %v5349
        %5432 = vmatpush1.bf16.msra.mxu0 %v5348
        %5433 = vmatprep.subr.bf16.mxu0 %v5352
        %5434 = vmatpush1.bf16.msra.mxu0 %v5351
        %5435 = vmatprep.subr.bf16.mxu0 %v5355
        %5436 = vmatpush1.bf16.msra.mxu0 %v5354
        %5437 = vmatprep.mubr.bf16.mxu0 %v5037
        %5438 = vmatmul.mubr.bf16.gmra.mrb[0].mxu0 %v5036
        %v5439 = vpop.f32.mrb[0].mxu0
        %v5440 = vadd.f32 %v5137, %v5439
        %v5441 = vpop.f32.mrb[0].mxu0
        %v5442 = vadd.f32 %v5141, %v5441
        %v5443 = vpop.f32.mrb[0].mxu0
        %v5444 = vadd.f32 %v5137, %v5443
        %v5445 = vpop.f32.mrb[0].mxu0
        %v5446 = vadd.f32 %v5141, %v5445
        %5447 = vmatprep.mubr.bf16.mxu0 %v5039
        %5448 = vmatmul.mubr.bf16.gmra.mrb[0].mxu0 %v5038
        %v5449 = vpop.f32.mrb[0].mxu0
        %v5450 = vadd.f32 %v5137, %v5449
        %v5451 = vpop.f32.mrb[0].mxu0
        %v5452 = vadd.f32 %v5141, %v5451
        %v5453 = vpop.f32.mrb[0].mxu0
        %v5454 = vadd.f32 %v5137, %v5453
        %v5455 = vpop.f32.mrb[0].mxu0
        %v5456 = vadd.f32 %v5141, %v5455
        %5457 = vmatprep.mubr.bf16.mxu0 %v5041
        %5458 = vmatmul.mubr.bf16.gmra.mrb[0].mxu0 %v5040
        %v5459 = vpop.f32.mrb[0].mxu0
        %v5460 = vadd.f32 %v5137, %v5459
        %v5461 = vpop.f32.mrb[0].mxu0
        %v5462 = vadd.f32 %v5141, %v5461
        %v5463 = vpop.f32.mrb[0].mxu0
        %v5464 = vadd.f32 %v5137, %v5463
        %v5465 = vpop.f32.mrb[0].mxu0
        %v5466 = vadd.f32 %v5141, %v5465
        %5467 = vmatprep.mubr.bf16.mxu0 %v5043
        %5468 = vmatmul.mubr.bf16.gmra.mrb[0].mxu0 %v5042
        %v5469 = vpop.f32.mrb[0].mxu0
        %v5470 = vadd.f32 %v5137, %v5469
        %v5471 = vpop.f32.mrb[0].mxu0
        %v5472 = vadd.f32 %v5141, %v5471
        %v5473 = vpop.f32.mrb[0].mxu0
        %v5474 = vadd.f32 %v5137, %v5473
        %v5475 = vpop.f32.mrb[0].mxu0
        %v5476 = vadd.f32 %v5141, %v5475
        %5477 = vmatprep.mubr.bf16.mxu0 %v5045
        %5478 = vmatmul.mubr.bf16.gmra.mrb[0].mxu0 %v5044
        %v5479 = vpop.f32.mrb[0].mxu0
        %v5480 = vadd.f32 %v5137, %v5479
        %v5481 = vpop.f32.mrb[0].mxu0
        %v5482 = vadd.f32 %v5141, %v5481
        %v5483 = vpop.f32.mrb[0].mxu0
        %v5484 = vadd.f32 %v5137, %v5483
        %v5485 = vpop.f32.mrb[0].mxu0
        %v5486 = vadd.f32 %v5141, %v5485
        %5487 = vmatprep.mubr.bf16.mxu0 %v5047
        %5488 = vmatmul.mubr.bf16.gmra.mrb[0].mxu0 %v5046
        %v5489 = vpop.f32.mrb[0].mxu0
        %v5490 = vadd.f32 %v5137, %v5489
        %v5491 = vpop.f32.mrb[0].mxu0
        %v5492 = vadd.f32 %v5141, %v5491
        %v5493 = vpop.f32.mrb[0].mxu0
        %v5494 = vadd.f32 %v5137, %v5493
        %v5495 = vpop.f32.mrb[0].mxu0
        %v5496 = vadd.f32 %v5141, %v5495
        %5497 = vmatprep.mubr.bf16.mxu0 %v5049
        %5498 = vmatmul.mubr.bf16.gmra.mrb[0].mxu0 %v5048
        %v5499 = vpop.f32.mrb[0].mxu0
        %v5500 = vadd.f32 %v5137, %v5499
        %v5501 = vpop.f32.mrb[0].mxu0
        %v5502 = vadd.f32 %v5141, %v5501
        %v5503 = vpop.f32.mrb[0].mxu0
        %v5504 = vadd.f32 %v5137, %v5503
        %v5505 = vpop.f32.mrb[0].mxu0
        %v5506 = vadd.f32 %v5141, %v5505
        %5507 = vmatprep.mubr.bf16.mxu0 %v5051
        %5508 = vmatmul.mubr.bf16.gmra.mrb[0].mxu0 %v5050
        %v5509 = vpop.f32.mrb[0].mxu0
        %v5510 = vadd.f32 %v5137, %v5509
        %v5511 = vpop.f32.mrb[0].mxu0
        %v5512 = vadd.f32 %v5141, %v5511
        %v5513 = vpop.f32.mrb[0].mxu0
        %v5514 = vadd.f32 %v5137, %v5513
        %v5515 = vpop.f32.mrb[0].mxu0
        %v5516 = vadd.f32 %v5141, %v5515
        %5517 = vmatprep.mubr.bf16.mxu0 %v5053
        %5518 = vmatmul.mubr.bf16.gmra.mrb[0].mxu0 %v5052
        %v5519 = vpop.f32.mrb[0].mxu0
        %v5520 = vadd.f32 %v5137, %v5519
        %v5521 = vpop.f32.mrb[0].mxu0
        %v5522 = vadd.f32 %v5141, %v5521
        %v5523 = vpop.f32.mrb[0].mxu0
        %v5524 = vadd.f32 %v5137, %v5523
        %v5525 = vpop.f32.mrb[0].mxu0
        %v5526 = vadd.f32 %v5141, %v5525
        %5527 = vmatprep.mubr.bf16.mxu0 %v5055
        %5528 = vmatmul.mubr.bf16.gmra.mrb[0].mxu0 %v5054
        %v5529 = vpop.f32.mrb[0].mxu0
        %v5530 = vadd.f32 %v5137, %v5529
        %v5531 = vpop.f32.mrb[0].mxu0
        %v5532 = vadd.f32 %v5141, %v5531
        %v5533 = vpop.f32.mrb[0].mxu0
        %v5534 = vadd.f32 %v5137, %v5533
        %v5535 = vpop.f32.mrb[0].mxu0
        %v5536 = vadd.f32 %v5141, %v5535
        %5537 = vmatprep.mubr.bf16.mxu0 %v5057
        %5538 = vmatmul.mubr.bf16.gmra.mrb[0].mxu0 %v5056
        %v5539 = vpop.f32.mrb[0].mxu0
        %v5540 = vadd.f32 %v5137, %v5539
        %v5541 = vpop.f32.mrb[0].mxu0
        %v5542 = vadd.f32 %v5141, %v5541
        %v5543 = vpop.f32.mrb[0].mxu0
        %v5544 = vadd.f32 %v5137, %v5543
        %v5545 = vpop.f32.mrb[0].mxu0
        %v5546 = vadd.f32 %v5141, %v5545
        %5547 = vmatprep.mubr.bf16.mxu0 %v5059
        %5548 = vmatmul.mubr.bf16.gmra.mrb[0].mxu0 %v5058
        %v5549 = vpop.f32.mrb[0].mxu0
        %v5550 = vadd.f32 %v5137, %v5549
        %v5551 = vpop.f32.mrb[0].mxu0
        %v5552 = vadd.f32 %v5141, %v5551
        %v5553 = vpop.f32.mrb[0].mxu0
        %v5554 = vadd.f32 %v5137, %v5553
        %v5555 = vpop.f32.mrb[0].mxu0
        %v5556 = vadd.f32 %v5141, %v5555
        %5557 = vmatprep.mubr.bf16.mxu0 %v5061
        %5558 = vmatmul.mubr.bf16.gmra.mrb[0].mxu0 %v5060
        %v5559 = vpop.f32.mrb[0].mxu0
        %v5560 = vadd.f32 %v5137, %v5559
        %v5561 = vpop.f32.mrb[0].mxu0
        %v5562 = vadd.f32 %v5141, %v5561
        %v5563 = vpop.f32.mrb[0].mxu0
        %v5564 = vadd.f32 %v5137, %v5563
        %v5565 = vpop.f32.mrb[0].mxu0
        %v5566 = vadd.f32 %v5141, %v5565
        %5567 = vmatprep.mubr.bf16.mxu0 %v5063
        %5568 = vmatmul.mubr.bf16.gmra.mrb[0].mxu0 %v5062
        %v5569 = vpop.f32.mrb[0].mxu0
        %v5570 = vadd.f32 %v5137, %v5569
        %v5571 = vpop.f32.mrb[0].mxu0
        %v5572 = vadd.f32 %v5141, %v5571
        %v5573 = vpop.f32.mrb[0].mxu0
        %v5574 = vadd.f32 %v5137, %v5573
        %v5575 = vpop.f32.mrb[0].mxu0
        %v5576 = vadd.f32 %v5141, %v5575
        %5577 = vmatprep.mubr.bf16.mxu0 %v5065
        %5578 = vmatmul.mubr.bf16.gmra.mrb[0].mxu0 %v5064
        %v5579 = vpop.f32.mrb[0].mxu0
        %v5580 = vadd.f32 %v5137, %v5579
        %v5581 = vpop.f32.mrb[0].mxu0
        %v5582 = vadd.f32 %v5141, %v5581
        %v5583 = vpop.f32.mrb[0].mxu0
        %v5584 = vadd.f32 %v5137, %v5583
        %v5585 = vpop.f32.mrb[0].mxu0
        %v5586 = vadd.f32 %v5141, %v5585
        %5587 = vmatprep.mubr.bf16.mxu0 %v5067
        %5588 = vmatmul.mubr.bf16.gmra.mrb[0].mxu0 %v5066
        %v5589 = vpop.f32.mrb[0].mxu0
        %v5590 = vadd.f32 %v5137, %v5589
        %v5591 = vpop.f32.mrb[0].mxu0
        %v5592 = vadd.f32 %v5141, %v5591
        %v5593 = vpop.f32.mrb[0].mxu0
        %v5594 = vadd.f32 %v5137, %v5593
        %v5595 = vpop.f32.mrb[0].mxu0
        %v5596 = vadd.f32 %v5141, %v5595
        %5597 = vdwg.mxu0
        %5598 = vmatprep.subr.bf16.mxu0 0
        %5599 = vmatpush1.bf16.msra.mxu0 %v5311
        %5600 = vmatprep.subr.bf16.mxu0 0
        %5601 = vmatpush1.bf16.msra.mxu0 %v5314
        %5602 = vmatprep.subr.bf16.mxu0 0
        %5603 = vmatpush1.bf16.msra.mxu0 %v5317
        %5604 = vmatprep.subr.bf16.mxu0 0
        %5605 = vmatpush1.bf16.msra.mxu0 %v5320
        %5606 = vmatprep.subr.bf16.mxu0 0
        %5607 = vmatpush1.bf16.msra.mxu0 %v5323
        %5608 = vmatprep.subr.bf16.mxu0 0
        %5609 = vmatpush1.bf16.msra.mxu0 %v5326
        %5610 = vmatprep.subr.bf16.mxu0 0
        %5611 = vmatpush1.bf16.msra.mxu0 %v5329
        %5612 = vmatprep.subr.bf16.mxu0 0
        %5613 = vmatpush1.bf16.msra.mxu0 %v5332
        %5614 = vmatprep.subr.bf16.mxu0 0
        %5615 = vmatpush1.bf16.msra.mxu0 %v5335
        %5616 = vmatprep.subr.bf16.mxu0 0
        %5617 = vmatpush1.bf16.msra.mxu0 %v5338
        %5618 = vmatprep.subr.bf16.mxu0 0
        %5619 = vmatpush1.bf16.msra.mxu0 %v5341
        %5620 = vmatprep.subr.bf16.mxu0 0
        %5621 = vmatpush1.bf16.msra.mxu0 %v5344
        %5622 = vmatprep.subr.bf16.mxu0 0
        %5623 = vmatpush1.bf16.msra.mxu0 %v5347
        %5624 = vmatprep.subr.bf16.mxu0 0
        %5625 = vmatpush1.bf16.msra.mxu0 %v5350
        %5626 = vmatprep.subr.bf16.mxu0 0
        %5627 = vmatpush1.bf16.msra.mxu0 %v5353
        %5628 = vmatprep.subr.bf16.mxu0 0
        %5629 = vmatpush1.bf16.msra.mxu0 %v5356
        %5630 = vmatprep.mubr.bf16.mxu0 %v5037
        %5631 = vmatmul.mubr.bf16.gmra.mrb[0].mxu0 %v5036
        %v5632 = vpop.f32.mrb[0].mxu0
        %v5633 = vadd.f32 %v5145, %v5632
        %v5634 = vpop.f32.mrb[0].mxu0
        %v5635 = vpop.f32.mrb[0].mxu0
        %v5636 = vadd.f32 %v5145, %v5635
        %v5637 = vpop.f32.mrb[0].mxu0
        %5638 = vmatprep.mubr.bf16.mxu0 %v5039
        %5639 = vmatmul.mubr.bf16.gmra.mrb[0].mxu0 %v5038
        %v5640 = vpop.f32.mrb[0].mxu0
        %v5641 = vadd.f32 %v5145, %v5640
        %v5642 = vpop.f32.mrb[0].mxu0
        %v5643 = vpop.f32.mrb[0].mxu0
        %v5644 = vadd.f32 %v5145, %v5643
        %v5645 = vpop.f32.mrb[0].mxu0
        %5646 = vmatprep.mubr.bf16.mxu0 %v5041
        %5647 = vmatmul.mubr.bf16.gmra.mrb[0].mxu0 %v5040
        %v5648 = vpop.f32.mrb[0].mxu0
        %v5649 = vadd.f32 %v5145, %v5648
        %v5650 = vpop.f32.mrb[0].mxu0
        %v5651 = vpop.f32.mrb[0].mxu0
        %v5652 = vadd.f32 %v5145, %v5651
        %v5653 = vpop.f32.mrb[0].mxu0
        %5654 = vmatprep.mubr.bf16.mxu0 %v5043
        %5655 = vmatmul.mubr.bf16.gmra.mrb[0].mxu0 %v5042
        %v5656 = vpop.f32.mrb[0].mxu0
        %v5657 = vadd.f32 %v5145, %v5656
        %v5658 = vpop.f32.mrb[0].mxu0
        %v5659 = vpop.f32.mrb[0].mxu0
        %v5660 = vadd.f32 %v5145, %v5659
        %v5661 = vpop.f32.mrb[0].mxu0
        %5662 = vmatprep.mubr.bf16.mxu0 %v5045
        %5663 = vmatmul.mubr.bf16.gmra.mrb[0].mxu0 %v5044
        %v5664 = vpop.f32.mrb[0].mxu0
        %v5665 = vadd.f32 %v5145, %v5664
        %v5666 = vpop.f32.mrb[0].mxu0
        %v5667 = vpop.f32.mrb[0].mxu0
        %v5668 = vadd.f32 %v5145, %v5667
        %v5669 = vpop.f32.mrb[0].mxu0
        %5670 = vmatprep.mubr.bf16.mxu0 %v5047
        %5671 = vmatmul.mubr.bf16.gmra.mrb[0].mxu0 %v5046
        %v5672 = vpop.f32.mrb[0].mxu0
        %v5673 = vadd.f32 %v5145, %v5672
        %v5674 = vpop.f32.mrb[0].mxu0
        %v5675 = vpop.f32.mrb[0].mxu0
        %v5676 = vadd.f32 %v5145, %v5675
        %v5677 = vpop.f32.mrb[0].mxu0
        %5678 = vmatprep.mubr.bf16.mxu0 %v5049
        %5679 = vmatmul.mubr.bf16.gmra.mrb[0].mxu0 %v5048
        %v5680 = vpop.f32.mrb[0].mxu0
        %v5681 = vadd.f32 %v5145, %v5680
        %v5682 = vpop.f32.mrb[0].mxu0
        %v5683 = vpop.f32.mrb[0].mxu0
        %v5684 = vadd.f32 %v5145, %v5683
        %v5685 = vpop.f32.mrb[0].mxu0
        %5686 = vmatprep.mubr.bf16.mxu0 %v5051
        %5687 = vmatmul.mubr.bf16.gmra.mrb[0].mxu0 %v5050
        %v5688 = vpop.f32.mrb[0].mxu0
        %v5689 = vadd.f32 %v5145, %v5688
        %v5690 = vpop.f32.mrb[0].mxu0
        %v5691 = vpop.f32.mrb[0].mxu0
        %v5692 = vadd.f32 %v5145, %v5691
        %v5693 = vpop.f32.mrb[0].mxu0
        %5694 = vmatprep.mubr.bf16.mxu0 %v5053
        %5695 = vmatmul.mubr.bf16.gmra.mrb[0].mxu0 %v5052
        %v5696 = vpop.f32.mrb[0].mxu0
        %v5697 = vadd.f32 %v5145, %v5696
        %v5698 = vpop.f32.mrb[0].mxu0
        %v5699 = vpop.f32.mrb[0].mxu0
        %v5700 = vadd.f32 %v5145, %v5699
        %v5701 = vpop.f32.mrb[0].mxu0
        %5702 = vmatprep.mubr.bf16.mxu0 %v5055
        %5703 = vmatmul.mubr.bf16.gmra.mrb[0].mxu0 %v5054
        %v5704 = vpop.f32.mrb[0].mxu0
        %v5705 = vadd.f32 %v5145, %v5704
        %v5706 = vpop.f32.mrb[0].mxu0
        %v5707 = vpop.f32.mrb[0].mxu0
        %v5708 = vadd.f32 %v5145, %v5707
        %v5709 = vpop.f32.mrb[0].mxu0
        %5710 = vmatprep.mubr.bf16.mxu0 %v5057
        %5711 = vmatmul.mubr.bf16.gmra.mrb[0].mxu0 %v5056
        %v5712 = vpop.f32.mrb[0].mxu0
        %v5713 = vadd.f32 %v5145, %v5712
        %v5714 = vpop.f32.mrb[0].mxu0
        %v5715 = vpop.f32.mrb[0].mxu0
        %v5716 = vadd.f32 %v5145, %v5715
        %v5717 = vpop.f32.mrb[0].mxu0
        %5718 = vmatprep.mubr.bf16.mxu0 %v5059
        %5719 = vmatmul.mubr.bf16.gmra.mrb[0].mxu0 %v5058
        %v5720 = vpop.f32.mrb[0].mxu0
        %v5721 = vadd.f32 %v5145, %v5720
        %v5722 = vpop.f32.mrb[0].mxu0
        %v5723 = vpop.f32.mrb[0].mxu0
        %v5724 = vadd.f32 %v5145, %v5723
        %v5725 = vpop.f32.mrb[0].mxu0
        %5726 = vmatprep.mubr.bf16.mxu0 %v5061
        %5727 = vmatmul.mubr.bf16.gmra.mrb[0].mxu0 %v5060
        %v5728 = vpop.f32.mrb[0].mxu0
        %v5729 = vadd.f32 %v5145, %v5728
        %v5730 = vpop.f32.mrb[0].mxu0
        %v5731 = vpop.f32.mrb[0].mxu0
        %v5732 = vadd.f32 %v5145, %v5731
        %v5733 = vpop.f32.mrb[0].mxu0
        %5734 = vmatprep.mubr.bf16.mxu0 %v5063
        %5735 = vmatmul.mubr.bf16.gmra.mrb[0].mxu0 %v5062
        %v5736 = vpop.f32.mrb[0].mxu0
        %v5737 = vadd.f32 %v5145, %v5736
        %v5738 = vpop.f32.mrb[0].mxu0
        %v5739 = vpop.f32.mrb[0].mxu0
        %v5740 = vadd.f32 %v5145, %v5739
        %v5741 = vpop.f32.mrb[0].mxu0
        %5742 = vmatprep.mubr.bf16.mxu0 %v5065
        %5743 = vmatmul.mubr.bf16.gmra.mrb[0].mxu0 %v5064
        %v5744 = vpop.f32.mrb[0].mxu0
        %v5745 = vadd.f32 %v5145, %v5744
        %v5746 = vpop.f32.mrb[0].mxu0
        %v5747 = vpop.f32.mrb[0].mxu0
        %v5748 = vadd.f32 %v5145, %v5747
        %v5749 = vpop.f32.mrb[0].mxu0
        %5750 = vmatprep.mubr.bf16.mxu0 %v5067
        %5751 = vmatmul.mubr.bf16.gmra.mrb[0].mxu0 %v5066
        %v5752 = vpop.f32.mrb[0].mxu0
        %v5753 = vadd.f32 %v5145, %v5752
        %v5754 = vpop.f32.mrb[0].mxu0
        %v5755 = vpop.f32.mrb[0].mxu0
        %v5756 = vadd.f32 %v5145, %v5755
        %v5757 = vpop.f32.mrb[0].mxu0
        %5758 = vdwg.mxu0
        %v5759 = vpack.c.bf16 %v5444, %v5440
        %v5760 = vpack.c.bf16 %v5446, %v5442
        %v5761 = vpack.c.bf16 %v5454, %v5450
        %v5762 = vpack.c.bf16 %v5456, %v5452
        %v5763 = vpack.c.bf16 %v5464, %v5460
        %v5764 = vpack.c.bf16 %v5466, %v5462
        %v5765 = vpack.c.bf16 %v5474, %v5470
        %v5766 = vpack.c.bf16 %v5476, %v5472
        %v5767 = vpack.c.bf16 %v5484, %v5480
        %v5768 = vpack.c.bf16 %v5486, %v5482
        %v5769 = vpack.c.bf16 %v5494, %v5490
        %v5770 = vpack.c.bf16 %v5496, %v5492
        %v5771 = vpack.c.bf16 %v5504, %v5500
        %v5772 = vpack.c.bf16 %v5506, %v5502
        %v5773 = vpack.c.bf16 %v5514, %v5510
        %v5774 = vpack.c.bf16 %v5516, %v5512
        %v5775 = vpack.c.bf16 %v5524, %v5520
        %v5776 = vpack.c.bf16 %v5526, %v5522
        %v5777 = vpack.c.bf16 %v5534, %v5530
        %v5778 = vpack.c.bf16 %v5536, %v5532
        %v5779 = vpack.c.bf16 %v5544, %v5540
        %v5780 = vpack.c.bf16 %v5546, %v5542
        %v5781 = vpack.c.bf16 %v5554, %v5550
        %v5782 = vpack.c.bf16 %v5556, %v5552
        %v5783 = vpack.c.bf16 %v5564, %v5560
        %v5784 = vpack.c.bf16 %v5566, %v5562
        %v5785 = vpack.c.bf16 %v5574, %v5570
        %v5786 = vpack.c.bf16 %v5576, %v5572
        %v5787 = vpack.c.bf16 %v5584, %v5580
        %v5788 = vpack.c.bf16 %v5586, %v5582
        %v5789 = vpack.c.bf16 %v5594, %v5590
        %v5790 = vpack.c.bf16 %v5596, %v5592
        %v5791 = vld [vmem:[%s21] sm:$0xf]
        %v5792 = vld [vmem:[%s21 + $0x4] sm:$0xf]
        %v5793 = vld [vmem:[%s21 + $0x8] sm:$0xf]
        %v5794 = vld [vmem:[%s21 + $0xc] sm:$0xf]
        %v5795 = vld [vmem:[%s21 + $0x10] sm:$0xf]
        %v5796 = vld [vmem:[%s21 + $0x14] sm:$0xf]
        %v5797 = vld [vmem:[%s21 + $0x18] sm:$0xf]
        %v5798 = vld [vmem:[%s21 + $0x1c] sm:$0xf]
        %v5799 = vld [vmem:[%s21 + $0x20] sm:$0xf]
        %v5800 = vld [vmem:[%s21 + $0x24] sm:$0xf]
        %v5801 = vld [vmem:[%s21 + $0x28] sm:$0xf]
        %v5802 = vld [vmem:[%s21 + $0x2c] sm:$0xf]
        %v5803 = vld [vmem:[%s21 + $0x30] sm:$0xf]
        %v5804 = vld [vmem:[%s21 + $0x34] sm:$0xf]
        %v5805 = vld [vmem:[%s21 + $0x38] sm:$0xf]
        %v5806 = vld [vmem:[%s21 + $0x3c] sm:$0xf]
        %v5807 = vld [vmem:[%s21 + $0x40] sm:$0xf]
        %v5808 = vld [vmem:[%s21 + $0x44] sm:$0xf]
        %v5809 = vld [vmem:[%s21 + $0x48] sm:$0xf]
        %v5810 = vld [vmem:[%s21 + $0x4c] sm:$0xf]
        %v5811 = vld [vmem:[%s21 + $0x50] sm:$0xf]
        %v5812 = vld [vmem:[%s21 + $0x54] sm:$0xf]
        %v5813 = vld [vmem:[%s21 + $0x58] sm:$0xf]
        %v5814 = vld [vmem:[%s21 + $0x5c] sm:$0xf]
        %v5815 = vld [vmem:[%s21 + $0x60] sm:$0xf]
        %v5816 = vld [vmem:[%s21 + $0x64] sm:$0xf]
        %v5817 = vld [vmem:[%s21 + $0x68] sm:$0xf]
        %v5818 = vld [vmem:[%s21 + $0x6c] sm:$0xf]
        %v5819 = vld [vmem:[%s21 + $0x70] sm:$0xf]
        %v5820 = vld [vmem:[%s21 + $0x74] sm:$0xf]
        %v5821 = vld [vmem:[%s21 + $0x78] sm:$0xf]
        %v5822 = vld [vmem:[%s21 + $0x7c] sm:$0xf]
        %v5823 = vld [vmem:[%s790] sm:$0xf]
        %v5824 = vld [vmem:[%s790 + $0x4] sm:$0xf]
        %v5825 = vld [vmem:[%s790 + $0x8] sm:$0xf]
        %v5826 = vld [vmem:[%s790 + $0xc] sm:$0xf]
        %v5827 = vld [vmem:[%s790 + $0x10] sm:$0xf]
        %v5828 = vld [vmem:[%s790 + $0x14] sm:$0xf]
        %v5829 = vld [vmem:[%s790 + $0x18] sm:$0xf]
        %v5830 = vld [vmem:[%s790 + $0x1c] sm:$0xf]
        %v5831 = vld [vmem:[%s790 + $0x20] sm:$0xf]
        %v5832 = vld [vmem:[%s790 + $0x24] sm:$0xf]
        %v5833 = vld [vmem:[%s790 + $0x28] sm:$0xf]
        %v5834 = vld [vmem:[%s790 + $0x2c] sm:$0xf]
        %v5835 = vld [vmem:[%s790 + $0x30] sm:$0xf]
        %v5836 = vld [vmem:[%s790 + $0x34] sm:$0xf]
        %v5837 = vld [vmem:[%s790 + $0x38] sm:$0xf]
        %v5838 = vld [vmem:[%s790 + $0x3c] sm:$0xf]
        %v5839 = vld [vmem:[%s790 + $0x40] sm:$0xf]
        %v5840 = vld [vmem:[%s790 + $0x44] sm:$0xf]
        %v5841 = vld [vmem:[%s790 + $0x48] sm:$0xf]
        %v5842 = vld [vmem:[%s790 + $0x4c] sm:$0xf]
        %v5843 = vld [vmem:[%s790 + $0x50] sm:$0xf]
        %v5844 = vld [vmem:[%s790 + $0x54] sm:$0xf]
        %v5845 = vld [vmem:[%s790 + $0x58] sm:$0xf]
        %v5846 = vld [vmem:[%s790 + $0x5c] sm:$0xf]
        %v5847 = vld [vmem:[%s790 + $0x60] sm:$0xf]
        %v5848 = vld [vmem:[%s790 + $0x64] sm:$0xf]
        %v5849 = vld [vmem:[%s790 + $0x68] sm:$0xf]
        %v5850 = vld [vmem:[%s790 + $0x6c] sm:$0xf]
        %v5851 = vld [vmem:[%s790 + $0x70] sm:$0xf]
        %v5852 = vld [vmem:[%s790 + $0x74] sm:$0xf]
        %v5853 = vld [vmem:[%s790 + $0x78] sm:$0xf]
        %v5854 = vld [vmem:[%s790 + $0x7c] sm:$0xf]
        %v5855 = vunpack.c.l.bf16 %v5823
        %v5856 = vunpack.c.l.bf16 %v5824
        %v5857 = vunpack.c.l.bf16 %v5825
        %v5858 = vunpack.c.l.bf16 %v5826
        %v5859 = vunpack.c.l.bf16 %v5827
        %v5860 = vunpack.c.l.bf16 %v5828
        %v5861 = vunpack.c.l.bf16 %v5829
        %v5862 = vunpack.c.l.bf16 %v5830
        %v5863 = vunpack.c.l.bf16 %v5831
        %v5864 = vunpack.c.l.bf16 %v5832
        %v5865 = vunpack.c.l.bf16 %v5833
        %v5866 = vunpack.c.l.bf16 %v5834
        %v5867 = vunpack.c.l.bf16 %v5835
        %v5868 = vunpack.c.l.bf16 %v5836
        %v5869 = vunpack.c.l.bf16 %v5837
        %v5870 = vunpack.c.l.bf16 %v5838
        %v5871 = vunpack.c.l.bf16 %v5839
        %v5872 = vunpack.c.l.bf16 %v5840
        %v5873 = vunpack.c.l.bf16 %v5841
        %v5874 = vunpack.c.l.bf16 %v5842
        %v5875 = vunpack.c.l.bf16 %v5843
        %v5876 = vunpack.c.l.bf16 %v5844
        %v5877 = vunpack.c.l.bf16 %v5845
        %v5878 = vunpack.c.l.bf16 %v5846
        %v5879 = vunpack.c.l.bf16 %v5847
        %v5880 = vunpack.c.l.bf16 %v5848
        %v5881 = vunpack.c.l.bf16 %v5849
        %v5882 = vunpack.c.l.bf16 %v5850
        %v5883 = vunpack.c.l.bf16 %v5851
        %v5884 = vunpack.c.l.bf16 %v5852
        %v5885 = vunpack.c.l.bf16 %v5853
        %v5886 = vunpack.c.l.bf16 %v5854
        %v5919 = vunpack.c.l.b16 %v5791
        %v5920 = vunpack.c.l.b16 %v5792
        %v5921 = vunpack.c.l.b16 %v5793
        %v5922 = vunpack.c.l.b16 %v5794
        %v5923 = vunpack.c.l.b16 %v5795
        %v5924 = vunpack.c.l.b16 %v5796
        %v5925 = vunpack.c.l.b16 %v5797
        %v5926 = vunpack.c.l.b16 %v5798
        %v5927 = vunpack.c.l.b16 %v5799
        %v5928 = vunpack.c.l.b16 %v5800
        %v5929 = vunpack.c.l.b16 %v5801
        %v5930 = vunpack.c.l.b16 %v5802
        %v5931 = vunpack.c.l.b16 %v5803
        %v5932 = vunpack.c.l.b16 %v5804
        %v5933 = vunpack.c.l.b16 %v5805
        %v5934 = vunpack.c.l.b16 %v5806
        %v5935 = vunpack.c.l.b16 %v5807
        %v5936 = vunpack.c.l.b16 %v5808
        %v5937 = vunpack.c.l.b16 %v5809
        %v5938 = vunpack.c.l.b16 %v5810
        %v5939 = vunpack.c.l.b16 %v5811
        %v5940 = vunpack.c.l.b16 %v5812
        %v5941 = vunpack.c.l.b16 %v5813
        %v5942 = vunpack.c.l.b16 %v5814
        %v5943 = vunpack.c.l.b16 %v5815
        %v5944 = vunpack.c.l.b16 %v5816
        %v5945 = vunpack.c.l.b16 %v5817
        %v5946 = vunpack.c.l.b16 %v5818
        %v5947 = vunpack.c.l.b16 %v5819
        %v5948 = vunpack.c.l.b16 %v5820
        %v5949 = vunpack.c.l.b16 %v5821
        %v5950 = vunpack.c.l.b16 %v5822
        %v5951 = vpack.c.b16 %v5920, %v5919
        %v5952 = vpack.c.b16 %v5922, %v5921
        %v5953 = vpack.c.b16 %v5924, %v5923
        %v5954 = vpack.c.b16 %v5926, %v5925
        %v5955 = vpack.c.b16 %v5928, %v5927
        %v5956 = vpack.c.b16 %v5930, %v5929
        %v5957 = vpack.c.b16 %v5932, %v5931
        %v5958 = vpack.c.b16 %v5934, %v5933
        %v5959 = vpack.c.b16 %v5936, %v5935
        %v5960 = vpack.c.b16 %v5938, %v5937
        %v5961 = vpack.c.b16 %v5940, %v5939
        %v5962 = vpack.c.b16 %v5942, %v5941
        %v5963 = vpack.c.b16 %v5944, %v5943
        %v5964 = vpack.c.b16 %v5946, %v5945
        %v5965 = vpack.c.b16 %v5948, %v5947
        %v5966 = vpack.c.b16 %v5950, %v5949
        %5983 = vmatprep.subr.bf16.mxu0 0
        %5984 = vmatpush1.bf16.msra.mxu0 %v5951
        %5985 = vmatprep.subr.bf16.mxu0 0
        %5986 = vmatpush1.bf16.msra.mxu0 %v5952
        %5987 = vmatprep.subr.bf16.mxu0 0
        %5988 = vmatpush1.bf16.msra.mxu0 %v5953
        %5989 = vmatprep.subr.bf16.mxu0 0
        %5990 = vmatpush1.bf16.msra.mxu0 %v5954
        %5991 = vmatprep.subr.bf16.mxu0 0
        %5992 = vmatpush1.bf16.msra.mxu0 %v5955
        %5993 = vmatprep.subr.bf16.mxu0 0
        %5994 = vmatpush1.bf16.msra.mxu0 %v5956
        %5995 = vmatprep.subr.bf16.mxu0 0
        %5996 = vmatpush1.bf16.msra.mxu0 %v5957
        %5997 = vmatprep.subr.bf16.mxu0 0
        %5998 = vmatpush1.bf16.msra.mxu0 %v5958
        %5999 = vmatprep.subr.bf16.mxu0 0
        %6000 = vmatpush1.bf16.msra.mxu0 %v5959
        %6001 = vmatprep.subr.bf16.mxu0 0
        %6002 = vmatpush1.bf16.msra.mxu0 %v5960
        %6003 = vmatprep.subr.bf16.mxu0 0
        %6004 = vmatpush1.bf16.msra.mxu0 %v5961
        %6005 = vmatprep.subr.bf16.mxu0 0
        %6006 = vmatpush1.bf16.msra.mxu0 %v5962
        %6007 = vmatprep.subr.bf16.mxu0 0
        %6008 = vmatpush1.bf16.msra.mxu0 %v5963
        %6009 = vmatprep.subr.bf16.mxu0 0
        %6010 = vmatpush1.bf16.msra.mxu0 %v5964
        %6011 = vmatprep.subr.bf16.mxu0 0
        %6012 = vmatpush1.bf16.msra.mxu0 %v5965
        %6013 = vmatprep.subr.bf16.mxu0 0
        %6014 = vmatpush1.bf16.msra.mxu0 %v5966
        %6015 = vmatprep.mubr.bf16.mxu0 %v5760
        %6016 = vmatmul.mubr.bf16.gmra.mrb[0].mxu0 %v5759
        %v6017 = vpop.f32.mrb[0].mxu0
        %v6018 = vadd.f32 %v5855, %v6017
        %v6019 = vpop.f32.mrb[0].mxu0
        %v6020 = vpop.f32.mrb[0].mxu0
        %v6021 = vadd.f32 %v5856, %v6020
        %v6022 = vpop.f32.mrb[0].mxu0
        %6023 = vmatprep.mubr.bf16.mxu0 %v5762
        %6024 = vmatmul.mubr.bf16.gmra.mrb[0].mxu0 %v5761
        %v6025 = vpop.f32.mrb[0].mxu0
        %v6026 = vadd.f32 %v5857, %v6025
        %v6027 = vpop.f32.mrb[0].mxu0
        %v6028 = vpop.f32.mrb[0].mxu0
        %v6029 = vadd.f32 %v5858, %v6028
        %v6030 = vpop.f32.mrb[0].mxu0
        %6031 = vmatprep.mubr.bf16.mxu0 %v5764
        %6032 = vmatmul.mubr.bf16.gmra.mrb[0].mxu0 %v5763
        %v6033 = vpop.f32.mrb[0].mxu0
        %v6034 = vadd.f32 %v5859, %v6033
        %v6035 = vpop.f32.mrb[0].mxu0
        %v6036 = vpop.f32.mrb[0].mxu0
        %v6037 = vadd.f32 %v5860, %v6036
        %v6038 = vpop.f32.mrb[0].mxu0
        %6039 = vmatprep.mubr.bf16.mxu0 %v5766
        %6040 = vmatmul.mubr.bf16.gmra.mrb[0].mxu0 %v5765
        %v6041 = vpop.f32.mrb[0].mxu0
        %v6042 = vadd.f32 %v5861, %v6041
        %v6043 = vpop.f32.mrb[0].mxu0
        %v6044 = vpop.f32.mrb[0].mxu0
        %v6045 = vadd.f32 %v5862, %v6044
        %v6046 = vpop.f32.mrb[0].mxu0
        %6047 = vmatprep.mubr.bf16.mxu0 %v5768
        %6048 = vmatmul.mubr.bf16.gmra.mrb[0].mxu0 %v5767
        %v6049 = vpop.f32.mrb[0].mxu0
        %v6050 = vadd.f32 %v5863, %v6049
        %v6051 = vpop.f32.mrb[0].mxu0
        %v6052 = vpop.f32.mrb[0].mxu0
        %v6053 = vadd.f32 %v5864, %v6052
        %v6054 = vpop.f32.mrb[0].mxu0
        %6055 = vmatprep.mubr.bf16.mxu0 %v5770
        %6056 = vmatmul.mubr.bf16.gmra.mrb[0].mxu0 %v5769
        %v6057 = vpop.f32.mrb[0].mxu0
        %v6058 = vadd.f32 %v5865, %v6057
        %v6059 = vpop.f32.mrb[0].mxu0
        %v6060 = vpop.f32.mrb[0].mxu0
        %v6061 = vadd.f32 %v5866, %v6060
        %v6062 = vpop.f32.mrb[0].mxu0
        %6063 = vmatprep.mubr.bf16.mxu0 %v5772
        %6064 = vmatmul.mubr.bf16.gmra.mrb[0].mxu0 %v5771
        %v6065 = vpop.f32.mrb[0].mxu0
        %v6066 = vadd.f32 %v5867, %v6065
        %v6067 = vpop.f32.mrb[0].mxu0
        %v6068 = vpop.f32.mrb[0].mxu0
        %v6069 = vadd.f32 %v5868, %v6068
        %v6070 = vpop.f32.mrb[0].mxu0
        %6071 = vmatprep.mubr.bf16.mxu0 %v5774
        %6072 = vmatmul.mubr.bf16.gmra.mrb[0].mxu0 %v5773
        %v6073 = vpop.f32.mrb[0].mxu0
        %v6074 = vadd.f32 %v5869, %v6073
        %v6075 = vpop.f32.mrb[0].mxu0
        %v6076 = vpop.f32.mrb[0].mxu0
        %v6077 = vadd.f32 %v5870, %v6076
        %v6078 = vpop.f32.mrb[0].mxu0
        %6079 = vmatprep.mubr.bf16.mxu0 %v5776
        %6080 = vmatmul.mubr.bf16.gmra.mrb[0].mxu0 %v5775
        %v6081 = vpop.f32.mrb[0].mxu0
        %v6082 = vadd.f32 %v5871, %v6081
        %v6083 = vpop.f32.mrb[0].mxu0
        %v6084 = vpop.f32.mrb[0].mxu0
        %v6085 = vadd.f32 %v5872, %v6084
        %v6086 = vpop.f32.mrb[0].mxu0
        %6087 = vmatprep.mubr.bf16.mxu0 %v5778
        %6088 = vmatmul.mubr.bf16.gmra.mrb[0].mxu0 %v5777
        %v6089 = vpop.f32.mrb[0].mxu0
        %v6090 = vadd.f32 %v5873, %v6089
        %v6091 = vpop.f32.mrb[0].mxu0
        %v6092 = vpop.f32.mrb[0].mxu0
        %v6093 = vadd.f32 %v5874, %v6092
        %v6094 = vpop.f32.mrb[0].mxu0
        %6095 = vmatprep.mubr.bf16.mxu0 %v5780
        %6096 = vmatmul.mubr.bf16.gmra.mrb[0].mxu0 %v5779
        %v6097 = vpop.f32.mrb[0].mxu0
        %v6098 = vadd.f32 %v5875, %v6097
        %v6099 = vpop.f32.mrb[0].mxu0
        %v6100 = vpop.f32.mrb[0].mxu0
        %v6101 = vadd.f32 %v5876, %v6100
        %v6102 = vpop.f32.mrb[0].mxu0
        %6103 = vmatprep.mubr.bf16.mxu0 %v5782
        %6104 = vmatmul.mubr.bf16.gmra.mrb[0].mxu0 %v5781
        %v6105 = vpop.f32.mrb[0].mxu0
        %v6106 = vadd.f32 %v5877, %v6105
        %v6107 = vpop.f32.mrb[0].mxu0
        %v6108 = vpop.f32.mrb[0].mxu0
        %v6109 = vadd.f32 %v5878, %v6108
        %v6110 = vpop.f32.mrb[0].mxu0
        %6111 = vmatprep.mubr.bf16.mxu0 %v5784
        %6112 = vmatmul.mubr.bf16.gmra.mrb[0].mxu0 %v5783
        %v6113 = vpop.f32.mrb[0].mxu0
        %v6114 = vadd.f32 %v5879, %v6113
        %v6115 = vpop.f32.mrb[0].mxu0
        %v6116 = vpop.f32.mrb[0].mxu0
        %v6117 = vadd.f32 %v5880, %v6116
        %v6118 = vpop.f32.mrb[0].mxu0
        %6119 = vmatprep.mubr.bf16.mxu0 %v5786
        %6120 = vmatmul.mubr.bf16.gmra.mrb[0].mxu0 %v5785
        %v6121 = vpop.f32.mrb[0].mxu0
        %v6122 = vadd.f32 %v5881, %v6121
        %v6123 = vpop.f32.mrb[0].mxu0
        %v6124 = vpop.f32.mrb[0].mxu0
        %v6125 = vadd.f32 %v5882, %v6124
        %v6126 = vpop.f32.mrb[0].mxu0
        %6127 = vmatprep.mubr.bf16.mxu0 %v5788
        %6128 = vmatmul.mubr.bf16.gmra.mrb[0].mxu0 %v5787
        %v6129 = vpop.f32.mrb[0].mxu0
        %v6130 = vadd.f32 %v5883, %v6129
        %v6131 = vpop.f32.mrb[0].mxu0
        %v6132 = vpop.f32.mrb[0].mxu0
        %v6133 = vadd.f32 %v5884, %v6132
        %v6134 = vpop.f32.mrb[0].mxu0
        %6135 = vmatprep.mubr.bf16.mxu0 %v5790
        %6136 = vmatmul.mubr.bf16.gmra.mrb[0].mxu0 %v5789
        %v6137 = vpop.f32.mrb[0].mxu0
        %v6138 = vadd.f32 %v5885, %v6137
        %v6139 = vpop.f32.mrb[0].mxu0
        %v6140 = vpop.f32.mrb[0].mxu0
        %v6141 = vadd.f32 %v5886, %v6140
        %v6142 = vpop.f32.mrb[0].mxu0
        %6143 = vdwg.mxu0
        %v6144 = vmax.f32 %v6018, 0.0
        %v6145 = vmax.f32 %v6021, 0.0
        %v6146 = vmax.f32 %v6026, 0.0
        %v6147 = vmax.f32 %v6029, 0.0
        %v6148 = vmax.f32 %v6034, 0.0
        %v6149 = vmax.f32 %v6037, 0.0
        %v6150 = vmax.f32 %v6042, 0.0
        %v6151 = vmax.f32 %v6045, 0.0
        %v6152 = vmax.f32 %v6050, 0.0
        %v6153 = vmax.f32 %v6053, 0.0
        %v6154 = vmax.f32 %v6058, 0.0
        %v6155 = vmax.f32 %v6061, 0.0
        %v6156 = vmax.f32 %v6066, 0.0
        %v6157 = vmax.f32 %v6069, 0.0
        %v6158 = vmax.f32 %v6074, 0.0
        %v6159 = vmax.f32 %v6077, 0.0
        %v6160 = vmax.f32 %v6082, 0.0
        %v6161 = vmax.f32 %v6085, 0.0
        %v6162 = vmax.f32 %v6090, 0.0
        %v6163 = vmax.f32 %v6093, 0.0
        %v6164 = vmax.f32 %v6098, 0.0
        %v6165 = vmax.f32 %v6101, 0.0
        %v6166 = vmax.f32 %v6106, 0.0
        %v6167 = vmax.f32 %v6109, 0.0
        %v6168 = vmax.f32 %v6114, 0.0
        %v6169 = vmax.f32 %v6117, 0.0
        %v6170 = vmax.f32 %v6122, 0.0
        %v6171 = vmax.f32 %v6125, 0.0
        %v6172 = vmax.f32 %v6130, 0.0
        %v6173 = vmax.f32 %v6133, 0.0
        %v6174 = vmax.f32 %v6138, 0.0
        %v6175 = vmax.f32 %v6141, 0.0
        %v6176 = vpack.c.bf16 %v6145, %v6144
        %v6177 = vpack.c.bf16 %v6147, %v6146
        %v6178 = vpack.c.bf16 %v6149, %v6148
        %v6179 = vpack.c.bf16 %v6151, %v6150
        %v6180 = vpack.c.bf16 %v6153, %v6152
        %v6181 = vpack.c.bf16 %v6155, %v6154
        %v6182 = vpack.c.bf16 %v6157, %v6156
        %v6183 = vpack.c.bf16 %v6159, %v6158
        %v6184 = vpack.c.bf16 %v6161, %v6160
        %v6185 = vpack.c.bf16 %v6163, %v6162
        %v6186 = vpack.c.bf16 %v6165, %v6164
        %v6187 = vpack.c.bf16 %v6167, %v6166
        %v6188 = vpack.c.bf16 %v6169, %v6168
        %v6189 = vpack.c.bf16 %v6171, %v6170
        %v6190 = vpack.c.bf16 %v6173, %v6172
        %v6191 = vpack.c.bf16 %v6175, %v6174
        %v6192 = vld [vmem:[%s22] sm:$0xf]
        %v6193 = vld [vmem:[%s22 + $0x4] sm:$0xf]
        %v6194 = vld [vmem:[%s22 + $0x8] sm:$0xf]
        %v6195 = vld [vmem:[%s22 + $0xc] sm:$0xf]
        %v6196 = vld [vmem:[%s22 + $0x10] sm:$0xf]
        %v6197 = vld [vmem:[%s22 + $0x14] sm:$0xf]
        %v6198 = vld [vmem:[%s22 + $0x18] sm:$0xf]
        %v6199 = vld [vmem:[%s22 + $0x1c] sm:$0xf]
        %v6200 = vld [vmem:[%s22 + $0x20] sm:$0xf]
        %v6201 = vld [vmem:[%s22 + $0x24] sm:$0xf]
        %v6202 = vld [vmem:[%s22 + $0x28] sm:$0xf]
        %v6203 = vld [vmem:[%s22 + $0x2c] sm:$0xf]
        %v6204 = vld [vmem:[%s22 + $0x30] sm:$0xf]
        %v6205 = vld [vmem:[%s22 + $0x34] sm:$0xf]
        %v6206 = vld [vmem:[%s22 + $0x38] sm:$0xf]
        %v6207 = vld [vmem:[%s22 + $0x3c] sm:$0xf]
        %v6208 = vld [vmem:[%s23] sm:$0x1]
        %v6210 = vlaneseq
        %v6211 = vshrl.u32 %v6210, 7
        %v6212 = vsub.s32 0, %v6211
        %v6213 = vrot.slane %v6208, %v6212
        %v6231 = vunpack.c.l.b16 %v6192
        %v6232 = vunpack.c.l.b16 %v6193
        %v6233 = vunpack.c.l.b16 %v6194
        %v6234 = vunpack.c.l.b16 %v6195
        %v6235 = vunpack.c.l.b16 %v6196
        %v6236 = vunpack.c.l.b16 %v6197
        %v6237 = vunpack.c.l.b16 %v6198
        %v6238 = vunpack.c.l.b16 %v6199
        %v6239 = vunpack.c.l.b16 %v6200
        %v6240 = vunpack.c.l.b16 %v6201
        %v6241 = vunpack.c.l.b16 %v6202
        %v6242 = vunpack.c.l.b16 %v6203
        %v6243 = vunpack.c.l.b16 %v6204
        %v6244 = vunpack.c.l.b16 %v6205
        %v6245 = vunpack.c.l.b16 %v6206
        %v6246 = vunpack.c.l.b16 %v6207
        %v6247 = vpack.c.b16 %v6232, %v6231
        %v6248 = vpack.c.b16 %v6234, %v6233
        %v6249 = vpack.c.b16 %v6236, %v6235
        %v6250 = vpack.c.b16 %v6238, %v6237
        %v6251 = vpack.c.b16 %v6240, %v6239
        %v6252 = vpack.c.b16 %v6242, %v6241
        %v6253 = vpack.c.b16 %v6244, %v6243
        %v6254 = vpack.c.b16 %v6246, %v6245
        %6263 = vmatprep.subr.bf16.mxu0 0
        %6264 = vmatpush1.bf16.msra.mxu0 %v6247
        %6265 = vmatprep.subr.bf16.mxu0 0
        %6266 = vmatpush1.bf16.msra.mxu0 %v6248
        %6267 = vmatprep.subr.bf16.mxu0 0
        %6268 = vmatpush1.bf16.msra.mxu0 %v6249
        %6269 = vmatprep.subr.bf16.mxu0 0
        %6270 = vmatpush1.bf16.msra.mxu0 %v6250
        %6271 = vmatprep.subr.bf16.mxu0 0
        %6272 = vmatpush1.bf16.msra.mxu0 %v6251
        %6273 = vmatprep.subr.bf16.mxu0 0
        %6274 = vmatpush1.bf16.msra.mxu0 %v6252
        %6275 = vmatprep.subr.bf16.mxu0 0
        %6276 = vmatpush1.bf16.msra.mxu0 %v6253
        %6277 = vmatprep.subr.bf16.mxu0 0
        %6278 = vmatpush1.bf16.msra.mxu0 %v6254
        %6279 = vmatprep.subr.bf16.mxu0 0
        %6280 = vmatpush1.bf16.msra.mxu0 0
        %6281 = vmatprep.subr.bf16.mxu0 0
        %6282 = vmatpush1.bf16.msra.mxu0 0
        %6283 = vmatprep.subr.bf16.mxu0 0
        %6284 = vmatpush1.bf16.msra.mxu0 0
        %6285 = vmatprep.subr.bf16.mxu0 0
        %6286 = vmatpush1.bf16.msra.mxu0 0
        %6287 = vmatprep.subr.bf16.mxu0 0
        %6288 = vmatpush1.bf16.msra.mxu0 0
        %6289 = vmatprep.subr.bf16.mxu0 0
        %6290 = vmatpush1.bf16.msra.mxu0 0
        %6291 = vmatprep.subr.bf16.mxu0 0
        %6292 = vmatpush1.bf16.msra.mxu0 0
        %6293 = vmatprep.subr.bf16.mxu0 0
        %6294 = vmatpush1.bf16.msra.mxu0 0
        %6295 = vmatprep.mubr.bf16.mxu0 0
        %6296 = vmatmul.mubr.bf16.gmra.mrb[0].mxu0 %v6176
        %v6297 = vpop.f32.mrb[0].mxu0
        %v6298 = vadd.f32 %v6213, %v6297
        %v6299 = vpop.f32.mrb[0].mxu0
        %v6300 = vpop.f32.mrb[0].mxu0
        %v6301 = vadd.f32 %v6213, %v6300
        %v6302 = vpop.f32.mrb[0].mxu0
        %6303 = vmatprep.mubr.bf16.mxu0 0
        %6304 = vmatmul.mubr.bf16.gmra.mrb[0].mxu0 %v6177
        %v6305 = vpop.f32.mrb[0].mxu0
        %v6306 = vadd.f32 %v6213, %v6305
        %v6307 = vpop.f32.mrb[0].mxu0
        %v6308 = vpop.f32.mrb[0].mxu0
        %v6309 = vadd.f32 %v6213, %v6308
        %v6310 = vpop.f32.mrb[0].mxu0
        %6311 = vmatprep.mubr.bf16.mxu0 0
        %6312 = vmatmul.mubr.bf16.gmra.mrb[0].mxu0 %v6178
        %v6313 = vpop.f32.mrb[0].mxu0
        %v6314 = vadd.f32 %v6213, %v6313
        %v6315 = vpop.f32.mrb[0].mxu0
        %v6316 = vpop.f32.mrb[0].mxu0
        %v6317 = vadd.f32 %v6213, %v6316
        %v6318 = vpop.f32.mrb[0].mxu0
        %6319 = vmatprep.mubr.bf16.mxu0 0
        %6320 = vmatmul.mubr.bf16.gmra.mrb[0].mxu0 %v6179
        %v6321 = vpop.f32.mrb[0].mxu0
        %v6322 = vadd.f32 %v6213, %v6321
        %v6323 = vpop.f32.mrb[0].mxu0
        %v6324 = vpop.f32.mrb[0].mxu0
        %v6325 = vadd.f32 %v6213, %v6324
        %v6326 = vpop.f32.mrb[0].mxu0
        %6327 = vmatprep.mubr.bf16.mxu0 0
        %6328 = vmatmul.mubr.bf16.gmra.mrb[0].mxu0 %v6180
        %v6329 = vpop.f32.mrb[0].mxu0
        %v6330 = vadd.f32 %v6213, %v6329
        %v6331 = vpop.f32.mrb[0].mxu0
        %v6332 = vpop.f32.mrb[0].mxu0
        %v6333 = vadd.f32 %v6213, %v6332
        %v6334 = vpop.f32.mrb[0].mxu0
        %6335 = vmatprep.mubr.bf16.mxu0 0
        %6336 = vmatmul.mubr.bf16.gmra.mrb[0].mxu0 %v6181
        %v6337 = vpop.f32.mrb[0].mxu0
        %v6338 = vadd.f32 %v6213, %v6337
        %v6339 = vpop.f32.mrb[0].mxu0
        %v6340 = vpop.f32.mrb[0].mxu0
        %v6341 = vadd.f32 %v6213, %v6340
        %v6342 = vpop.f32.mrb[0].mxu0
        %6343 = vmatprep.mubr.bf16.mxu0 0
        %6344 = vmatmul.mubr.bf16.gmra.mrb[0].mxu0 %v6182
        %v6345 = vpop.f32.mrb[0].mxu0
        %v6346 = vadd.f32 %v6213, %v6345
        %v6347 = vpop.f32.mrb[0].mxu0
        %v6348 = vpop.f32.mrb[0].mxu0
        %v6349 = vadd.f32 %v6213, %v6348
        %v6350 = vpop.f32.mrb[0].mxu0
        %6351 = vmatprep.mubr.bf16.mxu0 0
        %6352 = vmatmul.mubr.bf16.gmra.mrb[0].mxu0 %v6183
        %v6353 = vpop.f32.mrb[0].mxu0
        %v6354 = vadd.f32 %v6213, %v6353
        %v6355 = vpop.f32.mrb[0].mxu0
        %v6356 = vpop.f32.mrb[0].mxu0
        %v6357 = vadd.f32 %v6213, %v6356
        %v6358 = vpop.f32.mrb[0].mxu0
        %6359 = vmatprep.mubr.bf16.mxu0 0
        %6360 = vmatmul.mubr.bf16.gmra.mrb[0].mxu0 %v6184
        %v6361 = vpop.f32.mrb[0].mxu0
        %v6362 = vadd.f32 %v6213, %v6361
        %v6363 = vpop.f32.mrb[0].mxu0
        %v6364 = vpop.f32.mrb[0].mxu0
        %v6365 = vadd.f32 %v6213, %v6364
        %v6366 = vpop.f32.mrb[0].mxu0
        %6367 = vmatprep.mubr.bf16.mxu0 0
        %6368 = vmatmul.mubr.bf16.gmra.mrb[0].mxu0 %v6185
        %v6369 = vpop.f32.mrb[0].mxu0
        %v6370 = vadd.f32 %v6213, %v6369
        %v6371 = vpop.f32.mrb[0].mxu0
        %v6372 = vpop.f32.mrb[0].mxu0
        %v6373 = vadd.f32 %v6213, %v6372
        %v6374 = vpop.f32.mrb[0].mxu0
        %6375 = vmatprep.mubr.bf16.mxu0 0
        %6376 = vmatmul.mubr.bf16.gmra.mrb[0].mxu0 %v6186
        %v6377 = vpop.f32.mrb[0].mxu0
        %v6378 = vadd.f32 %v6213, %v6377
        %v6379 = vpop.f32.mrb[0].mxu0
        %v6380 = vpop.f32.mrb[0].mxu0
        %v6381 = vadd.f32 %v6213, %v6380
        %v6382 = vpop.f32.mrb[0].mxu0
        %6383 = vmatprep.mubr.bf16.mxu0 0
        %6384 = vmatmul.mubr.bf16.gmra.mrb[0].mxu0 %v6187
        %v6385 = vpop.f32.mrb[0].mxu0
        %v6386 = vadd.f32 %v6213, %v6385
        %v6387 = vpop.f32.mrb[0].mxu0
        %v6388 = vpop.f32.mrb[0].mxu0
        %v6389 = vadd.f32 %v6213, %v6388
        %v6390 = vpop.f32.mrb[0].mxu0
        %6391 = vmatprep.mubr.bf16.mxu0 0
        %6392 = vmatmul.mubr.bf16.gmra.mrb[0].mxu0 %v6188
        %v6393 = vpop.f32.mrb[0].mxu0
        %v6394 = vadd.f32 %v6213, %v6393
        %v6395 = vpop.f32.mrb[0].mxu0
        %v6396 = vpop.f32.mrb[0].mxu0
        %v6397 = vadd.f32 %v6213, %v6396
        %v6398 = vpop.f32.mrb[0].mxu0
        %6399 = vmatprep.mubr.bf16.mxu0 0
        %6400 = vmatmul.mubr.bf16.gmra.mrb[0].mxu0 %v6189
        %v6401 = vpop.f32.mrb[0].mxu0
        %v6402 = vadd.f32 %v6213, %v6401
        %v6403 = vpop.f32.mrb[0].mxu0
        %v6404 = vpop.f32.mrb[0].mxu0
        %v6405 = vadd.f32 %v6213, %v6404
        %v6406 = vpop.f32.mrb[0].mxu0
        %6407 = vmatprep.mubr.bf16.mxu0 0
        %6408 = vmatmul.mubr.bf16.gmra.mrb[0].mxu0 %v6190
        %v6409 = vpop.f32.mrb[0].mxu0
        %v6410 = vadd.f32 %v6213, %v6409
        %v6411 = vpop.f32.mrb[0].mxu0
        %v6412 = vpop.f32.mrb[0].mxu0
        %v6413 = vadd.f32 %v6213, %v6412
        %v6414 = vpop.f32.mrb[0].mxu0
        %6415 = vmatprep.mubr.bf16.mxu0 0
        %6416 = vmatmul.mubr.bf16.gmra.mrb[0].mxu0 %v6191
        %v6417 = vpop.f32.mrb[0].mxu0
        %v6418 = vadd.f32 %v6213, %v6417
        %v6419 = vpop.f32.mrb[0].mxu0
        %v6420 = vpop.f32.mrb[0].mxu0
        %v6421 = vadd.f32 %v6213, %v6420
        %v6422 = vpop.f32.mrb[0].mxu0
        %6423 = vdwg.mxu0
        %v6424 = vlaneseq
        %v6425 = vand.u32 %v6424, 127
        %vm6426 = vcmp.eq.s32.totalorder %v6425, 3
        %6428 = vset.pattern.permute.xlu0 0
        %6429 = vperm.xlu0 %6428, %v5633
        %v6430 = vpop.permute.xlu0 %6429
        %6433 = vset.pattern.permute.xlu0 0
        %6434 = vperm.xlu0 %6433, %v5636
        %v6435 = vpop.permute.xlu0 %6434
        %6438 = vset.pattern.permute.xlu0 0
        %6439 = vperm.xlu0 %6438, %v5641
        %v6440 = vpop.permute.xlu0 %6439
        %6443 = vset.pattern.permute.xlu0 0
        %6444 = vperm.xlu0 %6443, %v5644
        %v6445 = vpop.permute.xlu0 %6444
        %6448 = vset.pattern.permute.xlu0 0
        %6449 = vperm.xlu0 %6448, %v5649
        %v6450 = vpop.permute.xlu0 %6449
        %6453 = vset.pattern.permute.xlu0 0
        %6454 = vperm.xlu0 %6453, %v5652
        %v6455 = vpop.permute.xlu0 %6454
        %6458 = vset.pattern.permute.xlu0 0
        %6459 = vperm.xlu0 %6458, %v5657
        %v6460 = vpop.permute.xlu0 %6459
        %6463 = vset.pattern.permute.xlu0 0
        %6464 = vperm.xlu0 %6463, %v5660
        %v6465 = vpop.permute.xlu0 %6464
        %6468 = vset.pattern.permute.xlu0 0
        %6469 = vperm.xlu0 %6468, %v5665
        %v6470 = vpop.permute.xlu0 %6469
        %6473 = vset.pattern.permute.xlu0 0
        %6474 = vperm.xlu0 %6473, %v5668
        %v6475 = vpop.permute.xlu0 %6474
        %6478 = vset.pattern.permute.xlu0 0
        %6479 = vperm.xlu0 %6478, %v5673
        %v6480 = vpop.permute.xlu0 %6479
        %6483 = vset.pattern.permute.xlu0 0
        %6484 = vperm.xlu0 %6483, %v5676
        %v6485 = vpop.permute.xlu0 %6484
        %6488 = vset.pattern.permute.xlu0 0
        %6489 = vperm.xlu0 %6488, %v5681
        %v6490 = vpop.permute.xlu0 %6489
        %6493 = vset.pattern.permute.xlu0 0
        %6494 = vperm.xlu0 %6493, %v5684
        %v6495 = vpop.permute.xlu0 %6494
        %6498 = vset.pattern.permute.xlu0 0
        %6499 = vperm.xlu0 %6498, %v5689
        %v6500 = vpop.permute.xlu0 %6499
        %6503 = vset.pattern.permute.xlu0 0
        %6504 = vperm.xlu0 %6503, %v5692
        %v6505 = vpop.permute.xlu0 %6504
        %6508 = vset.pattern.permute.xlu0 0
        %6509 = vperm.xlu0 %6508, %v5697
        %v6510 = vpop.permute.xlu0 %6509
        %6513 = vset.pattern.permute.xlu0 0
        %6514 = vperm.xlu0 %6513, %v5700
        %v6515 = vpop.permute.xlu0 %6514
        %6518 = vset.pattern.permute.xlu0 0
        %6519 = vperm.xlu0 %6518, %v5705
        %v6520 = vpop.permute.xlu0 %6519
        %6523 = vset.pattern.permute.xlu0 0
        %6524 = vperm.xlu0 %6523, %v5708
        %v6525 = vpop.permute.xlu0 %6524
        %6528 = vset.pattern.permute.xlu0 0
        %6529 = vperm.xlu0 %6528, %v5713
        %v6530 = vpop.permute.xlu0 %6529
        %6533 = vset.pattern.permute.xlu0 0
        %6534 = vperm.xlu0 %6533, %v5716
        %v6535 = vpop.permute.xlu0 %6534
        %6538 = vset.pattern.permute.xlu0 0
        %6539 = vperm.xlu0 %6538, %v5721
        %v6540 = vpop.permute.xlu0 %6539
        %6543 = vset.pattern.permute.xlu0 0
        %6544 = vperm.xlu0 %6543, %v5724
        %v6545 = vpop.permute.xlu0 %6544
        %6548 = vset.pattern.permute.xlu0 0
        %6549 = vperm.xlu0 %6548, %v5729
        %v6550 = vpop.permute.xlu0 %6549
        %6553 = vset.pattern.permute.xlu0 0
        %6554 = vperm.xlu0 %6553, %v5732
        %v6555 = vpop.permute.xlu0 %6554
        %6558 = vset.pattern.permute.xlu0 0
        %6559 = vperm.xlu0 %6558, %v5737
        %v6560 = vpop.permute.xlu0 %6559
        %6563 = vset.pattern.permute.xlu0 0
        %6564 = vperm.xlu0 %6563, %v5740
        %v6565 = vpop.permute.xlu0 %6564
        %6568 = vset.pattern.permute.xlu0 0
        %6569 = vperm.xlu0 %6568, %v5745
        %v6570 = vpop.permute.xlu0 %6569
        %6573 = vset.pattern.permute.xlu0 0
        %6574 = vperm.xlu0 %6573, %v5748
        %v6575 = vpop.permute.xlu0 %6574
        %6578 = vset.pattern.permute.xlu0 0
        %6579 = vperm.xlu0 %6578, %v5753
        %v6580 = vpop.permute.xlu0 %6579
        %6583 = vset.pattern.permute.xlu0 0
        %6584 = vperm.xlu0 %6583, %v5756
        %v6585 = vpop.permute.xlu0 %6584
        %v6587 = vsel %vm6426, %v6430, %v6298
        %v6588 = vsel %vm6426, %v6435, %v6301
        %v6589 = vsel %vm6426, %v6440, %v6306
        %v6590 = vsel %vm6426, %v6445, %v6309
        %v6591 = vsel %vm6426, %v6450, %v6314
        %v6592 = vsel %vm6426, %v6455, %v6317
        %v6593 = vsel %vm6426, %v6460, %v6322
        %v6594 = vsel %vm6426, %v6465, %v6325
        %v6595 = vsel %vm6426, %v6470, %v6330
        %v6596 = vsel %vm6426, %v6475, %v6333
        %v6597 = vsel %vm6426, %v6480, %v6338
        %v6598 = vsel %vm6426, %v6485, %v6341
        %v6599 = vsel %vm6426, %v6490, %v6346
        %v6600 = vsel %vm6426, %v6495, %v6349
        %v6601 = vsel %vm6426, %v6500, %v6354
        %v6602 = vsel %vm6426, %v6505, %v6357
        %v6603 = vsel %vm6426, %v6510, %v6362
        %v6604 = vsel %vm6426, %v6515, %v6365
        %v6605 = vsel %vm6426, %v6520, %v6370
        %v6606 = vsel %vm6426, %v6525, %v6373
        %v6607 = vsel %vm6426, %v6530, %v6378
        %v6608 = vsel %vm6426, %v6535, %v6381
        %v6609 = vsel %vm6426, %v6540, %v6386
        %v6610 = vsel %vm6426, %v6545, %v6389
        %v6611 = vsel %vm6426, %v6550, %v6394
        %v6612 = vsel %vm6426, %v6555, %v6397
        %v6613 = vsel %vm6426, %v6560, %v6402
        %v6614 = vsel %vm6426, %v6565, %v6405
        %v6615 = vsel %vm6426, %v6570, %v6410
        %v6616 = vsel %vm6426, %v6575, %v6413
        %v6617 = vsel %vm6426, %v6580, %v6418
        %v6618 = vsel %vm6426, %v6585, %v6421
        %vm6619 = vcmask 64512
        %6620 = vst.msk [vmem:[%s767] sm:$0xff] %vm6619, %v6587
        %6621 = vst.msk [vmem:[%s767 + $0x8] sm:$0xff] %vm6619, %v6588
        %6622 = vst.msk [vmem:[%s767 + $0x10] sm:$0xff] %vm6619, %v6589
        %6623 = vst.msk [vmem:[%s767 + $0x18] sm:$0xff] %vm6619, %v6590
        %6624 = vst.msk [vmem:[%s767 + $0x20] sm:$0xff] %vm6619, %v6591
        %6625 = vst.msk [vmem:[%s767 + $0x28] sm:$0xff] %vm6619, %v6592
        %6626 = vst.msk [vmem:[%s767 + $0x30] sm:$0xff] %vm6619, %v6593
        %6627 = vst.msk [vmem:[%s767 + $0x38] sm:$0xff] %vm6619, %v6594
        %6628 = vst.msk [vmem:[%s767 + $0x40] sm:$0xff] %vm6619, %v6595
        %6629 = vst.msk [vmem:[%s767 + $0x48] sm:$0xff] %vm6619, %v6596
        %6630 = vst.msk [vmem:[%s767 + $0x50] sm:$0xff] %vm6619, %v6597
        %6631 = vst.msk [vmem:[%s767 + $0x58] sm:$0xff] %vm6619, %v6598
        %6632 = vst.msk [vmem:[%s767 + $0x60] sm:$0xff] %vm6619, %v6599
        %6633 = vst.msk [vmem:[%s767 + $0x68] sm:$0xff] %vm6619, %v6600
        %6634 = vst.msk [vmem:[%s767 + $0x70] sm:$0xff] %vm6619, %v6601
        %6635 = vst.msk [vmem:[%s767 + $0x78] sm:$0xff] %vm6619, %v6602
        %6636 = vst.msk [vmem:[%s767 + $0x80] sm:$0xff] %vm6619, %v6603
        %6637 = vst.msk [vmem:[%s767 + $0x88] sm:$0xff] %vm6619, %v6604
        %6638 = vst.msk [vmem:[%s767 + $0x90] sm:$0xff] %vm6619, %v6605
        %6639 = vst.msk [vmem:[%s767 + $0x98] sm:$0xff] %vm6619, %v6606
        %6640 = vst.msk [vmem:[%s767 + $0xa0] sm:$0xff] %vm6619, %v6607
        %6641 = vst.msk [vmem:[%s767 + $0xa8] sm:$0xff] %vm6619, %v6608
        %6642 = vst.msk [vmem:[%s767 + $0xb0] sm:$0xff] %vm6619, %v6609
        %6643 = vst.msk [vmem:[%s767 + $0xb8] sm:$0xff] %vm6619, %v6610
        %6644 = vst.msk [vmem:[%s767 + $0xc0] sm:$0xff] %vm6619, %v6611
        %6645 = vst.msk [vmem:[%s767 + $0xc8] sm:$0xff] %vm6619, %v6612
        %6646 = vst.msk [vmem:[%s767 + $0xd0] sm:$0xff] %vm6619, %v6613
        %6647 = vst.msk [vmem:[%s767 + $0xd8] sm:$0xff] %vm6619, %v6614
        %6648 = vst.msk [vmem:[%s767 + $0xe0] sm:$0xff] %vm6619, %v6615
        %6649 = vst.msk [vmem:[%s767 + $0xe8] sm:$0xff] %vm6619, %v6616
        %6650 = vst.msk [vmem:[%s767 + $0xf0] sm:$0xff] %vm6619, %v6617
        %6651 = vst.msk [vmem:[%s767 + $0xf8] sm:$0xff] %vm6619, %v6618
        %s6652 = sand.u32 %s557, 1
        %s6653 = sand.u32 %s557, 1
        %s6654 = smul.addr %s6653, 256
        %s6655 = scalar_lea.vmem [#allocation2], %s6654
        // Predicated region
        $region117: #{nerf_forward.3} parent=115 // pred_check
          %p6656 = pneg %p567
        $region118: #{nerf_forward.3} parent=115 // pred_check_branch
          %6658 = sbr.rel (%p6656) target = $region120
        $region119: #{nerf_forward.3} parent=115 // pred_region
          %s6659 = smul.u32 32, %s35
          %s6660 = ssub.s32 48, %s6659
          %p6661 = scmp.lt.s32.totalorder %s6660, 32
          %s6662 = scalar_select %p6661, %s6660, 32
          %s6663 = smul.u32 128, %s6662
          %p6664 = scmp.ne.s32.totalorder 0, %s6663
          %s6665 = smul.addr %s6659, 8
          %s6666 = scalar_lea.vmem %s24, %s6665
          // Predicated region
          $region121: #{nerf_forward.3} parent=119 // pred_check
            %p6667 = pneg %p6664
          $region122: #{nerf_forward.3} parent=119 // pred_check_branch
            %6669 = sbr.rel (%p6667) target = $region124
          $region123: #{nerf_forward.3} parent=119 // pred_region
            // Predicated region
            $region125: #{nerf_forward.3} parent=123 // pred_check
              _
            $region126: #{nerf_forward.3} parent=123 // pred_check_branch
              %6671 = sbr.rel (0) target = $region128
            $region127: #{nerf_forward.3} parent=123 // pred_region
              // Predicated region
              $region147: #{nerf_forward.3} parent=127 // pred_check
                _
              $region148: #{nerf_forward.3} parent=127 // pred_check_branch
                %6782 = sbr.rel (0) target = $region150
              $region149: #{nerf_forward.3} parent=127 // pred_region
                %s6783 = sshrl.u32 %s6662, 5
                // While loop
                $region151: #{nerf_forward.3} parent=149 // loop_pre_header
                  _
                $region152: #{nerf_forward.3} parent=149 // loop_header
                  %s6785 = sphi 0, %s6787
                  %p6786 = scmp.ge.s32.totalorder %s6785, %s6783
                  %s6790 = sphi 0, %s6859
                  %s6791 = sphi %s6655, %s6862
                  %s6792 = sphi %s6666, %s6863
                $region153: #{nerf_forward.3} parent=149 // loop_header_branch
                  %6789 = sbr.rel (%p6786) target = $region157
                $region154: #{nerf_forward.3} parent=149 // loop_body
                  %v6793 = vld [vmem:[%s6791] sm:$0xff]
                  %6794 = vst [vmem:[%s6792] sm:$0xff] %v6793
                  %v6795 = vld [vmem:[%s6791 + $0x8] sm:$0xff]
                  %6796 = vst [vmem:[%s6792 + $0x8] sm:$0xff] %v6795
                  %v6797 = vld [vmem:[%s6791 + $0x10] sm:$0xff]
                  %6798 = vst [vmem:[%s6792 + $0x10] sm:$0xff] %v6797
                  %v6799 = vld [vmem:[%s6791 + $0x18] sm:$0xff]
                  %6800 = vst [vmem:[%s6792 + $0x18] sm:$0xff] %v6799
                  %v6801 = vld [vmem:[%s6791 + $0x20] sm:$0xff]
                  %6802 = vst [vmem:[%s6792 + $0x20] sm:$0xff] %v6801
                  %v6803 = vld [vmem:[%s6791 + $0x28] sm:$0xff]
                  %6804 = vst [vmem:[%s6792 + $0x28] sm:$0xff] %v6803
                  %v6805 = vld [vmem:[%s6791 + $0x30] sm:$0xff]
                  %6806 = vst [vmem:[%s6792 + $0x30] sm:$0xff] %v6805
                  %v6807 = vld [vmem:[%s6791 + $0x38] sm:$0xff]
                  %6808 = vst [vmem:[%s6792 + $0x38] sm:$0xff] %v6807
                  %v6809 = vld [vmem:[%s6791 + $0x40] sm:$0xff]
                  %6810 = vst [vmem:[%s6792 + $0x40] sm:$0xff] %v6809
                  %v6811 = vld [vmem:[%s6791 + $0x48] sm:$0xff]
                  %6812 = vst [vmem:[%s6792 + $0x48] sm:$0xff] %v6811
                  %v6813 = vld [vmem:[%s6791 + $0x50] sm:$0xff]
                  %6814 = vst [vmem:[%s6792 + $0x50] sm:$0xff] %v6813
                  %v6815 = vld [vmem:[%s6791 + $0x58] sm:$0xff]
                  %6816 = vst [vmem:[%s6792 + $0x58] sm:$0xff] %v6815
                  %v6817 = vld [vmem:[%s6791 + $0x60] sm:$0xff]
                  %6818 = vst [vmem:[%s6792 + $0x60] sm:$0xff] %v6817
                  %v6819 = vld [vmem:[%s6791 + $0x68] sm:$0xff]
                  %6820 = vst [vmem:[%s6792 + $0x68] sm:$0xff] %v6819
                  %v6821 = vld [vmem:[%s6791 + $0x70] sm:$0xff]
                  %6822 = vst [vmem:[%s6792 + $0x70] sm:$0xff] %v6821
                  %v6823 = vld [vmem:[%s6791 + $0x78] sm:$0xff]
                  %6824 = vst [vmem:[%s6792 + $0x78] sm:$0xff] %v6823
                  %v6825 = vld [vmem:[%s6791 + $0x80] sm:$0xff]
                  %6826 = vst [vmem:[%s6792 + $0x80] sm:$0xff] %v6825
                  %v6827 = vld [vmem:[%s6791 + $0x88] sm:$0xff]
                  %6828 = vst [vmem:[%s6792 + $0x88] sm:$0xff] %v6827
                  %v6829 = vld [vmem:[%s6791 + $0x90] sm:$0xff]
                  %6830 = vst [vmem:[%s6792 + $0x90] sm:$0xff] %v6829
                  %v6831 = vld [vmem:[%s6791 + $0x98] sm:$0xff]
                  %6832 = vst [vmem:[%s6792 + $0x98] sm:$0xff] %v6831
                  %v6833 = vld [vmem:[%s6791 + $0xa0] sm:$0xff]
                  %6834 = vst [vmem:[%s6792 + $0xa0] sm:$0xff] %v6833
                  %v6835 = vld [vmem:[%s6791 + $0xa8] sm:$0xff]
                  %6836 = vst [vmem:[%s6792 + $0xa8] sm:$0xff] %v6835
                  %v6837 = vld [vmem:[%s6791 + $0xb0] sm:$0xff]
                  %6838 = vst [vmem:[%s6792 + $0xb0] sm:$0xff] %v6837
                  %v6839 = vld [vmem:[%s6791 + $0xb8] sm:$0xff]
                  %6840 = vst [vmem:[%s6792 + $0xb8] sm:$0xff] %v6839
                  %v6841 = vld [vmem:[%s6791 + $0xc0] sm:$0xff]
                  %6842 = vst [vmem:[%s6792 + $0xc0] sm:$0xff] %v6841
                  %v6843 = vld [vmem:[%s6791 + $0xc8] sm:$0xff]
                  %6844 = vst [vmem:[%s6792 + $0xc8] sm:$0xff] %v6843
                  %v6845 = vld [vmem:[%s6791 + $0xd0] sm:$0xff]
                  %6846 = vst [vmem:[%s6792 + $0xd0] sm:$0xff] %v6845
                  %v6847 = vld [vmem:[%s6791 + $0xd8] sm:$0xff]
                  %6848 = vst [vmem:[%s6792 + $0xd8] sm:$0xff] %v6847
                  %v6849 = vld [vmem:[%s6791 + $0xe0] sm:$0xff]
                  %6850 = vst [vmem:[%s6792 + $0xe0] sm:$0xff] %v6849
                  %v6851 = vld [vmem:[%s6791 + $0xe8] sm:$0xff]
                  %6852 = vst [vmem:[%s6792 + $0xe8] sm:$0xff] %v6851
                  %v6853 = vld [vmem:[%s6791 + $0xf0] sm:$0xff]
                  %6854 = vst [vmem:[%s6792 + $0xf0] sm:$0xff] %v6853
                  %v6855 = vld [vmem:[%s6791 + $0xf8] sm:$0xff]
                  %6856 = vst [vmem:[%s6792 + $0xf8] sm:$0xff] %v6855
                  %s6857 = sadd.s32 1, %s6790
                  %p6858 = scmp.ge.s32.totalorder %s6857, %s6783
                  %s6859 = scalar_select %p6858, 0, %s6857
                  %s6860 = smul.u32 %s6859, 256
                  %s6861 = smul.u32 %s6859, 256
                  %s6862 = scalar_lea.vmem %s6655, %s6860 [#allocation2]
                  %s6863 = scalar_lea.vmem %s6666, %s6861
                $region155: #{nerf_forward.3} parent=149 // loop_footer
                  %s6787 = sadd.s32 %s6785, 1
                $region156: #{nerf_forward.3} parent=149 // loop_footer_branch
                  %6784 = sbr.rel target = $region152
                $region157: #{nerf_forward.3} parent=149 // loop_exit
                  _
                %s6864 = sshrl.u32 %s6662, 5
                %s6865 = sand.u32 %s6662, 31
                %s6866 = smul.u32 %s6864, 32
                %s6867 = smul.u32 8, %s6866
                %s6868 = scalar_lea.vmem %s6655, %s6867 [#allocation2]
                %s6869 = smul.u32 8, %s6866
                %s6870 = scalar_lea.vmem %s6666, %s6869
                // While loop
                $region158: #{nerf_forward.3} parent=149 // loop_pre_header
                  _
                $region159: #{nerf_forward.3} parent=149 // loop_header
                  %s6872 = sphi 0, %s6874
                  %p6873 = scmp.ge.s32.totalorder %s6872, %s6865
                  %s6877 = sphi 0, %s6884
                  %s6878 = sphi %s6868, %s6887
                  %s6879 = sphi %s6870, %s6888
                $region160: #{nerf_forward.3} parent=149 // loop_header_branch
                  %6876 = sbr.rel (%p6873) target = $region164
                $region161: #{nerf_forward.3} parent=149 // loop_body
                  %v6880 = vld [vmem:[%s6878] sm:$0xff]
                  %6881 = vst [vmem:[%s6879] sm:$0xff] %v6880
                  %s6882 = sadd.s32 1, %s6877
                  %p6883 = scmp.ge.s32.totalorder %s6882, %s6865
                  %s6884 = scalar_select %p6883, 0, %s6882
                  %s6885 = smul.u32 %s6884, 8
                  %s6886 = smul.u32 %s6884, 8
                  %s6887 = scalar_lea.vmem %s6868, %s6885 [#allocation2]
                  %s6888 = scalar_lea.vmem %s6870, %s6886
                $region162: #{nerf_forward.3} parent=149 // loop_footer
                  %s6874 = sadd.s32 %s6872, 1
                $region163: #{nerf_forward.3} parent=149 // loop_footer_branch
                  %6871 = sbr.rel target = $region159
                $region164: #{nerf_forward.3} parent=149 // loop_exit
                  _
              $region150: #{nerf_forward.3} parent=127 // pred_fallthru
                _
              // Predicated region
              $region165: #{nerf_forward.3} parent=127 // pred_check
                _
              $region166: #{nerf_forward.3} parent=127 // pred_check_branch
                %6890 = sbr.rel target = $region168
              $region167: #{nerf_forward.3} parent=127 // pred_region
                _
              $region168: #{nerf_forward.3} parent=127 // pred_fallthru
                _
            $region128: #{nerf_forward.3} parent=123 // pred_fallthru
              _
            // Predicated region
            $region129: #{nerf_forward.3} parent=123 // pred_check
              _
            $region130: #{nerf_forward.3} parent=123 // pred_check_branch
              %6673 = sbr.rel target = $region132
            $region131: #{nerf_forward.3} parent=123 // pred_region
              %s6675 = sshrl.u32 %s6662, 5
              // While loop
              $region133: #{nerf_forward.3} parent=131 // loop_pre_header
                _
              $region134: #{nerf_forward.3} parent=131 // loop_header
                %s6677 = sphi 0, %s6679
                %p6678 = scmp.ge.s32.totalorder %s6677, %s6675
                %s6682 = sphi 0, %s6751
                %s6683 = sphi %s6655, %s6754
                %s6684 = sphi %s6666, %s6755
              $region135: #{nerf_forward.3} parent=131 // loop_header_branch
                %6681 = sbr.rel (%p6678) target = $region139
              $region136: #{nerf_forward.3} parent=131 // loop_body
                %v6685 = vld [vmem:[%s6683] sm:$0xff]
                %6686 = vst [vmem:[%s6684] sm:$0xff] %v6685
                %v6687 = vld [vmem:[%s6683 + $0x8] sm:$0xff]
                %6688 = vst [vmem:[%s6684 + $0x8] sm:$0xff] %v6687
                %v6689 = vld [vmem:[%s6683 + $0x10] sm:$0xff]
                %6690 = vst [vmem:[%s6684 + $0x10] sm:$0xff] %v6689
                %v6691 = vld [vmem:[%s6683 + $0x18] sm:$0xff]
                %6692 = vst [vmem:[%s6684 + $0x18] sm:$0xff] %v6691
                %v6693 = vld [vmem:[%s6683 + $0x20] sm:$0xff]
                %6694 = vst [vmem:[%s6684 + $0x20] sm:$0xff] %v6693
                %v6695 = vld [vmem:[%s6683 + $0x28] sm:$0xff]
                %6696 = vst [vmem:[%s6684 + $0x28] sm:$0xff] %v6695
                %v6697 = vld [vmem:[%s6683 + $0x30] sm:$0xff]
                %6698 = vst [vmem:[%s6684 + $0x30] sm:$0xff] %v6697
                %v6699 = vld [vmem:[%s6683 + $0x38] sm:$0xff]
                %6700 = vst [vmem:[%s6684 + $0x38] sm:$0xff] %v6699
                %v6701 = vld [vmem:[%s6683 + $0x40] sm:$0xff]
                %6702 = vst [vmem:[%s6684 + $0x40] sm:$0xff] %v6701
                %v6703 = vld [vmem:[%s6683 + $0x48] sm:$0xff]
                %6704 = vst [vmem:[%s6684 + $0x48] sm:$0xff] %v6703
                %v6705 = vld [vmem:[%s6683 + $0x50] sm:$0xff]
                %6706 = vst [vmem:[%s6684 + $0x50] sm:$0xff] %v6705
                %v6707 = vld [vmem:[%s6683 + $0x58] sm:$0xff]
                %6708 = vst [vmem:[%s6684 + $0x58] sm:$0xff] %v6707
                %v6709 = vld [vmem:[%s6683 + $0x60] sm:$0xff]
                %6710 = vst [vmem:[%s6684 + $0x60] sm:$0xff] %v6709
                %v6711 = vld [vmem:[%s6683 + $0x68] sm:$0xff]
                %6712 = vst [vmem:[%s6684 + $0x68] sm:$0xff] %v6711
                %v6713 = vld [vmem:[%s6683 + $0x70] sm:$0xff]
                %6714 = vst [vmem:[%s6684 + $0x70] sm:$0xff] %v6713
                %v6715 = vld [vmem:[%s6683 + $0x78] sm:$0xff]
                %6716 = vst [vmem:[%s6684 + $0x78] sm:$0xff] %v6715
                %v6717 = vld [vmem:[%s6683 + $0x80] sm:$0xff]
                %6718 = vst [vmem:[%s6684 + $0x80] sm:$0xff] %v6717
                %v6719 = vld [vmem:[%s6683 + $0x88] sm:$0xff]
                %6720 = vst [vmem:[%s6684 + $0x88] sm:$0xff] %v6719
                %v6721 = vld [vmem:[%s6683 + $0x90] sm:$0xff]
                %6722 = vst [vmem:[%s6684 + $0x90] sm:$0xff] %v6721
                %v6723 = vld [vmem:[%s6683 + $0x98] sm:$0xff]
                %6724 = vst [vmem:[%s6684 + $0x98] sm:$0xff] %v6723
                %v6725 = vld [vmem:[%s6683 + $0xa0] sm:$0xff]
                %6726 = vst [vmem:[%s6684 + $0xa0] sm:$0xff] %v6725
                %v6727 = vld [vmem:[%s6683 + $0xa8] sm:$0xff]
                %6728 = vst [vmem:[%s6684 + $0xa8] sm:$0xff] %v6727
                %v6729 = vld [vmem:[%s6683 + $0xb0] sm:$0xff]
                %6730 = vst [vmem:[%s6684 + $0xb0] sm:$0xff] %v6729
                %v6731 = vld [vmem:[%s6683 + $0xb8] sm:$0xff]
                %6732 = vst [vmem:[%s6684 + $0xb8] sm:$0xff] %v6731
                %v6733 = vld [vmem:[%s6683 + $0xc0] sm:$0xff]
                %6734 = vst [vmem:[%s6684 + $0xc0] sm:$0xff] %v6733
                %v6735 = vld [vmem:[%s6683 + $0xc8] sm:$0xff]
                %6736 = vst [vmem:[%s6684 + $0xc8] sm:$0xff] %v6735
                %v6737 = vld [vmem:[%s6683 + $0xd0] sm:$0xff]
                %6738 = vst [vmem:[%s6684 + $0xd0] sm:$0xff] %v6737
                %v6739 = vld [vmem:[%s6683 + $0xd8] sm:$0xff]
                %6740 = vst [vmem:[%s6684 + $0xd8] sm:$0xff] %v6739
                %v6741 = vld [vmem:[%s6683 + $0xe0] sm:$0xff]
                %6742 = vst [vmem:[%s6684 + $0xe0] sm:$0xff] %v6741
                %v6743 = vld [vmem:[%s6683 + $0xe8] sm:$0xff]
                %6744 = vst [vmem:[%s6684 + $0xe8] sm:$0xff] %v6743
                %v6745 = vld [vmem:[%s6683 + $0xf0] sm:$0xff]
                %6746 = vst [vmem:[%s6684 + $0xf0] sm:$0xff] %v6745
                %v6747 = vld [vmem:[%s6683 + $0xf8] sm:$0xff]
                %6748 = vst [vmem:[%s6684 + $0xf8] sm:$0xff] %v6747
                %s6749 = sadd.s32 1, %s6682
                %p6750 = scmp.ge.s32.totalorder %s6749, %s6675
                %s6751 = scalar_select %p6750, 0, %s6749
                %s6752 = smul.u32 %s6751, 256
                %s6753 = smul.u32 %s6751, 256
                %s6754 = scalar_lea.vmem %s6655, %s6752 [#allocation2]
                %s6755 = scalar_lea.vmem %s6666, %s6753
              $region137: #{nerf_forward.3} parent=131 // loop_footer
                %s6679 = sadd.s32 %s6677, 1
              $region138: #{nerf_forward.3} parent=131 // loop_footer_branch
                %6676 = sbr.rel target = $region134
              $region139: #{nerf_forward.3} parent=131 // loop_exit
                _
              %s6756 = sshrl.u32 %s6662, 5
              %s6757 = sand.u32 %s6662, 31
              %s6758 = smul.u32 %s6756, 32
              %s6759 = smul.u32 8, %s6758
              %s6760 = scalar_lea.vmem %s6655, %s6759 [#allocation2]
              %s6761 = smul.u32 8, %s6758
              %s6762 = scalar_lea.vmem %s6666, %s6761
              // While loop
              $region140: #{nerf_forward.3} parent=131 // loop_pre_header
                _
              $region141: #{nerf_forward.3} parent=131 // loop_header
                %s6764 = sphi 0, %s6766
                %p6765 = scmp.ge.s32.totalorder %s6764, %s6757
                %s6769 = sphi 0, %s6776
                %s6770 = sphi %s6760, %s6779
                %s6771 = sphi %s6762, %s6780
              $region142: #{nerf_forward.3} parent=131 // loop_header_branch
                %6768 = sbr.rel (%p6765) target = $region146
              $region143: #{nerf_forward.3} parent=131 // loop_body
                %v6772 = vld [vmem:[%s6770] sm:$0xff]
                %6773 = vst [vmem:[%s6771] sm:$0xff] %v6772
                %s6774 = sadd.s32 1, %s6769
                %p6775 = scmp.ge.s32.totalorder %s6774, %s6757
                %s6776 = scalar_select %p6775, 0, %s6774
                %s6777 = smul.u32 %s6776, 8
                %s6778 = smul.u32 %s6776, 8
                %s6779 = scalar_lea.vmem %s6760, %s6777 [#allocation2]
                %s6780 = scalar_lea.vmem %s6762, %s6778
              $region144: #{nerf_forward.3} parent=131 // loop_footer
                %s6766 = sadd.s32 %s6764, 1
              $region145: #{nerf_forward.3} parent=131 // loop_footer_branch
                %6763 = sbr.rel target = $region141
              $region146: #{nerf_forward.3} parent=131 // loop_exit
                _
            $region132: #{nerf_forward.3} parent=123 // pred_fallthru
              _
          $region124: #{nerf_forward.3} parent=119 // pred_fallthru
            _
          %6891 = vnop
        $region120: #{nerf_forward.3} parent=115 // pred_fallthru
          _
      $region116: #{nerf_forward.3} parent=5 // pred_fallthru
        _
      %p6892 = scmp.le.s32.totalorder 2, %s30
      // Predicated region
      $region169: #{nerf_forward.3} parent=5 // pred_check
        %p6893 = pneg %p6892
      $region170: #{nerf_forward.3} parent=5 // pred_check_branch
        %6895 = sbr.rel (%p6893) target = $region172
      $region171: #{nerf_forward.3} parent=5 // pred_region
        %s6896 = ssub.s32 %s30, 2
        // Predicated region
        $region173: #{nerf_forward.3} parent=171 // pred_check
          %p6897 = pneg %p573
        $region174: #{nerf_forward.3} parent=171 // pred_check_branch
          %6899 = sbr.rel (%p6897) target = $region176
        $region175: #{nerf_forward.3} parent=171 // pred_region
          %s6900 = sand.u32 %s558, 1
          %s6901 = sand.u32 %s558, 1
          %s6902 = smul.addr %s6901, 256
          %s6903 = scalar_lea.vmem [#allocation2], %s6902
        $region176: #{nerf_forward.3} parent=171 // pred_fallthru
          _
      $region172: #{nerf_forward.3} parent=5 // pred_fallthru
        _
    $region6: #{nerf_forward.3} parent=1 // loop_footer
      %s34 = sadd.s32 1, %s30
    $region7: #{nerf_forward.3} parent=1 // loop_footer_branch
      %29 = sbr.rel target = $region3
    $region8: #{nerf_forward.3} parent=1 // loop_exit
      _

</llo_original>
